<compile_context>
chip_gen: v5e
topology: v5e:2x2
jax: 0.10.0
libtpu: 0.0.40
codegen_flags: <defaults>
</compile_context>

<pallas_src>
import numpy as np

import jax
import jax.numpy as jnp
from jax.experimental import pallas as pl
from jax.experimental.pallas import tpu as pltpu


# ----------------------------------------------------------------------------
# In-kernel building blocks (operate on jnp values; weights arrive as refs)
# ----------------------------------------------------------------------------
def _pad2d(x, c):
    """Zero-pad a packed (H, W*C) activation by 1 in H and W -> (H+2, (W+2)*C)."""
    h, wc = x.shape
    zc = jnp.zeros((h, c), x.dtype)
    mid = jnp.concatenate([zc, x, zc], axis=1)
    zr = jnp.zeros((1, wc + 2 * c), x.dtype)
    return jnp.concatenate([zr, mid, zr], axis=0)


def _conv3x3_s1(x_bf, w_ref, b_ref, c, h):
    """3x3 stride-1 conv on packed bf16 (h, w*c): one MXU matmul (taps stacked on K)."""
    xp = _pad2d(x_bf, c)
    lhs = jnp.concatenate([xp[dh:dh + h, :] for dh in range(3)], axis=1)
    return jnp.dot(lhs, w_ref[...], preferred_element_type=jnp.float32) + b_ref[...]


def _conv3x3_s2(x_bf, w_ref, b_ref, c, ho):
    """3x3 stride-2 conv; output rows fully unrolled (ho <= 4); W stride is in the weight."""
    xp = _pad2d(x_bf, c)
    rows = [jnp.concatenate([xp[2 * i + dh:2 * i + dh + 1, :] for dh in range(3)],
                            axis=1) for i in range(ho)]
    lhs = rows[0] if ho == 1 else jnp.concatenate(rows, axis=0)
    return jnp.dot(lhs, w_ref[...], preferred_element_type=jnp.float32) + b_ref[...]


def _down1x1_s2(x_bf, wd_ref, bd_ref, ho):
    """1x1 stride-2 downsample conv on the (unpadded) packed input."""
    rows = [x_bf[2 * i:2 * i + 1, :] for i in range(ho)]
    lhs = rows[0] if ho == 1 else jnp.concatenate(rows, axis=0)
    return jnp.dot(lhs, wd_ref[...], preferred_element_type=jnp.float32) + bd_ref[...]


def _block_s1(x, w1, b1, w2, b2, c, h):
    """BasicBlock, stride 1: conv-bn-relu, conv-bn, +x, relu (BN folded)."""
    xb = x.astype(jnp.bfloat16)
    h1 = jnp.maximum(_conv3x3_s1(xb, w1, b1, c, h), 0.0)
    h2 = _conv3x3_s1(h1.astype(jnp.bfloat16), w2, b2, c, h)
    return jnp.maximum(h2 + x, 0.0)


def _block_s2(x, w1, b1, w2, b2, wd, bd, cfg):
    """BasicBlock, stride 2 with 1x1 downsample (BN folded everywhere)."""
    c, co, ho = cfg["c"], cfg["co"], cfg["ho"]
    xb = x.astype(jnp.bfloat16)
    h1 = jnp.maximum(_conv3x3_s2(xb, w1, b1, c, ho), 0.0)
    h2 = _conv3x3_s1(h1.astype(jnp.bfloat16), w2, b2, co, ho)
    idn = _down1x1_s2(xb, wd, bd, ho)
    return jnp.maximum(h2 + idn, 0.0)


def _make_kernel(stem_cfg, block_cfgs):
    kh = stem_cfg["kh"]
    sh, sw, sc = stem_cfg["h"], stem_cfg["w"], stem_cfg["c"]
    mh, mw = sh // 2, sw // 2

    def kernel(*refs):
        out_ref = refs[-1]
        it = iter(refs[:-1])
        p0_ref = next(it)
        p1_ref = next(it)
        wstem = next(it)
        bstem = next(it)

        # ---- stem: 7x7 s2 conv (+folded BN) + ReLU, single matmul ------------
        p0 = p0_ref[0]
        p1 = p1_ref[0]
        views = []
        for dh in range(kh):
            src = p0 if dh % 2 == 0 else p1
            r0 = dh // 2
            views.append(src[r0:r0 + sh, :])
        lhs = jnp.concatenate(views, axis=1)
        act = jnp.maximum(
            jnp.dot(lhs, wstem[...], preferred_element_type=jnp.float32)
            + bstem[...], 0.0)                                     # (sh, sw*sc)

        # ---- 3x3 s2 p1 maxpool: fully unrolled static-slice max --------------
        rows = []
        for i in range(mh):
            r = jnp.maximum(act[2 * i:2 * i + 1, :], act[2 * i + 1:2 * i + 2, :])
            if i > 0:
                r = jnp.maximum(r, act[2 * i - 1:2 * i, :])
            rows.append(r)
        hmax = jnp.concatenate(rows, axis=0)                        # (mh, sw*sc)
        cols = []
        for j in range(mw):
            cm = jnp.maximum(hmax[:, (2 * j) * sc:(2 * j + 1) * sc],
                             hmax[:, (2 * j + 1) * sc:(2 * j + 2) * sc])
            if j > 0:
                cm = jnp.maximum(cm, hmax[:, (2 * j - 1) * sc:(2 * j) * sc])
            cols.append(cm)
        x = jnp.concatenate(cols, axis=1)                           # (mh, mw*sc)

        # ---- layer1..layer4: whole BasicBlocks, weights resident in VMEM -----
        for cfg in block_cfgs:
            if cfg["stride"] == 1:
                w1, b1, w2, b2 = next(it), next(it), next(it), next(it)
                x = _block_s1(x, w1, b1, w2, b2, cfg["c"], cfg["h"])
            else:
                w1, b1, w2, b2 = next(it), next(it), next(it), next(it)
                wd, bd = next(it), next(it)
                x = _block_s2(x, w1, b1, w2, b2, wd, bd, cfg)

        # ---- classifier: 1x1 conv (spatial is 1x1 here) -----------------------
        wcls, bcls = next(it), next(it)
        feat = x.astype(jnp.bfloat16)                               # (1, C_final)
        out_ref[0] = (jnp.dot(feat, wcls[...],
                              preferred_element_type=jnp.float32) + bcls[...])

    return kernel


# ----------------------------------------------------------------------------
# Fused pallas_call wrapper
# ----------------------------------------------------------------------------
def _fused_call(p0, p1, prep):
    meta, flat = prep["meta"], prep["flat"]
    n = p0.shape[0]
    ncls = meta["num_classes"]

    def phase_spec(shape):
        return pl.BlockSpec((1,) + tuple(shape[1:]), lambda i: (i, 0, 0))

    def resident_spec(a):
        nd = a.ndim

        def idx(i):
            return (0,) * nd

        return pl.BlockSpec(tuple(a.shape), idx)

    cost = pl.CostEstimate(
        flops=int(meta["flops_per_image"]) * n,
        transcendentals=0,
        bytes_accessed=int(p0.size * p0.dtype.itemsize
                           + p1.size * p1.dtype.itemsize
                           + sum(a.size * a.dtype.itemsize for a in flat)
                           + n * ncls * 4))

    return pl.pallas_call(
        _make_kernel(meta["stem"], meta["blocks"]),
        out_shape=jax.ShapeDtypeStruct((n, 1, ncls), jnp.float32),
        grid=(n,),
        in_specs=[phase_spec(p0.shape), phase_spec(p1.shape)]
                 + [resident_spec(a) for a in flat],
        out_specs=pl.BlockSpec((1, 1, ncls), lambda i: (i, 0, 0)),
        compiler_params=pltpu.CompilerParams(
            dimension_semantics=("parallel",)),
        cost_estimate=cost,
    )(p0, p1, *flat)


# ----------------------------------------------------------------------------
# Parameter prep (runs ONCE, outside jit): fold BN, build tap-stacked banded
# bf16 weights and width-packed f32 biases.
# ----------------------------------------------------------------------------
def fold_bn(w, gamma, beta, mean, var, eps=1e-5):
    s = gamma / jnp.sqrt(var + eps)
    return w * s[:, None, None, None], beta - mean * s


def _banded_stacked(w_oihw, wp, wo, stride, kpad=None):
    """(KH*Ktap, Wo*Cout): row dh*Ktap + wpi*Cin + ci, col j*Cout + co holds
    w[co, ci, dh, dw] with wpi = stride*j + dw; zeros elsewhere."""
    w = np.asarray(w_oihw, dtype=np.float32)
    co, ci, kh, kw = w.shape
    ktap = wp * ci if kpad is None else int(kpad)
    assert ktap >= wp * ci
    m = np.zeros((kh * ktap, wo * co), np.float32)
    for dh in range(kh):
        base = dh * ktap
        for j in range(wo):
            for dw in range(kw):
                wpi = stride * j + dw
                if wpi >= wp:
                    continue
                m[base + wpi * ci: base + (wpi + 1) * ci,
                  j * co: (j + 1) * co] = w[:, :, dh, dw].T
    return jnp.asarray(m).astype(jnp.bfloat16)


def _packed_bias(b, wo):
    b = jnp.asarray(b, jnp.float32).reshape(-1)
    return jnp.tile(b, wo).reshape(1, wo * b.shape[0])


def prepare_params(params, in_hw=(32, 32)):
    hin, win = in_hw
    cin = int(params["conv1_w"].shape[1])
    base_c = int(params["conv1_w"].shape[0])
    kh_stem = int(params["conv1_w"].shape[2])

    sw_f, sb = fold_bn(params["conv1_w"], *params["bn1"])
    sh, sws = hin // 2, win // 2                        # stem spatial out
    wp_in = win + 6
    stem_lanes = int(-(-(wp_in * cin) // 128) * 128)    # round K up to 128 lanes
    stem_w = _banded_stacked(sw_f, wp_in, sws, stride=2, kpad=stem_lanes)
    stem_b = _packed_bias(sb, sws)
    flops = 2 * sh * int(stem_w.size)

    flat = [stem_w, stem_b]
    h, w, c = sh // 2, sws // 2, base_c                 # after maxpool
    block_cfgs = []
    for li, layer in enumerate(params["layers"]):
        for bi, bp in enumerate(layer):
            stride = 2 if (li > 0 and bi == 0) else 1
            w1, b1 = fold_bn(bp["conv1_w"], *bp["bn1"])
            w2, b2 = fold_bn(bp["conv2_w"], *bp["bn2"])
            if stride == 1:
                w1m = _banded_stacked(w1, w + 2, w, 1)
                w2m = _banded_stacked(w2, w + 2, w, 1)
                flat += [w1m, _packed_bias(b1, w), w2m, _packed_bias(b2, w)]
                flops += 2 * h * (int(w1m.size) + int(w2m.size))
                block_cfgs.append(dict(stride=1, h=h, w=w, c=c))
            else:
                ho, wo, co = h // 2, w // 2, c * 2
                wdw, bdv = fold_bn(bp["down_w"], *bp["down_bn"])
                w1m = _banded_stacked(w1, w + 2, wo, 2)
                w2m = _banded_stacked(w2, wo + 2, wo, 1)
                wdm = _banded_stacked(wdw, w, wo, 2)
                flat += [w1m, _packed_bias(b1, wo), w2m, _packed_bias(b2, wo),
                         wdm, _packed_bias(bdv, wo)]
                flops += 2 * ho * (int(w1m.size) + int(w2m.size) + int(wdm.size))
                block_cfgs.append(dict(stride=2, h=h, w=w, c=c, ho=ho, wo=wo, co=co))
                h, w, c = ho, wo, co

    # TODO(synk): classifier applied as a dense matmul, assuming the backbone
    # output spatial size is 1x1 (true for 32x32 inputs with this ResNet-18 layout).
    assert h == 1 and w == 1, (h, w)
    cls_w = jnp.asarray(params["cls_w"])[:, :, 0, 0].T.astype(jnp.bfloat16)
    cls_b = jnp.asarray(params["cls_b"], jnp.float32).reshape(1, -1)
    flat += [cls_w, cls_b]
    flops += 2 * int(cls_w.size)

    meta = dict(in_hw=(hin, win), cin=cin, stem_lanes=stem_lanes,
                stem=dict(kh=kh_stem, h=sh, w=sws, c=base_c),
                blocks=block_cfgs, num_classes=int(cls_w.shape[1]),
                flops_per_image=int(flops))
    return {"flat": flat, "meta": meta}


# ----------------------------------------------------------------------------
# Forward (FC_ResNet.forward semantics, inference-mode BN)
# ----------------------------------------------------------------------------
def fc_resnet_forward(prep, x_nchw):
    meta = prep["meta"]
    n = x_nchw.shape[0]
    hin, win = meta["in_hw"]
    cin = meta["cin"]
    x = jnp.transpose(x_nchw, (0, 2, 3, 1)).astype(jnp.float32)       # NHWC
    xp = jnp.pad(x, ((0, 0), (3, 3), (3, 3), (0, 0)))                 # stem pad=3
    hp, wp = hin + 6, win + 6
    xpk = xp.reshape(n, hp, wp * cin)
    lane_pad = meta["stem_lanes"] - wp * cin
    if lane_pad:
        xpk = jnp.pad(xpk, ((0, 0), (0, 0), (0, lane_pad)))
    xpk = xpk.astype(jnp.bfloat16)
    p0, p1 = xpk[:, 0::2, :], xpk[:, 1::2, :]                         # H-parity phases
    logits = _fused_call(p0, p1, prep)                                # (N, 1, classes)
    return logits.reshape(n, -1, 1, 1)                                # (N, classes, 1, 1)


# ----------------------------------------------------------------------------
# Pure-JAX reference (NHWC, eval-mode BN folded, bf16 matmul operands to match
# the kernel's MXU dtype) — used only for validation in __main__.
# ----------------------------------------------------------------------------
def _conv_ref(x, w, b, stride, pad):
    y = jax.lax.conv_general_dilated(
        x.astype(jnp.bfloat16), w.astype(jnp.bfloat16),
        window_strides=(stride, stride), padding=((pad, pad), (pad, pad)),
        dimension_numbers=("NHWC", "OIHW", "NHWC"),
        preferred_element_type=jnp.float32)
    return y + b.reshape(1, 1, 1, -1)


def _maxpool_ref(x):
    xp = jnp.pad(x, ((0, 0), (1, 1), (1, 1), (0, 0)), constant_values=-jnp.inf)
    ho = (xp.shape[1] - 3) // 2 + 1
    wo = (xp.shape[2] - 3) // 2 + 1
    r = None
    for dh in range(3):
        for dw in range(3):
            t = xp[:, dh:dh + 2 * ho:2, dw:dw + 2 * wo:2, :]
            r = t if r is None else jnp.maximum(r, t)
    return r


def reference_forward(params, x_nchw):
    x = jnp.transpose(x_nchw, (0, 2, 3, 1)).astype(jnp.float32)
    sw, sb = fold_bn(params["conv1_w"], *params["bn1"])
    x = jnp.maximum(_conv_ref(x, sw, sb, 2, 3), 0.0)
    x = _maxpool_ref(x)
    for li, layer in enumerate(params["layers"]):
        for b_i, bp in enumerate(layer):
            stride = 2 if (li > 0 and b_i == 0) else 1
            w1, b1 = fold_bn(bp["conv1_w"], *bp["bn1"])
            w2, b2 = fold_bn(bp["conv2_w"], *bp["bn2"])
            h1 = jnp.maximum(_conv_ref(x, w1, b1, stride, 1), 0.0)
            h2 = _conv_ref(h1, w2, b2, 1, 1)
            if stride == 1:
                ident = x
            else:
                wd, bd = fold_bn(bp["down_w"], *bp["down_bn"])
                ident = _conv_ref(x, wd, bd, stride, 0)
            x = jnp.maximum(h2 + ident, 0.0)
    logits = _conv_ref(x, params["cls_w"], params["cls_b"], 1, 0)
    return jnp.transpose(logits, (0, 3, 1, 2))


# ----------------------------------------------------------------------------
# Parameter init (deterministic, synthetic — ResNet-18 structure at base=8)
# ----------------------------------------------------------------------------
def _init_conv(key, cout, cin, kh, kw):
    fan_in = cin * kh * kw
    return (jax.random.normal(key, (cout, cin, kh, kw), jnp.float32)
            * jnp.sqrt(2.0 / fan_in)).astype(jnp.float32)


def _init_bn(key, c):
    k1, k2, k3, k4 = jax.random.split(key, 4)
    gamma = (1.0 + 0.1 * jax.random.normal(k1, (c,))).astype(jnp.float32)
    beta = (0.1 * jax.random.normal(k2, (c,))).astype(jnp.float32)
    mean = (0.1 * jax.random.normal(k3, (c,))).astype(jnp.float32)
    var = (1.0 + 0.1 * jnp.abs(jax.random.normal(k4, (c,)))).astype(jnp.float32)
    return (gamma, beta, mean, var)


def _init_block(key, cin, cout, downsample):
    ks = jax.random.split(key, 6)
    p = dict(conv1_w=_init_conv(ks[0], cout, cin, 3, 3), bn1=_init_bn(ks[1], cout),
             conv2_w=_init_conv(ks[2], cout, cout, 3, 3), bn2=_init_bn(ks[3], cout))
    if downsample:
        p["down_w"] = _init_conv(ks[4], cout, cin, 1, 1)
        p["down_bn"] = _init_bn(ks[5], cout)
    return p


def init_params(key, in_ch=3, base=8, num_classes=5):
    keys = jax.random.split(key, 12)
    params = {"conv1_w": _init_conv(keys[0], base, in_ch, 7, 7),
              "bn1": _init_bn(keys[1], base)}
    widths = [base, base * 2, base * 4, base * 8]
    layers, cin, ki = [], base, 2
    for li, cout in enumerate(widths):
        stride = 1 if li == 0 else 2
        blk0 = _init_block(keys[ki], cin, cout,
                           downsample=(stride != 1 or cin != cout)); ki += 1
        blk1 = _init_block(keys[ki], cout, cout, downsample=False); ki += 1
        layers.append([blk0, blk1])
        cin = cout
    params["layers"] = layers
    kc, kb = jax.random.split(keys[10], 2)
    params["cls_w"] = _init_conv(kc, num_classes, widths[-1], 1, 1)
    params["cls_b"] = (0.01 * jax.random.normal(kb, (num_classes,))).astype(jnp.float32)
    return params


if __name__ == "__main__":
    key = jax.random.PRNGKey(0)
    kp, kx = jax.random.split(key)
    num_classes = 5
    params = init_params(kp, in_ch=3, base=8, num_classes=num_classes)
    x = jax.random.normal(kx, (2, 3, 32, 32), jnp.float32)   # NCHW, like PyTorch

    prep = prepare_params(params, in_hw=(32, 32))            # once, outside jit
    fwd = jax.jit(lambda xb: fc_resnet_forward(prep, xb))
    out = fwd(x)
    jax.block_until_ready(out)

    assert out.shape == (2, num_classes, 1, 1), out.shape
    assert bool(jnp.all(jnp.isfinite(out)))

    ref = jax.jit(lambda xb: reference_forward(params, xb))(x)
    err = float(jnp.max(jnp.abs(out - ref)))
    scale = float(jnp.max(jnp.abs(ref)))
    assert err <= 1e-2 * max(1.0, scale), (err, scale)
    print("KERNEL_OK")
</pallas_src>

<mosaic_0001>
module attributes {stable_mosaic.version = 11 : i64} {
  func.func @kernel(%arg0: i32, %arg1: memref<1x19x128xbf16, #tpu.memory_space<vmem>>, %arg2: memref<1x19x128xbf16, #tpu.memory_space<vmem>>, %arg3: memref<896x128xbf16, #tpu.memory_space<vmem>>, %arg4: memref<1x128xf32, #tpu.memory_space<vmem>>, %arg5: memref<240x64xbf16, #tpu.memory_space<vmem>>, %arg6: memref<1x64xf32, #tpu.memory_space<vmem>>, %arg7: memref<240x64xbf16, #tpu.memory_space<vmem>>, %arg8: memref<1x64xf32, #tpu.memory_space<vmem>>, %arg9: memref<240x64xbf16, #tpu.memory_space<vmem>>, %arg10: memref<1x64xf32, #tpu.memory_space<vmem>>, %arg11: memref<240x64xbf16, #tpu.memory_space<vmem>>, %arg12: memref<1x64xf32, #tpu.memory_space<vmem>>, %arg13: memref<240x64xbf16, #tpu.memory_space<vmem>>, %arg14: memref<1x64xf32, #tpu.memory_space<vmem>>, %arg15: memref<288x64xbf16, #tpu.memory_space<vmem>>, %arg16: memref<1x64xf32, #tpu.memory_space<vmem>>, %arg17: memref<64x64xbf16, #tpu.memory_space<vmem>>, %arg18: memref<1x64xf32, #tpu.memory_space<vmem>>, %arg19: memref<288x64xbf16, #tpu.memory_space<vmem>>, %arg20: memref<1x64xf32, #tpu.memory_space<vmem>>, %arg21: memref<288x64xbf16, #tpu.memory_space<vmem>>, %arg22: memref<1x64xf32, #tpu.memory_space<vmem>>, %arg23: memref<288x64xbf16, #tpu.memory_space<vmem>>, %arg24: memref<1x64xf32, #tpu.memory_space<vmem>>, %arg25: memref<384x64xbf16, #tpu.memory_space<vmem>>, %arg26: memref<1x64xf32, #tpu.memory_space<vmem>>, %arg27: memref<64x64xbf16, #tpu.memory_space<vmem>>, %arg28: memref<1x64xf32, #tpu.memory_space<vmem>>, %arg29: memref<384x64xbf16, #tpu.memory_space<vmem>>, %arg30: memref<1x64xf32, #tpu.memory_space<vmem>>, %arg31: memref<384x64xbf16, #tpu.memory_space<vmem>>, %arg32: memref<1x64xf32, #tpu.memory_space<vmem>>, %arg33: memref<384x64xbf16, #tpu.memory_space<vmem>>, %arg34: memref<1x64xf32, #tpu.memory_space<vmem>>, %arg35: memref<576x64xbf16, #tpu.memory_space<vmem>>, %arg36: memref<1x64xf32, #tpu.memory_space<vmem>>, %arg37: memref<64x64xbf16, #tpu.memory_space<vmem>>, %arg38: memref<1x64xf32, #tpu.memory_space<vmem>>, %arg39: memref<576x64xbf16, #tpu.memory_space<vmem>>, %arg40: memref<1x64xf32, #tpu.memory_space<vmem>>, %arg41: memref<576x64xbf16, #tpu.memory_space<vmem>>, %arg42: memref<1x64xf32, #tpu.memory_space<vmem>>, %arg43: memref<64x5xbf16, #tpu.memory_space<vmem>>, %arg44: memref<1x5xf32, #tpu.memory_space<vmem>>, %arg45: memref<1x1x5xf32, #tpu.memory_space<vmem>>) attributes {dimension_semantics = [#tpu.dimension_semantics<parallel>], iteration_bounds = array<i64: 2>, scalar_prefetch = 0 : i64, scratch_operands = 0 : i64, tpu.core_type = #tpu.core_type<tc>, window_params = [{transform_indices = @transform_0, window_bounds = array<i64: 1, 19, 128>}, {transform_indices = @transform_1, window_bounds = array<i64: 1, 19, 128>}, {pipeline_mode = #tpu.pipeline_mode<synchronous>, transform_indices = @transform_2, window_bounds = array<i64: 896, 128>}, {pipeline_mode = #tpu.pipeline_mode<synchronous>, transform_indices = @transform_3, window_bounds = array<i64: 1, 128>}, {pipeline_mode = #tpu.pipeline_mode<synchronous>, transform_indices = @transform_4, window_bounds = array<i64: 240, 64>}, {pipeline_mode = #tpu.pipeline_mode<synchronous>, transform_indices = @transform_5, window_bounds = array<i64: 1, 64>}, {pipeline_mode = #tpu.pipeline_mode<synchronous>, transform_indices = @transform_6, window_bounds = array<i64: 240, 64>}, {pipeline_mode = #tpu.pipeline_mode<synchronous>, transform_indices = @transform_7, window_bounds = array<i64: 1, 64>}, {pipeline_mode = #tpu.pipeline_mode<synchronous>, transform_indices = @transform_8, window_bounds = array<i64: 240, 64>}, {pipeline_mode = #tpu.pipeline_mode<synchronous>, transform_indices = @transform_9, window_bounds = array<i64: 1, 64>}, {pipeline_mode = #tpu.pipeline_mode<synchronous>, transform_indices = @transform_10, window_bounds = array<i64: 240, 64>}, {pipeline_mode = #tpu.pipeline_mode<synchronous>, transform_indices = @transform_11, window_bounds = array<i64: 1, 64>}, {pipeline_mode = #tpu.pipeline_mode<synchronous>, transform_indices = @transform_12, window_bounds = array<i64: 240, 64>}, {pipeline_mode = #tpu.pipeline_mode<synchronous>, transform_indices = @transform_13, window_bounds = array<i64: 1, 64>}, {pipeline_mode = #tpu.pipeline_mode<synchronous>, transform_indices = @transform_14, window_bounds = array<i64: 288, 64>}, {pipeline_mode = #tpu.pipeline_mode<synchronous>, transform_indices = @transform_15, window_bounds = array<i64: 1, 64>}, {pipeline_mode = #tpu.pipeline_mode<synchronous>, transform_indices = @transform_16, window_bounds = array<i64: 64, 64>}, {pipeline_mode = #tpu.pipeline_mode<synchronous>, transform_indices = @transform_17, window_bounds = array<i64: 1, 64>}, {pipeline_mode = #tpu.pipeline_mode<synchronous>, transform_indices = @transform_18, window_bounds = array<i64: 288, 64>}, {pipeline_mode = #tpu.pipeline_mode<synchronous>, transform_indices = @transform_19, window_bounds = array<i64: 1, 64>}, {pipeline_mode = #tpu.pipeline_mode<synchronous>, transform_indices = @transform_20, window_bounds = array<i64: 288, 64>}, {pipeline_mode = #tpu.pipeline_mode<synchronous>, transform_indices = @transform_21, window_bounds = array<i64: 1, 64>}, {pipeline_mode = #tpu.pipeline_mode<synchronous>, transform_indices = @transform_22, window_bounds = array<i64: 288, 64>}, {pipeline_mode = #tpu.pipeline_mode<synchronous>, transform_indices = @transform_23, window_bounds = array<i64: 1, 64>}, {pipeline_mode = #tpu.pipeline_mode<synchronous>, transform_indices = @transform_24, window_bounds = array<i64: 384, 64>}, {pipeline_mode = #tpu.pipeline_mode<synchronous>, transform_indices = @transform_25, window_bounds = array<i64: 1, 64>}, {pipeline_mode = #tpu.pipeline_mode<synchronous>, transform_indices = @transform_26, window_bounds = array<i64: 64, 64>}, {pipeline_mode = #tpu.pipeline_mode<synchronous>, transform_indices = @transform_27, window_bounds = array<i64: 1, 64>}, {pipeline_mode = #tpu.pipeline_mode<synchronous>, transform_indices = @transform_28, window_bounds = array<i64: 384, 64>}, {pipeline_mode = #tpu.pipeline_mode<synchronous>, transform_indices = @transform_29, window_bounds = array<i64: 1, 64>}, {pipeline_mode = #tpu.pipeline_mode<synchronous>, transform_indices = @transform_30, window_bounds = array<i64: 384, 64>}, {pipeline_mode = #tpu.pipeline_mode<synchronous>, transform_indices = @transform_31, window_bounds = array<i64: 1, 64>}, {pipeline_mode = #tpu.pipeline_mode<synchronous>, transform_indices = @transform_32, window_bounds = array<i64: 384, 64>}, {pipeline_mode = #tpu.pipeline_mode<synchronous>, transform_indices = @transform_33, window_bounds = array<i64: 1, 64>}, {pipeline_mode = #tpu.pipeline_mode<synchronous>, transform_indices = @transform_34, window_bounds = array<i64: 576, 64>}, {pipeline_mode = #tpu.pipeline_mode<synchronous>, transform_indices = @transform_35, window_bounds = array<i64: 1, 64>}, {pipeline_mode = #tpu.pipeline_mode<synchronous>, transform_indices = @transform_36, window_bounds = array<i64: 64, 64>}, {pipeline_mode = #tpu.pipeline_mode<synchronous>, transform_indices = @transform_37, window_bounds = array<i64: 1, 64>}, {pipeline_mode = #tpu.pipeline_mode<synchronous>, transform_indices = @transform_38, window_bounds = array<i64: 576, 64>}, {pipeline_mode = #tpu.pipeline_mode<synchronous>, transform_indices = @transform_39, window_bounds = array<i64: 1, 64>}, {pipeline_mode = #tpu.pipeline_mode<synchronous>, transform_indices = @transform_40, window_bounds = array<i64: 576, 64>}, {pipeline_mode = #tpu.pipeline_mode<synchronous>, transform_indices = @transform_41, window_bounds = array<i64: 1, 64>}, {pipeline_mode = #tpu.pipeline_mode<synchronous>, transform_indices = @transform_42, window_bounds = array<i64: 64, 5>}, {pipeline_mode = #tpu.pipeline_mode<synchronous>, transform_indices = @transform_43, window_bounds = array<i64: 1, 5>}, {transform_indices = @transform_44, window_bounds = array<i64: 1, 1, 5>}]} {
    %c0 = arith.constant 0 : index
    %c0_0 = arith.constant 0 : index
    %c0_1 = arith.constant 0 : index
    %0 = vector.load %arg1[%c0, %c0_0, %c0_1] : memref<1x19x128xbf16, #tpu.memory_space<vmem>>, vector<1x19x128xbf16>
    %1 = vector.shape_cast %0 : vector<1x19x128xbf16> to vector<19x128xbf16>
    %c0_2 = arith.constant 0 : index
    %c0_3 = arith.constant 0 : index
    %c0_4 = arith.constant 0 : index
    %2 = vector.load %arg2[%c0_2, %c0_3, %c0_4] : memref<1x19x128xbf16, #tpu.memory_space<vmem>>, vector<1x19x128xbf16>
    %3 = vector.shape_cast %2 : vector<1x19x128xbf16> to vector<19x128xbf16>
    %4 = vector.extract_strided_slice %1 {offsets = [0, 0], sizes = [16, 128], strides = [1, 1]} : vector<19x128xbf16> to vector<16x128xbf16>
    %5 = vector.extract_strided_slice %3 {offsets = [0, 0], sizes = [16, 128], strides = [1, 1]} : vector<19x128xbf16> to vector<16x128xbf16>
    %6 = vector.extract_strided_slice %1 {offsets = [1, 0], sizes = [16, 128], strides = [1, 1]} : vector<19x128xbf16> to vector<16x128xbf16>
    %7 = vector.extract_strided_slice %3 {offsets = [1, 0], sizes = [16, 128], strides = [1, 1]} : vector<19x128xbf16> to vector<16x128xbf16>
    %8 = vector.extract_strided_slice %1 {offsets = [2, 0], sizes = [16, 128], strides = [1, 1]} : vector<19x128xbf16> to vector<16x128xbf16>
    %9 = vector.extract_strided_slice %3 {offsets = [2, 0], sizes = [16, 128], strides = [1, 1]} : vector<19x128xbf16> to vector<16x128xbf16>
    %10 = vector.extract_strided_slice %1 {offsets = [3, 0], sizes = [16, 128], strides = [1, 1]} : vector<19x128xbf16> to vector<16x128xbf16>
    %11 = tpu.concatenate %4, %5, %6, %7, %8, %9, %10 in 1 : vector<16x128xbf16>, vector<16x128xbf16>, vector<16x128xbf16>, vector<16x128xbf16>, vector<16x128xbf16>, vector<16x128xbf16>, vector<16x128xbf16> -> vector<16x896xbf16>
    %c0_5 = arith.constant 0 : index
    %c0_6 = arith.constant 0 : index
    %12 = vector.load %arg3[%c0_5, %c0_6] : memref<896x128xbf16, #tpu.memory_space<vmem>>, vector<896x128xbf16>
    %cst = arith.constant dense<0.000000e+00> : vector<16x128xf32>
    %13 = tpu.matmul %11, %12, %cst {dimension_numbers = #tpu.dot_dimension_numbers<[1], [0], [0], [1], [0, 0, 1, 1], [], []>} : vector<16x896xbf16>, vector<896x128xbf16>, vector<16x128xf32> -> vector<16x128xf32>
    %c0_7 = arith.constant 0 : index
    %c0_8 = arith.constant 0 : index
    %14 = vector.load %arg4[%c0_7, %c0_8] : memref<1x128xf32, #tpu.memory_space<vmem>>, vector<1x128xf32>
    %15 = vector.broadcast %14 : vector<1x128xf32> to vector<16x128xf32>
    %16 = arith.addf %13, %15 : vector<16x128xf32>
    %cst_9 = arith.constant 0.000000e+00 : f32
    %17 = vector.broadcast %cst_9 : f32 to vector<16x128xf32>
    %18 = arith.maximumf %16, %17 : vector<16x128xf32>
    %19 = vector.extract_strided_slice %18 {offsets = [0, 0], sizes = [1, 128], strides = [1, 1]} : vector<16x128xf32> to vector<1x128xf32>
    %20 = vector.extract_strided_slice %18 {offsets = [1, 0], sizes = [1, 128], strides = [1, 1]} : vector<16x128xf32> to vector<1x128xf32>
    %21 = arith.maximumf %19, %20 : vector<1x128xf32>
    %22 = vector.extract_strided_slice %18 {offsets = [2, 0], sizes = [1, 128], strides = [1, 1]} : vector<16x128xf32> to vector<1x128xf32>
    %23 = vector.extract_strided_slice %18 {offsets = [3, 0], sizes = [1, 128], strides = [1, 1]} : vector<16x128xf32> to vector<1x128xf32>
    %24 = arith.maximumf %22, %23 : vector<1x128xf32>
    %25 = vector.extract_strided_slice %18 {offsets = [1, 0], sizes = [1, 128], strides = [1, 1]} : vector<16x128xf32> to vector<1x128xf32>
    %26 = arith.maximumf %24, %25 : vector<1x128xf32>
    %27 = vector.extract_strided_slice %18 {offsets = [4, 0], sizes = [1, 128], strides = [1, 1]} : vector<16x128xf32> to vector<1x128xf32>
    %28 = vector.extract_strided_slice %18 {offsets = [5, 0], sizes = [1, 128], strides = [1, 1]} : vector<16x128xf32> to vector<1x128xf32>
    %29 = arith.maximumf %27, %28 : vector<1x128xf32>
    %30 = vector.extract_strided_slice %18 {offsets = [3, 0], sizes = [1, 128], strides = [1, 1]} : vector<16x128xf32> to vector<1x128xf32>
    %31 = arith.maximumf %29, %30 : vector<1x128xf32>
    %32 = vector.extract_strided_slice %18 {offsets = [6, 0], sizes = [1, 128], strides = [1, 1]} : vector<16x128xf32> to vector<1x128xf32>
    %33 = vector.extract_strided_slice %18 {offsets = [7, 0], sizes = [1, 128], strides = [1, 1]} : vector<16x128xf32> to vector<1x128xf32>
    %34 = arith.maximumf %32, %33 : vector<1x128xf32>
    %35 = vector.extract_strided_slice %18 {offsets = [5, 0], sizes = [1, 128], strides = [1, 1]} : vector<16x128xf32> to vector<1x128xf32>
    %36 = arith.maximumf %34, %35 : vector<1x128xf32>
    %37 = vector.extract_strided_slice %18 {offsets = [8, 0], sizes = [1, 128], strides = [1, 1]} : vector<16x128xf32> to vector<1x128xf32>
    %38 = vector.extract_strided_slice %18 {offsets = [9, 0], sizes = [1, 128], strides = [1, 1]} : vector<16x128xf32> to vector<1x128xf32>
    %39 = arith.maximumf %37, %38 : vector<1x128xf32>
    %40 = vector.extract_strided_slice %18 {offsets = [7, 0], sizes = [1, 128], strides = [1, 1]} : vector<16x128xf32> to vector<1x128xf32>
    %41 = arith.maximumf %39, %40 : vector<1x128xf32>
    %42 = vector.extract_strided_slice %18 {offsets = [10, 0], sizes = [1, 128], strides = [1, 1]} : vector<16x128xf32> to vector<1x128xf32>
    %43 = vector.extract_strided_slice %18 {offsets = [11, 0], sizes = [1, 128], strides = [1, 1]} : vector<16x128xf32> to vector<1x128xf32>
    %44 = arith.maximumf %42, %43 : vector<1x128xf32>
    %45 = vector.extract_strided_slice %18 {offsets = [9, 0], sizes = [1, 128], strides = [1, 1]} : vector<16x128xf32> to vector<1x128xf32>
    %46 = arith.maximumf %44, %45 : vector<1x128xf32>
    %47 = vector.extract_strided_slice %18 {offsets = [12, 0], sizes = [1, 128], strides = [1, 1]} : vector<16x128xf32> to vector<1x128xf32>
    %48 = vector.extract_strided_slice %18 {offsets = [13, 0], sizes = [1, 128], strides = [1, 1]} : vector<16x128xf32> to vector<1x128xf32>
    %49 = arith.maximumf %47, %48 : vector<1x128xf32>
    %50 = vector.extract_strided_slice %18 {offsets = [11, 0], sizes = [1, 128], strides = [1, 1]} : vector<16x128xf32> to vector<1x128xf32>
    %51 = arith.maximumf %49, %50 : vector<1x128xf32>
    %52 = vector.extract_strided_slice %18 {offsets = [14, 0], sizes = [1, 128], strides = [1, 1]} : vector<16x128xf32> to vector<1x128xf32>
    %53 = vector.extract_strided_slice %18 {offsets = [15, 0], sizes = [1, 128], strides = [1, 1]} : vector<16x128xf32> to vector<1x128xf32>
    %54 = arith.maximumf %52, %53 : vector<1x128xf32>
    %55 = vector.extract_strided_slice %18 {offsets = [13, 0], sizes = [1, 128], strides = [1, 1]} : vector<16x128xf32> to vector<1x128xf32>
    %56 = arith.maximumf %54, %55 : vector<1x128xf32>
    %57 = tpu.concatenate %21, %26, %31, %36, %41, %46, %51, %56 in 0 : vector<1x128xf32>, vector<1x128xf32>, vector<1x128xf32>, vector<1x128xf32>, vector<1x128xf32>, vector<1x128xf32>, vector<1x128xf32>, vector<1x128xf32> -> vector<8x128xf32>
    %58 = vector.extract_strided_slice %57 {offsets = [0, 0], sizes = [8, 8], strides = [1, 1]} : vector<8x128xf32> to vector<8x8xf32>
    %59 = vector.extract_strided_slice %57 {offsets = [0, 8], sizes = [8, 8], strides = [1, 1]} : vector<8x128xf32> to vector<8x8xf32>
    %60 = arith.maximumf %58, %59 : vector<8x8xf32>
    %61 = vector.extract_strided_slice %57 {offsets = [0, 16], sizes = [8, 8], strides = [1, 1]} : vector<8x128xf32> to vector<8x8xf32>
    %62 = vector.extract_strided_slice %57 {offsets = [0, 24], sizes = [8, 8], strides = [1, 1]} : vector<8x128xf32> to vector<8x8xf32>
    %63 = arith.maximumf %61, %62 : vector<8x8xf32>
    %64 = vector.extract_strided_slice %57 {offsets = [0, 8], sizes = [8, 8], strides = [1, 1]} : vector<8x128xf32> to vector<8x8xf32>
    %65 = arith.maximumf %63, %64 : vector<8x8xf32>
    %66 = vector.extract_strided_slice %57 {offsets = [0, 32], sizes = [8, 8], strides = [1, 1]} : vector<8x128xf32> to vector<8x8xf32>
    %67 = vector.extract_strided_slice %57 {offsets = [0, 40], sizes = [8, 8], strides = [1, 1]} : vector<8x128xf32> to vector<8x8xf32>
    %68 = arith.maximumf %66, %67 : vector<8x8xf32>
    %69 = vector.extract_strided_slice %57 {offsets = [0, 24], sizes = [8, 8], strides = [1, 1]} : vector<8x128xf32> to vector<8x8xf32>
    %70 = arith.maximumf %68, %69 : vector<8x8xf32>
    %71 = vector.extract_strided_slice %57 {offsets = [0, 48], sizes = [8, 8], strides = [1, 1]} : vector<8x128xf32> to vector<8x8xf32>
    %72 = vector.extract_strided_slice %57 {offsets = [0, 56], sizes = [8, 8], strides = [1, 1]} : vector<8x128xf32> to vector<8x8xf32>
    %73 = arith.maximumf %71, %72 : vector<8x8xf32>
    %74 = vector.extract_strided_slice %57 {offsets = [0, 40], sizes = [8, 8], strides = [1, 1]} : vector<8x128xf32> to vector<8x8xf32>
    %75 = arith.maximumf %73, %74 : vector<8x8xf32>
    %76 = vector.extract_strided_slice %57 {offsets = [0, 64], sizes = [8, 8], strides = [1, 1]} : vector<8x128xf32> to vector<8x8xf32>
    %77 = vector.extract_strided_slice %57 {offsets = [0, 72], sizes = [8, 8], strides = [1, 1]} : vector<8x128xf32> to vector<8x8xf32>
    %78 = arith.maximumf %76, %77 : vector<8x8xf32>
    %79 = vector.extract_strided_slice %57 {offsets = [0, 56], sizes = [8, 8], strides = [1, 1]} : vector<8x128xf32> to vector<8x8xf32>
    %80 = arith.maximumf %78, %79 : vector<8x8xf32>
    %81 = vector.extract_strided_slice %57 {offsets = [0, 80], sizes = [8, 8], strides = [1, 1]} : vector<8x128xf32> to vector<8x8xf32>
    %82 = vector.extract_strided_slice %57 {offsets = [0, 88], sizes = [8, 8], strides = [1, 1]} : vector<8x128xf32> to vector<8x8xf32>
    %83 = arith.maximumf %81, %82 : vector<8x8xf32>
    %84 = vector.extract_strided_slice %57 {offsets = [0, 72], sizes = [8, 8], strides = [1, 1]} : vector<8x128xf32> to vector<8x8xf32>
    %85 = arith.maximumf %83, %84 : vector<8x8xf32>
    %86 = vector.extract_strided_slice %57 {offsets = [0, 96], sizes = [8, 8], strides = [1, 1]} : vector<8x128xf32> to vector<8x8xf32>
    %87 = vector.extract_strided_slice %57 {offsets = [0, 104], sizes = [8, 8], strides = [1, 1]} : vector<8x128xf32> to vector<8x8xf32>
    %88 = arith.maximumf %86, %87 : vector<8x8xf32>
    %89 = vector.extract_strided_slice %57 {offsets = [0, 88], sizes = [8, 8], strides = [1, 1]} : vector<8x128xf32> to vector<8x8xf32>
    %90 = arith.maximumf %88, %89 : vector<8x8xf32>
    %91 = vector.extract_strided_slice %57 {offsets = [0, 112], sizes = [8, 8], strides = [1, 1]} : vector<8x128xf32> to vector<8x8xf32>
    %92 = vector.extract_strided_slice %57 {offsets = [0, 120], sizes = [8, 8], strides = [1, 1]} : vector<8x128xf32> to vector<8x8xf32>
    %93 = arith.maximumf %91, %92 : vector<8x8xf32>
    %94 = vector.extract_strided_slice %57 {offsets = [0, 104], sizes = [8, 8], strides = [1, 1]} : vector<8x128xf32> to vector<8x8xf32>
    %95 = arith.maximumf %93, %94 : vector<8x8xf32>
    %96 = tpu.concatenate %60, %65, %70, %75, %80, %85, %90, %95 in 1 : vector<8x8xf32>, vector<8x8xf32>, vector<8x8xf32>, vector<8x8xf32>, vector<8x8xf32>, vector<8x8xf32>, vector<8x8xf32>, vector<8x8xf32> -> vector<8x64xf32>
    %97 = arith.truncf %96 : vector<8x64xf32> to vector<8x64xbf16>
    %cst_10 = arith.constant 0.000000e+00 : bf16
    %98 = vector.broadcast %cst_10 : bf16 to vector<8x8xbf16>
    %99 = tpu.concatenate %98, %97, %98 in 1 : vector<8x8xbf16>, vector<8x64xbf16>, vector<8x8xbf16> -> vector<8x80xbf16>
    %cst_11 = arith.constant 0.000000e+00 : bf16
    %100 = vector.broadcast %cst_11 : bf16 to vector<1x80xbf16>
    %101 = tpu.concatenate %100, %99, %100 in 0 : vector<1x80xbf16>, vector<8x80xbf16>, vector<1x80xbf16> -> vector<10x80xbf16>
    %102 = vector.extract_strided_slice %101 {offsets = [0, 0], sizes = [8, 80], strides = [1, 1]} : vector<10x80xbf16> to vector<8x80xbf16>
    %103 = vector.extract_strided_slice %101 {offsets = [1, 0], sizes = [8, 80], strides = [1, 1]} : vector<10x80xbf16> to vector<8x80xbf16>
    %104 = vector.extract_strided_slice %101 {offsets = [2, 0], sizes = [8, 80], strides = [1, 1]} : vector<10x80xbf16> to vector<8x80xbf16>
    %105 = tpu.concatenate %102, %103, %104 in 1 : vector<8x80xbf16>, vector<8x80xbf16>, vector<8x80xbf16> -> vector<8x240xbf16>
    %c0_12 = arith.constant 0 : index
    %c0_13 = arith.constant 0 : index
    %106 = vector.load %arg5[%c0_12, %c0_13] : memref<240x64xbf16, #tpu.memory_space<vmem>>, vector<240x64xbf16>
    %cst_14 = arith.constant dense<0.000000e+00> : vector<8x64xf32>
    %107 = tpu.matmul %105, %106, %cst_14 {dimension_numbers = #tpu.dot_dimension_numbers<[1], [0], [0], [1], [0, 0, 1, 1], [], []>} : vector<8x240xbf16>, vector<240x64xbf16>, vector<8x64xf32> -> vector<8x64xf32>
    %c0_15 = arith.constant 0 : index
    %c0_16 = arith.constant 0 : index
    %108 = vector.load %arg6[%c0_15, %c0_16] : memref<1x64xf32, #tpu.memory_space<vmem>>, vector<1x64xf32>
    %109 = vector.broadcast %108 : vector<1x64xf32> to vector<8x64xf32>
    %110 = arith.addf %107, %109 : vector<8x64xf32>
    %cst_17 = arith.constant 0.000000e+00 : f32
    %111 = vector.broadcast %cst_17 : f32 to vector<8x64xf32>
    %112 = arith.maximumf %110, %111 : vector<8x64xf32>
    %113 = arith.truncf %112 : vector<8x64xf32> to vector<8x64xbf16>
    %cst_18 = arith.constant 0.000000e+00 : bf16
    %114 = vector.broadcast %cst_18 : bf16 to vector<8x8xbf16>
    %115 = tpu.concatenate %114, %113, %114 in 1 : vector<8x8xbf16>, vector<8x64xbf16>, vector<8x8xbf16> -> vector<8x80xbf16>
    %cst_19 = arith.constant 0.000000e+00 : bf16
    %116 = vector.broadcast %cst_19 : bf16 to vector<1x80xbf16>
    %117 = tpu.concatenate %116, %115, %116 in 0 : vector<1x80xbf16>, vector<8x80xbf16>, vector<1x80xbf16> -> vector<10x80xbf16>
    %118 = vector.extract_strided_slice %117 {offsets = [0, 0], sizes = [8, 80], strides = [1, 1]} : vector<10x80xbf16> to vector<8x80xbf16>
    %119 = vector.extract_strided_slice %117 {offsets = [1, 0], sizes = [8, 80], strides = [1, 1]} : vector<10x80xbf16> to vector<8x80xbf16>
    %120 = vector.extract_strided_slice %117 {offsets = [2, 0], sizes = [8, 80], strides = [1, 1]} : vector<10x80xbf16> to vector<8x80xbf16>
    %121 = tpu.concatenate %118, %119, %120 in 1 : vector<8x80xbf16>, vector<8x80xbf16>, vector<8x80xbf16> -> vector<8x240xbf16>
    %c0_20 = arith.constant 0 : index
    %c0_21 = arith.constant 0 : index
    %122 = vector.load %arg7[%c0_20, %c0_21] : memref<240x64xbf16, #tpu.memory_space<vmem>>, vector<240x64xbf16>
    %cst_22 = arith.constant dense<0.000000e+00> : vector<8x64xf32>
    %123 = tpu.matmul %121, %122, %cst_22 {dimension_numbers = #tpu.dot_dimension_numbers<[1], [0], [0], [1], [0, 0, 1, 1], [], []>} : vector<8x240xbf16>, vector<240x64xbf16>, vector<8x64xf32> -> vector<8x64xf32>
    %c0_23 = arith.constant 0 : index
    %c0_24 = arith.constant 0 : index
    %124 = vector.load %arg8[%c0_23, %c0_24] : memref<1x64xf32, #tpu.memory_space<vmem>>, vector<1x64xf32>
    %125 = vector.broadcast %124 : vector<1x64xf32> to vector<8x64xf32>
    %126 = arith.addf %123, %125 : vector<8x64xf32>
    %127 = arith.addf %126, %96 : vector<8x64xf32>
    %cst_25 = arith.constant 0.000000e+00 : f32
    %128 = vector.broadcast %cst_25 : f32 to vector<8x64xf32>
    %129 = arith.maximumf %127, %128 : vector<8x64xf32>
    %130 = arith.truncf %129 : vector<8x64xf32> to vector<8x64xbf16>
    %cst_26 = arith.constant 0.000000e+00 : bf16
    %131 = vector.broadcast %cst_26 : bf16 to vector<8x8xbf16>
    %132 = tpu.concatenate %131, %130, %131 in 1 : vector<8x8xbf16>, vector<8x64xbf16>, vector<8x8xbf16> -> vector<8x80xbf16>
    %cst_27 = arith.constant 0.000000e+00 : bf16
    %133 = vector.broadcast %cst_27 : bf16 to vector<1x80xbf16>
    %134 = tpu.concatenate %133, %132, %133 in 0 : vector<1x80xbf16>, vector<8x80xbf16>, vector<1x80xbf16> -> vector<10x80xbf16>
    %135 = vector.extract_strided_slice %134 {offsets = [0, 0], sizes = [8, 80], strides = [1, 1]} : vector<10x80xbf16> to vector<8x80xbf16>
    %136 = vector.extract_strided_slice %134 {offsets = [1, 0], sizes = [8, 80], strides = [1, 1]} : vector<10x80xbf16> to vector<8x80xbf16>
    %137 = vector.extract_strided_slice %134 {offsets = [2, 0], sizes = [8, 80], strides = [1, 1]} : vector<10x80xbf16> to vector<8x80xbf16>
    %138 = tpu.concatenate %135, %136, %137 in 1 : vector<8x80xbf16>, vector<8x80xbf16>, vector<8x80xbf16> -> vector<8x240xbf16>
    %c0_28 = arith.constant 0 : index
    %c0_29 = arith.constant 0 : index
    %139 = vector.load %arg9[%c0_28, %c0_29] : memref<240x64xbf16, #tpu.memory_space<vmem>>, vector<240x64xbf16>
    %cst_30 = arith.constant dense<0.000000e+00> : vector<8x64xf32>
    %140 = tpu.matmul %138, %139, %cst_30 {dimension_numbers = #tpu.dot_dimension_numbers<[1], [0], [0], [1], [0, 0, 1, 1], [], []>} : vector<8x240xbf16>, vector<240x64xbf16>, vector<8x64xf32> -> vector<8x64xf32>
    %c0_31 = arith.constant 0 : index
    %c0_32 = arith.constant 0 : index
    %141 = vector.load %arg10[%c0_31, %c0_32] : memref<1x64xf32, #tpu.memory_space<vmem>>, vector<1x64xf32>
    %142 = vector.broadcast %141 : vector<1x64xf32> to vector<8x64xf32>
    %143 = arith.addf %140, %142 : vector<8x64xf32>
    %cst_33 = arith.constant 0.000000e+00 : f32
    %144 = vector.broadcast %cst_33 : f32 to vector<8x64xf32>
    %145 = arith.maximumf %143, %144 : vector<8x64xf32>
    %146 = arith.truncf %145 : vector<8x64xf32> to vector<8x64xbf16>
    %cst_34 = arith.constant 0.000000e+00 : bf16
    %147 = vector.broadcast %cst_34 : bf16 to vector<8x8xbf16>
    %148 = tpu.concatenate %147, %146, %147 in 1 : vector<8x8xbf16>, vector<8x64xbf16>, vector<8x8xbf16> -> vector<8x80xbf16>
    %cst_35 = arith.constant 0.000000e+00 : bf16
    %149 = vector.broadcast %cst_35 : bf16 to vector<1x80xbf16>
    %150 = tpu.concatenate %149, %148, %149 in 0 : vector<1x80xbf16>, vector<8x80xbf16>, vector<1x80xbf16> -> vector<10x80xbf16>
    %151 = vector.extract_strided_slice %150 {offsets = [0, 0], sizes = [8, 80], strides = [1, 1]} : vector<10x80xbf16> to vector<8x80xbf16>
    %152 = vector.extract_strided_slice %150 {offsets = [1, 0], sizes = [8, 80], strides = [1, 1]} : vector<10x80xbf16> to vector<8x80xbf16>
    %153 = vector.extract_strided_slice %150 {offsets = [2, 0], sizes = [8, 80], strides = [1, 1]} : vector<10x80xbf16> to vector<8x80xbf16>
    %154 = tpu.concatenate %151, %152, %153 in 1 : vector<8x80xbf16>, vector<8x80xbf16>, vector<8x80xbf16> -> vector<8x240xbf16>
    %c0_36 = arith.constant 0 : index
    %c0_37 = arith.constant 0 : index
    %155 = vector.load %arg11[%c0_36, %c0_37] : memref<240x64xbf16, #tpu.memory_space<vmem>>, vector<240x64xbf16>
    %cst_38 = arith.constant dense<0.000000e+00> : vector<8x64xf32>
    %156 = tpu.matmul %154, %155, %cst_38 {dimension_numbers = #tpu.dot_dimension_numbers<[1], [0], [0], [1], [0, 0, 1, 1], [], []>} : vector<8x240xbf16>, vector<240x64xbf16>, vector<8x64xf32> -> vector<8x64xf32>
    %c0_39 = arith.constant 0 : index
    %c0_40 = arith.constant 0 : index
    %157 = vector.load %arg12[%c0_39, %c0_40] : memref<1x64xf32, #tpu.memory_space<vmem>>, vector<1x64xf32>
    %158 = vector.broadcast %157 : vector<1x64xf32> to vector<8x64xf32>
    %159 = arith.addf %156, %158 : vector<8x64xf32>
    %160 = arith.addf %159, %129 : vector<8x64xf32>
    %cst_41 = arith.constant 0.000000e+00 : f32
    %161 = vector.broadcast %cst_41 : f32 to vector<8x64xf32>
    %162 = arith.maximumf %160, %161 : vector<8x64xf32>
    %163 = arith.truncf %162 : vector<8x64xf32> to vector<8x64xbf16>
    %cst_42 = arith.constant 0.000000e+00 : bf16
    %164 = vector.broadcast %cst_42 : bf16 to vector<8x8xbf16>
    %165 = tpu.concatenate %164, %163, %164 in 1 : vector<8x8xbf16>, vector<8x64xbf16>, vector<8x8xbf16> -> vector<8x80xbf16>
    %cst_43 = arith.constant 0.000000e+00 : bf16
    %166 = vector.broadcast %cst_43 : bf16 to vector<1x80xbf16>
    %167 = tpu.concatenate %166, %165, %166 in 0 : vector<1x80xbf16>, vector<8x80xbf16>, vector<1x80xbf16> -> vector<10x80xbf16>
    %168 = vector.extract_strided_slice %167 {offsets = [0, 0], sizes = [1, 80], strides = [1, 1]} : vector<10x80xbf16> to vector<1x80xbf16>
    %169 = vector.extract_strided_slice %167 {offsets = [1, 0], sizes = [1, 80], strides = [1, 1]} : vector<10x80xbf16> to vector<1x80xbf16>
    %170 = vector.extract_strided_slice %167 {offsets = [2, 0], sizes = [1, 80], strides = [1, 1]} : vector<10x80xbf16> to vector<1x80xbf16>
    %171 = tpu.concatenate %168, %169, %170 in 1 : vector<1x80xbf16>, vector<1x80xbf16>, vector<1x80xbf16> -> vector<1x240xbf16>
    %172 = vector.extract_strided_slice %167 {offsets = [2, 0], sizes = [1, 80], strides = [1, 1]} : vector<10x80xbf16> to vector<1x80xbf16>
    %173 = vector.extract_strided_slice %167 {offsets = [3, 0], sizes = [1, 80], strides = [1, 1]} : vector<10x80xbf16> to vector<1x80xbf16>
    %174 = vector.extract_strided_slice %167 {offsets = [4, 0], sizes = [1, 80], strides = [1, 1]} : vector<10x80xbf16> to vector<1x80xbf16>
    %175 = tpu.concatenate %172, %173, %174 in 1 : vector<1x80xbf16>, vector<1x80xbf16>, vector<1x80xbf16> -> vector<1x240xbf16>
    %176 = vector.extract_strided_slice %167 {offsets = [4, 0], sizes = [1, 80], strides = [1, 1]} : vector<10x80xbf16> to vector<1x80xbf16>
    %177 = vector.extract_strided_slice %167 {offsets = [5, 0], sizes = [1, 80], strides = [1, 1]} : vector<10x80xbf16> to vector<1x80xbf16>
    %178 = vector.extract_strided_slice %167 {offsets = [6, 0], sizes = [1, 80], strides = [1, 1]} : vector<10x80xbf16> to vector<1x80xbf16>
    %179 = tpu.concatenate %176, %177, %178 in 1 : vector<1x80xbf16>, vector<1x80xbf16>, vector<1x80xbf16> -> vector<1x240xbf16>
    %180 = vector.extract_strided_slice %167 {offsets = [6, 0], sizes = [1, 80], strides = [1, 1]} : vector<10x80xbf16> to vector<1x80xbf16>
    %181 = vector.extract_strided_slice %167 {offsets = [7, 0], sizes = [1, 80], strides = [1, 1]} : vector<10x80xbf16> to vector<1x80xbf16>
    %182 = vector.extract_strided_slice %167 {offsets = [8, 0], sizes = [1, 80], strides = [1, 1]} : vector<10x80xbf16> to vector<1x80xbf16>
    %183 = tpu.concatenate %180, %181, %182 in 1 : vector<1x80xbf16>, vector<1x80xbf16>, vector<1x80xbf16> -> vector<1x240xbf16>
    %184 = tpu.concatenate %171, %175, %179, %183 in 0 : vector<1x240xbf16>, vector<1x240xbf16>, vector<1x240xbf16>, vector<1x240xbf16> -> vector<4x240xbf16>
    %c0_44 = arith.constant 0 : index
    %c0_45 = arith.constant 0 : index
    %185 = vector.load %arg13[%c0_44, %c0_45] : memref<240x64xbf16, #tpu.memory_space<vmem>>, vector<240x64xbf16>
    %cst_46 = arith.constant dense<0.000000e+00> : vector<4x64xf32>
    %186 = tpu.matmul %184, %185, %cst_46 {dimension_numbers = #tpu.dot_dimension_numbers<[1], [0], [0], [1], [0, 0, 1, 1], [], []>} : vector<4x240xbf16>, vector<240x64xbf16>, vector<4x64xf32> -> vector<4x64xf32>
    %c0_47 = arith.constant 0 : index
    %c0_48 = arith.constant 0 : index
    %187 = vector.load %arg14[%c0_47, %c0_48] : memref<1x64xf32, #tpu.memory_space<vmem>>, vector<1x64xf32>
    %188 = vector.broadcast %187 : vector<1x64xf32> to vector<4x64xf32>
    %189 = arith.addf %186, %188 : vector<4x64xf32>
    %cst_49 = arith.constant 0.000000e+00 : f32
    %190 = vector.broadcast %cst_49 : f32 to vector<4x64xf32>
    %191 = arith.maximumf %189, %190 : vector<4x64xf32>
    %192 = arith.truncf %191 : vector<4x64xf32> to vector<4x64xbf16>
    %cst_50 = arith.constant 0.000000e+00 : bf16
    %193 = vector.broadcast %cst_50 : bf16 to vector<4x16xbf16>
    %194 = tpu.concatenate %193, %192, %193 in 1 : vector<4x16xbf16>, vector<4x64xbf16>, vector<4x16xbf16> -> vector<4x96xbf16>
    %cst_51 = arith.constant 0.000000e+00 : bf16
    %195 = vector.broadcast %cst_51 : bf16 to vector<1x96xbf16>
    %196 = tpu.concatenate %195, %194, %195 in 0 : vector<1x96xbf16>, vector<4x96xbf16>, vector<1x96xbf16> -> vector<6x96xbf16>
    %197 = vector.extract_strided_slice %196 {offsets = [0, 0], sizes = [4, 96], strides = [1, 1]} : vector<6x96xbf16> to vector<4x96xbf16>
    %198 = vector.extract_strided_slice %196 {offsets = [1, 0], sizes = [4, 96], strides = [1, 1]} : vector<6x96xbf16> to vector<4x96xbf16>
    %199 = vector.extract_strided_slice %196 {offsets = [2, 0], sizes = [4, 96], strides = [1, 1]} : vector<6x96xbf16> to vector<4x96xbf16>
    %200 = tpu.concatenate %197, %198, %199 in 1 : vector<4x96xbf16>, vector<4x96xbf16>, vector<4x96xbf16> -> vector<4x288xbf16>
    %c0_52 = arith.constant 0 : index
    %c0_53 = arith.constant 0 : index
    %201 = vector.load %arg15[%c0_52, %c0_53] : memref<288x64xbf16, #tpu.memory_space<vmem>>, vector<288x64xbf16>
    %cst_54 = arith.constant dense<0.000000e+00> : vector<4x64xf32>
    %202 = tpu.matmul %200, %201, %cst_54 {dimension_numbers = #tpu.dot_dimension_numbers<[1], [0], [0], [1], [0, 0, 1, 1], [], []>} : vector<4x288xbf16>, vector<288x64xbf16>, vector<4x64xf32> -> vector<4x64xf32>
    %c0_55 = arith.constant 0 : index
    %c0_56 = arith.constant 0 : index
    %203 = vector.load %arg16[%c0_55, %c0_56] : memref<1x64xf32, #tpu.memory_space<vmem>>, vector<1x64xf32>
    %204 = vector.broadcast %203 : vector<1x64xf32> to vector<4x64xf32>
    %205 = arith.addf %202, %204 : vector<4x64xf32>
    %206 = vector.extract_strided_slice %163 {offsets = [0, 0], sizes = [1, 64], strides = [1, 1]} : vector<8x64xbf16> to vector<1x64xbf16>
    %207 = vector.extract_strided_slice %163 {offsets = [2, 0], sizes = [1, 64], strides = [1, 1]} : vector<8x64xbf16> to vector<1x64xbf16>
    %208 = vector.extract_strided_slice %163 {offsets = [4, 0], sizes = [1, 64], strides = [1, 1]} : vector<8x64xbf16> to vector<1x64xbf16>
    %209 = vector.extract_strided_slice %163 {offsets = [6, 0], sizes = [1, 64], strides = [1, 1]} : vector<8x64xbf16> to vector<1x64xbf16>
    %210 = tpu.concatenate %206, %207, %208, %209 in 0 : vector<1x64xbf16>, vector<1x64xbf16>, vector<1x64xbf16>, vector<1x64xbf16> -> vector<4x64xbf16>
    %c0_57 = arith.constant 0 : index
    %c0_58 = arith.constant 0 : index
    %211 = vector.load %arg17[%c0_57, %c0_58] : memref<64x64xbf16, #tpu.memory_space<vmem>>, vector<64x64xbf16>
    %cst_59 = arith.constant dense<0.000000e+00> : vector<4x64xf32>
    %212 = tpu.matmul %210, %211, %cst_59 {dimension_numbers = #tpu.dot_dimension_numbers<[1], [0], [0], [1], [0, 0, 1, 1], [], []>} : vector<4x64xbf16>, vector<64x64xbf16>, vector<4x64xf32> -> vector<4x64xf32>
    %c0_60 = arith.constant 0 : index
    %c0_61 = arith.constant 0 : index
    %213 = vector.load %arg18[%c0_60, %c0_61] : memref<1x64xf32, #tpu.memory_space<vmem>>, vector<1x64xf32>
    %214 = vector.broadcast %213 : vector<1x64xf32> to vector<4x64xf32>
    %215 = arith.addf %212, %214 : vector<4x64xf32>
    %216 = arith.addf %205, %215 : vector<4x64xf32>
    %cst_62 = arith.constant 0.000000e+00 : f32
    %217 = vector.broadcast %cst_62 : f32 to vector<4x64xf32>
    %218 = arith.maximumf %216, %217 : vector<4x64xf32>
    %219 = arith.truncf %218 : vector<4x64xf32> to vector<4x64xbf16>
    %cst_63 = arith.constant 0.000000e+00 : bf16
    %220 = vector.broadcast %cst_63 : bf16 to vector<4x16xbf16>
    %221 = tpu.concatenate %220, %219, %220 in 1 : vector<4x16xbf16>, vector<4x64xbf16>, vector<4x16xbf16> -> vector<4x96xbf16>
    %cst_64 = arith.constant 0.000000e+00 : bf16
    %222 = vector.broadcast %cst_64 : bf16 to vector<1x96xbf16>
    %223 = tpu.concatenate %222, %221, %222 in 0 : vector<1x96xbf16>, vector<4x96xbf16>, vector<1x96xbf16> -> vector<6x96xbf16>
    %224 = vector.extract_strided_slice %223 {offsets = [0, 0], sizes = [4, 96], strides = [1, 1]} : vector<6x96xbf16> to vector<4x96xbf16>
    %225 = vector.extract_strided_slice %223 {offsets = [1, 0], sizes = [4, 96], strides = [1, 1]} : vector<6x96xbf16> to vector<4x96xbf16>
    %226 = vector.extract_strided_slice %223 {offsets = [2, 0], sizes = [4, 96], strides = [1, 1]} : vector<6x96xbf16> to vector<4x96xbf16>
    %227 = tpu.concatenate %224, %225, %226 in 1 : vector<4x96xbf16>, vector<4x96xbf16>, vector<4x96xbf16> -> vector<4x288xbf16>
    %c0_65 = arith.constant 0 : index
    %c0_66 = arith.constant 0 : index
    %228 = vector.load %arg19[%c0_65, %c0_66] : memref<288x64xbf16, #tpu.memory_space<vmem>>, vector<288x64xbf16>
    %cst_67 = arith.constant dense<0.000000e+00> : vector<4x64xf32>
    %229 = tpu.matmul %227, %228, %cst_67 {dimension_numbers = #tpu.dot_dimension_numbers<[1], [0], [0], [1], [0, 0, 1, 1], [], []>} : vector<4x288xbf16>, vector<288x64xbf16>, vector<4x64xf32> -> vector<4x64xf32>
    %c0_68 = arith.constant 0 : index
    %c0_69 = arith.constant 0 : index
    %230 = vector.load %arg20[%c0_68, %c0_69] : memref<1x64xf32, #tpu.memory_space<vmem>>, vector<1x64xf32>
    %231 = vector.broadcast %230 : vector<1x64xf32> to vector<4x64xf32>
    %232 = arith.addf %229, %231 : vector<4x64xf32>
    %cst_70 = arith.constant 0.000000e+00 : f32
    %233 = vector.broadcast %cst_70 : f32 to vector<4x64xf32>
    %234 = arith.maximumf %232, %233 : vector<4x64xf32>
    %235 = arith.truncf %234 : vector<4x64xf32> to vector<4x64xbf16>
    %cst_71 = arith.constant 0.000000e+00 : bf16
    %236 = vector.broadcast %cst_71 : bf16 to vector<4x16xbf16>
    %237 = tpu.concatenate %236, %235, %236 in 1 : vector<4x16xbf16>, vector<4x64xbf16>, vector<4x16xbf16> -> vector<4x96xbf16>
    %cst_72 = arith.constant 0.000000e+00 : bf16
    %238 = vector.broadcast %cst_72 : bf16 to vector<1x96xbf16>
    %239 = tpu.concatenate %238, %237, %238 in 0 : vector<1x96xbf16>, vector<4x96xbf16>, vector<1x96xbf16> -> vector<6x96xbf16>
    %240 = vector.extract_strided_slice %239 {offsets = [0, 0], sizes = [4, 96], strides = [1, 1]} : vector<6x96xbf16> to vector<4x96xbf16>
    %241 = vector.extract_strided_slice %239 {offsets = [1, 0], sizes = [4, 96], strides = [1, 1]} : vector<6x96xbf16> to vector<4x96xbf16>
    %242 = vector.extract_strided_slice %239 {offsets = [2, 0], sizes = [4, 96], strides = [1, 1]} : vector<6x96xbf16> to vector<4x96xbf16>
    %243 = tpu.concatenate %240, %241, %242 in 1 : vector<4x96xbf16>, vector<4x96xbf16>, vector<4x96xbf16> -> vector<4x288xbf16>
    %c0_73 = arith.constant 0 : index
    %c0_74 = arith.constant 0 : index
    %244 = vector.load %arg21[%c0_73, %c0_74] : memref<288x64xbf16, #tpu.memory_space<vmem>>, vector<288x64xbf16>
    %cst_75 = arith.constant dense<0.000000e+00> : vector<4x64xf32>
    %245 = tpu.matmul %243, %244, %cst_75 {dimension_numbers = #tpu.dot_dimension_numbers<[1], [0], [0], [1], [0, 0, 1, 1], [], []>} : vector<4x288xbf16>, vector<288x64xbf16>, vector<4x64xf32> -> vector<4x64xf32>
    %c0_76 = arith.constant 0 : index
    %c0_77 = arith.constant 0 : index
    %246 = vector.load %arg22[%c0_76, %c0_77] : memref<1x64xf32, #tpu.memory_space<vmem>>, vector<1x64xf32>
    %247 = vector.broadcast %246 : vector<1x64xf32> to vector<4x64xf32>
    %248 = arith.addf %245, %247 : vector<4x64xf32>
    %249 = arith.addf %248, %218 : vector<4x64xf32>
    %cst_78 = arith.constant 0.000000e+00 : f32
    %250 = vector.broadcast %cst_78 : f32 to vector<4x64xf32>
    %251 = arith.maximumf %249, %250 : vector<4x64xf32>
    %252 = arith.truncf %251 : vector<4x64xf32> to vector<4x64xbf16>
    %cst_79 = arith.constant 0.000000e+00 : bf16
    %253 = vector.broadcast %cst_79 : bf16 to vector<4x16xbf16>
    %254 = tpu.concatenate %253, %252, %253 in 1 : vector<4x16xbf16>, vector<4x64xbf16>, vector<4x16xbf16> -> vector<4x96xbf16>
    %cst_80 = arith.constant 0.000000e+00 : bf16
    %255 = vector.broadcast %cst_80 : bf16 to vector<1x96xbf16>
    %256 = tpu.concatenate %255, %254, %255 in 0 : vector<1x96xbf16>, vector<4x96xbf16>, vector<1x96xbf16> -> vector<6x96xbf16>
    %257 = vector.extract_strided_slice %256 {offsets = [0, 0], sizes = [1, 96], strides = [1, 1]} : vector<6x96xbf16> to vector<1x96xbf16>
    %258 = vector.extract_strided_slice %256 {offsets = [1, 0], sizes = [1, 96], strides = [1, 1]} : vector<6x96xbf16> to vector<1x96xbf16>
    %259 = vector.extract_strided_slice %256 {offsets = [2, 0], sizes = [1, 96], strides = [1, 1]} : vector<6x96xbf16> to vector<1x96xbf16>
    %260 = tpu.concatenate %257, %258, %259 in 1 : vector<1x96xbf16>, vector<1x96xbf16>, vector<1x96xbf16> -> vector<1x288xbf16>
    %261 = vector.extract_strided_slice %256 {offsets = [2, 0], sizes = [1, 96], strides = [1, 1]} : vector<6x96xbf16> to vector<1x96xbf16>
    %262 = vector.extract_strided_slice %256 {offsets = [3, 0], sizes = [1, 96], strides = [1, 1]} : vector<6x96xbf16> to vector<1x96xbf16>
    %263 = vector.extract_strided_slice %256 {offsets = [4, 0], sizes = [1, 96], strides = [1, 1]} : vector<6x96xbf16> to vector<1x96xbf16>
    %264 = tpu.concatenate %261, %262, %263 in 1 : vector<1x96xbf16>, vector<1x96xbf16>, vector<1x96xbf16> -> vector<1x288xbf16>
    %265 = tpu.concatenate %260, %264 in 0 : vector<1x288xbf16>, vector<1x288xbf16> -> vector<2x288xbf16>
    %c0_81 = arith.constant 0 : index
    %c0_82 = arith.constant 0 : index
    %266 = vector.load %arg23[%c0_81, %c0_82] : memref<288x64xbf16, #tpu.memory_space<vmem>>, vector<288x64xbf16>
    %cst_83 = arith.constant dense<0.000000e+00> : vector<2x64xf32>
    %267 = tpu.matmul %265, %266, %cst_83 {dimension_numbers = #tpu.dot_dimension_numbers<[1], [0], [0], [1], [0, 0, 1, 1], [], []>} : vector<2x288xbf16>, vector<288x64xbf16>, vector<2x64xf32> -> vector<2x64xf32>
    %c0_84 = arith.constant 0 : index
    %c0_85 = arith.constant 0 : index
    %268 = vector.load %arg24[%c0_84, %c0_85] : memref<1x64xf32, #tpu.memory_space<vmem>>, vector<1x64xf32>
    %269 = vector.broadcast %268 : vector<1x64xf32> to vector<2x64xf32>
    %270 = arith.addf %267, %269 : vector<2x64xf32>
    %cst_86 = arith.constant 0.000000e+00 : f32
    %271 = vector.broadcast %cst_86 : f32 to vector<2x64xf32>
    %272 = arith.maximumf %270, %271 : vector<2x64xf32>
    %273 = arith.truncf %272 : vector<2x64xf32> to vector<2x64xbf16>
    %cst_87 = arith.constant 0.000000e+00 : bf16
    %274 = vector.broadcast %cst_87 : bf16 to vector<2x32xbf16>
    %275 = tpu.concatenate %274, %273, %274 in 1 : vector<2x32xbf16>, vector<2x64xbf16>, vector<2x32xbf16> -> vector<2x128xbf16>
    %cst_88 = arith.constant 0.000000e+00 : bf16
    %276 = vector.broadcast %cst_88 : bf16 to vector<1x128xbf16>
    %277 = tpu.concatenate %276, %275, %276 in 0 : vector<1x128xbf16>, vector<2x128xbf16>, vector<1x128xbf16> -> vector<4x128xbf16>
    %278 = vector.extract_strided_slice %277 {offsets = [0, 0], sizes = [2, 128], strides = [1, 1]} : vector<4x128xbf16> to vector<2x128xbf16>
    %279 = vector.extract_strided_slice %277 {offsets = [1, 0], sizes = [2, 128], strides = [1, 1]} : vector<4x128xbf16> to vector<2x128xbf16>
    %280 = vector.extract_strided_slice %277 {offsets = [2, 0], sizes = [2, 128], strides = [1, 1]} : vector<4x128xbf16> to vector<2x128xbf16>
    %281 = tpu.concatenate %278, %279, %280 in 1 : vector<2x128xbf16>, vector<2x128xbf16>, vector<2x128xbf16> -> vector<2x384xbf16>
    %c0_89 = arith.constant 0 : index
    %c0_90 = arith.constant 0 : index
    %282 = vector.load %arg25[%c0_89, %c0_90] : memref<384x64xbf16, #tpu.memory_space<vmem>>, vector<384x64xbf16>
    %cst_91 = arith.constant dense<0.000000e+00> : vector<2x64xf32>
    %283 = tpu.matmul %281, %282, %cst_91 {dimension_numbers = #tpu.dot_dimension_numbers<[1], [0], [0], [1], [0, 0, 1, 1], [], []>} : vector<2x384xbf16>, vector<384x64xbf16>, vector<2x64xf32> -> vector<2x64xf32>
    %c0_92 = arith.constant 0 : index
    %c0_93 = arith.constant 0 : index
    %284 = vector.load %arg26[%c0_92, %c0_93] : memref<1x64xf32, #tpu.memory_space<vmem>>, vector<1x64xf32>
    %285 = vector.broadcast %284 : vector<1x64xf32> to vector<2x64xf32>
    %286 = arith.addf %283, %285 : vector<2x64xf32>
    %287 = vector.extract_strided_slice %252 {offsets = [0, 0], sizes = [1, 64], strides = [1, 1]} : vector<4x64xbf16> to vector<1x64xbf16>
    %288 = vector.extract_strided_slice %252 {offsets = [2, 0], sizes = [1, 64], strides = [1, 1]} : vector<4x64xbf16> to vector<1x64xbf16>
    %289 = tpu.concatenate %287, %288 in 0 : vector<1x64xbf16>, vector<1x64xbf16> -> vector<2x64xbf16>
    %c0_94 = arith.constant 0 : index
    %c0_95 = arith.constant 0 : index
    %290 = vector.load %arg27[%c0_94, %c0_95] : memref<64x64xbf16, #tpu.memory_space<vmem>>, vector<64x64xbf16>
    %cst_96 = arith.constant dense<0.000000e+00> : vector<2x64xf32>
    %291 = tpu.matmul %289, %290, %cst_96 {dimension_numbers = #tpu.dot_dimension_numbers<[1], [0], [0], [1], [0, 0, 1, 1], [], []>} : vector<2x64xbf16>, vector<64x64xbf16>, vector<2x64xf32> -> vector<2x64xf32>
    %c0_97 = arith.constant 0 : index
    %c0_98 = arith.constant 0 : index
    %292 = vector.load %arg28[%c0_97, %c0_98] : memref<1x64xf32, #tpu.memory_space<vmem>>, vector<1x64xf32>
    %293 = vector.broadcast %292 : vector<1x64xf32> to vector<2x64xf32>
    %294 = arith.addf %291, %293 : vector<2x64xf32>
    %295 = arith.addf %286, %294 : vector<2x64xf32>
    %cst_99 = arith.constant 0.000000e+00 : f32
    %296 = vector.broadcast %cst_99 : f32 to vector<2x64xf32>
    %297 = arith.maximumf %295, %296 : vector<2x64xf32>
    %298 = arith.truncf %297 : vector<2x64xf32> to vector<2x64xbf16>
    %cst_100 = arith.constant 0.000000e+00 : bf16
    %299 = vector.broadcast %cst_100 : bf16 to vector<2x32xbf16>
    %300 = tpu.concatenate %299, %298, %299 in 1 : vector<2x32xbf16>, vector<2x64xbf16>, vector<2x32xbf16> -> vector<2x128xbf16>
    %cst_101 = arith.constant 0.000000e+00 : bf16
    %301 = vector.broadcast %cst_101 : bf16 to vector<1x128xbf16>
    %302 = tpu.concatenate %301, %300, %301 in 0 : vector<1x128xbf16>, vector<2x128xbf16>, vector<1x128xbf16> -> vector<4x128xbf16>
    %303 = vector.extract_strided_slice %302 {offsets = [0, 0], sizes = [2, 128], strides = [1, 1]} : vector<4x128xbf16> to vector<2x128xbf16>
    %304 = vector.extract_strided_slice %302 {offsets = [1, 0], sizes = [2, 128], strides = [1, 1]} : vector<4x128xbf16> to vector<2x128xbf16>
    %305 = vector.extract_strided_slice %302 {offsets = [2, 0], sizes = [2, 128], strides = [1, 1]} : vector<4x128xbf16> to vector<2x128xbf16>
    %306 = tpu.concatenate %303, %304, %305 in 1 : vector<2x128xbf16>, vector<2x128xbf16>, vector<2x128xbf16> -> vector<2x384xbf16>
    %c0_102 = arith.constant 0 : index
    %c0_103 = arith.constant 0 : index
    %307 = vector.load %arg29[%c0_102, %c0_103] : memref<384x64xbf16, #tpu.memory_space<vmem>>, vector<384x64xbf16>
    %cst_104 = arith.constant dense<0.000000e+00> : vector<2x64xf32>
    %308 = tpu.matmul %306, %307, %cst_104 {dimension_numbers = #tpu.dot_dimension_numbers<[1], [0], [0], [1], [0, 0, 1, 1], [], []>} : vector<2x384xbf16>, vector<384x64xbf16>, vector<2x64xf32> -> vector<2x64xf32>
    %c0_105 = arith.constant 0 : index
    %c0_106 = arith.constant 0 : index
    %309 = vector.load %arg30[%c0_105, %c0_106] : memref<1x64xf32, #tpu.memory_space<vmem>>, vector<1x64xf32>
    %310 = vector.broadcast %309 : vector<1x64xf32> to vector<2x64xf32>
    %311 = arith.addf %308, %310 : vector<2x64xf32>
    %cst_107 = arith.constant 0.000000e+00 : f32
    %312 = vector.broadcast %cst_107 : f32 to vector<2x64xf32>
    %313 = arith.maximumf %311, %312 : vector<2x64xf32>
    %314 = arith.truncf %313 : vector<2x64xf32> to vector<2x64xbf16>
    %cst_108 = arith.constant 0.000000e+00 : bf16
    %315 = vector.broadcast %cst_108 : bf16 to vector<2x32xbf16>
    %316 = tpu.concatenate %315, %314, %315 in 1 : vector<2x32xbf16>, vector<2x64xbf16>, vector<2x32xbf16> -> vector<2x128xbf16>
    %cst_109 = arith.constant 0.000000e+00 : bf16
    %317 = vector.broadcast %cst_109 : bf16 to vector<1x128xbf16>
    %318 = tpu.concatenate %317, %316, %317 in 0 : vector<1x128xbf16>, vector<2x128xbf16>, vector<1x128xbf16> -> vector<4x128xbf16>
    %319 = vector.extract_strided_slice %318 {offsets = [0, 0], sizes = [2, 128], strides = [1, 1]} : vector<4x128xbf16> to vector<2x128xbf16>
    %320 = vector.extract_strided_slice %318 {offsets = [1, 0], sizes = [2, 128], strides = [1, 1]} : vector<4x128xbf16> to vector<2x128xbf16>
    %321 = vector.extract_strided_slice %318 {offsets = [2, 0], sizes = [2, 128], strides = [1, 1]} : vector<4x128xbf16> to vector<2x128xbf16>
    %322 = tpu.concatenate %319, %320, %321 in 1 : vector<2x128xbf16>, vector<2x128xbf16>, vector<2x128xbf16> -> vector<2x384xbf16>
    %c0_110 = arith.constant 0 : index
    %c0_111 = arith.constant 0 : index
    %323 = vector.load %arg31[%c0_110, %c0_111] : memref<384x64xbf16, #tpu.memory_space<vmem>>, vector<384x64xbf16>
    %cst_112 = arith.constant dense<0.000000e+00> : vector<2x64xf32>
    %324 = tpu.matmul %322, %323, %cst_112 {dimension_numbers = #tpu.dot_dimension_numbers<[1], [0], [0], [1], [0, 0, 1, 1], [], []>} : vector<2x384xbf16>, vector<384x64xbf16>, vector<2x64xf32> -> vector<2x64xf32>
    %c0_113 = arith.constant 0 : index
    %c0_114 = arith.constant 0 : index
    %325 = vector.load %arg32[%c0_113, %c0_114] : memref<1x64xf32, #tpu.memory_space<vmem>>, vector<1x64xf32>
    %326 = vector.broadcast %325 : vector<1x64xf32> to vector<2x64xf32>
    %327 = arith.addf %324, %326 : vector<2x64xf32>
    %328 = arith.addf %327, %297 : vector<2x64xf32>
    %cst_115 = arith.constant 0.000000e+00 : f32
    %329 = vector.broadcast %cst_115 : f32 to vector<2x64xf32>
    %330 = arith.maximumf %328, %329 : vector<2x64xf32>
    %331 = arith.truncf %330 : vector<2x64xf32> to vector<2x64xbf16>
    %cst_116 = arith.constant 0.000000e+00 : bf16
    %332 = vector.broadcast %cst_116 : bf16 to vector<2x32xbf16>
    %333 = tpu.concatenate %332, %331, %332 in 1 : vector<2x32xbf16>, vector<2x64xbf16>, vector<2x32xbf16> -> vector<2x128xbf16>
    %cst_117 = arith.constant 0.000000e+00 : bf16
    %334 = vector.broadcast %cst_117 : bf16 to vector<1x128xbf16>
    %335 = tpu.concatenate %334, %333, %334 in 0 : vector<1x128xbf16>, vector<2x128xbf16>, vector<1x128xbf16> -> vector<4x128xbf16>
    %336 = vector.extract_strided_slice %335 {offsets = [0, 0], sizes = [1, 128], strides = [1, 1]} : vector<4x128xbf16> to vector<1x128xbf16>
    %337 = vector.extract_strided_slice %335 {offsets = [1, 0], sizes = [1, 128], strides = [1, 1]} : vector<4x128xbf16> to vector<1x128xbf16>
    %338 = vector.extract_strided_slice %335 {offsets = [2, 0], sizes = [1, 128], strides = [1, 1]} : vector<4x128xbf16> to vector<1x128xbf16>
    %339 = tpu.concatenate %336, %337, %338 in 1 : vector<1x128xbf16>, vector<1x128xbf16>, vector<1x128xbf16> -> vector<1x384xbf16>
    %c0_118 = arith.constant 0 : index
    %c0_119 = arith.constant 0 : index
    %340 = vector.load %arg33[%c0_118, %c0_119] : memref<384x64xbf16, #tpu.memory_space<vmem>>, vector<384x64xbf16>
    %cst_120 = arith.constant dense<0.000000e+00> : vector<1x64xf32>
    %341 = tpu.matmul %339, %340, %cst_120 {dimension_numbers = #tpu.dot_dimension_numbers<[1], [0], [0], [1], [0, 0, 1, 1], [], []>} : vector<1x384xbf16>, vector<384x64xbf16>, vector<1x64xf32> -> vector<1x64xf32>
    %c0_121 = arith.constant 0 : index
    %c0_122 = arith.constant 0 : index
    %342 = vector.load %arg34[%c0_121, %c0_122] : memref<1x64xf32, #tpu.memory_space<vmem>>, vector<1x64xf32>
    %343 = arith.addf %341, %342 : vector<1x64xf32>
    %cst_123 = arith.constant 0.000000e+00 : f32
    %344 = vector.broadcast %cst_123 : f32 to vector<1x64xf32>
    %345 = arith.maximumf %343, %344 : vector<1x64xf32>
    %346 = arith.truncf %345 : vector<1x64xf32> to vector<1x64xbf16>
    %cst_124 = arith.constant 0.000000e+00 : bf16
    %347 = vector.broadcast %cst_124 : bf16 to vector<1x64xbf16>
    %348 = tpu.concatenate %347, %346, %347 in 1 : vector<1x64xbf16>, vector<1x64xbf16>, vector<1x64xbf16> -> vector<1x192xbf16>
    %cst_125 = arith.constant 0.000000e+00 : bf16
    %349 = vector.broadcast %cst_125 : bf16 to vector<1x192xbf16>
    %350 = tpu.concatenate %349, %348, %349 in 0 : vector<1x192xbf16>, vector<1x192xbf16>, vector<1x192xbf16> -> vector<3x192xbf16>
    %351 = vector.extract_strided_slice %350 {offsets = [0, 0], sizes = [1, 192], strides = [1, 1]} : vector<3x192xbf16> to vector<1x192xbf16>
    %352 = vector.extract_strided_slice %350 {offsets = [1, 0], sizes = [1, 192], strides = [1, 1]} : vector<3x192xbf16> to vector<1x192xbf16>
    %353 = vector.extract_strided_slice %350 {offsets = [2, 0], sizes = [1, 192], strides = [1, 1]} : vector<3x192xbf16> to vector<1x192xbf16>
    %354 = tpu.concatenate %351, %352, %353 in 1 : vector<1x192xbf16>, vector<1x192xbf16>, vector<1x192xbf16> -> vector<1x576xbf16>
    %c0_126 = arith.constant 0 : index
    %c0_127 = arith.constant 0 : index
    %355 = vector.load %arg35[%c0_126, %c0_127] : memref<576x64xbf16, #tpu.memory_space<vmem>>, vector<576x64xbf16>
    %cst_128 = arith.constant dense<0.000000e+00> : vector<1x64xf32>
    %356 = tpu.matmul %354, %355, %cst_128 {dimension_numbers = #tpu.dot_dimension_numbers<[1], [0], [0], [1], [0, 0, 1, 1], [], []>} : vector<1x576xbf16>, vector<576x64xbf16>, vector<1x64xf32> -> vector<1x64xf32>
    %c0_129 = arith.constant 0 : index
    %c0_130 = arith.constant 0 : index
    %357 = vector.load %arg36[%c0_129, %c0_130] : memref<1x64xf32, #tpu.memory_space<vmem>>, vector<1x64xf32>
    %358 = arith.addf %356, %357 : vector<1x64xf32>
    %359 = vector.extract_strided_slice %331 {offsets = [0, 0], sizes = [1, 64], strides = [1, 1]} : vector<2x64xbf16> to vector<1x64xbf16>
    %c0_131 = arith.constant 0 : index
    %c0_132 = arith.constant 0 : index
    %360 = vector.load %arg37[%c0_131, %c0_132] : memref<64x64xbf16, #tpu.memory_space<vmem>>, vector<64x64xbf16>
    %cst_133 = arith.constant dense<0.000000e+00> : vector<1x64xf32>
    %361 = tpu.matmul %359, %360, %cst_133 {dimension_numbers = #tpu.dot_dimension_numbers<[1], [0], [0], [1], [0, 0, 1, 1], [], []>} : vector<1x64xbf16>, vector<64x64xbf16>, vector<1x64xf32> -> vector<1x64xf32>
    %c0_134 = arith.constant 0 : index
    %c0_135 = arith.constant 0 : index
    %362 = vector.load %arg38[%c0_134, %c0_135] : memref<1x64xf32, #tpu.memory_space<vmem>>, vector<1x64xf32>
    %363 = arith.addf %361, %362 : vector<1x64xf32>
    %364 = arith.addf %358, %363 : vector<1x64xf32>
    %cst_136 = arith.constant 0.000000e+00 : f32
    %365 = vector.broadcast %cst_136 : f32 to vector<1x64xf32>
    %366 = arith.maximumf %364, %365 : vector<1x64xf32>
    %367 = arith.truncf %366 : vector<1x64xf32> to vector<1x64xbf16>
    %cst_137 = arith.constant 0.000000e+00 : bf16
    %368 = vector.broadcast %cst_137 : bf16 to vector<1x64xbf16>
    %369 = tpu.concatenate %368, %367, %368 in 1 : vector<1x64xbf16>, vector<1x64xbf16>, vector<1x64xbf16> -> vector<1x192xbf16>
    %cst_138 = arith.constant 0.000000e+00 : bf16
    %370 = vector.broadcast %cst_138 : bf16 to vector<1x192xbf16>
    %371 = tpu.concatenate %370, %369, %370 in 0 : vector<1x192xbf16>, vector<1x192xbf16>, vector<1x192xbf16> -> vector<3x192xbf16>
    %372 = vector.extract_strided_slice %371 {offsets = [0, 0], sizes = [1, 192], strides = [1, 1]} : vector<3x192xbf16> to vector<1x192xbf16>
    %373 = vector.extract_strided_slice %371 {offsets = [1, 0], sizes = [1, 192], strides = [1, 1]} : vector<3x192xbf16> to vector<1x192xbf16>
    %374 = vector.extract_strided_slice %371 {offsets = [2, 0], sizes = [1, 192], strides = [1, 1]} : vector<3x192xbf16> to vector<1x192xbf16>
    %375 = tpu.concatenate %372, %373, %374 in 1 : vector<1x192xbf16>, vector<1x192xbf16>, vector<1x192xbf16> -> vector<1x576xbf16>
    %c0_139 = arith.constant 0 : index
    %c0_140 = arith.constant 0 : index
    %376 = vector.load %arg39[%c0_139, %c0_140] : memref<576x64xbf16, #tpu.memory_space<vmem>>, vector<576x64xbf16>
    %cst_141 = arith.constant dense<0.000000e+00> : vector<1x64xf32>
    %377 = tpu.matmul %375, %376, %cst_141 {dimension_numbers = #tpu.dot_dimension_numbers<[1], [0], [0], [1], [0, 0, 1, 1], [], []>} : vector<1x576xbf16>, vector<576x64xbf16>, vector<1x64xf32> -> vector<1x64xf32>
    %c0_142 = arith.constant 0 : index
    %c0_143 = arith.constant 0 : index
    %378 = vector.load %arg40[%c0_142, %c0_143] : memref<1x64xf32, #tpu.memory_space<vmem>>, vector<1x64xf32>
    %379 = arith.addf %377, %378 : vector<1x64xf32>
    %cst_144 = arith.constant 0.000000e+00 : f32
    %380 = vector.broadcast %cst_144 : f32 to vector<1x64xf32>
    %381 = arith.maximumf %379, %380 : vector<1x64xf32>
    %382 = arith.truncf %381 : vector<1x64xf32> to vector<1x64xbf16>
    %cst_145 = arith.constant 0.000000e+00 : bf16
    %383 = vector.broadcast %cst_145 : bf16 to vector<1x64xbf16>
    %384 = tpu.concatenate %383, %382, %383 in 1 : vector<1x64xbf16>, vector<1x64xbf16>, vector<1x64xbf16> -> vector<1x192xbf16>
    %cst_146 = arith.constant 0.000000e+00 : bf16
    %385 = vector.broadcast %cst_146 : bf16 to vector<1x192xbf16>
    %386 = tpu.concatenate %385, %384, %385 in 0 : vector<1x192xbf16>, vector<1x192xbf16>, vector<1x192xbf16> -> vector<3x192xbf16>
    %387 = vector.extract_strided_slice %386 {offsets = [0, 0], sizes = [1, 192], strides = [1, 1]} : vector<3x192xbf16> to vector<1x192xbf16>
    %388 = vector.extract_strided_slice %386 {offsets = [1, 0], sizes = [1, 192], strides = [1, 1]} : vector<3x192xbf16> to vector<1x192xbf16>
    %389 = vector.extract_strided_slice %386 {offsets = [2, 0], sizes = [1, 192], strides = [1, 1]} : vector<3x192xbf16> to vector<1x192xbf16>
    %390 = tpu.concatenate %387, %388, %389 in 1 : vector<1x192xbf16>, vector<1x192xbf16>, vector<1x192xbf16> -> vector<1x576xbf16>
    %c0_147 = arith.constant 0 : index
    %c0_148 = arith.constant 0 : index
    %391 = vector.load %arg41[%c0_147, %c0_148] : memref<576x64xbf16, #tpu.memory_space<vmem>>, vector<576x64xbf16>
    %cst_149 = arith.constant dense<0.000000e+00> : vector<1x64xf32>
    %392 = tpu.matmul %390, %391, %cst_149 {dimension_numbers = #tpu.dot_dimension_numbers<[1], [0], [0], [1], [0, 0, 1, 1], [], []>} : vector<1x576xbf16>, vector<576x64xbf16>, vector<1x64xf32> -> vector<1x64xf32>
    %c0_150 = arith.constant 0 : index
    %c0_151 = arith.constant 0 : index
    %393 = vector.load %arg42[%c0_150, %c0_151] : memref<1x64xf32, #tpu.memory_space<vmem>>, vector<1x64xf32>
    %394 = arith.addf %392, %393 : vector<1x64xf32>
    %395 = arith.addf %394, %366 : vector<1x64xf32>
    %cst_152 = arith.constant 0.000000e+00 : f32
    %396 = vector.broadcast %cst_152 : f32 to vector<1x64xf32>
    %397 = arith.maximumf %395, %396 : vector<1x64xf32>
    %398 = arith.truncf %397 : vector<1x64xf32> to vector<1x64xbf16>
    %c0_153 = arith.constant 0 : index
    %c0_154 = arith.constant 0 : index
    %399 = vector.load %arg43[%c0_153, %c0_154] : memref<64x5xbf16, #tpu.memory_space<vmem>>, vector<64x5xbf16>
    %cst_155 = arith.constant dense<0.000000e+00> : vector<1x5xf32>
    %400 = tpu.matmul %398, %399, %cst_155 {dimension_numbers = #tpu.dot_dimension_numbers<[1], [0], [0], [1], [0, 0, 1, 1], [], []>} : vector<1x64xbf16>, vector<64x5xbf16>, vector<1x5xf32> -> vector<1x5xf32>
    %c0_156 = arith.constant 0 : index
    %c0_157 = arith.constant 0 : index
    %401 = vector.load %arg44[%c0_156, %c0_157] : memref<1x5xf32, #tpu.memory_space<vmem>>, vector<1x5xf32>
    %402 = arith.addf %400, %401 : vector<1x5xf32>
    %c0_158 = arith.constant 0 : index
    %c0_159 = arith.constant 0 : index
    %c0_160 = arith.constant 0 : index
    %403 = vector.load %arg45[%c0_158, %c0_159, %c0_160] : memref<1x1x5xf32, #tpu.memory_space<vmem>>, vector<1x1x5xf32>
    %404 = vector.shape_cast %403 : vector<1x1x5xf32> to vector<1x5xf32>
    %405 = vector.shape_cast %402 : vector<1x5xf32> to vector<1x1x5xf32>
    tpu.vector_store %arg45[%c0_158, %c0_159, %c0_160], %405 {strides = array<i32>} : memref<1x1x5xf32, #tpu.memory_space<vmem>>, vector<1x1x5xf32>,
    return
  }
  func.func @transform_0(%arg0: i32) -> (i32, i32, i32) {
    %c0_i32 = arith.constant 0 : i32
    %c0_i32_0 = arith.constant 0 : i32
    %c0_i32_1 = arith.constant 0 : i32
    return %arg0, %c0_i32, %c0_i32_0 : i32, i32, i32
  }
  func.func @transform_1(%arg0: i32) -> (i32, i32, i32) {
    %c0_i32 = arith.constant 0 : i32
    %c0_i32_0 = arith.constant 0 : i32
    %c0_i32_1 = arith.constant 0 : i32
    return %arg0, %c0_i32, %c0_i32_0 : i32, i32, i32
  }
  func.func @transform_2(%arg0: i32) -> (i32, i32) {
    %c0_i32 = arith.constant 0 : i32
    %c0_i32_0 = arith.constant 0 : i32
    %c0_i32_1 = arith.constant 0 : i32
    return %c0_i32, %c0_i32_0 : i32, i32
  }
  func.func @transform_3(%arg0: i32) -> (i32, i32) {
    %c0_i32 = arith.constant 0 : i32
    %c0_i32_0 = arith.constant 0 : i32
    %c0_i32_1 = arith.constant 0 : i32
    return %c0_i32, %c0_i32_0 : i32, i32
  }
  func.func @transform_4(%arg0: i32) -> (i32, i32) {
    %c0_i32 = arith.constant 0 : i32
    %c0_i32_0 = arith.constant 0 : i32
    %c0_i32_1 = arith.constant 0 : i32
    return %c0_i32, %c0_i32_0 : i32, i32
  }
  func.func @transform_5(%arg0: i32) -> (i32, i32) {
    %c0_i32 = arith.constant 0 : i32
    %c0_i32_0 = arith.constant 0 : i32
    %c0_i32_1 = arith.constant 0 : i32
    return %c0_i32, %c0_i32_0 : i32, i32
  }
  func.func @transform_6(%arg0: i32) -> (i32, i32) {
    %c0_i32 = arith.constant 0 : i32
    %c0_i32_0 = arith.constant 0 : i32
    %c0_i32_1 = arith.constant 0 : i32
    return %c0_i32, %c0_i32_0 : i32, i32
  }
  func.func @transform_7(%arg0: i32) -> (i32, i32) {
    %c0_i32 = arith.constant 0 : i32
    %c0_i32_0 = arith.constant 0 : i32
    %c0_i32_1 = arith.constant 0 : i32
    return %c0_i32, %c0_i32_0 : i32, i32
  }
  func.func @transform_8(%arg0: i32) -> (i32, i32) {
    %c0_i32 = arith.constant 0 : i32
    %c0_i32_0 = arith.constant 0 : i32
    %c0_i32_1 = arith.constant 0 : i32
    return %c0_i32, %c0_i32_0 : i32, i32
  }
  func.func @transform_9(%arg0: i32) -> (i32, i32) {
    %c0_i32 = arith.constant 0 : i32
    %c0_i32_0 = arith.constant 0 : i32
    %c0_i32_1 = arith.constant 0 : i32
    return %c0_i32, %c0_i32_0 : i32, i32
  }
  func.func @transform_10(%arg0: i32) -> (i32, i32) {
    %c0_i32 = arith.constant 0 : i32
    %c0_i32_0 = arith.constant 0 : i32
    %c0_i32_1 = arith.constant 0 : i32
    return %c0_i32, %c0_i32_0 : i32, i32
  }
  func.func @transform_11(%arg0: i32) -> (i32, i32) {
    %c0_i32 = arith.constant 0 : i32
    %c0_i32_0 = arith.constant 0 : i32
    %c0_i32_1 = arith.constant 0 : i32
    return %c0_i32, %c0_i32_0 : i32, i32
  }
  func.func @transform_12(%arg0: i32) -> (i32, i32) {
    %c0_i32 = arith.constant 0 : i32
    %c0_i32_0 = arith.constant 0 : i32
    %c0_i32_1 = arith.constant 0 : i32
    return %c0_i32, %c0_i32_0 : i32, i32
  }
  func.func @transform_13(%arg0: i32) -> (i32, i32) {
    %c0_i32 = arith.constant 0 : i32
    %c0_i32_0 = arith.constant 0 : i32
    %c0_i32_1 = arith.constant 0 : i32
    return %c0_i32, %c0_i32_0 : i32, i32
  }
  func.func @transform_14(%arg0: i32) -> (i32, i32) {
    %c0_i32 = arith.constant 0 : i32
    %c0_i32_0 = arith.constant 0 : i32
    %c0_i32_1 = arith.constant 0 : i32
    return %c0_i32, %c0_i32_0 : i32, i32
  }
  func.func @transform_15(%arg0: i32) -> (i32, i32) {
    %c0_i32 = arith.constant 0 : i32
    %c0_i32_0 = arith.constant 0 : i32
    %c0_i32_1 = arith.constant 0 : i32
    return %c0_i32, %c0_i32_0 : i32, i32
  }
  func.func @transform_16(%arg0: i32) -> (i32, i32) {
    %c0_i32 = arith.constant 0 : i32
    %c0_i32_0 = arith.constant 0 : i32
    %c0_i32_1 = arith.constant 0 : i32
    return %c0_i32, %c0_i32_0 : i32, i32
  }
  func.func @transform_17(%arg0: i32) -> (i32, i32) {
    %c0_i32 = arith.constant 0 : i32
    %c0_i32_0 = arith.constant 0 : i32
    %c0_i32_1 = arith.constant 0 : i32
    return %c0_i32, %c0_i32_0 : i32, i32
  }
  func.func @transform_18(%arg0: i32) -> (i32, i32) {
    %c0_i32 = arith.constant 0 : i32
    %c0_i32_0 = arith.constant 0 : i32
    %c0_i32_1 = arith.constant 0 : i32
    return %c0_i32, %c0_i32_0 : i32, i32
  }
  func.func @transform_19(%arg0: i32) -> (i32, i32) {
    %c0_i32 = arith.constant 0 : i32
    %c0_i32_0 = arith.constant 0 : i32
    %c0_i32_1 = arith.constant 0 : i32
    return %c0_i32, %c0_i32_0 : i32, i32
  }
  func.func @transform_20(%arg0: i32) -> (i32, i32) {
    %c0_i32 = arith.constant 0 : i32
    %c0_i32_0 = arith.constant 0 : i32
    %c0_i32_1 = arith.constant 0 : i32
    return %c0_i32, %c0_i32_0 : i32, i32
  }
  func.func @transform_21(%arg0: i32) -> (i32, i32) {
    %c0_i32 = arith.constant 0 : i32
    %c0_i32_0 = arith.constant 0 : i32
    %c0_i32_1 = arith.constant 0 : i32
    return %c0_i32, %c0_i32_0 : i32, i32
  }
  func.func @transform_22(%arg0: i32) -> (i32, i32) {
    %c0_i32 = arith.constant 0 : i32
    %c0_i32_0 = arith.constant 0 : i32
    %c0_i32_1 = arith.constant 0 : i32
    return %c0_i32, %c0_i32_0 : i32, i32
  }
  func.func @transform_23(%arg0: i32) -> (i32, i32) {
    %c0_i32 = arith.constant 0 : i32
    %c0_i32_0 = arith.constant 0 : i32
    %c0_i32_1 = arith.constant 0 : i32
    return %c0_i32, %c0_i32_0 : i32, i32
  }
  func.func @transform_24(%arg0: i32) -> (i32, i32) {
    %c0_i32 = arith.constant 0 : i32
    %c0_i32_0 = arith.constant 0 : i32
    %c0_i32_1 = arith.constant 0 : i32
    return %c0_i32, %c0_i32_0 : i32, i32
  }
  func.func @transform_25(%arg0: i32) -> (i32, i32) {
    %c0_i32 = arith.constant 0 : i32
    %c0_i32_0 = arith.constant 0 : i32
    %c0_i32_1 = arith.constant 0 : i32
    return %c0_i32, %c0_i32_0 : i32, i32
  }
  func.func @transform_26(%arg0: i32) -> (i32, i32) {
    %c0_i32 = arith.constant 0 : i32
    %c0_i32_0 = arith.constant 0 : i32
    %c0_i32_1 = arith.constant 0 : i32
    return %c0_i32, %c0_i32_0 : i32, i32
  }
  func.func @transform_27(%arg0: i32) -> (i32, i32) {
    %c0_i32 = arith.constant 0 : i32
    %c0_i32_0 = arith.constant 0 : i32
    %c0_i32_1 = arith.constant 0 : i32
    return %c0_i32, %c0_i32_0 : i32, i32
  }
  func.func @transform_28(%arg0: i32) -> (i32, i32) {
    %c0_i32 = arith.constant 0 : i32
    %c0_i32_0 = arith.constant 0 : i32
    %c0_i32_1 = arith.constant 0 : i32
    return %c0_i32, %c0_i32_0 : i32, i32
  }
  func.func @transform_29(%arg0: i32) -> (i32, i32) {
    %c0_i32 = arith.constant 0 : i32
    %c0_i32_0 = arith.constant 0 : i32
    %c0_i32_1 = arith.constant 0 : i32
    return %c0_i32, %c0_i32_0 : i32, i32
  }
  func.func @transform_30(%arg0: i32) -> (i32, i32) {
    %c0_i32 = arith.constant 0 : i32
    %c0_i32_0 = arith.constant 0 : i32
    %c0_i32_1 = arith.constant 0 : i32
    return %c0_i32, %c0_i32_0 : i32, i32
  }
  func.func @transform_31(%arg0: i32) -> (i32, i32) {
    %c0_i32 = arith.constant 0 : i32
    %c0_i32_0 = arith.constant 0 : i32
    %c0_i32_1 = arith.constant 0 : i32
    return %c0_i32, %c0_i32_0 : i32, i32
  }
  func.func @transform_32(%arg0: i32) -> (i32, i32) {
    %c0_i32 = arith.constant 0 : i32
    %c0_i32_0 = arith.constant 0 : i32
    %c0_i32_1 = arith.constant 0 : i32
    return %c0_i32, %c0_i32_0 : i32, i32
  }
  func.func @transform_33(%arg0: i32) -> (i32, i32) {
    %c0_i32 = arith.constant 0 : i32
    %c0_i32_0 = arith.constant 0 : i32
    %c0_i32_1 = arith.constant 0 : i32
    return %c0_i32, %c0_i32_0 : i32, i32
  }
  func.func @transform_34(%arg0: i32) -> (i32, i32) {
    %c0_i32 = arith.constant 0 : i32
    %c0_i32_0 = arith.constant 0 : i32
    %c0_i32_1 = arith.constant 0 : i32
    return %c0_i32, %c0_i32_0 : i32, i32
  }
  func.func @transform_35(%arg0: i32) -> (i32, i32) {
    %c0_i32 = arith.constant 0 : i32
    %c0_i32_0 = arith.constant 0 : i32
    %c0_i32_1 = arith.constant 0 : i32
    return %c0_i32, %c0_i32_0 : i32, i32
  }
  func.func @transform_36(%arg0: i32) -> (i32, i32) {
    %c0_i32 = arith.constant 0 : i32
    %c0_i32_0 = arith.constant 0 : i32
    %c0_i32_1 = arith.constant 0 : i32
    return %c0_i32, %c0_i32_0 : i32, i32
  }
  func.func @transform_37(%arg0: i32) -> (i32, i32) {
    %c0_i32 = arith.constant 0 : i32
    %c0_i32_0 = arith.constant 0 : i32
    %c0_i32_1 = arith.constant 0 : i32
    return %c0_i32, %c0_i32_0 : i32, i32
  }
  func.func @transform_38(%arg0: i32) -> (i32, i32) {
    %c0_i32 = arith.constant 0 : i32
    %c0_i32_0 = arith.constant 0 : i32
    %c0_i32_1 = arith.constant 0 : i32
    return %c0_i32, %c0_i32_0 : i32, i32
  }
  func.func @transform_39(%arg0: i32) -> (i32, i32) {
    %c0_i32 = arith.constant 0 : i32
    %c0_i32_0 = arith.constant 0 : i32
    %c0_i32_1 = arith.constant 0 : i32
    return %c0_i32, %c0_i32_0 : i32, i32
  }
  func.func @transform_40(%arg0: i32) -> (i32, i32) {
    %c0_i32 = arith.constant 0 : i32
    %c0_i32_0 = arith.constant 0 : i32
    %c0_i32_1 = arith.constant 0 : i32
    return %c0_i32, %c0_i32_0 : i32, i32
  }
  func.func @transform_41(%arg0: i32) -> (i32, i32) {
    %c0_i32 = arith.constant 0 : i32
    %c0_i32_0 = arith.constant 0 : i32
    %c0_i32_1 = arith.constant 0 : i32
    return %c0_i32, %c0_i32_0 : i32, i32
  }
  func.func @transform_42(%arg0: i32) -> (i32, i32) {
    %c0_i32 = arith.constant 0 : i32
    %c0_i32_0 = arith.constant 0 : i32
    %c0_i32_1 = arith.constant 0 : i32
    return %c0_i32, %c0_i32_0 : i32, i32
  }
  func.func @transform_43(%arg0: i32) -> (i32, i32) {
    %c0_i32 = arith.constant 0 : i32
    %c0_i32_0 = arith.constant 0 : i32
    %c0_i32_1 = arith.constant 0 : i32
    return %c0_i32, %c0_i32_0 : i32, i32
  }
  func.func @transform_44(%arg0: i32) -> (i32, i32, i32) {
    %c0_i32 = arith.constant 0 : i32
    %c0_i32_0 = arith.constant 0 : i32
    %c0_i32_1 = arith.constant 0 : i32
    return %arg0, %c0_i32, %c0_i32_0 : i32, i32, i32
  }
}

</mosaic_0001>

<llo_original>
// kernel: _lambda_.1
$region0: #{_lambda_.1}
  #allocation0 [shape = 'u32[]', space=smem, size = 0x4, offset = 0x4, fixed_abs, tag = 'smem constant byte address 0x4 - core index']
  #allocation1 [shape = 'u32[72,128]{1,0:T(1,128)}', space=vmem, size = 0x9000, scoped, tag = 'internal scratch']
  %s0 = inlined_call_operand.smem [shape: u32[45], index: -1, kind: input, shape index: {}]
  %s1 = sld [smem:[%s0]]
  %s2 = scalar_lea.smem %s0, 1
  %s3 = sld [smem:[%s2]]
  %s4 = scalar_lea.smem %s0, 2
  %s5 = sld [smem:[%s4]]
  %s6 = scalar_lea.smem %s0, 3
  %s7 = sld [smem:[%s6]]
  %s8 = scalar_lea.smem %s0, 4
  %s9 = sld [smem:[%s8]]
  %s10 = scalar_lea.smem %s0, 5
  %s11 = sld [smem:[%s10]]
  %s12 = scalar_lea.smem %s0, 6
  %s13 = sld [smem:[%s12]]
  %s14 = scalar_lea.smem %s0, 7
  %s15 = sld [smem:[%s14]]
  %s16 = scalar_lea.smem %s0, 8
  %s17 = sld [smem:[%s16]]
  %s18 = scalar_lea.smem %s0, 9
  %s19 = sld [smem:[%s18]]
  %s20 = scalar_lea.smem %s0, 10
  %s21 = sld [smem:[%s20]]
  %s22 = scalar_lea.smem %s0, 11
  %s23 = sld [smem:[%s22]]
  %s24 = scalar_lea.smem %s0, 12
  %s25 = sld [smem:[%s24]]
  %s26 = scalar_lea.smem %s0, 13
  %s27 = sld [smem:[%s26]]
  %s28 = scalar_lea.smem %s0, 14
  %s29 = sld [smem:[%s28]]
  %s30 = scalar_lea.smem %s0, 15
  %s31 = sld [smem:[%s30]]
  %s32 = scalar_lea.smem %s0, 16
  %s33 = sld [smem:[%s32]]
  %s34 = scalar_lea.smem %s0, 17
  %s35 = sld [smem:[%s34]]
  %s36 = scalar_lea.smem %s0, 18
  %s37 = sld [smem:[%s36]]
  %s38 = scalar_lea.smem %s0, 19
  %s39 = sld [smem:[%s38]]
  %s40 = scalar_lea.smem %s0, 20
  %s41 = sld [smem:[%s40]]
  %s42 = scalar_lea.smem %s0, 21
  %s43 = sld [smem:[%s42]]
  %s44 = scalar_lea.smem %s0, 22
  %s45 = sld [smem:[%s44]]
  %s46 = scalar_lea.smem %s0, 23
  %s47 = sld [smem:[%s46]]
  %s48 = scalar_lea.smem %s0, 24
  %s49 = sld [smem:[%s48]]
  %s50 = scalar_lea.smem %s0, 25
  %s51 = sld [smem:[%s50]]
  %s52 = scalar_lea.smem %s0, 26
  %s53 = sld [smem:[%s52]]
  %s54 = scalar_lea.smem %s0, 27
  %s55 = sld [smem:[%s54]]
  %s56 = scalar_lea.smem %s0, 28
  %s57 = sld [smem:[%s56]]
  %s58 = scalar_lea.smem %s0, 29
  %s59 = sld [smem:[%s58]]
  %s60 = scalar_lea.smem %s0, 30
  %s61 = sld [smem:[%s60]]
  %s62 = scalar_lea.smem %s0, 31
  %s63 = sld [smem:[%s62]]
  %s64 = scalar_lea.smem %s0, 32
  %s65 = sld [smem:[%s64]]
  %s66 = scalar_lea.smem %s0, 33
  %s67 = sld [smem:[%s66]]
  %s68 = scalar_lea.smem %s0, 34
  %s69 = sld [smem:[%s68]]
  %s70 = scalar_lea.smem %s0, 35
  %s71 = sld [smem:[%s70]]
  %s72 = scalar_lea.smem %s0, 36
  %s73 = sld [smem:[%s72]]
  %s74 = scalar_lea.smem %s0, 37
  %s75 = sld [smem:[%s74]]
  %s76 = scalar_lea.smem %s0, 38
  %s77 = sld [smem:[%s76]]
  %s78 = scalar_lea.smem %s0, 39
  %s79 = sld [smem:[%s78]]
  %s80 = scalar_lea.smem %s0, 40
  %s81 = sld [smem:[%s80]]
  %s82 = scalar_lea.smem %s0, 41
  %s83 = sld [smem:[%s82]]
  %s84 = scalar_lea.smem %s0, 42
  %s85 = sld [smem:[%s84]]
  %s86 = scalar_lea.smem %s0, 43
  %s87 = sld [smem:[%s86]]
  %s88 = scalar_lea.smem %s0, 44
  %s89 = sld [smem:[%s88]]
  %s90 = sld [smem:[#allocation0]]
  $region357: #{_lambda_.1} parent=0
    _
  %s92 = ssub.s32 1, %s90
  %s93 = scalar_select 0, %s92, %s90
  $region1: #{_lambda_.1} parent=0
    #allocation2 [shape = 'u8[512]{0}', space=vmem, size = 0x400, scoped, tag = 'input window, operand 3, single buffered']
    #allocation3 [shape = 's32[2]{0}', space=sflag, size = 0x8, scoped, tag = 'scoped memory for _lambda_.1']
    #allocation4 [shape = 's32[2]{0}', space=sflag, size = 0x8, scoped, tag = 'scoped memory for _lambda_.1']
    #allocation5 [shape = 'u8[61440]{0}', space=vmem, size = 0xf000, scoped, tag = 'input window, operand 4, single buffered']
    #allocation6 [shape = 's32[1]{0}', space=sflag, size = 0x4, scoped, tag = 'scoped memory for _lambda_.1']
    #allocation7 [shape = 'u8[512]{0}', space=vmem, size = 0x400, scoped, tag = 'input window, operand 5, single buffered']
    #allocation8 [shape = 'u8[61440]{0}', space=vmem, size = 0xf000, scoped, tag = 'input window, operand 6, single buffered']
    #allocation9 [shape = 's32[1]{0}', space=sflag, size = 0x4, scoped, tag = 'scoped memory for _lambda_.1']
    #allocation10 [shape = 'u8[512]{0}', space=vmem, size = 0x400, scoped, tag = 'input window, operand 7, single buffered']
    #allocation11 [shape = 'u8[61440]{0}', space=vmem, size = 0xf000, scoped, tag = 'input window, operand 8, single buffered']
    #allocation12 [shape = 's32[1]{0}', space=sflag, size = 0x4, scoped, tag = 'scoped memory for _lambda_.1']
    #allocation13 [shape = 'u8[512]{0}', space=vmem, size = 0x400, scoped, tag = 'input window, operand 9, single buffered']
    #allocation14 [shape = 'u8[61440]{0}', space=vmem, size = 0xf000, scoped, tag = 'input window, operand 10, single buffered']
    #allocation15 [shape = 's32[1]{0}', space=sflag, size = 0x4, scoped, tag = 'scoped memory for _lambda_.1']
    #allocation16 [shape = 'u8[512]{0}', space=vmem, size = 0x400, scoped, tag = 'input window, operand 11, single buffered']
    #allocation17 [shape = 'u8[61440]{0}', space=vmem, size = 0xf000, scoped, tag = 'input window, operand 12, single buffered']
    #allocation18 [shape = 's32[1]{0}', space=sflag, size = 0x4, scoped, tag = 'scoped memory for _lambda_.1']
    #allocation19 [shape = 'u8[512]{0}', space=vmem, size = 0x400, scoped, tag = 'input window, operand 13, single buffered']
    #allocation20 [shape = 'u8[73728]{0}', space=vmem, size = 0x12000, scoped, tag = 'input window, operand 14, single buffered']
    #allocation21 [shape = 's32[1]{0}', space=sflag, size = 0x4, scoped, tag = 'scoped memory for _lambda_.1']
    #allocation22 [shape = 'u8[512]{0}', space=vmem, size = 0x400, scoped, tag = 'input window, operand 15, single buffered']
    #allocation23 [shape = 'u8[16384]{0}', space=vmem, size = 0x4000, scoped, tag = 'input window, operand 16, single buffered']
    #allocation24 [shape = 's32[1]{0}', space=sflag, size = 0x4, scoped, tag = 'scoped memory for _lambda_.1']
    #allocation25 [shape = 'u8[512]{0}', space=vmem, size = 0x400, scoped, tag = 'input window, operand 17, single buffered']
    #allocation26 [shape = 'u8[73728]{0}', space=vmem, size = 0x12000, scoped, tag = 'input window, operand 18, single buffered']
    #allocation27 [shape = 's32[1]{0}', space=sflag, size = 0x4, scoped, tag = 'scoped memory for _lambda_.1']
    #allocation28 [shape = 'u8[512]{0}', space=vmem, size = 0x400, scoped, tag = 'input window, operand 19, single buffered']
    #allocation29 [shape = 'u8[73728]{0}', space=vmem, size = 0x12000, scoped, tag = 'input window, operand 20, single buffered']
    #allocation30 [shape = 's32[1]{0}', space=sflag, size = 0x4, scoped, tag = 'scoped memory for _lambda_.1']
    #allocation31 [shape = 'u8[512]{0}', space=vmem, size = 0x400, scoped, tag = 'input window, operand 21, single buffered']
    #allocation32 [shape = 'u8[73728]{0}', space=vmem, size = 0x12000, scoped, tag = 'input window, operand 22, single buffered']
    #allocation33 [shape = 's32[1]{0}', space=sflag, size = 0x4, scoped, tag = 'scoped memory for _lambda_.1']
    #allocation34 [shape = 'u8[512]{0}', space=vmem, size = 0x400, scoped, tag = 'input window, operand 23, single buffered']
    #allocation35 [shape = 'u8[98304]{0}', space=vmem, size = 0x18000, scoped, tag = 'input window, operand 24, single buffered']
    #allocation36 [shape = 's32[1]{0}', space=sflag, size = 0x4, scoped, tag = 'scoped memory for _lambda_.1']
    #allocation37 [shape = 'u8[512]{0}', space=vmem, size = 0x400, scoped, tag = 'input window, operand 25, single buffered']
    #allocation38 [shape = 'u8[16384]{0}', space=vmem, size = 0x4000, scoped, tag = 'input window, operand 26, single buffered']
    #allocation39 [shape = 's32[1]{0}', space=sflag, size = 0x4, scoped, tag = 'scoped memory for _lambda_.1']
    #allocation40 [shape = 'u8[512]{0}', space=vmem, size = 0x400, scoped, tag = 'input window, operand 27, single buffered']
    #allocation41 [shape = 'u8[98304]{0}', space=vmem, size = 0x18000, scoped, tag = 'input window, operand 28, single buffered']
    #allocation42 [shape = 's32[1]{0}', space=sflag, size = 0x4, scoped, tag = 'scoped memory for _lambda_.1']
    #allocation43 [shape = 'u8[512]{0}', space=vmem, size = 0x400, scoped, tag = 'input window, operand 29, single buffered']
    #allocation44 [shape = 'u8[98304]{0}', space=vmem, size = 0x18000, scoped, tag = 'input window, operand 30, single buffered']
    #allocation45 [shape = 's32[1]{0}', space=sflag, size = 0x4, scoped, tag = 'scoped memory for _lambda_.1']
    #allocation46 [shape = 'u8[512]{0}', space=vmem, size = 0x400, scoped, tag = 'input window, operand 31, single buffered']
    #allocation47 [shape = 'u8[98304]{0}', space=vmem, size = 0x18000, scoped, tag = 'input window, operand 32, single buffered']
    #allocation48 [shape = 's32[1]{0}', space=sflag, size = 0x4, scoped, tag = 'scoped memory for _lambda_.1']
    #allocation49 [shape = 'u8[512]{0}', space=vmem, size = 0x400, scoped, tag = 'input window, operand 33, single buffered']
    #allocation50 [shape = 'u8[147456]{0}', space=vmem, size = 0x24000, scoped, tag = 'input window, operand 34, single buffered']
    #allocation51 [shape = 's32[1]{0}', space=sflag, size = 0x4, scoped, tag = 'scoped memory for _lambda_.1']
    #allocation52 [shape = 'u8[512]{0}', space=vmem, size = 0x400, scoped, tag = 'input window, operand 35, single buffered']
    #allocation53 [shape = 'u8[16384]{0}', space=vmem, size = 0x4000, scoped, tag = 'input window, operand 36, single buffered']
    #allocation54 [shape = 's32[1]{0}', space=sflag, size = 0x4, scoped, tag = 'scoped memory for _lambda_.1']
    #allocation55 [shape = 'u8[512]{0}', space=vmem, size = 0x400, scoped, tag = 'input window, operand 37, single buffered']
    #allocation56 [shape = 'u8[512]{0}', space=vmem, size = 0x400, scoped, tag = 'input window, operand 39, single buffered']
    #allocation57 [shape = 's32[1]{0}', space=sflag, size = 0x4, scoped, tag = 'scoped memory for _lambda_.1']
    #allocation58 [shape = 'u8[512]{0}', space=vmem, size = 0x400, scoped, tag = 'input window, operand 41, single buffered']
    #allocation59 [shape = 'u8[1024]{0}', space=vmem, size = 0x400, scoped, tag = 'output window, operand 0']
    %94 = vsyncpa [#allocation3], 0
    %95 = vsyncpa [#allocation6], 0
    %96 = vsyncpa [#allocation9], 0
    %97 = vsyncpa [#allocation12], 0
    %98 = vsyncpa [#allocation15], 0
    %99 = vsyncpa [#allocation18], 0
    %100 = vsyncpa [#allocation21], 0
    %101 = vsyncpa [#allocation24], 0
    %102 = vsyncpa [#allocation27], 0
    %103 = vsyncpa [#allocation30], 0
    %104 = vsyncpa [#allocation33], 0
    %105 = vsyncpa [#allocation36], 0
    %106 = vsyncpa [#allocation39], 0
    %107 = vsyncpa [#allocation42], 0
    %108 = vsyncpa [#allocation45], 0
    %109 = vsyncpa [#allocation48], 0
    %110 = vsyncpa [#allocation51], 0
    %111 = vsyncpa [#allocation54], 0
    %112 = vsyncpa [#allocation57], 0
    %113 = vsyncpa [#allocation4], 0
    %s114 = scalar_lea.sflag [#allocation4], 1
    %115 = vsyncpa %s114, 0
    loop: start=0, step=1, limit=4
    $region2: #{_lambda_.1} parent=1 // loop_pre_header
      _
    $region3: #{_lambda_.1} parent=1 // loop_header
      %s117 = sphi 0, %s121
      %p118 = scmp.ge.s32.totalorder %s117, 4
      %s127 = sphi 0, %s129
      %s130 = sphi 0, %s127
      %s131 = sphi 0, %s130
      %s147 = sphi 0, %s131
      %s153 = sphi 0, %s155
      %s156 = sphi 0, %s153
      %s157 = sphi 0, %s156
      %s173 = sphi 0, %s157
      %s177 = sphi 0, %s177
      %s179 = sphi 0, %s177
      %s180 = sphi 0, %s179
      %s194 = sphi 0, %s180
      %s198 = sphi 0, %s198
      %s200 = sphi 0, %s198
      %s201 = sphi 0, %s200
      %s215 = sphi 0, %s201
      %s219 = sphi 0, %s219
      %s221 = sphi 0, %s219
      %s222 = sphi 0, %s221
      %s236 = sphi 0, %s222
      %s240 = sphi 0, %s240
      %s242 = sphi 0, %s240
      %s243 = sphi 0, %s242
      %s257 = sphi 0, %s243
      %s261 = sphi 0, %s261
      %s263 = sphi 0, %s261
      %s264 = sphi 0, %s263
      %s278 = sphi 0, %s264
      %s282 = sphi 0, %s282
      %s284 = sphi 0, %s282
      %s285 = sphi 0, %s284
      %s299 = sphi 0, %s285
      %s303 = sphi 0, %s303
      %s305 = sphi 0, %s303
      %s306 = sphi 0, %s305
      %s320 = sphi 0, %s306
      %s324 = sphi 0, %s324
      %s326 = sphi 0, %s324
      %s327 = sphi 0, %s326
      %s341 = sphi 0, %s327
      %s345 = sphi 0, %s345
      %s347 = sphi 0, %s345
      %s348 = sphi 0, %s347
      %s362 = sphi 0, %s348
      %s366 = sphi 0, %s366
      %s368 = sphi 0, %s366
      %s369 = sphi 0, %s368
      %s383 = sphi 0, %s369
      %s387 = sphi 0, %s387
      %s389 = sphi 0, %s387
      %s390 = sphi 0, %s389
      %s404 = sphi 0, %s390
      %s408 = sphi 0, %s408
      %s410 = sphi 0, %s408
      %s411 = sphi 0, %s410
      %s425 = sphi 0, %s411
      %s429 = sphi 0, %s429
      %s431 = sphi 0, %s429
      %s432 = sphi 0, %s431
      %s446 = sphi 0, %s432
      %s450 = sphi 0, %s450
      %s452 = sphi 0, %s450
      %s453 = sphi 0, %s452
      %s467 = sphi 0, %s453
      %s471 = sphi 0, %s471
      %s473 = sphi 0, %s471
      %s474 = sphi 0, %s473
      %s488 = sphi 0, %s474
      %s492 = sphi 0, %s492
      %s494 = sphi 0, %s492
      %s495 = sphi 0, %s494
      %s509 = sphi 0, %s495
      %s513 = sphi 0, %s513
      %s515 = sphi 0, %s513
      %s516 = sphi 0, %s515
      %s530 = sphi 0, %s516
      %s534 = sphi 0, %s534
      %s536 = sphi 0, %s534
      %s537 = sphi 0, %s536
      %s551 = sphi 0, %s537
      %s555 = sphi 0, %s555
      %s557 = sphi 0, %s555
      %s558 = sphi 0, %s557
      %s572 = sphi 0, %s558
      %s576 = sphi 0, %s576
      %s578 = sphi 0, %s576
      %s579 = sphi 0, %s578
      %s593 = sphi 0, %s579
      %s597 = sphi 0, %s597
      %s599 = sphi 0, %s597
      %s600 = sphi 0, %s599
      %s614 = sphi 0, %s600
      %s618 = sphi 0, %s618
      %s620 = sphi 0, %s618
      %s621 = sphi 0, %s620
      %s635 = sphi 0, %s621
      %s639 = sphi 0, %s639
      %s641 = sphi 0, %s639
      %s642 = sphi 0, %s641
      %s656 = sphi 0, %s642
      %s660 = sphi 0, %s660
      %s662 = sphi 0, %s660
      %s663 = sphi 0, %s662
      %s677 = sphi 0, %s663
      %s681 = sphi 0, %s681
      %s683 = sphi 0, %s681
      %s684 = sphi 0, %s683
      %s698 = sphi 0, %s684
      %s702 = sphi 0, %s702
      %s704 = sphi 0, %s702
      %s705 = sphi 0, %s704
      %s719 = sphi 0, %s705
      %s723 = sphi 0, %s723
      %s725 = sphi 0, %s723
      %s726 = sphi 0, %s725
      %s740 = sphi 0, %s726
      %s744 = sphi 0, %s744
      %s746 = sphi 0, %s744
      %s747 = sphi 0, %s746
      %s761 = sphi 0, %s747
      %s765 = sphi 0, %s765
      %s767 = sphi 0, %s765
      %s768 = sphi 0, %s767
      %s782 = sphi 0, %s768
      %s786 = sphi 0, %s786
      %s788 = sphi 0, %s786
      %s789 = sphi 0, %s788
      %s803 = sphi 0, %s789
      %s807 = sphi 0, %s807
      %s809 = sphi 0, %s807
      %s810 = sphi 0, %s809
      %s824 = sphi 0, %s810
      %s828 = sphi 0, %s828
      %s830 = sphi 0, %s828
      %s831 = sphi 0, %s830
      %s845 = sphi 0, %s831
      %s849 = sphi 0, %s849
      %s851 = sphi 0, %s849
      %s852 = sphi 0, %s851
      %s866 = sphi 0, %s852
      %s870 = sphi 0, %s870
      %s872 = sphi 0, %s870
      %s873 = sphi 0, %s872
      %s887 = sphi 0, %s873
      %s891 = sphi 0, %s891
      %s893 = sphi 0, %s891
      %s894 = sphi 0, %s893
      %s908 = sphi 0, %s894
      %s912 = sphi 0, %s912
      %s914 = sphi 0, %s912
      %s915 = sphi 0, %s914
      %s929 = sphi 0, %s915
      %s933 = sphi 0, %s933
      %s935 = sphi 0, %s933
      %s936 = sphi 0, %s935
      %s950 = sphi 0, %s936
      %s954 = sphi 0, %s954
      %s956 = sphi 0, %s954
      %s957 = sphi 0, %s956
      %s971 = sphi 0, %s957
      %s975 = sphi 0, %s975
      %s977 = sphi 0, %s975
      %s978 = sphi 0, %s977
      %s992 = sphi 0, %s978
      %s996 = sphi 0, %s996
      %s998 = sphi 0, %s996
      %s999 = sphi 0, %s998
      %s1013 = sphi 0, %s999
      %s1017 = sphi 0, %s1017
      %s1019 = sphi 0, %s1017
      %s1020 = sphi 0, %s1019
      %s1034 = sphi 0, %s1020
      %s1038 = sphi 0, %s1038
      %s1040 = sphi 0, %s1038
      %s1041 = sphi 0, %s1040
      %s1055 = sphi 0, %s1041
      %s1061 = sphi 0, %s1063
      %s1064 = sphi 0, %s1061
      %s1065 = sphi 0, %s1064
      %s1081 = sphi 0, %s1065
    $region4: #{_lambda_.1} parent=1 // loop_header_branch
      %120 = sbr.rel (%p118) target = $region8
    $region5: #{_lambda_.1} parent=1 // loop_body
      %s122 = ssub.s32 %s117, 1
      %s123 = ssub.s32 %s117, 2
      %s124 = sadd.s32 %s117, 1
      %s125 = ssub.s32 %s117, %s124
      %p126 = scmp.eq.s32.totalorder %s125, 0
      %s128 = sadd.s32 %s127, 1
      %s129 = scalar_select %p126, %s127, %s128
      %p132 = pneg %p126
      %p133 = scmp.eq.s32.totalorder %s117, 1
      %p134 = por %p132, %p133
      %p135 = scmp.ne.s32.totalorder %s127, %s130
      %p136 = scmp.eq.s32.totalorder %s117, 0
      %p137 = por %p135, %p136
      %p138 = scmp.ne.s32.totalorder %s127, %s130
      %p139 = scmp.eq.s32.totalorder %s122, 1
      %p140 = por %p138, %p139
      %p141 = scmp.ne.s32.totalorder %s130, %s131
      %p142 = scmp.eq.s32.totalorder %s122, 0
      %p143 = por %p141, %p142
      %p144 = scmp.ne.s32.totalorder %s130, %s131
      %p145 = scmp.eq.s32.totalorder %s123, 1
      %p146 = por %p144, %p145
      %p148 = scmp.ne.s32.totalorder %s131, %s147
      %p149 = scmp.eq.s32.totalorder %s123, 0
      %p150 = por %p148, %p149
      %s151 = ssub.s32 %s117, %s124
      %p152 = scmp.eq.s32.totalorder %s151, 0
      %s154 = sadd.s32 %s153, 1
      %s155 = scalar_select %p152, %s153, %s154
      %p158 = pneg %p152
      %p159 = scmp.eq.s32.totalorder %s117, 1
      %p160 = por %p158, %p159
      %p161 = scmp.ne.s32.totalorder %s153, %s156
      %p162 = scmp.eq.s32.totalorder %s117, 0
      %p163 = por %p161, %p162
      %p164 = scmp.ne.s32.totalorder %s153, %s156
      %p165 = scmp.eq.s32.totalorder %s122, 1
      %p166 = por %p164, %p165
      %p167 = scmp.ne.s32.totalorder %s156, %s157
      %p168 = scmp.eq.s32.totalorder %s122, 0
      %p169 = por %p167, %p168
      %p170 = scmp.ne.s32.totalorder %s156, %s157
      %p171 = scmp.eq.s32.totalorder %s123, 1
      %p172 = por %p170, %p171
      %p174 = scmp.ne.s32.totalorder %s157, %s173
      %p175 = scmp.eq.s32.totalorder %s123, 0
      %p176 = por %p174, %p175
      %s178 = sadd.s32 %s177, 1
      %p181 = scmp.eq.s32.totalorder %s117, 1
      %p182 = scmp.ne.s32.totalorder %s177, %s179
      %p183 = scmp.eq.s32.totalorder %s117, 0
      %p184 = por %p182, %p183
      %p185 = scmp.ne.s32.totalorder %s177, %s179
      %p186 = scmp.eq.s32.totalorder %s122, 1
      %p187 = por %p185, %p186
      %p188 = scmp.ne.s32.totalorder %s179, %s180
      %p189 = scmp.eq.s32.totalorder %s122, 0
      %p190 = por %p188, %p189
      %p191 = scmp.ne.s32.totalorder %s179, %s180
      %p192 = scmp.eq.s32.totalorder %s123, 1
      %p193 = por %p191, %p192
      %p195 = scmp.ne.s32.totalorder %s180, %s194
      %p196 = scmp.eq.s32.totalorder %s123, 0
      %p197 = por %p195, %p196
      %s199 = sadd.s32 %s198, 1
      %p202 = scmp.eq.s32.totalorder %s117, 1
      %p203 = scmp.ne.s32.totalorder %s198, %s200
      %p204 = scmp.eq.s32.totalorder %s117, 0
      %p205 = por %p203, %p204
      %p206 = scmp.ne.s32.totalorder %s198, %s200
      %p207 = scmp.eq.s32.totalorder %s122, 1
      %p208 = por %p206, %p207
      %p209 = scmp.ne.s32.totalorder %s200, %s201
      %p210 = scmp.eq.s32.totalorder %s122, 0
      %p211 = por %p209, %p210
      %p212 = scmp.ne.s32.totalorder %s200, %s201
      %p213 = scmp.eq.s32.totalorder %s123, 1
      %p214 = por %p212, %p213
      %p216 = scmp.ne.s32.totalorder %s201, %s215
      %p217 = scmp.eq.s32.totalorder %s123, 0
      %p218 = por %p216, %p217
      %s220 = sadd.s32 %s219, 1
      %p223 = scmp.eq.s32.totalorder %s117, 1
      %p224 = scmp.ne.s32.totalorder %s219, %s221
      %p225 = scmp.eq.s32.totalorder %s117, 0
      %p226 = por %p224, %p225
      %p227 = scmp.ne.s32.totalorder %s219, %s221
      %p228 = scmp.eq.s32.totalorder %s122, 1
      %p229 = por %p227, %p228
      %p230 = scmp.ne.s32.totalorder %s221, %s222
      %p231 = scmp.eq.s32.totalorder %s122, 0
      %p232 = por %p230, %p231
      %p233 = scmp.ne.s32.totalorder %s221, %s222
      %p234 = scmp.eq.s32.totalorder %s123, 1
      %p235 = por %p233, %p234
      %p237 = scmp.ne.s32.totalorder %s222, %s236
      %p238 = scmp.eq.s32.totalorder %s123, 0
      %p239 = por %p237, %p238
      %s241 = sadd.s32 %s240, 1
      %p244 = scmp.eq.s32.totalorder %s117, 1
      %p245 = scmp.ne.s32.totalorder %s240, %s242
      %p246 = scmp.eq.s32.totalorder %s117, 0
      %p247 = por %p245, %p246
      %p248 = scmp.ne.s32.totalorder %s240, %s242
      %p249 = scmp.eq.s32.totalorder %s122, 1
      %p250 = por %p248, %p249
      %p251 = scmp.ne.s32.totalorder %s242, %s243
      %p252 = scmp.eq.s32.totalorder %s122, 0
      %p253 = por %p251, %p252
      %p254 = scmp.ne.s32.totalorder %s242, %s243
      %p255 = scmp.eq.s32.totalorder %s123, 1
      %p256 = por %p254, %p255
      %p258 = scmp.ne.s32.totalorder %s243, %s257
      %p259 = scmp.eq.s32.totalorder %s123, 0
      %p260 = por %p258, %p259
      %s262 = sadd.s32 %s261, 1
      %p265 = scmp.eq.s32.totalorder %s117, 1
      %p266 = scmp.ne.s32.totalorder %s261, %s263
      %p267 = scmp.eq.s32.totalorder %s117, 0
      %p268 = por %p266, %p267
      %p269 = scmp.ne.s32.totalorder %s261, %s263
      %p270 = scmp.eq.s32.totalorder %s122, 1
      %p271 = por %p269, %p270
      %p272 = scmp.ne.s32.totalorder %s263, %s264
      %p273 = scmp.eq.s32.totalorder %s122, 0
      %p274 = por %p272, %p273
      %p275 = scmp.ne.s32.totalorder %s263, %s264
      %p276 = scmp.eq.s32.totalorder %s123, 1
      %p277 = por %p275, %p276
      %p279 = scmp.ne.s32.totalorder %s264, %s278
      %p280 = scmp.eq.s32.totalorder %s123, 0
      %p281 = por %p279, %p280
      %s283 = sadd.s32 %s282, 1
      %p286 = scmp.eq.s32.totalorder %s117, 1
      %p287 = scmp.ne.s32.totalorder %s282, %s284
      %p288 = scmp.eq.s32.totalorder %s117, 0
      %p289 = por %p287, %p288
      %p290 = scmp.ne.s32.totalorder %s282, %s284
      %p291 = scmp.eq.s32.totalorder %s122, 1
      %p292 = por %p290, %p291
      %p293 = scmp.ne.s32.totalorder %s284, %s285
      %p294 = scmp.eq.s32.totalorder %s122, 0
      %p295 = por %p293, %p294
      %p296 = scmp.ne.s32.totalorder %s284, %s285
      %p297 = scmp.eq.s32.totalorder %s123, 1
      %p298 = por %p296, %p297
      %p300 = scmp.ne.s32.totalorder %s285, %s299
      %p301 = scmp.eq.s32.totalorder %s123, 0
      %p302 = por %p300, %p301
      %s304 = sadd.s32 %s303, 1
      %p307 = scmp.eq.s32.totalorder %s117, 1
      %p308 = scmp.ne.s32.totalorder %s303, %s305
      %p309 = scmp.eq.s32.totalorder %s117, 0
      %p310 = por %p308, %p309
      %p311 = scmp.ne.s32.totalorder %s303, %s305
      %p312 = scmp.eq.s32.totalorder %s122, 1
      %p313 = por %p311, %p312
      %p314 = scmp.ne.s32.totalorder %s305, %s306
      %p315 = scmp.eq.s32.totalorder %s122, 0
      %p316 = por %p314, %p315
      %p317 = scmp.ne.s32.totalorder %s305, %s306
      %p318 = scmp.eq.s32.totalorder %s123, 1
      %p319 = por %p317, %p318
      %p321 = scmp.ne.s32.totalorder %s306, %s320
      %p322 = scmp.eq.s32.totalorder %s123, 0
      %p323 = por %p321, %p322
      %s325 = sadd.s32 %s324, 1
      %p328 = scmp.eq.s32.totalorder %s117, 1
      %p329 = scmp.ne.s32.totalorder %s324, %s326
      %p330 = scmp.eq.s32.totalorder %s117, 0
      %p331 = por %p329, %p330
      %p332 = scmp.ne.s32.totalorder %s324, %s326
      %p333 = scmp.eq.s32.totalorder %s122, 1
      %p334 = por %p332, %p333
      %p335 = scmp.ne.s32.totalorder %s326, %s327
      %p336 = scmp.eq.s32.totalorder %s122, 0
      %p337 = por %p335, %p336
      %p338 = scmp.ne.s32.totalorder %s326, %s327
      %p339 = scmp.eq.s32.totalorder %s123, 1
      %p340 = por %p338, %p339
      %p342 = scmp.ne.s32.totalorder %s327, %s341
      %p343 = scmp.eq.s32.totalorder %s123, 0
      %p344 = por %p342, %p343
      %s346 = sadd.s32 %s345, 1
      %p349 = scmp.eq.s32.totalorder %s117, 1
      %p350 = scmp.ne.s32.totalorder %s345, %s347
      %p351 = scmp.eq.s32.totalorder %s117, 0
      %p352 = por %p350, %p351
      %p353 = scmp.ne.s32.totalorder %s345, %s347
      %p354 = scmp.eq.s32.totalorder %s122, 1
      %p355 = por %p353, %p354
      %p356 = scmp.ne.s32.totalorder %s347, %s348
      %p357 = scmp.eq.s32.totalorder %s122, 0
      %p358 = por %p356, %p357
      %p359 = scmp.ne.s32.totalorder %s347, %s348
      %p360 = scmp.eq.s32.totalorder %s123, 1
      %p361 = por %p359, %p360
      %p363 = scmp.ne.s32.totalorder %s348, %s362
      %p364 = scmp.eq.s32.totalorder %s123, 0
      %p365 = por %p363, %p364
      %s367 = sadd.s32 %s366, 1
      %p370 = scmp.eq.s32.totalorder %s117, 1
      %p371 = scmp.ne.s32.totalorder %s366, %s368
      %p372 = scmp.eq.s32.totalorder %s117, 0
      %p373 = por %p371, %p372
      %p374 = scmp.ne.s32.totalorder %s366, %s368
      %p375 = scmp.eq.s32.totalorder %s122, 1
      %p376 = por %p374, %p375
      %p377 = scmp.ne.s32.totalorder %s368, %s369
      %p378 = scmp.eq.s32.totalorder %s122, 0
      %p379 = por %p377, %p378
      %p380 = scmp.ne.s32.totalorder %s368, %s369
      %p381 = scmp.eq.s32.totalorder %s123, 1
      %p382 = por %p380, %p381
      %p384 = scmp.ne.s32.totalorder %s369, %s383
      %p385 = scmp.eq.s32.totalorder %s123, 0
      %p386 = por %p384, %p385
      %s388 = sadd.s32 %s387, 1
      %p391 = scmp.eq.s32.totalorder %s117, 1
      %p392 = scmp.ne.s32.totalorder %s387, %s389
      %p393 = scmp.eq.s32.totalorder %s117, 0
      %p394 = por %p392, %p393
      %p395 = scmp.ne.s32.totalorder %s387, %s389
      %p396 = scmp.eq.s32.totalorder %s122, 1
      %p397 = por %p395, %p396
      %p398 = scmp.ne.s32.totalorder %s389, %s390
      %p399 = scmp.eq.s32.totalorder %s122, 0
      %p400 = por %p398, %p399
      %p401 = scmp.ne.s32.totalorder %s389, %s390
      %p402 = scmp.eq.s32.totalorder %s123, 1
      %p403 = por %p401, %p402
      %p405 = scmp.ne.s32.totalorder %s390, %s404
      %p406 = scmp.eq.s32.totalorder %s123, 0
      %p407 = por %p405, %p406
      %s409 = sadd.s32 %s408, 1
      %p412 = scmp.eq.s32.totalorder %s117, 1
      %p413 = scmp.ne.s32.totalorder %s408, %s410
      %p414 = scmp.eq.s32.totalorder %s117, 0
      %p415 = por %p413, %p414
      %p416 = scmp.ne.s32.totalorder %s408, %s410
      %p417 = scmp.eq.s32.totalorder %s122, 1
      %p418 = por %p416, %p417
      %p419 = scmp.ne.s32.totalorder %s410, %s411
      %p420 = scmp.eq.s32.totalorder %s122, 0
      %p421 = por %p419, %p420
      %p422 = scmp.ne.s32.totalorder %s410, %s411
      %p423 = scmp.eq.s32.totalorder %s123, 1
      %p424 = por %p422, %p423
      %p426 = scmp.ne.s32.totalorder %s411, %s425
      %p427 = scmp.eq.s32.totalorder %s123, 0
      %p428 = por %p426, %p427
      %s430 = sadd.s32 %s429, 1
      %p433 = scmp.eq.s32.totalorder %s117, 1
      %p434 = scmp.ne.s32.totalorder %s429, %s431
      %p435 = scmp.eq.s32.totalorder %s117, 0
      %p436 = por %p434, %p435
      %p437 = scmp.ne.s32.totalorder %s429, %s431
      %p438 = scmp.eq.s32.totalorder %s122, 1
      %p439 = por %p437, %p438
      %p440 = scmp.ne.s32.totalorder %s431, %s432
      %p441 = scmp.eq.s32.totalorder %s122, 0
      %p442 = por %p440, %p441
      %p443 = scmp.ne.s32.totalorder %s431, %s432
      %p444 = scmp.eq.s32.totalorder %s123, 1
      %p445 = por %p443, %p444
      %p447 = scmp.ne.s32.totalorder %s432, %s446
      %p448 = scmp.eq.s32.totalorder %s123, 0
      %p449 = por %p447, %p448
      %s451 = sadd.s32 %s450, 1
      %p454 = scmp.eq.s32.totalorder %s117, 1
      %p455 = scmp.ne.s32.totalorder %s450, %s452
      %p456 = scmp.eq.s32.totalorder %s117, 0
      %p457 = por %p455, %p456
      %p458 = scmp.ne.s32.totalorder %s450, %s452
      %p459 = scmp.eq.s32.totalorder %s122, 1
      %p460 = por %p458, %p459
      %p461 = scmp.ne.s32.totalorder %s452, %s453
      %p462 = scmp.eq.s32.totalorder %s122, 0
      %p463 = por %p461, %p462
      %p464 = scmp.ne.s32.totalorder %s452, %s453
      %p465 = scmp.eq.s32.totalorder %s123, 1
      %p466 = por %p464, %p465
      %p468 = scmp.ne.s32.totalorder %s453, %s467
      %p469 = scmp.eq.s32.totalorder %s123, 0
      %p470 = por %p468, %p469
      %s472 = sadd.s32 %s471, 1
      %p475 = scmp.eq.s32.totalorder %s117, 1
      %p476 = scmp.ne.s32.totalorder %s471, %s473
      %p477 = scmp.eq.s32.totalorder %s117, 0
      %p478 = por %p476, %p477
      %p479 = scmp.ne.s32.totalorder %s471, %s473
      %p480 = scmp.eq.s32.totalorder %s122, 1
      %p481 = por %p479, %p480
      %p482 = scmp.ne.s32.totalorder %s473, %s474
      %p483 = scmp.eq.s32.totalorder %s122, 0
      %p484 = por %p482, %p483
      %p485 = scmp.ne.s32.totalorder %s473, %s474
      %p486 = scmp.eq.s32.totalorder %s123, 1
      %p487 = por %p485, %p486
      %p489 = scmp.ne.s32.totalorder %s474, %s488
      %p490 = scmp.eq.s32.totalorder %s123, 0
      %p491 = por %p489, %p490
      %s493 = sadd.s32 %s492, 1
      %p496 = scmp.eq.s32.totalorder %s117, 1
      %p497 = scmp.ne.s32.totalorder %s492, %s494
      %p498 = scmp.eq.s32.totalorder %s117, 0
      %p499 = por %p497, %p498
      %p500 = scmp.ne.s32.totalorder %s492, %s494
      %p501 = scmp.eq.s32.totalorder %s122, 1
      %p502 = por %p500, %p501
      %p503 = scmp.ne.s32.totalorder %s494, %s495
      %p504 = scmp.eq.s32.totalorder %s122, 0
      %p505 = por %p503, %p504
      %p506 = scmp.ne.s32.totalorder %s494, %s495
      %p507 = scmp.eq.s32.totalorder %s123, 1
      %p508 = por %p506, %p507
      %p510 = scmp.ne.s32.totalorder %s495, %s509
      %p511 = scmp.eq.s32.totalorder %s123, 0
      %p512 = por %p510, %p511
      %s514 = sadd.s32 %s513, 1
      %p517 = scmp.eq.s32.totalorder %s117, 1
      %p518 = scmp.ne.s32.totalorder %s513, %s515
      %p519 = scmp.eq.s32.totalorder %s117, 0
      %p520 = por %p518, %p519
      %p521 = scmp.ne.s32.totalorder %s513, %s515
      %p522 = scmp.eq.s32.totalorder %s122, 1
      %p523 = por %p521, %p522
      %p524 = scmp.ne.s32.totalorder %s515, %s516
      %p525 = scmp.eq.s32.totalorder %s122, 0
      %p526 = por %p524, %p525
      %p527 = scmp.ne.s32.totalorder %s515, %s516
      %p528 = scmp.eq.s32.totalorder %s123, 1
      %p529 = por %p527, %p528
      %p531 = scmp.ne.s32.totalorder %s516, %s530
      %p532 = scmp.eq.s32.totalorder %s123, 0
      %p533 = por %p531, %p532
      %s535 = sadd.s32 %s534, 1
      %p538 = scmp.eq.s32.totalorder %s117, 1
      %p539 = scmp.ne.s32.totalorder %s534, %s536
      %p540 = scmp.eq.s32.totalorder %s117, 0
      %p541 = por %p539, %p540
      %p542 = scmp.ne.s32.totalorder %s534, %s536
      %p543 = scmp.eq.s32.totalorder %s122, 1
      %p544 = por %p542, %p543
      %p545 = scmp.ne.s32.totalorder %s536, %s537
      %p546 = scmp.eq.s32.totalorder %s122, 0
      %p547 = por %p545, %p546
      %p548 = scmp.ne.s32.totalorder %s536, %s537
      %p549 = scmp.eq.s32.totalorder %s123, 1
      %p550 = por %p548, %p549
      %p552 = scmp.ne.s32.totalorder %s537, %s551
      %p553 = scmp.eq.s32.totalorder %s123, 0
      %p554 = por %p552, %p553
      %s556 = sadd.s32 %s555, 1
      %p559 = scmp.eq.s32.totalorder %s117, 1
      %p560 = scmp.ne.s32.totalorder %s555, %s557
      %p561 = scmp.eq.s32.totalorder %s117, 0
      %p562 = por %p560, %p561
      %p563 = scmp.ne.s32.totalorder %s555, %s557
      %p564 = scmp.eq.s32.totalorder %s122, 1
      %p565 = por %p563, %p564
      %p566 = scmp.ne.s32.totalorder %s557, %s558
      %p567 = scmp.eq.s32.totalorder %s122, 0
      %p568 = por %p566, %p567
      %p569 = scmp.ne.s32.totalorder %s557, %s558
      %p570 = scmp.eq.s32.totalorder %s123, 1
      %p571 = por %p569, %p570
      %p573 = scmp.ne.s32.totalorder %s558, %s572
      %p574 = scmp.eq.s32.totalorder %s123, 0
      %p575 = por %p573, %p574
      %s577 = sadd.s32 %s576, 1
      %p580 = scmp.eq.s32.totalorder %s117, 1
      %p581 = scmp.ne.s32.totalorder %s576, %s578
      %p582 = scmp.eq.s32.totalorder %s117, 0
      %p583 = por %p581, %p582
      %p584 = scmp.ne.s32.totalorder %s576, %s578
      %p585 = scmp.eq.s32.totalorder %s122, 1
      %p586 = por %p584, %p585
      %p587 = scmp.ne.s32.totalorder %s578, %s579
      %p588 = scmp.eq.s32.totalorder %s122, 0
      %p589 = por %p587, %p588
      %p590 = scmp.ne.s32.totalorder %s578, %s579
      %p591 = scmp.eq.s32.totalorder %s123, 1
      %p592 = por %p590, %p591
      %p594 = scmp.ne.s32.totalorder %s579, %s593
      %p595 = scmp.eq.s32.totalorder %s123, 0
      %p596 = por %p594, %p595
      %s598 = sadd.s32 %s597, 1
      %p601 = scmp.eq.s32.totalorder %s117, 1
      %p602 = scmp.ne.s32.totalorder %s597, %s599
      %p603 = scmp.eq.s32.totalorder %s117, 0
      %p604 = por %p602, %p603
      %p605 = scmp.ne.s32.totalorder %s597, %s599
      %p606 = scmp.eq.s32.totalorder %s122, 1
      %p607 = por %p605, %p606
      %p608 = scmp.ne.s32.totalorder %s599, %s600
      %p609 = scmp.eq.s32.totalorder %s122, 0
      %p610 = por %p608, %p609
      %p611 = scmp.ne.s32.totalorder %s599, %s600
      %p612 = scmp.eq.s32.totalorder %s123, 1
      %p613 = por %p611, %p612
      %p615 = scmp.ne.s32.totalorder %s600, %s614
      %p616 = scmp.eq.s32.totalorder %s123, 0
      %p617 = por %p615, %p616
      %s619 = sadd.s32 %s618, 1
      %p622 = scmp.eq.s32.totalorder %s117, 1
      %p623 = scmp.ne.s32.totalorder %s618, %s620
      %p624 = scmp.eq.s32.totalorder %s117, 0
      %p625 = por %p623, %p624
      %p626 = scmp.ne.s32.totalorder %s618, %s620
      %p627 = scmp.eq.s32.totalorder %s122, 1
      %p628 = por %p626, %p627
      %p629 = scmp.ne.s32.totalorder %s620, %s621
      %p630 = scmp.eq.s32.totalorder %s122, 0
      %p631 = por %p629, %p630
      %p632 = scmp.ne.s32.totalorder %s620, %s621
      %p633 = scmp.eq.s32.totalorder %s123, 1
      %p634 = por %p632, %p633
      %p636 = scmp.ne.s32.totalorder %s621, %s635
      %p637 = scmp.eq.s32.totalorder %s123, 0
      %p638 = por %p636, %p637
      %s640 = sadd.s32 %s639, 1
      %p643 = scmp.eq.s32.totalorder %s117, 1
      %p644 = scmp.ne.s32.totalorder %s639, %s641
      %p645 = scmp.eq.s32.totalorder %s117, 0
      %p646 = por %p644, %p645
      %p647 = scmp.ne.s32.totalorder %s639, %s641
      %p648 = scmp.eq.s32.totalorder %s122, 1
      %p649 = por %p647, %p648
      %p650 = scmp.ne.s32.totalorder %s641, %s642
      %p651 = scmp.eq.s32.totalorder %s122, 0
      %p652 = por %p650, %p651
      %p653 = scmp.ne.s32.totalorder %s641, %s642
      %p654 = scmp.eq.s32.totalorder %s123, 1
      %p655 = por %p653, %p654
      %p657 = scmp.ne.s32.totalorder %s642, %s656
      %p658 = scmp.eq.s32.totalorder %s123, 0
      %p659 = por %p657, %p658
      %s661 = sadd.s32 %s660, 1
      %p664 = scmp.eq.s32.totalorder %s117, 1
      %p665 = scmp.ne.s32.totalorder %s660, %s662
      %p666 = scmp.eq.s32.totalorder %s117, 0
      %p667 = por %p665, %p666
      %p668 = scmp.ne.s32.totalorder %s660, %s662
      %p669 = scmp.eq.s32.totalorder %s122, 1
      %p670 = por %p668, %p669
      %p671 = scmp.ne.s32.totalorder %s662, %s663
      %p672 = scmp.eq.s32.totalorder %s122, 0
      %p673 = por %p671, %p672
      %p674 = scmp.ne.s32.totalorder %s662, %s663
      %p675 = scmp.eq.s32.totalorder %s123, 1
      %p676 = por %p674, %p675
      %p678 = scmp.ne.s32.totalorder %s663, %s677
      %p679 = scmp.eq.s32.totalorder %s123, 0
      %p680 = por %p678, %p679
      %s682 = sadd.s32 %s681, 1
      %p685 = scmp.eq.s32.totalorder %s117, 1
      %p686 = scmp.ne.s32.totalorder %s681, %s683
      %p687 = scmp.eq.s32.totalorder %s117, 0
      %p688 = por %p686, %p687
      %p689 = scmp.ne.s32.totalorder %s681, %s683
      %p690 = scmp.eq.s32.totalorder %s122, 1
      %p691 = por %p689, %p690
      %p692 = scmp.ne.s32.totalorder %s683, %s684
      %p693 = scmp.eq.s32.totalorder %s122, 0
      %p694 = por %p692, %p693
      %p695 = scmp.ne.s32.totalorder %s683, %s684
      %p696 = scmp.eq.s32.totalorder %s123, 1
      %p697 = por %p695, %p696
      %p699 = scmp.ne.s32.totalorder %s684, %s698
      %p700 = scmp.eq.s32.totalorder %s123, 0
      %p701 = por %p699, %p700
      %s703 = sadd.s32 %s702, 1
      %p706 = scmp.eq.s32.totalorder %s117, 1
      %p707 = scmp.ne.s32.totalorder %s702, %s704
      %p708 = scmp.eq.s32.totalorder %s117, 0
      %p709 = por %p707, %p708
      %p710 = scmp.ne.s32.totalorder %s702, %s704
      %p711 = scmp.eq.s32.totalorder %s122, 1
      %p712 = por %p710, %p711
      %p713 = scmp.ne.s32.totalorder %s704, %s705
      %p714 = scmp.eq.s32.totalorder %s122, 0
      %p715 = por %p713, %p714
      %p716 = scmp.ne.s32.totalorder %s704, %s705
      %p717 = scmp.eq.s32.totalorder %s123, 1
      %p718 = por %p716, %p717
      %p720 = scmp.ne.s32.totalorder %s705, %s719
      %p721 = scmp.eq.s32.totalorder %s123, 0
      %p722 = por %p720, %p721
      %s724 = sadd.s32 %s723, 1
      %p727 = scmp.eq.s32.totalorder %s117, 1
      %p728 = scmp.ne.s32.totalorder %s723, %s725
      %p729 = scmp.eq.s32.totalorder %s117, 0
      %p730 = por %p728, %p729
      %p731 = scmp.ne.s32.totalorder %s723, %s725
      %p732 = scmp.eq.s32.totalorder %s122, 1
      %p733 = por %p731, %p732
      %p734 = scmp.ne.s32.totalorder %s725, %s726
      %p735 = scmp.eq.s32.totalorder %s122, 0
      %p736 = por %p734, %p735
      %p737 = scmp.ne.s32.totalorder %s725, %s726
      %p738 = scmp.eq.s32.totalorder %s123, 1
      %p739 = por %p737, %p738
      %p741 = scmp.ne.s32.totalorder %s726, %s740
      %p742 = scmp.eq.s32.totalorder %s123, 0
      %p743 = por %p741, %p742
      %s745 = sadd.s32 %s744, 1
      %p748 = scmp.eq.s32.totalorder %s117, 1
      %p749 = scmp.ne.s32.totalorder %s744, %s746
      %p750 = scmp.eq.s32.totalorder %s117, 0
      %p751 = por %p749, %p750
      %p752 = scmp.ne.s32.totalorder %s744, %s746
      %p753 = scmp.eq.s32.totalorder %s122, 1
      %p754 = por %p752, %p753
      %p755 = scmp.ne.s32.totalorder %s746, %s747
      %p756 = scmp.eq.s32.totalorder %s122, 0
      %p757 = por %p755, %p756
      %p758 = scmp.ne.s32.totalorder %s746, %s747
      %p759 = scmp.eq.s32.totalorder %s123, 1
      %p760 = por %p758, %p759
      %p762 = scmp.ne.s32.totalorder %s747, %s761
      %p763 = scmp.eq.s32.totalorder %s123, 0
      %p764 = por %p762, %p763
      %s766 = sadd.s32 %s765, 1
      %p769 = scmp.eq.s32.totalorder %s117, 1
      %p770 = scmp.ne.s32.totalorder %s765, %s767
      %p771 = scmp.eq.s32.totalorder %s117, 0
      %p772 = por %p770, %p771
      %p773 = scmp.ne.s32.totalorder %s765, %s767
      %p774 = scmp.eq.s32.totalorder %s122, 1
      %p775 = por %p773, %p774
      %p776 = scmp.ne.s32.totalorder %s767, %s768
      %p777 = scmp.eq.s32.totalorder %s122, 0
      %p778 = por %p776, %p777
      %p779 = scmp.ne.s32.totalorder %s767, %s768
      %p780 = scmp.eq.s32.totalorder %s123, 1
      %p781 = por %p779, %p780
      %p783 = scmp.ne.s32.totalorder %s768, %s782
      %p784 = scmp.eq.s32.totalorder %s123, 0
      %p785 = por %p783, %p784
      %s787 = sadd.s32 %s786, 1
      %p790 = scmp.eq.s32.totalorder %s117, 1
      %p791 = scmp.ne.s32.totalorder %s786, %s788
      %p792 = scmp.eq.s32.totalorder %s117, 0
      %p793 = por %p791, %p792
      %p794 = scmp.ne.s32.totalorder %s786, %s788
      %p795 = scmp.eq.s32.totalorder %s122, 1
      %p796 = por %p794, %p795
      %p797 = scmp.ne.s32.totalorder %s788, %s789
      %p798 = scmp.eq.s32.totalorder %s122, 0
      %p799 = por %p797, %p798
      %p800 = scmp.ne.s32.totalorder %s788, %s789
      %p801 = scmp.eq.s32.totalorder %s123, 1
      %p802 = por %p800, %p801
      %p804 = scmp.ne.s32.totalorder %s789, %s803
      %p805 = scmp.eq.s32.totalorder %s123, 0
      %p806 = por %p804, %p805
      %s808 = sadd.s32 %s807, 1
      %p811 = scmp.eq.s32.totalorder %s117, 1
      %p812 = scmp.ne.s32.totalorder %s807, %s809
      %p813 = scmp.eq.s32.totalorder %s117, 0
      %p814 = por %p812, %p813
      %p815 = scmp.ne.s32.totalorder %s807, %s809
      %p816 = scmp.eq.s32.totalorder %s122, 1
      %p817 = por %p815, %p816
      %p818 = scmp.ne.s32.totalorder %s809, %s810
      %p819 = scmp.eq.s32.totalorder %s122, 0
      %p820 = por %p818, %p819
      %p821 = scmp.ne.s32.totalorder %s809, %s810
      %p822 = scmp.eq.s32.totalorder %s123, 1
      %p823 = por %p821, %p822
      %p825 = scmp.ne.s32.totalorder %s810, %s824
      %p826 = scmp.eq.s32.totalorder %s123, 0
      %p827 = por %p825, %p826
      %s829 = sadd.s32 %s828, 1
      %p832 = scmp.eq.s32.totalorder %s117, 1
      %p833 = scmp.ne.s32.totalorder %s828, %s830
      %p834 = scmp.eq.s32.totalorder %s117, 0
      %p835 = por %p833, %p834
      %p836 = scmp.ne.s32.totalorder %s828, %s830
      %p837 = scmp.eq.s32.totalorder %s122, 1
      %p838 = por %p836, %p837
      %p839 = scmp.ne.s32.totalorder %s830, %s831
      %p840 = scmp.eq.s32.totalorder %s122, 0
      %p841 = por %p839, %p840
      %p842 = scmp.ne.s32.totalorder %s830, %s831
      %p843 = scmp.eq.s32.totalorder %s123, 1
      %p844 = por %p842, %p843
      %p846 = scmp.ne.s32.totalorder %s831, %s845
      %p847 = scmp.eq.s32.totalorder %s123, 0
      %p848 = por %p846, %p847
      %s850 = sadd.s32 %s849, 1
      %p853 = scmp.eq.s32.totalorder %s117, 1
      %p854 = scmp.ne.s32.totalorder %s849, %s851
      %p855 = scmp.eq.s32.totalorder %s117, 0
      %p856 = por %p854, %p855
      %p857 = scmp.ne.s32.totalorder %s849, %s851
      %p858 = scmp.eq.s32.totalorder %s122, 1
      %p859 = por %p857, %p858
      %p860 = scmp.ne.s32.totalorder %s851, %s852
      %p861 = scmp.eq.s32.totalorder %s122, 0
      %p862 = por %p860, %p861
      %p863 = scmp.ne.s32.totalorder %s851, %s852
      %p864 = scmp.eq.s32.totalorder %s123, 1
      %p865 = por %p863, %p864
      %p867 = scmp.ne.s32.totalorder %s852, %s866
      %p868 = scmp.eq.s32.totalorder %s123, 0
      %p869 = por %p867, %p868
      %s871 = sadd.s32 %s870, 1
      %p874 = scmp.eq.s32.totalorder %s117, 1
      %p875 = scmp.ne.s32.totalorder %s870, %s872
      %p876 = scmp.eq.s32.totalorder %s117, 0
      %p877 = por %p875, %p876
      %p878 = scmp.ne.s32.totalorder %s870, %s872
      %p879 = scmp.eq.s32.totalorder %s122, 1
      %p880 = por %p878, %p879
      %p881 = scmp.ne.s32.totalorder %s872, %s873
      %p882 = scmp.eq.s32.totalorder %s122, 0
      %p883 = por %p881, %p882
      %p884 = scmp.ne.s32.totalorder %s872, %s873
      %p885 = scmp.eq.s32.totalorder %s123, 1
      %p886 = por %p884, %p885
      %p888 = scmp.ne.s32.totalorder %s873, %s887
      %p889 = scmp.eq.s32.totalorder %s123, 0
      %p890 = por %p888, %p889
      %s892 = sadd.s32 %s891, 1
      %p895 = scmp.eq.s32.totalorder %s117, 1
      %p896 = scmp.ne.s32.totalorder %s891, %s893
      %p897 = scmp.eq.s32.totalorder %s117, 0
      %p898 = por %p896, %p897
      %p899 = scmp.ne.s32.totalorder %s891, %s893
      %p900 = scmp.eq.s32.totalorder %s122, 1
      %p901 = por %p899, %p900
      %p902 = scmp.ne.s32.totalorder %s893, %s894
      %p903 = scmp.eq.s32.totalorder %s122, 0
      %p904 = por %p902, %p903
      %p905 = scmp.ne.s32.totalorder %s893, %s894
      %p906 = scmp.eq.s32.totalorder %s123, 1
      %p907 = por %p905, %p906
      %p909 = scmp.ne.s32.totalorder %s894, %s908
      %p910 = scmp.eq.s32.totalorder %s123, 0
      %p911 = por %p909, %p910
      %s913 = sadd.s32 %s912, 1
      %p916 = scmp.eq.s32.totalorder %s117, 1
      %p917 = scmp.ne.s32.totalorder %s912, %s914
      %p918 = scmp.eq.s32.totalorder %s117, 0
      %p919 = por %p917, %p918
      %p920 = scmp.ne.s32.totalorder %s912, %s914
      %p921 = scmp.eq.s32.totalorder %s122, 1
      %p922 = por %p920, %p921
      %p923 = scmp.ne.s32.totalorder %s914, %s915
      %p924 = scmp.eq.s32.totalorder %s122, 0
      %p925 = por %p923, %p924
      %p926 = scmp.ne.s32.totalorder %s914, %s915
      %p927 = scmp.eq.s32.totalorder %s123, 1
      %p928 = por %p926, %p927
      %p930 = scmp.ne.s32.totalorder %s915, %s929
      %p931 = scmp.eq.s32.totalorder %s123, 0
      %p932 = por %p930, %p931
      %s934 = sadd.s32 %s933, 1
      %p937 = scmp.eq.s32.totalorder %s117, 1
      %p938 = scmp.ne.s32.totalorder %s933, %s935
      %p939 = scmp.eq.s32.totalorder %s117, 0
      %p940 = por %p938, %p939
      %p941 = scmp.ne.s32.totalorder %s933, %s935
      %p942 = scmp.eq.s32.totalorder %s122, 1
      %p943 = por %p941, %p942
      %p944 = scmp.ne.s32.totalorder %s935, %s936
      %p945 = scmp.eq.s32.totalorder %s122, 0
      %p946 = por %p944, %p945
      %p947 = scmp.ne.s32.totalorder %s935, %s936
      %p948 = scmp.eq.s32.totalorder %s123, 1
      %p949 = por %p947, %p948
      %p951 = scmp.ne.s32.totalorder %s936, %s950
      %p952 = scmp.eq.s32.totalorder %s123, 0
      %p953 = por %p951, %p952
      %s955 = sadd.s32 %s954, 1
      %p958 = scmp.eq.s32.totalorder %s117, 1
      %p959 = scmp.ne.s32.totalorder %s954, %s956
      %p960 = scmp.eq.s32.totalorder %s117, 0
      %p961 = por %p959, %p960
      %p962 = scmp.ne.s32.totalorder %s954, %s956
      %p963 = scmp.eq.s32.totalorder %s122, 1
      %p964 = por %p962, %p963
      %p965 = scmp.ne.s32.totalorder %s956, %s957
      %p966 = scmp.eq.s32.totalorder %s122, 0
      %p967 = por %p965, %p966
      %p968 = scmp.ne.s32.totalorder %s956, %s957
      %p969 = scmp.eq.s32.totalorder %s123, 1
      %p970 = por %p968, %p969
      %p972 = scmp.ne.s32.totalorder %s957, %s971
      %p973 = scmp.eq.s32.totalorder %s123, 0
      %p974 = por %p972, %p973
      %s976 = sadd.s32 %s975, 1
      %p979 = scmp.eq.s32.totalorder %s117, 1
      %p980 = scmp.ne.s32.totalorder %s975, %s977
      %p981 = scmp.eq.s32.totalorder %s117, 0
      %p982 = por %p980, %p981
      %p983 = scmp.ne.s32.totalorder %s975, %s977
      %p984 = scmp.eq.s32.totalorder %s122, 1
      %p985 = por %p983, %p984
      %p986 = scmp.ne.s32.totalorder %s977, %s978
      %p987 = scmp.eq.s32.totalorder %s122, 0
      %p988 = por %p986, %p987
      %p989 = scmp.ne.s32.totalorder %s977, %s978
      %p990 = scmp.eq.s32.totalorder %s123, 1
      %p991 = por %p989, %p990
      %p993 = scmp.ne.s32.totalorder %s978, %s992
      %p994 = scmp.eq.s32.totalorder %s123, 0
      %p995 = por %p993, %p994
      %s997 = sadd.s32 %s996, 1
      %p1000 = scmp.eq.s32.totalorder %s117, 1
      %p1001 = scmp.ne.s32.totalorder %s996, %s998
      %p1002 = scmp.eq.s32.totalorder %s117, 0
      %p1003 = por %p1001, %p1002
      %p1004 = scmp.ne.s32.totalorder %s996, %s998
      %p1005 = scmp.eq.s32.totalorder %s122, 1
      %p1006 = por %p1004, %p1005
      %p1007 = scmp.ne.s32.totalorder %s998, %s999
      %p1008 = scmp.eq.s32.totalorder %s122, 0
      %p1009 = por %p1007, %p1008
      %p1010 = scmp.ne.s32.totalorder %s998, %s999
      %p1011 = scmp.eq.s32.totalorder %s123, 1
      %p1012 = por %p1010, %p1011
      %p1014 = scmp.ne.s32.totalorder %s999, %s1013
      %p1015 = scmp.eq.s32.totalorder %s123, 0
      %p1016 = por %p1014, %p1015
      %s1018 = sadd.s32 %s1017, 1
      %p1021 = scmp.eq.s32.totalorder %s117, 1
      %p1022 = scmp.ne.s32.totalorder %s1017, %s1019
      %p1023 = scmp.eq.s32.totalorder %s117, 0
      %p1024 = por %p1022, %p1023
      %p1025 = scmp.ne.s32.totalorder %s1017, %s1019
      %p1026 = scmp.eq.s32.totalorder %s122, 1
      %p1027 = por %p1025, %p1026
      %p1028 = scmp.ne.s32.totalorder %s1019, %s1020
      %p1029 = scmp.eq.s32.totalorder %s122, 0
      %p1030 = por %p1028, %p1029
      %p1031 = scmp.ne.s32.totalorder %s1019, %s1020
      %p1032 = scmp.eq.s32.totalorder %s123, 1
      %p1033 = por %p1031, %p1032
      %p1035 = scmp.ne.s32.totalorder %s1020, %s1034
      %p1036 = scmp.eq.s32.totalorder %s123, 0
      %p1037 = por %p1035, %p1036
      %s1039 = sadd.s32 %s1038, 1
      %p1042 = scmp.eq.s32.totalorder %s117, 1
      %p1043 = scmp.ne.s32.totalorder %s1038, %s1040
      %p1044 = scmp.eq.s32.totalorder %s117, 0
      %p1045 = por %p1043, %p1044
      %p1046 = scmp.ne.s32.totalorder %s1038, %s1040
      %p1047 = scmp.eq.s32.totalorder %s122, 1
      %p1048 = por %p1046, %p1047
      %p1049 = scmp.ne.s32.totalorder %s1040, %s1041
      %p1050 = scmp.eq.s32.totalorder %s122, 0
      %p1051 = por %p1049, %p1050
      %p1052 = scmp.ne.s32.totalorder %s1040, %s1041
      %p1053 = scmp.eq.s32.totalorder %s123, 1
      %p1054 = por %p1052, %p1053
      %p1056 = scmp.ne.s32.totalorder %s1041, %s1055
      %p1057 = scmp.eq.s32.totalorder %s123, 0
      %p1058 = por %p1056, %p1057
      %s1059 = ssub.s32 %s117, %s124
      %p1060 = scmp.eq.s32.totalorder %s1059, 0
      %s1062 = sadd.s32 %s1061, 1
      %s1063 = scalar_select %p1060, %s1061, %s1062
      %p1066 = pneg %p1060
      %p1067 = scmp.eq.s32.totalorder %s117, 1
      %p1068 = por %p1066, %p1067
      %p1069 = scmp.ne.s32.totalorder %s1061, %s1064
      %p1070 = scmp.eq.s32.totalorder %s117, 0
      %p1071 = por %p1069, %p1070
      %p1072 = scmp.ne.s32.totalorder %s1061, %s1064
      %p1073 = scmp.eq.s32.totalorder %s122, 1
      %p1074 = por %p1072, %p1073
      %p1075 = scmp.ne.s32.totalorder %s1064, %s1065
      %p1076 = scmp.eq.s32.totalorder %s122, 0
      %p1077 = por %p1075, %p1076
      %p1078 = scmp.ne.s32.totalorder %s1064, %s1065
      %p1079 = scmp.eq.s32.totalorder %s123, 1
      %p1080 = por %p1078, %p1079
      %p1082 = scmp.ne.s32.totalorder %s1065, %s1081
      %p1083 = scmp.eq.s32.totalorder %s123, 0
      %p1084 = por %p1082, %p1083
      %p1085 = scmp.le.s32.totalorder 1, %s117
      %p1086 = scmp.lt.s32.totalorder %s117, 3
      %p1087 = pnand %p1085, %p1086
      %p1088 = pneg %p1087
      // Predicated region
      $region9: #{_lambda_.1} parent=5 // pred_check
        _
      $region10: #{_lambda_.1} parent=5 // pred_check_branch
        %1090 = sbr.rel (%p1087) target = $region12
      $region11: #{_lambda_.1} parent=5 // pred_region
        %s1091 = ssub.s32 %s117, 1
        // Predicated region
        $region13: #{_lambda_.1} parent=11 // pred_check
          %p1092 = pneg %p190
        $region14: #{_lambda_.1} parent=11 // pred_check_branch
          %1094 = sbr.rel (%p1092) target = $region16
        $region15: #{_lambda_.1} parent=11 // pred_region
          _
        $region16: #{_lambda_.1} parent=11 // pred_fallthru
          _
        // Predicated region
        $region17: #{_lambda_.1} parent=11 // pred_check
          %p1095 = pneg %p211
        $region18: #{_lambda_.1} parent=11 // pred_check_branch
          %1097 = sbr.rel (%p1095) target = $region20
        $region19: #{_lambda_.1} parent=11 // pred_region
          %1099 = vsyncadd [#allocation3], 0
          %s1101 = sshll.u32 %s7, 4
          %s1102 = int_to_ptr.hbm [resolvable:$true] %s1101
          %s1103 = sshll.u32 [#allocation2], 4
          %s1104 = int_to_ptr.vmem [resolvable:$true] %s1103
          %1106 = dma.hbm_to_vmem [thread:$0]  %s1102, 16, %s1104, [#allocation3]
        $region20: #{_lambda_.1} parent=11 // pred_fallthru
          _
        // Predicated region
        $region21: #{_lambda_.1} parent=11 // pred_check
          %p1107 = pneg %p232
        $region22: #{_lambda_.1} parent=11 // pred_check_branch
          %1109 = sbr.rel (%p1107) target = $region24
        $region23: #{_lambda_.1} parent=11 // pred_region
          %1111 = vsyncadd [#allocation6], 0
          %s1112 = sshll.u32 %s9, 4
          %s1113 = int_to_ptr.hbm [resolvable:$true] %s1112
          %s1114 = sshll.u32 [#allocation5], 4
          %s1115 = int_to_ptr.vmem [resolvable:$true] %s1114
          %1120 = dma.hbm_to_vmem [thread:$0]  %s1113, 1920, %s1115, [#allocation6], 64, 64, 4
        $region24: #{_lambda_.1} parent=11 // pred_fallthru
          _
        // Predicated region
        $region25: #{_lambda_.1} parent=11 // pred_check
          %p1121 = pneg %p253
        $region26: #{_lambda_.1} parent=11 // pred_check_branch
          %1123 = sbr.rel (%p1121) target = $region28
        $region27: #{_lambda_.1} parent=11 // pred_region
          %1125 = vsyncadd [#allocation6], 0
          %s1127 = sshll.u32 %s11, 4
          %s1128 = int_to_ptr.hbm [resolvable:$true] %s1127
          %s1129 = sshll.u32 [#allocation7], 4
          %s1130 = int_to_ptr.vmem [resolvable:$true] %s1129
          %1132 = dma.hbm_to_vmem [thread:$0]  %s1128, 16, %s1130, [#allocation6]
        $region28: #{_lambda_.1} parent=11 // pred_fallthru
          _
        // Predicated region
        $region29: #{_lambda_.1} parent=11 // pred_check
          %p1133 = pneg %p274
        $region30: #{_lambda_.1} parent=11 // pred_check_branch
          %1135 = sbr.rel (%p1133) target = $region32
        $region31: #{_lambda_.1} parent=11 // pred_region
          %1137 = vsyncadd [#allocation9], 0
          %s1138 = sshll.u32 %s13, 4
          %s1139 = int_to_ptr.hbm [resolvable:$true] %s1138
          %s1140 = sshll.u32 [#allocation8], 4
          %s1141 = int_to_ptr.vmem [resolvable:$true] %s1140
          %1146 = dma.hbm_to_vmem [thread:$0]  %s1139, 1920, %s1141, [#allocation9], 64, 64, 4
        $region32: #{_lambda_.1} parent=11 // pred_fallthru
          _
        // Predicated region
        $region33: #{_lambda_.1} parent=11 // pred_check
          %p1147 = pneg %p295
        $region34: #{_lambda_.1} parent=11 // pred_check_branch
          %1149 = sbr.rel (%p1147) target = $region36
        $region35: #{_lambda_.1} parent=11 // pred_region
          %1151 = vsyncadd [#allocation9], 0
          %s1153 = sshll.u32 %s15, 4
          %s1154 = int_to_ptr.hbm [resolvable:$true] %s1153
          %s1155 = sshll.u32 [#allocation10], 4
          %s1156 = int_to_ptr.vmem [resolvable:$true] %s1155
          %1158 = dma.hbm_to_vmem [thread:$0]  %s1154, 16, %s1156, [#allocation9]
        $region36: #{_lambda_.1} parent=11 // pred_fallthru
          _
        // Predicated region
        $region37: #{_lambda_.1} parent=11 // pred_check
          %p1159 = pneg %p316
        $region38: #{_lambda_.1} parent=11 // pred_check_branch
          %1161 = sbr.rel (%p1159) target = $region40
        $region39: #{_lambda_.1} parent=11 // pred_region
          %1163 = vsyncadd [#allocation12], 0
          %s1164 = sshll.u32 %s17, 4
          %s1165 = int_to_ptr.hbm [resolvable:$true] %s1164
          %s1166 = sshll.u32 [#allocation11], 4
          %s1167 = int_to_ptr.vmem [resolvable:$true] %s1166
          %1172 = dma.hbm_to_vmem [thread:$0]  %s1165, 1920, %s1167, [#allocation12], 64, 64, 4
        $region40: #{_lambda_.1} parent=11 // pred_fallthru
          _
        // Predicated region
        $region41: #{_lambda_.1} parent=11 // pred_check
          %p1173 = pneg %p337
        $region42: #{_lambda_.1} parent=11 // pred_check_branch
          %1175 = sbr.rel (%p1173) target = $region44
        $region43: #{_lambda_.1} parent=11 // pred_region
          %1177 = vsyncadd [#allocation12], 0
          %s1179 = sshll.u32 %s19, 4
          %s1180 = int_to_ptr.hbm [resolvable:$true] %s1179
          %s1181 = sshll.u32 [#allocation13], 4
          %s1182 = int_to_ptr.vmem [resolvable:$true] %s1181
          %1184 = dma.hbm_to_vmem [thread:$0]  %s1180, 16, %s1182, [#allocation12]
        $region44: #{_lambda_.1} parent=11 // pred_fallthru
          _
        // Predicated region
        $region45: #{_lambda_.1} parent=11 // pred_check
          %p1185 = pneg %p358
        $region46: #{_lambda_.1} parent=11 // pred_check_branch
          %1187 = sbr.rel (%p1185) target = $region48
        $region47: #{_lambda_.1} parent=11 // pred_region
          %1189 = vsyncadd [#allocation15], 0
          %s1190 = sshll.u32 %s21, 4
          %s1191 = int_to_ptr.hbm [resolvable:$true] %s1190
          %s1192 = sshll.u32 [#allocation14], 4
          %s1193 = int_to_ptr.vmem [resolvable:$true] %s1192
          %1198 = dma.hbm_to_vmem [thread:$0]  %s1191, 1920, %s1193, [#allocation15], 64, 64, 4
        $region48: #{_lambda_.1} parent=11 // pred_fallthru
          _
        // Predicated region
        $region49: #{_lambda_.1} parent=11 // pred_check
          %p1199 = pneg %p379
        $region50: #{_lambda_.1} parent=11 // pred_check_branch
          %1201 = sbr.rel (%p1199) target = $region52
        $region51: #{_lambda_.1} parent=11 // pred_region
          %1203 = vsyncadd [#allocation15], 0
          %s1205 = sshll.u32 %s23, 4
          %s1206 = int_to_ptr.hbm [resolvable:$true] %s1205
          %s1207 = sshll.u32 [#allocation16], 4
          %s1208 = int_to_ptr.vmem [resolvable:$true] %s1207
          %1210 = dma.hbm_to_vmem [thread:$0]  %s1206, 16, %s1208, [#allocation15]
        $region52: #{_lambda_.1} parent=11 // pred_fallthru
          _
        // Predicated region
        $region53: #{_lambda_.1} parent=11 // pred_check
          %p1211 = pneg %p400
        $region54: #{_lambda_.1} parent=11 // pred_check_branch
          %1213 = sbr.rel (%p1211) target = $region56
        $region55: #{_lambda_.1} parent=11 // pred_region
          %1215 = vsyncadd [#allocation18], 0
          %s1216 = sshll.u32 %s25, 4
          %s1217 = int_to_ptr.hbm [resolvable:$true] %s1216
          %s1218 = sshll.u32 [#allocation17], 4
          %s1219 = int_to_ptr.vmem [resolvable:$true] %s1218
          %1224 = dma.hbm_to_vmem [thread:$0]  %s1217, 1920, %s1219, [#allocation18], 64, 64, 4
        $region56: #{_lambda_.1} parent=11 // pred_fallthru
          _
        // Predicated region
        $region57: #{_lambda_.1} parent=11 // pred_check
          %p1225 = pneg %p421
        $region58: #{_lambda_.1} parent=11 // pred_check_branch
          %1227 = sbr.rel (%p1225) target = $region60
        $region59: #{_lambda_.1} parent=11 // pred_region
          %1229 = vsyncadd [#allocation18], 0
          %s1231 = sshll.u32 %s27, 4
          %s1232 = int_to_ptr.hbm [resolvable:$true] %s1231
          %s1233 = sshll.u32 [#allocation19], 4
          %s1234 = int_to_ptr.vmem [resolvable:$true] %s1233
          %1236 = dma.hbm_to_vmem [thread:$0]  %s1232, 16, %s1234, [#allocation18]
        $region60: #{_lambda_.1} parent=11 // pred_fallthru
          _
        // Predicated region
        $region61: #{_lambda_.1} parent=11 // pred_check
          %p1237 = pneg %p442
        $region62: #{_lambda_.1} parent=11 // pred_check_branch
          %1239 = sbr.rel (%p1237) target = $region64
        $region63: #{_lambda_.1} parent=11 // pred_region
          %1241 = vsyncadd [#allocation21], 0
          %s1242 = sshll.u32 %s29, 4
          %s1243 = int_to_ptr.hbm [resolvable:$true] %s1242
          %s1244 = sshll.u32 [#allocation20], 4
          %s1245 = int_to_ptr.vmem [resolvable:$true] %s1244
          %1250 = dma.hbm_to_vmem [thread:$0]  %s1243, 2304, %s1245, [#allocation21], 64, 64, 4
        $region64: #{_lambda_.1} parent=11 // pred_fallthru
          _
        // Predicated region
        $region65: #{_lambda_.1} parent=11 // pred_check
          %p1251 = pneg %p463
        $region66: #{_lambda_.1} parent=11 // pred_check_branch
          %1253 = sbr.rel (%p1251) target = $region68
        $region67: #{_lambda_.1} parent=11 // pred_region
          %1255 = vsyncadd [#allocation21], 0
          %s1257 = sshll.u32 %s31, 4
          %s1258 = int_to_ptr.hbm [resolvable:$true] %s1257
          %s1259 = sshll.u32 [#allocation22], 4
          %s1260 = int_to_ptr.vmem [resolvable:$true] %s1259
          %1262 = dma.hbm_to_vmem [thread:$0]  %s1258, 16, %s1260, [#allocation21]
        $region68: #{_lambda_.1} parent=11 // pred_fallthru
          _
        // Predicated region
        $region69: #{_lambda_.1} parent=11 // pred_check
          %p1263 = pneg %p484
        $region70: #{_lambda_.1} parent=11 // pred_check_branch
          %1265 = sbr.rel (%p1263) target = $region72
        $region71: #{_lambda_.1} parent=11 // pred_region
          %1267 = vsyncadd [#allocation24], 0
          %s1268 = sshll.u32 %s33, 4
          %s1269 = int_to_ptr.hbm [resolvable:$true] %s1268
          %s1270 = sshll.u32 [#allocation23], 4
          %s1271 = int_to_ptr.vmem [resolvable:$true] %s1270
          %1276 = dma.hbm_to_vmem [thread:$0]  %s1269, 512, %s1271, [#allocation24], 64, 64, 4
        $region72: #{_lambda_.1} parent=11 // pred_fallthru
          _
        // Predicated region
        $region73: #{_lambda_.1} parent=11 // pred_check
          %p1277 = pneg %p505
        $region74: #{_lambda_.1} parent=11 // pred_check_branch
          %1279 = sbr.rel (%p1277) target = $region76
        $region75: #{_lambda_.1} parent=11 // pred_region
          %1281 = vsyncadd [#allocation24], 0
          %s1283 = sshll.u32 %s35, 4
          %s1284 = int_to_ptr.hbm [resolvable:$true] %s1283
          %s1285 = sshll.u32 [#allocation25], 4
          %s1286 = int_to_ptr.vmem [resolvable:$true] %s1285
          %1288 = dma.hbm_to_vmem [thread:$0]  %s1284, 16, %s1286, [#allocation24]
        $region76: #{_lambda_.1} parent=11 // pred_fallthru
          _
        // Predicated region
        $region77: #{_lambda_.1} parent=11 // pred_check
          %p1289 = pneg %p526
        $region78: #{_lambda_.1} parent=11 // pred_check_branch
          %1291 = sbr.rel (%p1289) target = $region80
        $region79: #{_lambda_.1} parent=11 // pred_region
          %1293 = vsyncadd [#allocation27], 0
          %s1294 = sshll.u32 %s37, 4
          %s1295 = int_to_ptr.hbm [resolvable:$true] %s1294
          %s1296 = sshll.u32 [#allocation26], 4
          %s1297 = int_to_ptr.vmem [resolvable:$true] %s1296
          %1302 = dma.hbm_to_vmem [thread:$0]  %s1295, 2304, %s1297, [#allocation27], 64, 64, 4
        $region80: #{_lambda_.1} parent=11 // pred_fallthru
          _
        // Predicated region
        $region81: #{_lambda_.1} parent=11 // pred_check
          %p1303 = pneg %p547
        $region82: #{_lambda_.1} parent=11 // pred_check_branch
          %1305 = sbr.rel (%p1303) target = $region84
        $region83: #{_lambda_.1} parent=11 // pred_region
          %1307 = vsyncadd [#allocation27], 0
          %s1309 = sshll.u32 %s39, 4
          %s1310 = int_to_ptr.hbm [resolvable:$true] %s1309
          %s1311 = sshll.u32 [#allocation28], 4
          %s1312 = int_to_ptr.vmem [resolvable:$true] %s1311
          %1314 = dma.hbm_to_vmem [thread:$0]  %s1310, 16, %s1312, [#allocation27]
        $region84: #{_lambda_.1} parent=11 // pred_fallthru
          _
        // Predicated region
        $region85: #{_lambda_.1} parent=11 // pred_check
          %p1315 = pneg %p568
        $region86: #{_lambda_.1} parent=11 // pred_check_branch
          %1317 = sbr.rel (%p1315) target = $region88
        $region87: #{_lambda_.1} parent=11 // pred_region
          %1319 = vsyncadd [#allocation30], 0
          %s1320 = sshll.u32 %s41, 4
          %s1321 = int_to_ptr.hbm [resolvable:$true] %s1320
          %s1322 = sshll.u32 [#allocation29], 4
          %s1323 = int_to_ptr.vmem [resolvable:$true] %s1322
          %1328 = dma.hbm_to_vmem [thread:$0]  %s1321, 2304, %s1323, [#allocation30], 64, 64, 4
        $region88: #{_lambda_.1} parent=11 // pred_fallthru
          _
        // Predicated region
        $region89: #{_lambda_.1} parent=11 // pred_check
          %p1329 = pneg %p589
        $region90: #{_lambda_.1} parent=11 // pred_check_branch
          %1331 = sbr.rel (%p1329) target = $region92
        $region91: #{_lambda_.1} parent=11 // pred_region
          %1333 = vsyncadd [#allocation30], 0
          %s1335 = sshll.u32 %s43, 4
          %s1336 = int_to_ptr.hbm [resolvable:$true] %s1335
          %s1337 = sshll.u32 [#allocation31], 4
          %s1338 = int_to_ptr.vmem [resolvable:$true] %s1337
          %1340 = dma.hbm_to_vmem [thread:$0]  %s1336, 16, %s1338, [#allocation30]
        $region92: #{_lambda_.1} parent=11 // pred_fallthru
          _
        // Predicated region
        $region93: #{_lambda_.1} parent=11 // pred_check
          %p1341 = pneg %p610
        $region94: #{_lambda_.1} parent=11 // pred_check_branch
          %1343 = sbr.rel (%p1341) target = $region96
        $region95: #{_lambda_.1} parent=11 // pred_region
          %1345 = vsyncadd [#allocation33], 0
          %s1346 = sshll.u32 %s45, 4
          %s1347 = int_to_ptr.hbm [resolvable:$true] %s1346
          %s1348 = sshll.u32 [#allocation32], 4
          %s1349 = int_to_ptr.vmem [resolvable:$true] %s1348
          %1354 = dma.hbm_to_vmem [thread:$0]  %s1347, 2304, %s1349, [#allocation33], 64, 64, 4
        $region96: #{_lambda_.1} parent=11 // pred_fallthru
          _
        // Predicated region
        $region97: #{_lambda_.1} parent=11 // pred_check
          %p1355 = pneg %p631
        $region98: #{_lambda_.1} parent=11 // pred_check_branch
          %1357 = sbr.rel (%p1355) target = $region100
        $region99: #{_lambda_.1} parent=11 // pred_region
          %1359 = vsyncadd [#allocation33], 0
          %s1361 = sshll.u32 %s47, 4
          %s1362 = int_to_ptr.hbm [resolvable:$true] %s1361
          %s1363 = sshll.u32 [#allocation34], 4
          %s1364 = int_to_ptr.vmem [resolvable:$true] %s1363
          %1366 = dma.hbm_to_vmem [thread:$0]  %s1362, 16, %s1364, [#allocation33]
        $region100: #{_lambda_.1} parent=11 // pred_fallthru
          _
        // Predicated region
        $region101: #{_lambda_.1} parent=11 // pred_check
          %p1367 = pneg %p652
        $region102: #{_lambda_.1} parent=11 // pred_check_branch
          %1369 = sbr.rel (%p1367) target = $region104
        $region103: #{_lambda_.1} parent=11 // pred_region
          %1371 = vsyncadd [#allocation36], 0
          %s1372 = sshll.u32 %s49, 4
          %s1373 = int_to_ptr.hbm [resolvable:$true] %s1372
          %s1374 = sshll.u32 [#allocation35], 4
          %s1375 = int_to_ptr.vmem [resolvable:$true] %s1374
          %1380 = dma.hbm_to_vmem [thread:$0]  %s1373, 3072, %s1375, [#allocation36], 64, 64, 4
        $region104: #{_lambda_.1} parent=11 // pred_fallthru
          _
        // Predicated region
        $region105: #{_lambda_.1} parent=11 // pred_check
          %p1381 = pneg %p673
        $region106: #{_lambda_.1} parent=11 // pred_check_branch
          %1383 = sbr.rel (%p1381) target = $region108
        $region107: #{_lambda_.1} parent=11 // pred_region
          %1385 = vsyncadd [#allocation36], 0
          %s1387 = sshll.u32 %s51, 4
          %s1388 = int_to_ptr.hbm [resolvable:$true] %s1387
          %s1389 = sshll.u32 [#allocation37], 4
          %s1390 = int_to_ptr.vmem [resolvable:$true] %s1389
          %1392 = dma.hbm_to_vmem [thread:$0]  %s1388, 16, %s1390, [#allocation36]
        $region108: #{_lambda_.1} parent=11 // pred_fallthru
          _
        // Predicated region
        $region109: #{_lambda_.1} parent=11 // pred_check
          %p1393 = pneg %p694
        $region110: #{_lambda_.1} parent=11 // pred_check_branch
          %1395 = sbr.rel (%p1393) target = $region112
        $region111: #{_lambda_.1} parent=11 // pred_region
          %1397 = vsyncadd [#allocation39], 0
          %s1398 = sshll.u32 %s53, 4
          %s1399 = int_to_ptr.hbm [resolvable:$true] %s1398
          %s1400 = sshll.u32 [#allocation38], 4
          %s1401 = int_to_ptr.vmem [resolvable:$true] %s1400
          %1406 = dma.hbm_to_vmem [thread:$0]  %s1399, 512, %s1401, [#allocation39], 64, 64, 4
        $region112: #{_lambda_.1} parent=11 // pred_fallthru
          _
        // Predicated region
        $region113: #{_lambda_.1} parent=11 // pred_check
          %p1407 = pneg %p715
        $region114: #{_lambda_.1} parent=11 // pred_check_branch
          %1409 = sbr.rel (%p1407) target = $region116
        $region115: #{_lambda_.1} parent=11 // pred_region
          %1411 = vsyncadd [#allocation39], 0
          %s1413 = sshll.u32 %s55, 4
          %s1414 = int_to_ptr.hbm [resolvable:$true] %s1413
          %s1415 = sshll.u32 [#allocation40], 4
          %s1416 = int_to_ptr.vmem [resolvable:$true] %s1415
          %1418 = dma.hbm_to_vmem [thread:$0]  %s1414, 16, %s1416, [#allocation39]
        $region116: #{_lambda_.1} parent=11 // pred_fallthru
          _
        // Predicated region
        $region117: #{_lambda_.1} parent=11 // pred_check
          %p1419 = pneg %p736
        $region118: #{_lambda_.1} parent=11 // pred_check_branch
          %1421 = sbr.rel (%p1419) target = $region120
        $region119: #{_lambda_.1} parent=11 // pred_region
          %1423 = vsyncadd [#allocation42], 0
          %s1424 = sshll.u32 %s57, 4
          %s1425 = int_to_ptr.hbm [resolvable:$true] %s1424
          %s1426 = sshll.u32 [#allocation41], 4
          %s1427 = int_to_ptr.vmem [resolvable:$true] %s1426
          %1432 = dma.hbm_to_vmem [thread:$0]  %s1425, 3072, %s1427, [#allocation42], 64, 64, 4
        $region120: #{_lambda_.1} parent=11 // pred_fallthru
          _
        // Predicated region
        $region121: #{_lambda_.1} parent=11 // pred_check
          %p1433 = pneg %p757
        $region122: #{_lambda_.1} parent=11 // pred_check_branch
          %1435 = sbr.rel (%p1433) target = $region124
        $region123: #{_lambda_.1} parent=11 // pred_region
          %1437 = vsyncadd [#allocation42], 0
          %s1439 = sshll.u32 %s59, 4
          %s1440 = int_to_ptr.hbm [resolvable:$true] %s1439
          %s1441 = sshll.u32 [#allocation43], 4
          %s1442 = int_to_ptr.vmem [resolvable:$true] %s1441
          %1444 = dma.hbm_to_vmem [thread:$0]  %s1440, 16, %s1442, [#allocation42]
        $region124: #{_lambda_.1} parent=11 // pred_fallthru
          _
        // Predicated region
        $region125: #{_lambda_.1} parent=11 // pred_check
          %p1445 = pneg %p778
        $region126: #{_lambda_.1} parent=11 // pred_check_branch
          %1447 = sbr.rel (%p1445) target = $region128
        $region127: #{_lambda_.1} parent=11 // pred_region
          %1449 = vsyncadd [#allocation45], 0
          %s1450 = sshll.u32 %s61, 4
          %s1451 = int_to_ptr.hbm [resolvable:$true] %s1450
          %s1452 = sshll.u32 [#allocation44], 4
          %s1453 = int_to_ptr.vmem [resolvable:$true] %s1452
          %1458 = dma.hbm_to_vmem [thread:$0]  %s1451, 3072, %s1453, [#allocation45], 64, 64, 4
        $region128: #{_lambda_.1} parent=11 // pred_fallthru
          _
        // Predicated region
        $region129: #{_lambda_.1} parent=11 // pred_check
          %p1459 = pneg %p799
        $region130: #{_lambda_.1} parent=11 // pred_check_branch
          %1461 = sbr.rel (%p1459) target = $region132
        $region131: #{_lambda_.1} parent=11 // pred_region
          %1463 = vsyncadd [#allocation45], 0
          %s1465 = sshll.u32 %s63, 4
          %s1466 = int_to_ptr.hbm [resolvable:$true] %s1465
          %s1467 = sshll.u32 [#allocation46], 4
          %s1468 = int_to_ptr.vmem [resolvable:$true] %s1467
          %1470 = dma.hbm_to_vmem [thread:$0]  %s1466, 16, %s1468, [#allocation45]
        $region132: #{_lambda_.1} parent=11 // pred_fallthru
          _
        // Predicated region
        $region133: #{_lambda_.1} parent=11 // pred_check
          %p1471 = pneg %p820
        $region134: #{_lambda_.1} parent=11 // pred_check_branch
          %1473 = sbr.rel (%p1471) target = $region136
        $region135: #{_lambda_.1} parent=11 // pred_region
          %1475 = vsyncadd [#allocation48], 0
          %s1476 = sshll.u32 %s65, 4
          %s1477 = int_to_ptr.hbm [resolvable:$true] %s1476
          %s1478 = sshll.u32 [#allocation47], 4
          %s1479 = int_to_ptr.vmem [resolvable:$true] %s1478
          %1484 = dma.hbm_to_vmem [thread:$0]  %s1477, 3072, %s1479, [#allocation48], 64, 64, 4
        $region136: #{_lambda_.1} parent=11 // pred_fallthru
          _
        // Predicated region
        $region137: #{_lambda_.1} parent=11 // pred_check
          %p1485 = pneg %p841
        $region138: #{_lambda_.1} parent=11 // pred_check_branch
          %1487 = sbr.rel (%p1485) target = $region140
        $region139: #{_lambda_.1} parent=11 // pred_region
          %1489 = vsyncadd [#allocation48], 0
          %s1491 = sshll.u32 %s67, 4
          %s1492 = int_to_ptr.hbm [resolvable:$true] %s1491
          %s1493 = sshll.u32 [#allocation49], 4
          %s1494 = int_to_ptr.vmem [resolvable:$true] %s1493
          %1496 = dma.hbm_to_vmem [thread:$0]  %s1492, 16, %s1494, [#allocation48]
        $region140: #{_lambda_.1} parent=11 // pred_fallthru
          _
        // Predicated region
        $region141: #{_lambda_.1} parent=11 // pred_check
          %p1497 = pneg %p862
        $region142: #{_lambda_.1} parent=11 // pred_check_branch
          %1499 = sbr.rel (%p1497) target = $region144
        $region143: #{_lambda_.1} parent=11 // pred_region
          %1501 = vsyncadd [#allocation51], 0
          %s1502 = sshll.u32 %s69, 4
          %s1503 = int_to_ptr.hbm [resolvable:$true] %s1502
          %s1504 = sshll.u32 [#allocation50], 4
          %s1505 = int_to_ptr.vmem [resolvable:$true] %s1504
          %1510 = dma.hbm_to_vmem [thread:$0]  %s1503, 4608, %s1505, [#allocation51], 64, 64, 4
        $region144: #{_lambda_.1} parent=11 // pred_fallthru
          _
        // Predicated region
        $region145: #{_lambda_.1} parent=11 // pred_check
          %p1511 = pneg %p883
        $region146: #{_lambda_.1} parent=11 // pred_check_branch
          %1513 = sbr.rel (%p1511) target = $region148
        $region147: #{_lambda_.1} parent=11 // pred_region
          %1515 = vsyncadd [#allocation51], 0
          %s1517 = sshll.u32 %s71, 4
          %s1518 = int_to_ptr.hbm [resolvable:$true] %s1517
          %s1519 = sshll.u32 [#allocation52], 4
          %s1520 = int_to_ptr.vmem [resolvable:$true] %s1519
          %1522 = dma.hbm_to_vmem [thread:$0]  %s1518, 16, %s1520, [#allocation51]
        $region148: #{_lambda_.1} parent=11 // pred_fallthru
          _
        // Predicated region
        $region149: #{_lambda_.1} parent=11 // pred_check
          %p1523 = pneg %p904
        $region150: #{_lambda_.1} parent=11 // pred_check_branch
          %1525 = sbr.rel (%p1523) target = $region152
        $region151: #{_lambda_.1} parent=11 // pred_region
          %1527 = vsyncadd [#allocation54], 0
          %s1528 = sshll.u32 %s73, 4
          %s1529 = int_to_ptr.hbm [resolvable:$true] %s1528
          %s1530 = sshll.u32 [#allocation53], 4
          %s1531 = int_to_ptr.vmem [resolvable:$true] %s1530
          %1536 = dma.hbm_to_vmem [thread:$0]  %s1529, 512, %s1531, [#allocation54], 64, 64, 4
        $region152: #{_lambda_.1} parent=11 // pred_fallthru
          _
        // Predicated region
        $region153: #{_lambda_.1} parent=11 // pred_check
          %p1537 = pneg %p925
        $region154: #{_lambda_.1} parent=11 // pred_check_branch
          %1539 = sbr.rel (%p1537) target = $region156
        $region155: #{_lambda_.1} parent=11 // pred_region
          %1541 = vsyncadd [#allocation54], 0
          %s1543 = sshll.u32 %s75, 4
          %s1544 = int_to_ptr.hbm [resolvable:$true] %s1543
          %s1545 = sshll.u32 [#allocation55], 4
          %s1546 = int_to_ptr.vmem [resolvable:$true] %s1545
          %1548 = dma.hbm_to_vmem [thread:$0]  %s1544, 16, %s1546, [#allocation54]
        $region156: #{_lambda_.1} parent=11 // pred_fallthru
          _
        // Predicated region
        $region157: #{_lambda_.1} parent=11 // pred_check
          %p1549 = pneg %p946
        $region158: #{_lambda_.1} parent=11 // pred_check_branch
          %1551 = sbr.rel (%p1549) target = $region160
        $region159: #{_lambda_.1} parent=11 // pred_region
          _
        $region160: #{_lambda_.1} parent=11 // pred_fallthru
          _
        // Predicated region
        $region161: #{_lambda_.1} parent=11 // pred_check
          %p1552 = pneg %p967
        $region162: #{_lambda_.1} parent=11 // pred_check_branch
          %1554 = sbr.rel (%p1552) target = $region164
        $region163: #{_lambda_.1} parent=11 // pred_region
          %1556 = vsyncadd [#allocation57], 0
          %s1558 = sshll.u32 %s79, 4
          %s1559 = int_to_ptr.hbm [resolvable:$true] %s1558
          %s1560 = sshll.u32 [#allocation56], 4
          %s1561 = int_to_ptr.vmem [resolvable:$true] %s1560
          %1563 = dma.hbm_to_vmem [thread:$0]  %s1559, 16, %s1561, [#allocation57]
        $region164: #{_lambda_.1} parent=11 // pred_fallthru
          _
        // Predicated region
        $region165: #{_lambda_.1} parent=11 // pred_check
          %p1564 = pneg %p988
        $region166: #{_lambda_.1} parent=11 // pred_check_branch
          %1566 = sbr.rel (%p1564) target = $region168
        $region167: #{_lambda_.1} parent=11 // pred_region
          _
        $region168: #{_lambda_.1} parent=11 // pred_fallthru
          _
        // Predicated region
        $region169: #{_lambda_.1} parent=11 // pred_check
          %p1567 = pneg %p1009
        $region170: #{_lambda_.1} parent=11 // pred_check_branch
          %1569 = sbr.rel (%p1567) target = $region172
        $region171: #{_lambda_.1} parent=11 // pred_region
          %1571 = vsyncadd [#allocation57], 0
          %s1573 = sshll.u32 %s83, 4
          %s1574 = int_to_ptr.hbm [resolvable:$true] %s1573
          %s1575 = sshll.u32 [#allocation58], 4
          %s1576 = int_to_ptr.vmem [resolvable:$true] %s1575
          %1578 = dma.hbm_to_vmem [thread:$0]  %s1574, 16, %s1576, [#allocation57]
        $region172: #{_lambda_.1} parent=11 // pred_fallthru
          _
        // Predicated region
        $region173: #{_lambda_.1} parent=11 // pred_check
          %p1579 = pneg %p1030
        $region174: #{_lambda_.1} parent=11 // pred_check_branch
          %1581 = sbr.rel (%p1579) target = $region176
        $region175: #{_lambda_.1} parent=11 // pred_region
          _
        $region176: #{_lambda_.1} parent=11 // pred_fallthru
          _
        // Predicated region
        $region177: #{_lambda_.1} parent=11 // pred_check
          %p1582 = pneg %p1051
        $region178: #{_lambda_.1} parent=11 // pred_check_branch
          %1584 = sbr.rel (%p1582) target = $region180
        $region179: #{_lambda_.1} parent=11 // pred_region
          _
        $region180: #{_lambda_.1} parent=11 // pred_fallthru
          _
      $region12: #{_lambda_.1} parent=5 // pred_fallthru
        _
      %p1585 = scmp.lt.s32.totalorder %s117, 2
      // Predicated region
      $region181: #{_lambda_.1} parent=5 // pred_check
        %p1586 = pneg %p1585
      $region182: #{_lambda_.1} parent=5 // pred_check_branch
        %1588 = sbr.rel (%p1586) target = $region184
      $region183: #{_lambda_.1} parent=5 // pred_region
        // Predicated region
        $region185: #{_lambda_.1} parent=183 // pred_check
          %p1589 = pneg %p137
        $region186: #{_lambda_.1} parent=183 // pred_check_branch
          %1591 = sbr.rel (%p1589) target = $region188
        $region187: #{_lambda_.1} parent=183 // pred_region
          %p1592 = scmp.lt.s32.totalorder %s117, 1
          %s1593 = scalar_select %p1592, %s117, 1
          %s1594 = smul.addr %s1593, 3
          %s1595 = smul.addr %s1594, 4
          %s1596 = scalar_lea.vmem %s1, %s1595
        $region188: #{_lambda_.1} parent=183 // pred_fallthru
          _
        // Predicated region
        $region189: #{_lambda_.1} parent=183 // pred_check
          %p1597 = pneg %p163
        $region190: #{_lambda_.1} parent=183 // pred_check_branch
          %1599 = sbr.rel (%p1597) target = $region192
        $region191: #{_lambda_.1} parent=183 // pred_region
          %p1600 = scmp.lt.s32.totalorder %s117, 1
          %s1601 = scalar_select %p1600, %s117, 1
          %s1602 = smul.addr %s1601, 3
          %s1603 = smul.addr %s1602, 4
          %s1604 = scalar_lea.vmem %s3, %s1603
        $region192: #{_lambda_.1} parent=183 // pred_fallthru
          _
      $region184: #{_lambda_.1} parent=5 // pred_fallthru
        _
      %p1605 = scmp.le.s32.totalorder 1, %s117
      %p1606 = scmp.lt.s32.totalorder %s117, 3
      %p1607 = pnand %p1605, %p1606
      %p1608 = pneg %p1607
      // Predicated region
      $region193: #{_lambda_.1} parent=5 // pred_check
        _
      $region194: #{_lambda_.1} parent=5 // pred_check_branch
        %1610 = sbr.rel (%p1607) target = $region196
      $region195: #{_lambda_.1} parent=5 // pred_region
        %s1611 = ssub.s32 %s117, 1
        // Predicated region
        $region197: #{_lambda_.1} parent=195 // pred_check
          %p1612 = pneg %p211
        $region198: #{_lambda_.1} parent=195 // pred_check_branch
          %1614 = sbr.rel (%p1612) target = $region200
        $region199: #{_lambda_.1} parent=195 // pred_region
          %1616 = dma.done [#allocation3], 16
        $region200: #{_lambda_.1} parent=195 // pred_fallthru
          _
        // Predicated region
        $region201: #{_lambda_.1} parent=195 // pred_check
          %p1617 = pneg %p232
        $region202: #{_lambda_.1} parent=195 // pred_check_branch
          %1619 = sbr.rel (%p1617) target = $region204
        $region203: #{_lambda_.1} parent=195 // pred_region
          %1621 = dma.done [#allocation6], 1920
        $region204: #{_lambda_.1} parent=195 // pred_fallthru
          _
        // Predicated region
        $region205: #{_lambda_.1} parent=195 // pred_check
          %p1622 = pneg %p253
        $region206: #{_lambda_.1} parent=195 // pred_check_branch
          %1624 = sbr.rel (%p1622) target = $region208
        $region207: #{_lambda_.1} parent=195 // pred_region
          %1626 = dma.done [#allocation6], 16
        $region208: #{_lambda_.1} parent=195 // pred_fallthru
          _
        // Predicated region
        $region209: #{_lambda_.1} parent=195 // pred_check
          %p1627 = pneg %p274
        $region210: #{_lambda_.1} parent=195 // pred_check_branch
          %1629 = sbr.rel (%p1627) target = $region212
        $region211: #{_lambda_.1} parent=195 // pred_region
          %1631 = dma.done [#allocation9], 1920
        $region212: #{_lambda_.1} parent=195 // pred_fallthru
          _
        // Predicated region
        $region213: #{_lambda_.1} parent=195 // pred_check
          %p1632 = pneg %p295
        $region214: #{_lambda_.1} parent=195 // pred_check_branch
          %1634 = sbr.rel (%p1632) target = $region216
        $region215: #{_lambda_.1} parent=195 // pred_region
          %1636 = dma.done [#allocation9], 16
        $region216: #{_lambda_.1} parent=195 // pred_fallthru
          _
        // Predicated region
        $region217: #{_lambda_.1} parent=195 // pred_check
          %p1637 = pneg %p316
        $region218: #{_lambda_.1} parent=195 // pred_check_branch
          %1639 = sbr.rel (%p1637) target = $region220
        $region219: #{_lambda_.1} parent=195 // pred_region
          %1641 = dma.done [#allocation12], 1920
        $region220: #{_lambda_.1} parent=195 // pred_fallthru
          _
        // Predicated region
        $region221: #{_lambda_.1} parent=195 // pred_check
          %p1642 = pneg %p337
        $region222: #{_lambda_.1} parent=195 // pred_check_branch
          %1644 = sbr.rel (%p1642) target = $region224
        $region223: #{_lambda_.1} parent=195 // pred_region
          %1646 = dma.done [#allocation12], 16
        $region224: #{_lambda_.1} parent=195 // pred_fallthru
          _
        // Predicated region
        $region225: #{_lambda_.1} parent=195 // pred_check
          %p1647 = pneg %p358
        $region226: #{_lambda_.1} parent=195 // pred_check_branch
          %1649 = sbr.rel (%p1647) target = $region228
        $region227: #{_lambda_.1} parent=195 // pred_region
          %1651 = dma.done [#allocation15], 1920
        $region228: #{_lambda_.1} parent=195 // pred_fallthru
          _
        // Predicated region
        $region229: #{_lambda_.1} parent=195 // pred_check
          %p1652 = pneg %p379
        $region230: #{_lambda_.1} parent=195 // pred_check_branch
          %1654 = sbr.rel (%p1652) target = $region232
        $region231: #{_lambda_.1} parent=195 // pred_region
          %1656 = dma.done [#allocation15], 16
        $region232: #{_lambda_.1} parent=195 // pred_fallthru
          _
        // Predicated region
        $region233: #{_lambda_.1} parent=195 // pred_check
          %p1657 = pneg %p400
        $region234: #{_lambda_.1} parent=195 // pred_check_branch
          %1659 = sbr.rel (%p1657) target = $region236
        $region235: #{_lambda_.1} parent=195 // pred_region
          %1661 = dma.done [#allocation18], 1920
        $region236: #{_lambda_.1} parent=195 // pred_fallthru
          _
        // Predicated region
        $region237: #{_lambda_.1} parent=195 // pred_check
          %p1662 = pneg %p421
        $region238: #{_lambda_.1} parent=195 // pred_check_branch
          %1664 = sbr.rel (%p1662) target = $region240
        $region239: #{_lambda_.1} parent=195 // pred_region
          %1666 = dma.done [#allocation18], 16
        $region240: #{_lambda_.1} parent=195 // pred_fallthru
          _
        // Predicated region
        $region241: #{_lambda_.1} parent=195 // pred_check
          %p1667 = pneg %p442
        $region242: #{_lambda_.1} parent=195 // pred_check_branch
          %1669 = sbr.rel (%p1667) target = $region244
        $region243: #{_lambda_.1} parent=195 // pred_region
          %1671 = dma.done [#allocation21], 2304
        $region244: #{_lambda_.1} parent=195 // pred_fallthru
          _
        // Predicated region
        $region245: #{_lambda_.1} parent=195 // pred_check
          %p1672 = pneg %p463
        $region246: #{_lambda_.1} parent=195 // pred_check_branch
          %1674 = sbr.rel (%p1672) target = $region248
        $region247: #{_lambda_.1} parent=195 // pred_region
          %1676 = dma.done [#allocation21], 16
        $region248: #{_lambda_.1} parent=195 // pred_fallthru
          _
        // Predicated region
        $region249: #{_lambda_.1} parent=195 // pred_check
          %p1677 = pneg %p484
        $region250: #{_lambda_.1} parent=195 // pred_check_branch
          %1679 = sbr.rel (%p1677) target = $region252
        $region251: #{_lambda_.1} parent=195 // pred_region
          %1681 = dma.done [#allocation24], 512
        $region252: #{_lambda_.1} parent=195 // pred_fallthru
          _
        // Predicated region
        $region253: #{_lambda_.1} parent=195 // pred_check
          %p1682 = pneg %p505
        $region254: #{_lambda_.1} parent=195 // pred_check_branch
          %1684 = sbr.rel (%p1682) target = $region256
        $region255: #{_lambda_.1} parent=195 // pred_region
          %1686 = dma.done [#allocation24], 16
        $region256: #{_lambda_.1} parent=195 // pred_fallthru
          _
        // Predicated region
        $region257: #{_lambda_.1} parent=195 // pred_check
          %p1687 = pneg %p526
        $region258: #{_lambda_.1} parent=195 // pred_check_branch
          %1689 = sbr.rel (%p1687) target = $region260
        $region259: #{_lambda_.1} parent=195 // pred_region
          %1691 = dma.done [#allocation27], 2304
        $region260: #{_lambda_.1} parent=195 // pred_fallthru
          _
        // Predicated region
        $region261: #{_lambda_.1} parent=195 // pred_check
          %p1692 = pneg %p547
        $region262: #{_lambda_.1} parent=195 // pred_check_branch
          %1694 = sbr.rel (%p1692) target = $region264
        $region263: #{_lambda_.1} parent=195 // pred_region
          %1696 = dma.done [#allocation27], 16
        $region264: #{_lambda_.1} parent=195 // pred_fallthru
          _
        // Predicated region
        $region265: #{_lambda_.1} parent=195 // pred_check
          %p1697 = pneg %p568
        $region266: #{_lambda_.1} parent=195 // pred_check_branch
          %1699 = sbr.rel (%p1697) target = $region268
        $region267: #{_lambda_.1} parent=195 // pred_region
          %1701 = dma.done [#allocation30], 2304
        $region268: #{_lambda_.1} parent=195 // pred_fallthru
          _
        // Predicated region
        $region269: #{_lambda_.1} parent=195 // pred_check
          %p1702 = pneg %p589
        $region270: #{_lambda_.1} parent=195 // pred_check_branch
          %1704 = sbr.rel (%p1702) target = $region272
        $region271: #{_lambda_.1} parent=195 // pred_region
          %1706 = dma.done [#allocation30], 16
        $region272: #{_lambda_.1} parent=195 // pred_fallthru
          _
        // Predicated region
        $region273: #{_lambda_.1} parent=195 // pred_check
          %p1707 = pneg %p610
        $region274: #{_lambda_.1} parent=195 // pred_check_branch
          %1709 = sbr.rel (%p1707) target = $region276
        $region275: #{_lambda_.1} parent=195 // pred_region
          %1711 = dma.done [#allocation33], 2304
        $region276: #{_lambda_.1} parent=195 // pred_fallthru
          _
        // Predicated region
        $region277: #{_lambda_.1} parent=195 // pred_check
          %p1712 = pneg %p631
        $region278: #{_lambda_.1} parent=195 // pred_check_branch
          %1714 = sbr.rel (%p1712) target = $region280
        $region279: #{_lambda_.1} parent=195 // pred_region
          %1716 = dma.done [#allocation33], 16
        $region280: #{_lambda_.1} parent=195 // pred_fallthru
          _
        // Predicated region
        $region281: #{_lambda_.1} parent=195 // pred_check
          %p1717 = pneg %p652
        $region282: #{_lambda_.1} parent=195 // pred_check_branch
          %1719 = sbr.rel (%p1717) target = $region284
        $region283: #{_lambda_.1} parent=195 // pred_region
          %1721 = dma.done [#allocation36], 3072
        $region284: #{_lambda_.1} parent=195 // pred_fallthru
          _
        // Predicated region
        $region285: #{_lambda_.1} parent=195 // pred_check
          %p1722 = pneg %p673
        $region286: #{_lambda_.1} parent=195 // pred_check_branch
          %1724 = sbr.rel (%p1722) target = $region288
        $region287: #{_lambda_.1} parent=195 // pred_region
          %1726 = dma.done [#allocation36], 16
        $region288: #{_lambda_.1} parent=195 // pred_fallthru
          _
        // Predicated region
        $region289: #{_lambda_.1} parent=195 // pred_check
          %p1727 = pneg %p694
        $region290: #{_lambda_.1} parent=195 // pred_check_branch
          %1729 = sbr.rel (%p1727) target = $region292
        $region291: #{_lambda_.1} parent=195 // pred_region
          %1731 = dma.done [#allocation39], 512
        $region292: #{_lambda_.1} parent=195 // pred_fallthru
          _
        // Predicated region
        $region293: #{_lambda_.1} parent=195 // pred_check
          %p1732 = pneg %p715
        $region294: #{_lambda_.1} parent=195 // pred_check_branch
          %1734 = sbr.rel (%p1732) target = $region296
        $region295: #{_lambda_.1} parent=195 // pred_region
          %1736 = dma.done [#allocation39], 16
        $region296: #{_lambda_.1} parent=195 // pred_fallthru
          _
        // Predicated region
        $region297: #{_lambda_.1} parent=195 // pred_check
          %p1737 = pneg %p736
        $region298: #{_lambda_.1} parent=195 // pred_check_branch
          %1739 = sbr.rel (%p1737) target = $region300
        $region299: #{_lambda_.1} parent=195 // pred_region
          %1741 = dma.done [#allocation42], 3072
        $region300: #{_lambda_.1} parent=195 // pred_fallthru
          _
        // Predicated region
        $region301: #{_lambda_.1} parent=195 // pred_check
          %p1742 = pneg %p757
        $region302: #{_lambda_.1} parent=195 // pred_check_branch
          %1744 = sbr.rel (%p1742) target = $region304
        $region303: #{_lambda_.1} parent=195 // pred_region
          %1746 = dma.done [#allocation42], 16
        $region304: #{_lambda_.1} parent=195 // pred_fallthru
          _
        // Predicated region
        $region305: #{_lambda_.1} parent=195 // pred_check
          %p1747 = pneg %p778
        $region306: #{_lambda_.1} parent=195 // pred_check_branch
          %1749 = sbr.rel (%p1747) target = $region308
        $region307: #{_lambda_.1} parent=195 // pred_region
          %1751 = dma.done [#allocation45], 3072
        $region308: #{_lambda_.1} parent=195 // pred_fallthru
          _
        // Predicated region
        $region309: #{_lambda_.1} parent=195 // pred_check
          %p1752 = pneg %p799
        $region310: #{_lambda_.1} parent=195 // pred_check_branch
          %1754 = sbr.rel (%p1752) target = $region312
        $region311: #{_lambda_.1} parent=195 // pred_region
          %1756 = dma.done [#allocation45], 16
        $region312: #{_lambda_.1} parent=195 // pred_fallthru
          _
        // Predicated region
        $region313: #{_lambda_.1} parent=195 // pred_check
          %p1757 = pneg %p820
        $region314: #{_lambda_.1} parent=195 // pred_check_branch
          %1759 = sbr.rel (%p1757) target = $region316
        $region315: #{_lambda_.1} parent=195 // pred_region
          %1761 = dma.done [#allocation48], 3072
        $region316: #{_lambda_.1} parent=195 // pred_fallthru
          _
        // Predicated region
        $region317: #{_lambda_.1} parent=195 // pred_check
          %p1762 = pneg %p841
        $region318: #{_lambda_.1} parent=195 // pred_check_branch
          %1764 = sbr.rel (%p1762) target = $region320
        $region319: #{_lambda_.1} parent=195 // pred_region
          %1766 = dma.done [#allocation48], 16
        $region320: #{_lambda_.1} parent=195 // pred_fallthru
          _
        // Predicated region
        $region321: #{_lambda_.1} parent=195 // pred_check
          %p1767 = pneg %p862
        $region322: #{_lambda_.1} parent=195 // pred_check_branch
          %1769 = sbr.rel (%p1767) target = $region324
        $region323: #{_lambda_.1} parent=195 // pred_region
          %1771 = dma.done [#allocation51], 4608
        $region324: #{_lambda_.1} parent=195 // pred_fallthru
          _
        // Predicated region
        $region325: #{_lambda_.1} parent=195 // pred_check
          %p1772 = pneg %p883
        $region326: #{_lambda_.1} parent=195 // pred_check_branch
          %1774 = sbr.rel (%p1772) target = $region328
        $region327: #{_lambda_.1} parent=195 // pred_region
          %1776 = dma.done [#allocation51], 16
        $region328: #{_lambda_.1} parent=195 // pred_fallthru
          _
        // Predicated region
        $region329: #{_lambda_.1} parent=195 // pred_check
          %p1777 = pneg %p904
        $region330: #{_lambda_.1} parent=195 // pred_check_branch
          %1779 = sbr.rel (%p1777) target = $region332
        $region331: #{_lambda_.1} parent=195 // pred_region
          %1781 = dma.done [#allocation54], 512
        $region332: #{_lambda_.1} parent=195 // pred_fallthru
          _
        // Predicated region
        $region333: #{_lambda_.1} parent=195 // pred_check
          %p1782 = pneg %p925
        $region334: #{_lambda_.1} parent=195 // pred_check_branch
          %1784 = sbr.rel (%p1782) target = $region336
        $region335: #{_lambda_.1} parent=195 // pred_region
          %1786 = dma.done [#allocation54], 16
        $region336: #{_lambda_.1} parent=195 // pred_fallthru
          _
        // Predicated region
        $region337: #{_lambda_.1} parent=195 // pred_check
          %p1787 = pneg %p967
        $region338: #{_lambda_.1} parent=195 // pred_check_branch
          %1789 = sbr.rel (%p1787) target = $region340
        $region339: #{_lambda_.1} parent=195 // pred_region
          %1791 = dma.done [#allocation57], 16
        $region340: #{_lambda_.1} parent=195 // pred_fallthru
          _
        // Predicated region
        $region341: #{_lambda_.1} parent=195 // pred_check
          %p1792 = pneg %p1009
        $region342: #{_lambda_.1} parent=195 // pred_check_branch
          %1794 = sbr.rel (%p1792) target = $region344
        $region343: #{_lambda_.1} parent=195 // pred_region
          %1796 = dma.done [#allocation57], 16
        $region344: #{_lambda_.1} parent=195 // pred_fallthru
          _
        %p1797 = scmp.lt.s32.totalorder %s122, 1
        %s1798 = scalar_select %p1797, %s122, 1
        %s1799 = smul.addr %s1798, 3
        %s1800 = smul.addr %s1799, 4
        %s1801 = scalar_lea.vmem %s1, %s1800
        %p1802 = pneg %p143
        %p1803 = pneg %p140
        %p1804 = scmp.lt.s32.totalorder %s122, 1
        %s1805 = scalar_select %p1804, %s122, 1
        %s1806 = smul.addr %s1805, 3
        %s1807 = smul.addr %s1806, 4
        %s1808 = scalar_lea.vmem %s3, %s1807
        %p1809 = pneg %p169
        %p1810 = pneg %p166
        %p1811 = pneg %p190
        %p1812 = pneg %p187
        %p1813 = pneg %p211
        %p1814 = pneg %p208
        %p1815 = pneg %p232
        %p1816 = pneg %p229
        %p1817 = pneg %p253
        %p1818 = pneg %p250
        %p1819 = pneg %p274
        %p1820 = pneg %p271
        %p1821 = pneg %p295
        %p1822 = pneg %p292
        %p1823 = pneg %p316
        %p1824 = pneg %p313
        %p1825 = pneg %p337
        %p1826 = pneg %p334
        %p1827 = pneg %p358
        %p1828 = pneg %p355
        %p1829 = pneg %p379
        %p1830 = pneg %p376
        %p1831 = pneg %p400
        %p1832 = pneg %p397
        %p1833 = pneg %p421
        %p1834 = pneg %p418
        %p1835 = pneg %p442
        %p1836 = pneg %p439
        %p1837 = pneg %p463
        %p1838 = pneg %p460
        %p1839 = pneg %p484
        %p1840 = pneg %p481
        %p1841 = pneg %p505
        %p1842 = pneg %p502
        %p1843 = pneg %p526
        %p1844 = pneg %p523
        %p1845 = pneg %p547
        %p1846 = pneg %p544
        %p1847 = pneg %p568
        %p1848 = pneg %p565
        %p1849 = pneg %p589
        %p1850 = pneg %p586
        %p1851 = pneg %p610
        %p1852 = pneg %p607
        %p1853 = pneg %p631
        %p1854 = pneg %p628
        %p1855 = pneg %p652
        %p1856 = pneg %p649
        %p1857 = pneg %p673
        %p1858 = pneg %p670
        %p1859 = pneg %p694
        %p1860 = pneg %p691
        %p1861 = pneg %p715
        %p1862 = pneg %p712
        %p1863 = pneg %p736
        %p1864 = pneg %p733
        %p1865 = pneg %p757
        %p1866 = pneg %p754
        %p1867 = pneg %p778
        %p1868 = pneg %p775
        %p1869 = pneg %p799
        %p1870 = pneg %p796
        %p1871 = pneg %p820
        %p1872 = pneg %p817
        %p1873 = pneg %p841
        %p1874 = pneg %p838
        %p1875 = pneg %p862
        %p1876 = pneg %p859
        %p1877 = pneg %p883
        %p1878 = pneg %p880
        %p1879 = pneg %p904
        %p1880 = pneg %p901
        %p1881 = pneg %p925
        %p1882 = pneg %p922
        %p1883 = pneg %p946
        %p1884 = pneg %p943
        %p1885 = pneg %p967
        %p1886 = pneg %p964
        %p1887 = pneg %p988
        %p1888 = pneg %p985
        %p1889 = pneg %p1009
        %p1890 = pneg %p1006
        %p1891 = pneg %p1030
        %p1892 = pneg %p1027
        %p1893 = pneg %p1051
        %p1894 = pneg %p1048
        %p1895 = pneg %p1077
        %p1896 = pneg %p1074
        %s1897 = sand.u32 %s1064, 1
        %s1898 = scalar_lea.sflag [#allocation4], %s1897
        %s1899 = sand.u32 %s1064, 1
        %s1900 = scalar_lea.vmem [#allocation59], %s1899
        %p1901 = scmp.lt.s32.totalorder %s122, 1
        %s1902 = scalar_select %p1901, %s122, 1
        %s1903 = smul.addr %s1902, 3
        %s1904 = smul.addr %s1903, 4
        %s1905 = scalar_lea.vmem %s1, %s1904
        %p1906 = scmp.lt.s32.totalorder %s122, 1
        %s1907 = scalar_select %p1906, %s122, 1
        %s1908 = smul.addr %s1907, 3
        %s1909 = smul.addr %s1908, 4
        %s1910 = scalar_lea.vmem %s3, %s1909
        %v1912 = vld [vmem:[%s1905] sm:$0xf]
        %v1913 = vld [vmem:[%s1905 + $0x4] sm:$0xf]
        %v1914 = vld [vmem:[%s1905 + $0x8] sm:$0x3]
        %v1915 = vld [vmem:[%s1910] sm:$0xf]
        %v1916 = vld [vmem:[%s1910 + $0x4] sm:$0xf]
        %v1917 = vld [vmem:[%s1910 + $0x8] sm:$0x3]
        %v1920 = vunpack.c.l.b16 %v1912
        %v1921 = vunpack.c.l.b16 %v1913
        %v1922 = vpack.c.b16 %v1921, %v1920
        %v1926 = vunpack.c.l.b16 %v1915
        %v1927 = vunpack.c.l.b16 %v1916
        %v1928 = vpack.c.b16 %v1927, %v1926
        %v1931 = vunpack.c.l.b16 %v1914
        %v1932 = vpack.c.b16 %v1931, %v1931
        %vm1933 = vsmask.f32 7424
        %v1935 = vshrl.u32 %v1922, 16
        %v1937 = vshll.u32 %v1922, 16
        %v1939 = vrot.slane %v1937, 1
        %v1940 = vor.u32 %v1935, %v1939
        %v1942 = vshll.u32 %v1932, 16
        %v1944 = vrot.slane %v1942, 1
        %v1945 = vsel %vm1933, %v1940, %v1944
        %v1948 = vunpack.c.l.b16 %v1917
        %v1949 = vpack.c.b16 %v1948, %v1948
        %v1951 = vshrl.u32 %v1928, 16
        %v1953 = vshll.u32 %v1928, 16
        %v1955 = vrot.slane %v1953, 1
        %v1956 = vor.u32 %v1951, %v1955
        %v1958 = vshll.u32 %v1949, 16
        %v1960 = vrot.slane %v1958, 1
        %v1961 = vsel %vm1933, %v1956, %v1960
        %vm1963 = vcmask 1046528
        %v1964 = vrot.slane %v1922, 1
        %v1965 = vrot.slane %v1932, 1
        %v1966 = vsel %vm1963, %v1964, %v1965
        %v1968 = vrot.slane %v1928, 1
        %v1969 = vrot.slane %v1949, 1
        %v1970 = vsel %vm1963, %v1968, %v1969
        %vm1972 = vsmask.f32 6400
        %v1973 = vrot.slane %v1935, 1
        %v1974 = vrot.slane %v1937, 2
        %v1975 = vor.u32 %v1973, %v1974
        %v1976 = vshrl.u32 %v1932, 16
        %v1978 = vrot.slane %v1976, 1
        %v1979 = vrot.slane %v1942, 2
        %v1980 = vor.u32 %v1978, %v1979
        %v1981 = vsel %vm1972, %v1975, %v1980
        %v1983 = vld [vmem:[%s5] sm:$0xf]
        %v1984 = vld [vmem:[%s5 + $0x4] sm:$0xf]
        %v1985 = vld [vmem:[%s5 + $0x8] sm:$0xf]
        %v1986 = vld [vmem:[%s5 + $0xc] sm:$0xf]
        %v1987 = vld [vmem:[%s5 + $0x10] sm:$0xf]
        %v1988 = vld [vmem:[%s5 + $0x14] sm:$0xf]
        %v1989 = vld [vmem:[%s5 + $0x18] sm:$0xf]
        %v1990 = vld [vmem:[%s5 + $0x1c] sm:$0xf]
        %v1991 = vld [vmem:[%s5 + $0x20] sm:$0xf]
        %v1992 = vld [vmem:[%s5 + $0x24] sm:$0xf]
        %v1993 = vld [vmem:[%s5 + $0x28] sm:$0xf]
        %v1994 = vld [vmem:[%s5 + $0x2c] sm:$0xf]
        %v1995 = vld [vmem:[%s5 + $0x30] sm:$0xf]
        %v1996 = vld [vmem:[%s5 + $0x34] sm:$0xf]
        %v1997 = vld [vmem:[%s5 + $0x38] sm:$0xf]
        %v1998 = vld [vmem:[%s5 + $0x3c] sm:$0xf]
        %v1999 = vld [vmem:[%s5 + $0x40] sm:$0xf]
        %v2000 = vld [vmem:[%s5 + $0x44] sm:$0xf]
        %v2001 = vld [vmem:[%s5 + $0x48] sm:$0xf]
        %v2002 = vld [vmem:[%s5 + $0x4c] sm:$0xf]
        %v2003 = vld [vmem:[%s5 + $0x50] sm:$0xf]
        %v2004 = vld [vmem:[%s5 + $0x54] sm:$0xf]
        %v2005 = vld [vmem:[%s5 + $0x58] sm:$0xf]
        %v2006 = vld [vmem:[%s5 + $0x5c] sm:$0xf]
        %v2007 = vld [vmem:[%s5 + $0x60] sm:$0xf]
        %v2008 = vld [vmem:[%s5 + $0x64] sm:$0xf]
        %v2009 = vld [vmem:[%s5 + $0x68] sm:$0xf]
        %v2010 = vld [vmem:[%s5 + $0x6c] sm:$0xf]
        %v2011 = vld [vmem:[%s5 + $0x70] sm:$0xf]
        %v2012 = vld [vmem:[%s5 + $0x74] sm:$0xf]
        %v2013 = vld [vmem:[%s5 + $0x78] sm:$0xf]
        %v2014 = vld [vmem:[%s5 + $0x7c] sm:$0xf]
        %v2015 = vld [vmem:[%s5 + $0x80] sm:$0xf]
        %v2016 = vld [vmem:[%s5 + $0x84] sm:$0xf]
        %v2017 = vld [vmem:[%s5 + $0x88] sm:$0xf]
        %v2018 = vld [vmem:[%s5 + $0x8c] sm:$0xf]
        %v2019 = vld [vmem:[%s5 + $0x90] sm:$0xf]
        %v2020 = vld [vmem:[%s5 + $0x94] sm:$0xf]
        %v2021 = vld [vmem:[%s5 + $0x98] sm:$0xf]
        %v2022 = vld [vmem:[%s5 + $0x9c] sm:$0xf]
        %v2023 = vld [vmem:[%s5 + $0xa0] sm:$0xf]
        %v2024 = vld [vmem:[%s5 + $0xa4] sm:$0xf]
        %v2025 = vld [vmem:[%s5 + $0xa8] sm:$0xf]
        %v2026 = vld [vmem:[%s5 + $0xac] sm:$0xf]
        %v2027 = vld [vmem:[%s5 + $0xb0] sm:$0xf]
        %v2028 = vld [vmem:[%s5 + $0xb4] sm:$0xf]
        %v2029 = vld [vmem:[%s5 + $0xb8] sm:$0xf]
        %v2030 = vld [vmem:[%s5 + $0xbc] sm:$0xf]
        %v2031 = vld [vmem:[%s5 + $0xc0] sm:$0xf]
        %v2032 = vld [vmem:[%s5 + $0xc4] sm:$0xf]
        %v2033 = vld [vmem:[%s5 + $0xc8] sm:$0xf]
        %v2034 = vld [vmem:[%s5 + $0xcc] sm:$0xf]
        %v2035 = vld [vmem:[%s5 + $0xd0] sm:$0xf]
        %v2036 = vld [vmem:[%s5 + $0xd4] sm:$0xf]
        %v2037 = vld [vmem:[%s5 + $0xd8] sm:$0xf]
        %v2038 = vld [vmem:[%s5 + $0xdc] sm:$0xf]
        %v2039 = vld [vmem:[%s5 + $0xe0] sm:$0xf]
        %v2040 = vld [vmem:[%s5 + $0xe4] sm:$0xf]
        %v2041 = vld [vmem:[%s5 + $0xe8] sm:$0xf]
        %v2042 = vld [vmem:[%s5 + $0xec] sm:$0xf]
        %v2043 = vld [vmem:[%s5 + $0xf0] sm:$0xf]
        %v2044 = vld [vmem:[%s5 + $0xf4] sm:$0xf]
        %v2045 = vld [vmem:[%s5 + $0xf8] sm:$0xf]
        %v2046 = vld [vmem:[%s5 + $0xfc] sm:$0xf]
        %v2047 = vld [vmem:[%s5 + $0x100] sm:$0xf]
        %v2048 = vld [vmem:[%s5 + $0x104] sm:$0xf]
        %v2049 = vld [vmem:[%s5 + $0x108] sm:$0xf]
        %v2050 = vld [vmem:[%s5 + $0x10c] sm:$0xf]
        %v2051 = vld [vmem:[%s5 + $0x110] sm:$0xf]
        %v2052 = vld [vmem:[%s5 + $0x114] sm:$0xf]
        %v2053 = vld [vmem:[%s5 + $0x118] sm:$0xf]
        %v2054 = vld [vmem:[%s5 + $0x11c] sm:$0xf]
        %v2055 = vld [vmem:[%s5 + $0x120] sm:$0xf]
        %v2056 = vld [vmem:[%s5 + $0x124] sm:$0xf]
        %v2057 = vld [vmem:[%s5 + $0x128] sm:$0xf]
        %v2058 = vld [vmem:[%s5 + $0x12c] sm:$0xf]
        %v2059 = vld [vmem:[%s5 + $0x130] sm:$0xf]
        %v2060 = vld [vmem:[%s5 + $0x134] sm:$0xf]
        %v2061 = vld [vmem:[%s5 + $0x138] sm:$0xf]
        %v2062 = vld [vmem:[%s5 + $0x13c] sm:$0xf]
        %v2063 = vld [vmem:[%s5 + $0x140] sm:$0xf]
        %v2064 = vld [vmem:[%s5 + $0x144] sm:$0xf]
        %v2065 = vld [vmem:[%s5 + $0x148] sm:$0xf]
        %v2066 = vld [vmem:[%s5 + $0x14c] sm:$0xf]
        %v2067 = vld [vmem:[%s5 + $0x150] sm:$0xf]
        %v2068 = vld [vmem:[%s5 + $0x154] sm:$0xf]
        %v2069 = vld [vmem:[%s5 + $0x158] sm:$0xf]
        %v2070 = vld [vmem:[%s5 + $0x15c] sm:$0xf]
        %v2071 = vld [vmem:[%s5 + $0x160] sm:$0xf]
        %v2072 = vld [vmem:[%s5 + $0x164] sm:$0xf]
        %v2073 = vld [vmem:[%s5 + $0x168] sm:$0xf]
        %v2074 = vld [vmem:[%s5 + $0x16c] sm:$0xf]
        %v2075 = vld [vmem:[%s5 + $0x170] sm:$0xf]
        %v2076 = vld [vmem:[%s5 + $0x174] sm:$0xf]
        %v2077 = vld [vmem:[%s5 + $0x178] sm:$0xf]
        %v2078 = vld [vmem:[%s5 + $0x17c] sm:$0xf]
        %v2079 = vld [vmem:[%s5 + $0x180] sm:$0xf]
        %v2080 = vld [vmem:[%s5 + $0x184] sm:$0xf]
        %v2081 = vld [vmem:[%s5 + $0x188] sm:$0xf]
        %v2082 = vld [vmem:[%s5 + $0x18c] sm:$0xf]
        %v2083 = vld [vmem:[%s5 + $0x190] sm:$0xf]
        %v2084 = vld [vmem:[%s5 + $0x194] sm:$0xf]
        %v2085 = vld [vmem:[%s5 + $0x198] sm:$0xf]
        %v2086 = vld [vmem:[%s5 + $0x19c] sm:$0xf]
        %v2087 = vld [vmem:[%s5 + $0x1a0] sm:$0xf]
        %v2088 = vld [vmem:[%s5 + $0x1a4] sm:$0xf]
        %v2089 = vld [vmem:[%s5 + $0x1a8] sm:$0xf]
        %v2090 = vld [vmem:[%s5 + $0x1ac] sm:$0xf]
        %v2091 = vld [vmem:[%s5 + $0x1b0] sm:$0xf]
        %v2092 = vld [vmem:[%s5 + $0x1b4] sm:$0xf]
        %v2093 = vld [vmem:[%s5 + $0x1b8] sm:$0xf]
        %v2094 = vld [vmem:[%s5 + $0x1bc] sm:$0xf]
        %v2095 = vld [vmem:[#allocation2] sm:$0x1]
        %v2097 = vperm.slane %v2095, 0
        %v2211 = vunpack.c.l.b16 %v1983
        %v2212 = vunpack.c.l.b16 %v1984
        %v2213 = vunpack.c.l.b16 %v1985
        %v2214 = vunpack.c.l.b16 %v1986
        %v2215 = vunpack.c.l.b16 %v1987
        %v2216 = vunpack.c.l.b16 %v1988
        %v2217 = vunpack.c.l.b16 %v1989
        %v2218 = vunpack.c.l.b16 %v1990
        %v2219 = vunpack.c.l.b16 %v1991
        %v2220 = vunpack.c.l.b16 %v1992
        %v2221 = vunpack.c.l.b16 %v1993
        %v2222 = vunpack.c.l.b16 %v1994
        %v2223 = vunpack.c.l.b16 %v1995
        %v2224 = vunpack.c.l.b16 %v1996
        %v2225 = vunpack.c.l.b16 %v1997
        %v2226 = vunpack.c.l.b16 %v1998
        %v2227 = vunpack.c.l.b16 %v1999
        %v2228 = vunpack.c.l.b16 %v2000
        %v2229 = vunpack.c.l.b16 %v2001
        %v2230 = vunpack.c.l.b16 %v2002
        %v2231 = vunpack.c.l.b16 %v2003
        %v2232 = vunpack.c.l.b16 %v2004
        %v2233 = vunpack.c.l.b16 %v2005
        %v2234 = vunpack.c.l.b16 %v2006
        %v2235 = vunpack.c.l.b16 %v2007
        %v2236 = vunpack.c.l.b16 %v2008
        %v2237 = vunpack.c.l.b16 %v2009
        %v2238 = vunpack.c.l.b16 %v2010
        %v2239 = vunpack.c.l.b16 %v2011
        %v2240 = vunpack.c.l.b16 %v2012
        %v2241 = vunpack.c.l.b16 %v2013
        %v2242 = vunpack.c.l.b16 %v2014
        %v2243 = vunpack.c.l.b16 %v2015
        %v2244 = vunpack.c.l.b16 %v2016
        %v2245 = vunpack.c.l.b16 %v2017
        %v2246 = vunpack.c.l.b16 %v2018
        %v2247 = vunpack.c.l.b16 %v2019
        %v2248 = vunpack.c.l.b16 %v2020
        %v2249 = vunpack.c.l.b16 %v2021
        %v2250 = vunpack.c.l.b16 %v2022
        %v2251 = vunpack.c.l.b16 %v2023
        %v2252 = vunpack.c.l.b16 %v2024
        %v2253 = vunpack.c.l.b16 %v2025
        %v2254 = vunpack.c.l.b16 %v2026
        %v2255 = vunpack.c.l.b16 %v2027
        %v2256 = vunpack.c.l.b16 %v2028
        %v2257 = vunpack.c.l.b16 %v2029
        %v2258 = vunpack.c.l.b16 %v2030
        %v2259 = vunpack.c.l.b16 %v2031
        %v2260 = vunpack.c.l.b16 %v2032
        %v2261 = vunpack.c.l.b16 %v2033
        %v2262 = vunpack.c.l.b16 %v2034
        %v2263 = vunpack.c.l.b16 %v2035
        %v2264 = vunpack.c.l.b16 %v2036
        %v2265 = vunpack.c.l.b16 %v2037
        %v2266 = vunpack.c.l.b16 %v2038
        %v2267 = vunpack.c.l.b16 %v2039
        %v2268 = vunpack.c.l.b16 %v2040
        %v2269 = vunpack.c.l.b16 %v2041
        %v2270 = vunpack.c.l.b16 %v2042
        %v2271 = vunpack.c.l.b16 %v2043
        %v2272 = vunpack.c.l.b16 %v2044
        %v2273 = vunpack.c.l.b16 %v2045
        %v2274 = vunpack.c.l.b16 %v2046
        %v2275 = vunpack.c.l.b16 %v2047
        %v2276 = vunpack.c.l.b16 %v2048
        %v2277 = vunpack.c.l.b16 %v2049
        %v2278 = vunpack.c.l.b16 %v2050
        %v2279 = vunpack.c.l.b16 %v2051
        %v2280 = vunpack.c.l.b16 %v2052
        %v2281 = vunpack.c.l.b16 %v2053
        %v2282 = vunpack.c.l.b16 %v2054
        %v2283 = vunpack.c.l.b16 %v2055
        %v2284 = vunpack.c.l.b16 %v2056
        %v2285 = vunpack.c.l.b16 %v2057
        %v2286 = vunpack.c.l.b16 %v2058
        %v2287 = vunpack.c.l.b16 %v2059
        %v2288 = vunpack.c.l.b16 %v2060
        %v2289 = vunpack.c.l.b16 %v2061
        %v2290 = vunpack.c.l.b16 %v2062
        %v2291 = vunpack.c.l.b16 %v2063
        %v2292 = vunpack.c.l.b16 %v2064
        %v2293 = vunpack.c.l.b16 %v2065
        %v2294 = vunpack.c.l.b16 %v2066
        %v2295 = vunpack.c.l.b16 %v2067
        %v2296 = vunpack.c.l.b16 %v2068
        %v2297 = vunpack.c.l.b16 %v2069
        %v2298 = vunpack.c.l.b16 %v2070
        %v2299 = vunpack.c.l.b16 %v2071
        %v2300 = vunpack.c.l.b16 %v2072
        %v2301 = vunpack.c.l.b16 %v2073
        %v2302 = vunpack.c.l.b16 %v2074
        %v2303 = vunpack.c.l.b16 %v2075
        %v2304 = vunpack.c.l.b16 %v2076
        %v2305 = vunpack.c.l.b16 %v2077
        %v2306 = vunpack.c.l.b16 %v2078
        %v2307 = vunpack.c.l.b16 %v2079
        %v2308 = vunpack.c.l.b16 %v2080
        %v2309 = vunpack.c.l.b16 %v2081
        %v2310 = vunpack.c.l.b16 %v2082
        %v2311 = vunpack.c.l.b16 %v2083
        %v2312 = vunpack.c.l.b16 %v2084
        %v2313 = vunpack.c.l.b16 %v2085
        %v2314 = vunpack.c.l.b16 %v2086
        %v2315 = vunpack.c.l.b16 %v2087
        %v2316 = vunpack.c.l.b16 %v2088
        %v2317 = vunpack.c.l.b16 %v2089
        %v2318 = vunpack.c.l.b16 %v2090
        %v2319 = vunpack.c.l.b16 %v2091
        %v2320 = vunpack.c.l.b16 %v2092
        %v2321 = vunpack.c.l.b16 %v2093
        %v2322 = vunpack.c.l.b16 %v2094
        %v2323 = vpack.c.b16 %v2212, %v2211
        %v2324 = vpack.c.b16 %v2214, %v2213
        %v2325 = vpack.c.b16 %v2216, %v2215
        %v2326 = vpack.c.b16 %v2218, %v2217
        %v2327 = vpack.c.b16 %v2220, %v2219
        %v2328 = vpack.c.b16 %v2222, %v2221
        %v2329 = vpack.c.b16 %v2224, %v2223
        %v2330 = vpack.c.b16 %v2226, %v2225
        %v2331 = vpack.c.b16 %v2228, %v2227
        %v2332 = vpack.c.b16 %v2230, %v2229
        %v2333 = vpack.c.b16 %v2232, %v2231
        %v2334 = vpack.c.b16 %v2234, %v2233
        %v2335 = vpack.c.b16 %v2236, %v2235
        %v2336 = vpack.c.b16 %v2238, %v2237
        %v2337 = vpack.c.b16 %v2240, %v2239
        %v2338 = vpack.c.b16 %v2242, %v2241
        %v2339 = vpack.c.b16 %v2244, %v2243
        %v2340 = vpack.c.b16 %v2246, %v2245
        %v2341 = vpack.c.b16 %v2248, %v2247
        %v2342 = vpack.c.b16 %v2250, %v2249
        %v2343 = vpack.c.b16 %v2252, %v2251
        %v2344 = vpack.c.b16 %v2254, %v2253
        %v2345 = vpack.c.b16 %v2256, %v2255
        %v2346 = vpack.c.b16 %v2258, %v2257
        %v2347 = vpack.c.b16 %v2260, %v2259
        %v2348 = vpack.c.b16 %v2262, %v2261
        %v2349 = vpack.c.b16 %v2264, %v2263
        %v2350 = vpack.c.b16 %v2266, %v2265
        %v2351 = vpack.c.b16 %v2268, %v2267
        %v2352 = vpack.c.b16 %v2270, %v2269
        %v2353 = vpack.c.b16 %v2272, %v2271
        %v2354 = vpack.c.b16 %v2274, %v2273
        %v2355 = vpack.c.b16 %v2276, %v2275
        %v2356 = vpack.c.b16 %v2278, %v2277
        %v2357 = vpack.c.b16 %v2280, %v2279
        %v2358 = vpack.c.b16 %v2282, %v2281
        %v2359 = vpack.c.b16 %v2284, %v2283
        %v2360 = vpack.c.b16 %v2286, %v2285
        %v2361 = vpack.c.b16 %v2288, %v2287
        %v2362 = vpack.c.b16 %v2290, %v2289
        %v2363 = vpack.c.b16 %v2292, %v2291
        %v2364 = vpack.c.b16 %v2294, %v2293
        %v2365 = vpack.c.b16 %v2296, %v2295
        %v2366 = vpack.c.b16 %v2298, %v2297
        %v2367 = vpack.c.b16 %v2300, %v2299
        %v2368 = vpack.c.b16 %v2302, %v2301
        %v2369 = vpack.c.b16 %v2304, %v2303
        %v2370 = vpack.c.b16 %v2306, %v2305
        %v2371 = vpack.c.b16 %v2308, %v2307
        %v2372 = vpack.c.b16 %v2310, %v2309
        %v2373 = vpack.c.b16 %v2312, %v2311
        %v2374 = vpack.c.b16 %v2314, %v2313
        %v2375 = vpack.c.b16 %v2316, %v2315
        %v2376 = vpack.c.b16 %v2318, %v2317
        %v2377 = vpack.c.b16 %v2320, %v2319
        %v2378 = vpack.c.b16 %v2322, %v2321
        %2435 = vmatpush.bf16.msra.mxu0 %v2330
        %2436 = vmatpush.bf16.msra.mxu0 %v2329
        %2437 = vmatpush.bf16.msra.mxu0 %v2328
        %2438 = vmatpush.bf16.msra.mxu0 %v2327
        %2439 = vmatpush.bf16.msra.mxu0 %v2326
        %2440 = vmatpush.bf16.msra.mxu0 %v2325
        %2441 = vmatpush.bf16.msra.mxu0 %v2324
        %2442 = vmatpush.bf16.msra.mxu0 %v2323
        %2443 = vmatmul.bf16.gmra.mxu0 %v1922
        %v2444 = vpop.f32.mrf.mxu0
        %v2445 = vadd.f32 %v2097, %v2444
        %v2446 = vpop.f32.mrf.mxu0
        %v2447 = vadd.f32 %v2097, %v2446
        %2448 = vdwg.mxu0
        %2449 = vmatpush.bf16.msra.mxu0 %v2338
        %2450 = vmatpush.bf16.msra.mxu0 %v2337
        %2451 = vmatpush.bf16.msra.mxu0 %v2336
        %2452 = vmatpush.bf16.msra.mxu0 %v2335
        %2453 = vmatpush.bf16.msra.mxu0 %v2334
        %2454 = vmatpush.bf16.msra.mxu0 %v2333
        %2455 = vmatpush.bf16.msra.mxu0 %v2332
        %2456 = vmatpush.bf16.msra.mxu0 %v2331
        %2457 = vmatmul.bf16.gmra.mxu0 %v1928
        %v2458 = vpop.f32.mrf.mxu0
        %v2459 = vadd.f32 %v2445, %v2458
        %v2460 = vpop.f32.mrf.mxu0
        %v2461 = vadd.f32 %v2447, %v2460
        %2462 = vdwg.mxu0
        %2463 = vmatpush.bf16.msra.mxu0 %v2346
        %2464 = vmatpush.bf16.msra.mxu0 %v2345
        %2465 = vmatpush.bf16.msra.mxu0 %v2344
        %2466 = vmatpush.bf16.msra.mxu0 %v2343
        %2467 = vmatpush.bf16.msra.mxu0 %v2342
        %2468 = vmatpush.bf16.msra.mxu0 %v2341
        %2469 = vmatpush.bf16.msra.mxu0 %v2340
        %2470 = vmatpush.bf16.msra.mxu0 %v2339
        %2471 = vmatmul.bf16.gmra.mxu0 %v1945
        %v2472 = vpop.f32.mrf.mxu0
        %v2473 = vadd.f32 %v2459, %v2472
        %v2474 = vpop.f32.mrf.mxu0
        %v2475 = vadd.f32 %v2461, %v2474
        %2476 = vdwg.mxu0
        %2477 = vmatpush.bf16.msra.mxu0 %v2354
        %2478 = vmatpush.bf16.msra.mxu0 %v2353
        %2479 = vmatpush.bf16.msra.mxu0 %v2352
        %2480 = vmatpush.bf16.msra.mxu0 %v2351
        %2481 = vmatpush.bf16.msra.mxu0 %v2350
        %2482 = vmatpush.bf16.msra.mxu0 %v2349
        %2483 = vmatpush.bf16.msra.mxu0 %v2348
        %2484 = vmatpush.bf16.msra.mxu0 %v2347
        %2485 = vmatmul.bf16.gmra.mxu0 %v1961
        %v2486 = vpop.f32.mrf.mxu0
        %v2487 = vadd.f32 %v2473, %v2486
        %v2488 = vpop.f32.mrf.mxu0
        %v2489 = vadd.f32 %v2475, %v2488
        %2490 = vdwg.mxu0
        %2491 = vmatpush.bf16.msra.mxu0 %v2362
        %2492 = vmatpush.bf16.msra.mxu0 %v2361
        %2493 = vmatpush.bf16.msra.mxu0 %v2360
        %2494 = vmatpush.bf16.msra.mxu0 %v2359
        %2495 = vmatpush.bf16.msra.mxu0 %v2358
        %2496 = vmatpush.bf16.msra.mxu0 %v2357
        %2497 = vmatpush.bf16.msra.mxu0 %v2356
        %2498 = vmatpush.bf16.msra.mxu0 %v2355
        %2499 = vmatmul.bf16.gmra.mxu0 %v1966
        %v2500 = vpop.f32.mrf.mxu0
        %v2501 = vadd.f32 %v2487, %v2500
        %v2502 = vpop.f32.mrf.mxu0
        %v2503 = vadd.f32 %v2489, %v2502
        %2504 = vdwg.mxu0
        %2505 = vmatpush.bf16.msra.mxu0 %v2370
        %2506 = vmatpush.bf16.msra.mxu0 %v2369
        %2507 = vmatpush.bf16.msra.mxu0 %v2368
        %2508 = vmatpush.bf16.msra.mxu0 %v2367
        %2509 = vmatpush.bf16.msra.mxu0 %v2366
        %2510 = vmatpush.bf16.msra.mxu0 %v2365
        %2511 = vmatpush.bf16.msra.mxu0 %v2364
        %2512 = vmatpush.bf16.msra.mxu0 %v2363
        %2513 = vmatmul.bf16.gmra.mxu0 %v1970
        %v2514 = vpop.f32.mrf.mxu0
        %v2515 = vadd.f32 %v2501, %v2514
        %v2516 = vpop.f32.mrf.mxu0
        %v2517 = vadd.f32 %v2503, %v2516
        %2518 = vdwg.mxu0
        %2519 = vmatpush.bf16.msra.mxu0 %v2378
        %2520 = vmatpush.bf16.msra.mxu0 %v2377
        %2521 = vmatpush.bf16.msra.mxu0 %v2376
        %2522 = vmatpush.bf16.msra.mxu0 %v2375
        %2523 = vmatpush.bf16.msra.mxu0 %v2374
        %2524 = vmatpush.bf16.msra.mxu0 %v2373
        %2525 = vmatpush.bf16.msra.mxu0 %v2372
        %2526 = vmatpush.bf16.msra.mxu0 %v2371
        %2527 = vmatmul.bf16.gmra.mxu0 %v1981
        %v2528 = vpop.f32.mrf.mxu0
        %v2529 = vadd.f32 %v2515, %v2528
        %v2530 = vpop.f32.mrf.mxu0
        %v2531 = vadd.f32 %v2517, %v2530
        %2532 = vdwg.mxu0
        %v2533 = vmax.f32 %v2529, 0.0
        %v2534 = vmax.f32 %v2531, 0.0
        %v2536 = vrot.slane %v2533, 1
        %v2538 = vmax.f32 %v2533, %v2536
        %v2539 = vrot.slane %v2533, 7
        %v2541 = vmax.f32 %v2538, %v2539
        %v2543 = vrot.slane %v2534, 1
        %v2545 = vmax.f32 %v2534, %v2543
        %v2546 = vmax.f32 %v2545, %v2539
        %v2547 = vrot.slane %v2534, 7
        %v2549 = vmax.f32 %v2545, %v2547
        %v2551 = vrot.slane %v2541, 1
        %v2553 = vrot.slane %v2541, 2
        %v2555 = vrot.slane %v2541, 3
        %v2558 = vrot.slane %v2546, 4
        %v2561 = vrot.slane %v2549, 5
        %v2563 = vrot.slane %v2549, 6
        %v2565 = vrot.slane %v2549, 7
        %vm2567 = vcmask 1040384
        %v2568 = vsel %vm2567, %v2538, %v2551
        %vm2569 = vcmask 1041408
        %v2570 = vsel %vm2569, %v2568, %v2553
        %vm2571 = vcmask 1042432
        %v2572 = vsel %vm2571, %v2570, %v2555
        %vm2573 = vcmask 1043456
        %v2574 = vsel %vm2573, %v2572, %v2558
        %vm2575 = vcmask 1044480
        %v2576 = vsel %vm2575, %v2574, %v2561
        %vm2577 = vcmask 1045504
        %v2578 = vsel %vm2577, %v2576, %v2563
        %vm2579 = vcmask 1046528
        %v2580 = vsel %vm2579, %v2578, %v2565
        %2582 = vrot.lane.b32.xlu0 %v2580, 120
        %v2583 = vpop.permute.xlu0 %2582
        %v2585 = vmax.f32 %v2580, %v2583
        %2586 = vrot.lane.b32.xlu0 %v2580, 8
        %v2587 = vpop.permute.xlu0 %2586
        %v2589 = vmax.f32 %v2585, %v2587
        %2591 = vrot.lane.b32.xlu0 %v2589, 120
        %v2592 = vpop.permute.xlu0 %2591
        %2594 = vrot.lane.b32.xlu0 %v2589, 112
        %v2595 = vpop.permute.xlu0 %2594
        %2597 = vrot.lane.b32.xlu0 %v2589, 104
        %v2598 = vpop.permute.xlu0 %2597
        %2600 = vrot.lane.b32.xlu0 %v2589, 96
        %v2601 = vpop.permute.xlu0 %2600
        %2603 = vrot.lane.b32.xlu0 %v2589, 88
        %v2604 = vpop.permute.xlu0 %2603
        %2606 = vrot.lane.b32.xlu0 %v2589, 80
        %v2607 = vpop.permute.xlu0 %2606
        %2609 = vrot.lane.b32.xlu0 %v2589, 72
        %v2610 = vpop.permute.xlu0 %2609
        %vm2612 = vcmask 64512
        %v2613 = vsel %vm2612, %v2585, %v2592
        %vm2614 = vcmask 130048
        %v2615 = vsel %vm2614, %v2613, %v2595
        %vm2616 = vcmask 195584
        %v2617 = vsel %vm2616, %v2615, %v2598
        %vm2618 = vcmask 261120
        %v2619 = vsel %vm2618, %v2617, %v2601
        %vm2620 = vcmask 326656
        %v2621 = vsel %vm2620, %v2619, %v2604
        %vm2622 = vcmask 392192
        %v2623 = vsel %vm2622, %v2621, %v2607
        %vm2624 = vcmask 457728
        %v2625 = vsel %vm2624, %v2623, %v2610
        %v2626 = vpack.c.bf16 %v2625, %v2625
        %v2628 = vunpack.c.l.b16 %v2626
        %v2629 = vpack.c.b16 %v2628, %v2628
        %2630 = vrot.lane.b32.xlu0 %v2629, 8
        %v2631 = vpop.permute.xlu0 %2630
        %v2634 = vsel %vm2612, 0, %v2631
        %vm2635 = vcmask 588800
        %v2636 = vsel %vm2635, %v2634, 0
        %v2637 = vshrl.u32 %v2636, 16
        %v2639 = vrot.slane %v2637, 7
        %v2640 = vshll.u32 %v2636, 16
        %v2642 = vor.u32 %v2639, %v2640
        %vm2644 = vcmask 1040384
        %vm2645 = vsmask.f32 256
        %vm2646 = vmand %vm2644, %vm2645
        %v2647 = vsel %vm2646, 0, %v2642
        %vm2648 = vcmask 1044480
        %vm2649 = vsmask.f32 4352
        %vm2650 = vmand %vm2648, %vm2649
        %v2651 = vsel %vm2650, %v2647, 0
        %v2653 = vshrl.u32 %v2651, 16
        %v2655 = vshll.u32 %v2651, 16
        %v2657 = vrot.slane %v2655, 1
        %v2658 = vor.u32 %v2653, %v2657
        %2659 = vrot.lane.b32.xlu0 %v2658, 80
        %v2660 = vpop.permute.xlu0 %2659
        %v2662 = vrot.slane %v2651, 1
        %2663 = vrot.lane.b32.xlu0 %v2662, 32
        %v2664 = vpop.permute.xlu0 %2663
        %vm2665 = vcmask 654336
        %v2667 = vsel %vm2665, %v2651, %v2660
        %v2670 = vsel %vm2618, %v2660, %v2664
        %v2671 = vld [vmem:[#allocation5] sm:$0xf]
        %v2672 = vld [vmem:[#allocation5 + $0x4] sm:$0xf]
        %v2673 = vld [vmem:[#allocation5 + $0x8] sm:$0xf]
        %v2674 = vld [vmem:[#allocation5 + $0xc] sm:$0xf]
        %v2675 = vld [vmem:[#allocation5 + $0x10] sm:$0xf]
        %v2676 = vld [vmem:[#allocation5 + $0x14] sm:$0xf]
        %v2677 = vld [vmem:[#allocation5 + $0x18] sm:$0xf]
        %v2678 = vld [vmem:[#allocation5 + $0x1c] sm:$0xf]
        %v2679 = vld [vmem:[#allocation5 + $0x20] sm:$0xf]
        %v2680 = vld [vmem:[#allocation5 + $0x24] sm:$0xf]
        %v2681 = vld [vmem:[#allocation5 + $0x28] sm:$0xf]
        %v2682 = vld [vmem:[#allocation5 + $0x2c] sm:$0xf]
        %v2683 = vld [vmem:[#allocation5 + $0x30] sm:$0xf]
        %v2684 = vld [vmem:[#allocation5 + $0x34] sm:$0xf]
        %v2685 = vld [vmem:[#allocation5 + $0x38] sm:$0xf]
        %v2686 = vld [vmem:[#allocation5 + $0x3c] sm:$0xf]
        %v2687 = vld [vmem:[#allocation5 + $0x40] sm:$0xf]
        %v2688 = vld [vmem:[#allocation5 + $0x44] sm:$0xf]
        %v2689 = vld [vmem:[#allocation5 + $0x48] sm:$0xf]
        %v2690 = vld [vmem:[#allocation5 + $0x4c] sm:$0xf]
        %v2691 = vld [vmem:[#allocation5 + $0x50] sm:$0xf]
        %v2692 = vld [vmem:[#allocation5 + $0x54] sm:$0xf]
        %v2693 = vld [vmem:[#allocation5 + $0x58] sm:$0xf]
        %v2694 = vld [vmem:[#allocation5 + $0x5c] sm:$0xf]
        %v2695 = vld [vmem:[#allocation5 + $0x60] sm:$0xf]
        %v2696 = vld [vmem:[#allocation5 + $0x64] sm:$0xf]
        %v2697 = vld [vmem:[#allocation5 + $0x68] sm:$0xf]
        %v2698 = vld [vmem:[#allocation5 + $0x6c] sm:$0xf]
        %v2699 = vld [vmem:[#allocation5 + $0x70] sm:$0xf]
        %v2700 = vld [vmem:[#allocation5 + $0x74] sm:$0xf]
        %v2701 = vld [vmem:[#allocation7] sm:$0x1]
        %v2703 = vperm.slane %v2701, 0
        %v2735 = vunpack.c.l.b16 %v2671
        %v2736 = vunpack.c.l.b16 %v2672
        %v2737 = vunpack.c.l.b16 %v2673
        %v2738 = vunpack.c.l.b16 %v2674
        %v2739 = vunpack.c.l.b16 %v2675
        %v2740 = vunpack.c.l.b16 %v2676
        %v2741 = vunpack.c.l.b16 %v2677
        %v2742 = vunpack.c.l.b16 %v2678
        %v2743 = vunpack.c.l.b16 %v2679
        %v2744 = vunpack.c.l.b16 %v2680
        %v2745 = vunpack.c.l.b16 %v2681
        %v2746 = vunpack.c.l.b16 %v2682
        %v2747 = vunpack.c.l.b16 %v2683
        %v2748 = vunpack.c.l.b16 %v2684
        %v2749 = vunpack.c.l.b16 %v2685
        %v2750 = vunpack.c.l.b16 %v2686
        %v2751 = vunpack.c.l.b16 %v2687
        %v2752 = vunpack.c.l.b16 %v2688
        %v2753 = vunpack.c.l.b16 %v2689
        %v2754 = vunpack.c.l.b16 %v2690
        %v2755 = vunpack.c.l.b16 %v2691
        %v2756 = vunpack.c.l.b16 %v2692
        %v2757 = vunpack.c.l.b16 %v2693
        %v2758 = vunpack.c.l.b16 %v2694
        %v2759 = vunpack.c.l.b16 %v2695
        %v2760 = vunpack.c.l.b16 %v2696
        %v2761 = vunpack.c.l.b16 %v2697
        %v2762 = vunpack.c.l.b16 %v2698
        %v2763 = vunpack.c.l.b16 %v2699
        %v2764 = vunpack.c.l.b16 %v2700
        %v2765 = vpack.c.b16 %v2736, %v2735
        %v2766 = vpack.c.b16 %v2738, %v2737
        %v2767 = vpack.c.b16 %v2740, %v2739
        %v2768 = vpack.c.b16 %v2742, %v2741
        %v2769 = vpack.c.b16 %v2744, %v2743
        %v2770 = vpack.c.b16 %v2746, %v2745
        %v2771 = vpack.c.b16 %v2748, %v2747
        %v2772 = vpack.c.b16 %v2750, %v2749
        %v2773 = vpack.c.b16 %v2752, %v2751
        %v2774 = vpack.c.b16 %v2754, %v2753
        %v2775 = vpack.c.b16 %v2756, %v2755
        %v2776 = vpack.c.b16 %v2758, %v2757
        %v2777 = vpack.c.b16 %v2760, %v2759
        %v2778 = vpack.c.b16 %v2762, %v2761
        %v2779 = vpack.c.b16 %v2764, %v2763
        %vm2795 = vcmask 916480
        %v2796 = vsel %vm2795, %v2670, 0
        %2798 = vmatpush.bf16.msra.mxu0 %v2772
        %2799 = vmatpush.bf16.msra.mxu0 %v2771
        %2800 = vmatpush.bf16.msra.mxu0 %v2770
        %2801 = vmatpush.bf16.msra.mxu0 %v2769
        %2802 = vmatpush.bf16.msra.mxu0 %v2768
        %2803 = vmatpush.bf16.msra.mxu0 %v2767
        %2804 = vmatpush.bf16.msra.mxu0 %v2766
        %2805 = vmatpush.bf16.msra.mxu0 %v2765
        %2806 = vmatmul.bf16.gmra.mxu0 %v2667
        %v2807 = vpop.f32.mrf.mxu0
        %v2808 = vadd.f32 %v2703, %v2807
        %v2809 = vpop.f32.mrf.mxu0
        %2810 = vdwg.mxu0
        %2811 = vmatpush.bf16.msra.mxu0 0
        %2812 = vmatpush.bf16.msra.mxu0 %v2779
        %2813 = vmatpush.bf16.msra.mxu0 %v2778
        %2814 = vmatpush.bf16.msra.mxu0 %v2777
        %2815 = vmatpush.bf16.msra.mxu0 %v2776
        %2816 = vmatpush.bf16.msra.mxu0 %v2775
        %2817 = vmatpush.bf16.msra.mxu0 %v2774
        %2818 = vmatpush.bf16.msra.mxu0 %v2773
        %2819 = vmatmul.bf16.gmra.mxu0 %v2796
        %v2820 = vpop.f32.mrf.mxu0
        %v2821 = vadd.f32 %v2808, %v2820
        %v2822 = vpop.f32.mrf.mxu0
        %2823 = vdwg.mxu0
        %v2824 = vmax.f32 %v2821, 0.0
        %v2825 = vpack.c.bf16 %v2824, %v2824
        %v2827 = vunpack.c.l.b16 %v2825
        %v2828 = vpack.c.b16 %v2827, %v2827
        %2829 = vrot.lane.b32.xlu0 %v2828, 8
        %v2830 = vpop.permute.xlu0 %2829
        %v2832 = vsel %vm2612, 0, %v2830
        %v2833 = vsel %vm2635, %v2832, 0
        %v2834 = vshrl.u32 %v2833, 16
        %v2836 = vrot.slane %v2834, 7
        %v2837 = vshll.u32 %v2833, 16
        %v2839 = vor.u32 %v2836, %v2837
        %v2841 = vsel %vm2646, 0, %v2839
        %v2842 = vsel %vm2650, %v2841, 0
        %v2844 = vshrl.u32 %v2842, 16
        %v2846 = vshll.u32 %v2842, 16
        %v2848 = vrot.slane %v2846, 1
        %v2849 = vor.u32 %v2844, %v2848
        %2850 = vrot.lane.b32.xlu0 %v2849, 80
        %v2851 = vpop.permute.xlu0 %2850
        %v2853 = vrot.slane %v2842, 1
        %2854 = vrot.lane.b32.xlu0 %v2853, 32
        %v2855 = vpop.permute.xlu0 %2854
        %v2857 = vsel %vm2665, %v2842, %v2851
        %v2860 = vsel %vm2618, %v2851, %v2855
        %v2861 = vld [vmem:[#allocation8] sm:$0xf]
        %v2862 = vld [vmem:[#allocation8 + $0x4] sm:$0xf]
        %v2863 = vld [vmem:[#allocation8 + $0x8] sm:$0xf]
        %v2864 = vld [vmem:[#allocation8 + $0xc] sm:$0xf]
        %v2865 = vld [vmem:[#allocation8 + $0x10] sm:$0xf]
        %v2866 = vld [vmem:[#allocation8 + $0x14] sm:$0xf]
        %v2867 = vld [vmem:[#allocation8 + $0x18] sm:$0xf]
        %v2868 = vld [vmem:[#allocation8 + $0x1c] sm:$0xf]
        %v2869 = vld [vmem:[#allocation8 + $0x20] sm:$0xf]
        %v2870 = vld [vmem:[#allocation8 + $0x24] sm:$0xf]
        %v2871 = vld [vmem:[#allocation8 + $0x28] sm:$0xf]
        %v2872 = vld [vmem:[#allocation8 + $0x2c] sm:$0xf]
        %v2873 = vld [vmem:[#allocation8 + $0x30] sm:$0xf]
        %v2874 = vld [vmem:[#allocation8 + $0x34] sm:$0xf]
        %v2875 = vld [vmem:[#allocation8 + $0x38] sm:$0xf]
        %v2876 = vld [vmem:[#allocation8 + $0x3c] sm:$0xf]
        %v2877 = vld [vmem:[#allocation8 + $0x40] sm:$0xf]
        %v2878 = vld [vmem:[#allocation8 + $0x44] sm:$0xf]
        %v2879 = vld [vmem:[#allocation8 + $0x48] sm:$0xf]
        %v2880 = vld [vmem:[#allocation8 + $0x4c] sm:$0xf]
        %v2881 = vld [vmem:[#allocation8 + $0x50] sm:$0xf]
        %v2882 = vld [vmem:[#allocation8 + $0x54] sm:$0xf]
        %v2883 = vld [vmem:[#allocation8 + $0x58] sm:$0xf]
        %v2884 = vld [vmem:[#allocation8 + $0x5c] sm:$0xf]
        %v2885 = vld [vmem:[#allocation8 + $0x60] sm:$0xf]
        %v2886 = vld [vmem:[#allocation8 + $0x64] sm:$0xf]
        %v2887 = vld [vmem:[#allocation8 + $0x68] sm:$0xf]
        %v2888 = vld [vmem:[#allocation8 + $0x6c] sm:$0xf]
        %v2889 = vld [vmem:[#allocation8 + $0x70] sm:$0xf]
        %v2890 = vld [vmem:[#allocation8 + $0x74] sm:$0xf]
        %v2891 = vld [vmem:[#allocation10] sm:$0x1]
        %v2893 = vperm.slane %v2891, 0
        %v2925 = vunpack.c.l.b16 %v2861
        %v2926 = vunpack.c.l.b16 %v2862
        %v2927 = vunpack.c.l.b16 %v2863
        %v2928 = vunpack.c.l.b16 %v2864
        %v2929 = vunpack.c.l.b16 %v2865
        %v2930 = vunpack.c.l.b16 %v2866
        %v2931 = vunpack.c.l.b16 %v2867
        %v2932 = vunpack.c.l.b16 %v2868
        %v2933 = vunpack.c.l.b16 %v2869
        %v2934 = vunpack.c.l.b16 %v2870
        %v2935 = vunpack.c.l.b16 %v2871
        %v2936 = vunpack.c.l.b16 %v2872
        %v2937 = vunpack.c.l.b16 %v2873
        %v2938 = vunpack.c.l.b16 %v2874
        %v2939 = vunpack.c.l.b16 %v2875
        %v2940 = vunpack.c.l.b16 %v2876
        %v2941 = vunpack.c.l.b16 %v2877
        %v2942 = vunpack.c.l.b16 %v2878
        %v2943 = vunpack.c.l.b16 %v2879
        %v2944 = vunpack.c.l.b16 %v2880
        %v2945 = vunpack.c.l.b16 %v2881
        %v2946 = vunpack.c.l.b16 %v2882
        %v2947 = vunpack.c.l.b16 %v2883
        %v2948 = vunpack.c.l.b16 %v2884
        %v2949 = vunpack.c.l.b16 %v2885
        %v2950 = vunpack.c.l.b16 %v2886
        %v2951 = vunpack.c.l.b16 %v2887
        %v2952 = vunpack.c.l.b16 %v2888
        %v2953 = vunpack.c.l.b16 %v2889
        %v2954 = vunpack.c.l.b16 %v2890
        %v2955 = vpack.c.b16 %v2926, %v2925
        %v2956 = vpack.c.b16 %v2928, %v2927
        %v2957 = vpack.c.b16 %v2930, %v2929
        %v2958 = vpack.c.b16 %v2932, %v2931
        %v2959 = vpack.c.b16 %v2934, %v2933
        %v2960 = vpack.c.b16 %v2936, %v2935
        %v2961 = vpack.c.b16 %v2938, %v2937
        %v2962 = vpack.c.b16 %v2940, %v2939
        %v2963 = vpack.c.b16 %v2942, %v2941
        %v2964 = vpack.c.b16 %v2944, %v2943
        %v2965 = vpack.c.b16 %v2946, %v2945
        %v2966 = vpack.c.b16 %v2948, %v2947
        %v2967 = vpack.c.b16 %v2950, %v2949
        %v2968 = vpack.c.b16 %v2952, %v2951
        %v2969 = vpack.c.b16 %v2954, %v2953
        %v2985 = vsel %vm2795, %v2860, 0
        %2987 = vmatpush.bf16.msra.mxu0 %v2962
        %2988 = vmatpush.bf16.msra.mxu0 %v2961
        %2989 = vmatpush.bf16.msra.mxu0 %v2960
        %2990 = vmatpush.bf16.msra.mxu0 %v2959
        %2991 = vmatpush.bf16.msra.mxu0 %v2958
        %2992 = vmatpush.bf16.msra.mxu0 %v2957
        %2993 = vmatpush.bf16.msra.mxu0 %v2956
        %2994 = vmatpush.bf16.msra.mxu0 %v2955
        %2995 = vmatmul.bf16.gmra.mxu0 %v2857
        %v2996 = vpop.f32.mrf.mxu0
        %v2997 = vadd.f32 %v2893, %v2996
        %v2998 = vpop.f32.mrf.mxu0
        %2999 = vdwg.mxu0
        %3000 = vmatpush.bf16.msra.mxu0 0
        %3001 = vmatpush.bf16.msra.mxu0 %v2969
        %3002 = vmatpush.bf16.msra.mxu0 %v2968
        %3003 = vmatpush.bf16.msra.mxu0 %v2967
        %3004 = vmatpush.bf16.msra.mxu0 %v2966
        %3005 = vmatpush.bf16.msra.mxu0 %v2965
        %3006 = vmatpush.bf16.msra.mxu0 %v2964
        %3007 = vmatpush.bf16.msra.mxu0 %v2963
        %3008 = vmatmul.bf16.gmra.mxu0 %v2985
        %v3009 = vpop.f32.mrf.mxu0
        %v3010 = vadd.f32 %v2997, %v3009
        %v3011 = vpop.f32.mrf.mxu0
        %3012 = vdwg.mxu0
        %v3013 = vadd.f32 %v3010, %v2625
        %v3014 = vmax.f32 %v3013, 0.0
        %v3015 = vpack.c.bf16 %v3014, %v3014
        %v3017 = vunpack.c.l.b16 %v3015
        %v3018 = vpack.c.b16 %v3017, %v3017
        %3019 = vrot.lane.b32.xlu0 %v3018, 8
        %v3020 = vpop.permute.xlu0 %3019
        %v3022 = vsel %vm2612, 0, %v3020
        %v3023 = vsel %vm2635, %v3022, 0
        %v3024 = vshrl.u32 %v3023, 16
        %v3026 = vrot.slane %v3024, 7
        %v3027 = vshll.u32 %v3023, 16
        %v3029 = vor.u32 %v3026, %v3027
        %v3031 = vsel %vm2646, 0, %v3029
        %v3032 = vsel %vm2650, %v3031, 0
        %v3034 = vshrl.u32 %v3032, 16
        %v3036 = vshll.u32 %v3032, 16
        %v3038 = vrot.slane %v3036, 1
        %v3039 = vor.u32 %v3034, %v3038
        %3040 = vrot.lane.b32.xlu0 %v3039, 80
        %v3041 = vpop.permute.xlu0 %3040
        %v3043 = vrot.slane %v3032, 1
        %3044 = vrot.lane.b32.xlu0 %v3043, 32
        %v3045 = vpop.permute.xlu0 %3044
        %v3047 = vsel %vm2665, %v3032, %v3041
        %v3050 = vsel %vm2618, %v3041, %v3045
        %v3051 = vld [vmem:[#allocation11] sm:$0xf]
        %v3052 = vld [vmem:[#allocation11 + $0x4] sm:$0xf]
        %v3053 = vld [vmem:[#allocation11 + $0x8] sm:$0xf]
        %v3054 = vld [vmem:[#allocation11 + $0xc] sm:$0xf]
        %v3055 = vld [vmem:[#allocation11 + $0x10] sm:$0xf]
        %v3056 = vld [vmem:[#allocation11 + $0x14] sm:$0xf]
        %v3057 = vld [vmem:[#allocation11 + $0x18] sm:$0xf]
        %v3058 = vld [vmem:[#allocation11 + $0x1c] sm:$0xf]
        %v3059 = vld [vmem:[#allocation11 + $0x20] sm:$0xf]
        %v3060 = vld [vmem:[#allocation11 + $0x24] sm:$0xf]
        %v3061 = vld [vmem:[#allocation11 + $0x28] sm:$0xf]
        %v3062 = vld [vmem:[#allocation11 + $0x2c] sm:$0xf]
        %v3063 = vld [vmem:[#allocation11 + $0x30] sm:$0xf]
        %v3064 = vld [vmem:[#allocation11 + $0x34] sm:$0xf]
        %v3065 = vld [vmem:[#allocation11 + $0x38] sm:$0xf]
        %v3066 = vld [vmem:[#allocation11 + $0x3c] sm:$0xf]
        %v3067 = vld [vmem:[#allocation11 + $0x40] sm:$0xf]
        %v3068 = vld [vmem:[#allocation11 + $0x44] sm:$0xf]
        %v3069 = vld [vmem:[#allocation11 + $0x48] sm:$0xf]
        %v3070 = vld [vmem:[#allocation11 + $0x4c] sm:$0xf]
        %v3071 = vld [vmem:[#allocation11 + $0x50] sm:$0xf]
        %v3072 = vld [vmem:[#allocation11 + $0x54] sm:$0xf]
        %v3073 = vld [vmem:[#allocation11 + $0x58] sm:$0xf]
        %v3074 = vld [vmem:[#allocation11 + $0x5c] sm:$0xf]
        %v3075 = vld [vmem:[#allocation11 + $0x60] sm:$0xf]
        %v3076 = vld [vmem:[#allocation11 + $0x64] sm:$0xf]
        %v3077 = vld [vmem:[#allocation11 + $0x68] sm:$0xf]
        %v3078 = vld [vmem:[#allocation11 + $0x6c] sm:$0xf]
        %v3079 = vld [vmem:[#allocation11 + $0x70] sm:$0xf]
        %v3080 = vld [vmem:[#allocation11 + $0x74] sm:$0xf]
        %v3081 = vld [vmem:[#allocation13] sm:$0x1]
        %v3083 = vperm.slane %v3081, 0
        %v3115 = vunpack.c.l.b16 %v3051
        %v3116 = vunpack.c.l.b16 %v3052
        %v3117 = vunpack.c.l.b16 %v3053
        %v3118 = vunpack.c.l.b16 %v3054
        %v3119 = vunpack.c.l.b16 %v3055
        %v3120 = vunpack.c.l.b16 %v3056
        %v3121 = vunpack.c.l.b16 %v3057
        %v3122 = vunpack.c.l.b16 %v3058
        %v3123 = vunpack.c.l.b16 %v3059
        %v3124 = vunpack.c.l.b16 %v3060
        %v3125 = vunpack.c.l.b16 %v3061
        %v3126 = vunpack.c.l.b16 %v3062
        %v3127 = vunpack.c.l.b16 %v3063
        %v3128 = vunpack.c.l.b16 %v3064
        %v3129 = vunpack.c.l.b16 %v3065
        %v3130 = vunpack.c.l.b16 %v3066
        %v3131 = vunpack.c.l.b16 %v3067
        %v3132 = vunpack.c.l.b16 %v3068
        %v3133 = vunpack.c.l.b16 %v3069
        %v3134 = vunpack.c.l.b16 %v3070
        %v3135 = vunpack.c.l.b16 %v3071
        %v3136 = vunpack.c.l.b16 %v3072
        %v3137 = vunpack.c.l.b16 %v3073
        %v3138 = vunpack.c.l.b16 %v3074
        %v3139 = vunpack.c.l.b16 %v3075
        %v3140 = vunpack.c.l.b16 %v3076
        %v3141 = vunpack.c.l.b16 %v3077
        %v3142 = vunpack.c.l.b16 %v3078
        %v3143 = vunpack.c.l.b16 %v3079
        %v3144 = vunpack.c.l.b16 %v3080
        %v3145 = vpack.c.b16 %v3116, %v3115
        %v3146 = vpack.c.b16 %v3118, %v3117
        %v3147 = vpack.c.b16 %v3120, %v3119
        %v3148 = vpack.c.b16 %v3122, %v3121
        %v3149 = vpack.c.b16 %v3124, %v3123
        %v3150 = vpack.c.b16 %v3126, %v3125
        %v3151 = vpack.c.b16 %v3128, %v3127
        %v3152 = vpack.c.b16 %v3130, %v3129
        %v3153 = vpack.c.b16 %v3132, %v3131
        %v3154 = vpack.c.b16 %v3134, %v3133
        %v3155 = vpack.c.b16 %v3136, %v3135
        %v3156 = vpack.c.b16 %v3138, %v3137
        %v3157 = vpack.c.b16 %v3140, %v3139
        %v3158 = vpack.c.b16 %v3142, %v3141
        %v3159 = vpack.c.b16 %v3144, %v3143
        %v3175 = vsel %vm2795, %v3050, 0
        %3177 = vmatpush.bf16.msra.mxu0 %v3152
        %3178 = vmatpush.bf16.msra.mxu0 %v3151
        %3179 = vmatpush.bf16.msra.mxu0 %v3150
        %3180 = vmatpush.bf16.msra.mxu0 %v3149
        %3181 = vmatpush.bf16.msra.mxu0 %v3148
        %3182 = vmatpush.bf16.msra.mxu0 %v3147
        %3183 = vmatpush.bf16.msra.mxu0 %v3146
        %3184 = vmatpush.bf16.msra.mxu0 %v3145
        %3185 = vmatmul.bf16.gmra.mxu0 %v3047
        %v3186 = vpop.f32.mrf.mxu0
        %v3187 = vadd.f32 %v3083, %v3186
        %v3188 = vpop.f32.mrf.mxu0
        %3189 = vdwg.mxu0
        %3190 = vmatpush.bf16.msra.mxu0 0
        %3191 = vmatpush.bf16.msra.mxu0 %v3159
        %3192 = vmatpush.bf16.msra.mxu0 %v3158
        %3193 = vmatpush.bf16.msra.mxu0 %v3157
        %3194 = vmatpush.bf16.msra.mxu0 %v3156
        %3195 = vmatpush.bf16.msra.mxu0 %v3155
        %3196 = vmatpush.bf16.msra.mxu0 %v3154
        %3197 = vmatpush.bf16.msra.mxu0 %v3153
        %3198 = vmatmul.bf16.gmra.mxu0 %v3175
        %v3199 = vpop.f32.mrf.mxu0
        %v3200 = vadd.f32 %v3187, %v3199
        %v3201 = vpop.f32.mrf.mxu0
        %3202 = vdwg.mxu0
        %v3203 = vmax.f32 %v3200, 0.0
        %v3204 = vpack.c.bf16 %v3203, %v3203
        %v3206 = vunpack.c.l.b16 %v3204
        %v3207 = vpack.c.b16 %v3206, %v3206
        %3208 = vrot.lane.b32.xlu0 %v3207, 8
        %v3209 = vpop.permute.xlu0 %3208
        %v3211 = vsel %vm2612, 0, %v3209
        %v3212 = vsel %vm2635, %v3211, 0
        %v3213 = vshrl.u32 %v3212, 16
        %v3215 = vrot.slane %v3213, 7
        %v3216 = vshll.u32 %v3212, 16
        %v3218 = vor.u32 %v3215, %v3216
        %v3220 = vsel %vm2646, 0, %v3218
        %v3221 = vsel %vm2650, %v3220, 0
        %v3223 = vshrl.u32 %v3221, 16
        %v3225 = vshll.u32 %v3221, 16
        %v3227 = vrot.slane %v3225, 1
        %v3228 = vor.u32 %v3223, %v3227
        %3229 = vrot.lane.b32.xlu0 %v3228, 80
        %v3230 = vpop.permute.xlu0 %3229
        %v3232 = vrot.slane %v3221, 1
        %3233 = vrot.lane.b32.xlu0 %v3232, 32
        %v3234 = vpop.permute.xlu0 %3233
        %v3236 = vsel %vm2665, %v3221, %v3230
        %v3239 = vsel %vm2618, %v3230, %v3234
        %v3240 = vld [vmem:[#allocation14] sm:$0xf]
        %v3241 = vld [vmem:[#allocation14 + $0x4] sm:$0xf]
        %v3242 = vld [vmem:[#allocation14 + $0x8] sm:$0xf]
        %v3243 = vld [vmem:[#allocation14 + $0xc] sm:$0xf]
        %v3244 = vld [vmem:[#allocation14 + $0x10] sm:$0xf]
        %v3245 = vld [vmem:[#allocation14 + $0x14] sm:$0xf]
        %v3246 = vld [vmem:[#allocation14 + $0x18] sm:$0xf]
        %v3247 = vld [vmem:[#allocation14 + $0x1c] sm:$0xf]
        %v3248 = vld [vmem:[#allocation14 + $0x20] sm:$0xf]
        %v3249 = vld [vmem:[#allocation14 + $0x24] sm:$0xf]
        %v3250 = vld [vmem:[#allocation14 + $0x28] sm:$0xf]
        %v3251 = vld [vmem:[#allocation14 + $0x2c] sm:$0xf]
        %v3252 = vld [vmem:[#allocation14 + $0x30] sm:$0xf]
        %v3253 = vld [vmem:[#allocation14 + $0x34] sm:$0xf]
        %v3254 = vld [vmem:[#allocation14 + $0x38] sm:$0xf]
        %v3255 = vld [vmem:[#allocation14 + $0x3c] sm:$0xf]
        %v3256 = vld [vmem:[#allocation14 + $0x40] sm:$0xf]
        %v3257 = vld [vmem:[#allocation14 + $0x44] sm:$0xf]
        %v3258 = vld [vmem:[#allocation14 + $0x48] sm:$0xf]
        %v3259 = vld [vmem:[#allocation14 + $0x4c] sm:$0xf]
        %v3260 = vld [vmem:[#allocation14 + $0x50] sm:$0xf]
        %v3261 = vld [vmem:[#allocation14 + $0x54] sm:$0xf]
        %v3262 = vld [vmem:[#allocation14 + $0x58] sm:$0xf]
        %v3263 = vld [vmem:[#allocation14 + $0x5c] sm:$0xf]
        %v3264 = vld [vmem:[#allocation14 + $0x60] sm:$0xf]
        %v3265 = vld [vmem:[#allocation14 + $0x64] sm:$0xf]
        %v3266 = vld [vmem:[#allocation14 + $0x68] sm:$0xf]
        %v3267 = vld [vmem:[#allocation14 + $0x6c] sm:$0xf]
        %v3268 = vld [vmem:[#allocation14 + $0x70] sm:$0xf]
        %v3269 = vld [vmem:[#allocation14 + $0x74] sm:$0xf]
        %v3270 = vld [vmem:[#allocation16] sm:$0x1]
        %v3272 = vperm.slane %v3270, 0
        %v3304 = vunpack.c.l.b16 %v3240
        %v3305 = vunpack.c.l.b16 %v3241
        %v3306 = vunpack.c.l.b16 %v3242
        %v3307 = vunpack.c.l.b16 %v3243
        %v3308 = vunpack.c.l.b16 %v3244
        %v3309 = vunpack.c.l.b16 %v3245
        %v3310 = vunpack.c.l.b16 %v3246
        %v3311 = vunpack.c.l.b16 %v3247
        %v3312 = vunpack.c.l.b16 %v3248
        %v3313 = vunpack.c.l.b16 %v3249
        %v3314 = vunpack.c.l.b16 %v3250
        %v3315 = vunpack.c.l.b16 %v3251
        %v3316 = vunpack.c.l.b16 %v3252
        %v3317 = vunpack.c.l.b16 %v3253
        %v3318 = vunpack.c.l.b16 %v3254
        %v3319 = vunpack.c.l.b16 %v3255
        %v3320 = vunpack.c.l.b16 %v3256
        %v3321 = vunpack.c.l.b16 %v3257
        %v3322 = vunpack.c.l.b16 %v3258
        %v3323 = vunpack.c.l.b16 %v3259
        %v3324 = vunpack.c.l.b16 %v3260
        %v3325 = vunpack.c.l.b16 %v3261
        %v3326 = vunpack.c.l.b16 %v3262
        %v3327 = vunpack.c.l.b16 %v3263
        %v3328 = vunpack.c.l.b16 %v3264
        %v3329 = vunpack.c.l.b16 %v3265
        %v3330 = vunpack.c.l.b16 %v3266
        %v3331 = vunpack.c.l.b16 %v3267
        %v3332 = vunpack.c.l.b16 %v3268
        %v3333 = vunpack.c.l.b16 %v3269
        %v3334 = vpack.c.b16 %v3305, %v3304
        %v3335 = vpack.c.b16 %v3307, %v3306
        %v3336 = vpack.c.b16 %v3309, %v3308
        %v3337 = vpack.c.b16 %v3311, %v3310
        %v3338 = vpack.c.b16 %v3313, %v3312
        %v3339 = vpack.c.b16 %v3315, %v3314
        %v3340 = vpack.c.b16 %v3317, %v3316
        %v3341 = vpack.c.b16 %v3319, %v3318
        %v3342 = vpack.c.b16 %v3321, %v3320
        %v3343 = vpack.c.b16 %v3323, %v3322
        %v3344 = vpack.c.b16 %v3325, %v3324
        %v3345 = vpack.c.b16 %v3327, %v3326
        %v3346 = vpack.c.b16 %v3329, %v3328
        %v3347 = vpack.c.b16 %v3331, %v3330
        %v3348 = vpack.c.b16 %v3333, %v3332
        %v3364 = vsel %vm2795, %v3239, 0
        %3366 = vmatpush.bf16.msra.mxu0 %v3341
        %3367 = vmatpush.bf16.msra.mxu0 %v3340
        %3368 = vmatpush.bf16.msra.mxu0 %v3339
        %3369 = vmatpush.bf16.msra.mxu0 %v3338
        %3370 = vmatpush.bf16.msra.mxu0 %v3337
        %3371 = vmatpush.bf16.msra.mxu0 %v3336
        %3372 = vmatpush.bf16.msra.mxu0 %v3335
        %3373 = vmatpush.bf16.msra.mxu0 %v3334
        %3374 = vmatmul.bf16.gmra.mxu0 %v3236
        %v3375 = vpop.f32.mrf.mxu0
        %v3376 = vadd.f32 %v3272, %v3375
        %v3377 = vpop.f32.mrf.mxu0
        %3378 = vdwg.mxu0
        %3379 = vmatpush.bf16.msra.mxu0 0
        %3380 = vmatpush.bf16.msra.mxu0 %v3348
        %3381 = vmatpush.bf16.msra.mxu0 %v3347
        %3382 = vmatpush.bf16.msra.mxu0 %v3346
        %3383 = vmatpush.bf16.msra.mxu0 %v3345
        %3384 = vmatpush.bf16.msra.mxu0 %v3344
        %3385 = vmatpush.bf16.msra.mxu0 %v3343
        %3386 = vmatpush.bf16.msra.mxu0 %v3342
        %3387 = vmatmul.bf16.gmra.mxu0 %v3364
        %v3388 = vpop.f32.mrf.mxu0
        %v3389 = vadd.f32 %v3376, %v3388
        %v3390 = vpop.f32.mrf.mxu0
        %3391 = vdwg.mxu0
        %v3392 = vadd.f32 %v3389, %v3014
        %v3393 = vmax.f32 %v3392, 0.0
        %v3394 = vpack.c.bf16 %v3393, %v3393
        %v3396 = vunpack.c.l.b16 %v3394
        %v3397 = vpack.c.b16 %v3396, %v3396
        %3398 = vrot.lane.b32.xlu0 %v3397, 8
        %v3399 = vpop.permute.xlu0 %3398
        %v3401 = vsel %vm2612, 0, %v3399
        %v3402 = vsel %vm2635, %v3401, 0
        %v3403 = vshrl.u32 %v3402, 16
        %v3405 = vrot.slane %v3403, 7
        %v3406 = vshll.u32 %v3402, 16
        %v3408 = vor.u32 %v3405, %v3406
        %v3410 = vsel %vm2646, 0, %v3408
        %v3411 = vsel %vm2650, %v3410, 0
        %v3413 = vshrl.u32 %v3411, 16
        %3415 = vrot.lane.b32.xlu0 %v3413, 80
        %v3416 = vpop.permute.xlu0 %3415
        %v3418 = vrot.slane %v3411, 1
        %3419 = vrot.lane.b32.xlu0 %v3418, 32
        %v3420 = vpop.permute.xlu0 %3419
        %v3422 = vsel %vm2665, %v3411, %v3416
        %v3425 = vsel %vm2618, %v3416, %v3420
        %v3427 = vshll.u32 %v3422, 16
        %v3429 = vrot.slane %v3427, 1
        %v3430 = vshll.u32 %v3425, 16
        %v3432 = vrot.slane %v3430, 1
        %v3437 = vrot.slane %v3422, 1
        %v3438 = vrot.slane %v3425, 1
        %v3439 = vrot.slane %v3427, 2
        %v3440 = vrot.slane %v3430, 2
        %v3443 = vsel %vm2646, %v3422, %v3429
        %v3444 = vsel %vm2646, %v3425, %v3432
        %v3447 = vsel %vm2567, %v3443, %v3437
        %v3451 = vsel %vm2567, %v3444, %v3438
        %vm3453 = vcmask 1041408
        %vm3454 = vsmask.f32 1280
        %vm3455 = vmand %vm3453, %vm3454
        %v3456 = vsel %vm3455, %v3447, %v3439
        %v3457 = vsel %vm3455, %v3451, %v3440
        %v3458 = vld [vmem:[#allocation17] sm:$0xf]
        %v3459 = vld [vmem:[#allocation17 + $0x4] sm:$0xf]
        %v3460 = vld [vmem:[#allocation17 + $0x8] sm:$0xf]
        %v3461 = vld [vmem:[#allocation17 + $0xc] sm:$0xf]
        %v3462 = vld [vmem:[#allocation17 + $0x10] sm:$0xf]
        %v3463 = vld [vmem:[#allocation17 + $0x14] sm:$0xf]
        %v3464 = vld [vmem:[#allocation17 + $0x18] sm:$0xf]
        %v3465 = vld [vmem:[#allocation17 + $0x1c] sm:$0xf]
        %v3466 = vld [vmem:[#allocation17 + $0x20] sm:$0xf]
        %v3467 = vld [vmem:[#allocation17 + $0x24] sm:$0xf]
        %v3468 = vld [vmem:[#allocation17 + $0x28] sm:$0xf]
        %v3469 = vld [vmem:[#allocation17 + $0x2c] sm:$0xf]
        %v3470 = vld [vmem:[#allocation17 + $0x30] sm:$0xf]
        %v3471 = vld [vmem:[#allocation17 + $0x34] sm:$0xf]
        %v3472 = vld [vmem:[#allocation17 + $0x38] sm:$0xf]
        %v3473 = vld [vmem:[#allocation17 + $0x3c] sm:$0xf]
        %v3474 = vld [vmem:[#allocation17 + $0x40] sm:$0xf]
        %v3475 = vld [vmem:[#allocation17 + $0x44] sm:$0xf]
        %v3476 = vld [vmem:[#allocation17 + $0x48] sm:$0xf]
        %v3477 = vld [vmem:[#allocation17 + $0x4c] sm:$0xf]
        %v3478 = vld [vmem:[#allocation17 + $0x50] sm:$0xf]
        %v3479 = vld [vmem:[#allocation17 + $0x54] sm:$0xf]
        %v3480 = vld [vmem:[#allocation17 + $0x58] sm:$0xf]
        %v3481 = vld [vmem:[#allocation17 + $0x5c] sm:$0xf]
        %v3482 = vld [vmem:[#allocation17 + $0x60] sm:$0xf]
        %v3483 = vld [vmem:[#allocation17 + $0x64] sm:$0xf]
        %v3484 = vld [vmem:[#allocation17 + $0x68] sm:$0xf]
        %v3485 = vld [vmem:[#allocation17 + $0x6c] sm:$0xf]
        %v3486 = vld [vmem:[#allocation17 + $0x70] sm:$0xf]
        %v3487 = vld [vmem:[#allocation17 + $0x74] sm:$0xf]
        %v3488 = vld [vmem:[#allocation19] sm:$0x1]
        %v3490 = vperm.slane %v3488, 0
        %v3522 = vunpack.c.l.b16 %v3458
        %v3523 = vunpack.c.l.b16 %v3459
        %v3524 = vunpack.c.l.b16 %v3460
        %v3525 = vunpack.c.l.b16 %v3461
        %v3526 = vunpack.c.l.b16 %v3462
        %v3527 = vunpack.c.l.b16 %v3463
        %v3528 = vunpack.c.l.b16 %v3464
        %v3529 = vunpack.c.l.b16 %v3465
        %v3530 = vunpack.c.l.b16 %v3466
        %v3531 = vunpack.c.l.b16 %v3467
        %v3532 = vunpack.c.l.b16 %v3468
        %v3533 = vunpack.c.l.b16 %v3469
        %v3534 = vunpack.c.l.b16 %v3470
        %v3535 = vunpack.c.l.b16 %v3471
        %v3536 = vunpack.c.l.b16 %v3472
        %v3537 = vunpack.c.l.b16 %v3473
        %v3538 = vunpack.c.l.b16 %v3474
        %v3539 = vunpack.c.l.b16 %v3475
        %v3540 = vunpack.c.l.b16 %v3476
        %v3541 = vunpack.c.l.b16 %v3477
        %v3542 = vunpack.c.l.b16 %v3478
        %v3543 = vunpack.c.l.b16 %v3479
        %v3544 = vunpack.c.l.b16 %v3480
        %v3545 = vunpack.c.l.b16 %v3481
        %v3546 = vunpack.c.l.b16 %v3482
        %v3547 = vunpack.c.l.b16 %v3483
        %v3548 = vunpack.c.l.b16 %v3484
        %v3549 = vunpack.c.l.b16 %v3485
        %v3550 = vunpack.c.l.b16 %v3486
        %v3551 = vunpack.c.l.b16 %v3487
        %v3552 = vpack.c.b16 %v3523, %v3522
        %v3553 = vpack.c.b16 %v3525, %v3524
        %v3554 = vpack.c.b16 %v3527, %v3526
        %v3555 = vpack.c.b16 %v3529, %v3528
        %v3556 = vpack.c.b16 %v3531, %v3530
        %v3557 = vpack.c.b16 %v3533, %v3532
        %v3558 = vpack.c.b16 %v3535, %v3534
        %v3559 = vpack.c.b16 %v3537, %v3536
        %v3560 = vpack.c.b16 %v3539, %v3538
        %v3561 = vpack.c.b16 %v3541, %v3540
        %v3562 = vpack.c.b16 %v3543, %v3542
        %v3563 = vpack.c.b16 %v3545, %v3544
        %v3564 = vpack.c.b16 %v3547, %v3546
        %v3565 = vpack.c.b16 %v3549, %v3548
        %v3566 = vpack.c.b16 %v3551, %v3550
        %v3583 = vsel %vm2795, %v3457, 0
        %3585 = vmatpush.bf16.msra.mxu0 %v3559
        %3586 = vmatpush.bf16.msra.mxu0 %v3558
        %3587 = vmatpush.bf16.msra.mxu0 %v3557
        %3588 = vmatpush.bf16.msra.mxu0 %v3556
        %3589 = vmatpush.bf16.msra.mxu0 %v3555
        %3590 = vmatpush.bf16.msra.mxu0 %v3554
        %3591 = vmatpush.bf16.msra.mxu0 %v3553
        %3592 = vmatpush.bf16.msra.mxu0 %v3552
        %3593 = vmatmul.bf16.gmra.mxu0 %v3456
        %v3594 = vpop.f32.mrf.mxu0
        %v3595 = vadd.f32 %v3490, %v3594
        %v3596 = vpop.f32.mrf.mxu0
        %3597 = vdwg.mxu0
        %3598 = vmatpush.bf16.msra.mxu0 0
        %3599 = vmatpush.bf16.msra.mxu0 %v3566
        %3600 = vmatpush.bf16.msra.mxu0 %v3565
        %3601 = vmatpush.bf16.msra.mxu0 %v3564
        %3602 = vmatpush.bf16.msra.mxu0 %v3563
        %3603 = vmatpush.bf16.msra.mxu0 %v3562
        %3604 = vmatpush.bf16.msra.mxu0 %v3561
        %3605 = vmatpush.bf16.msra.mxu0 %v3560
        %3606 = vmatmul.bf16.gmra.mxu0 %v3583
        %v3607 = vpop.f32.mrf.mxu0
        %v3608 = vadd.f32 %v3595, %v3607
        %v3609 = vpop.f32.mrf.mxu0
        %3610 = vdwg.mxu0
        %v3611 = vmax.f32 %v3608, 0.0
        %v3612 = vpack.c.bf16 %v3611, %v3611
        %v3614 = vunpack.c.l.b16 %v3612
        %v3615 = vpack.c.b16 %v3614, %v3614
        %3616 = vrot.lane.b32.xlu0 %v3615, 16
        %v3617 = vpop.permute.xlu0 %3616
        %v3619 = vsel %vm2614, 0, %v3617
        %v3620 = vsel %vm2665, %v3619, 0
        %v3621 = vshrl.u32 %v3620, 16
        %v3623 = vrot.slane %v3621, 7
        %v3624 = vshll.u32 %v3620, 16
        %v3626 = vor.u32 %v3623, %v3624
        %v3628 = vsel %vm2646, 0, %v3626
        %vm3629 = vcmask 1042432
        %vm3630 = vsmask.f32 2304
        %vm3631 = vmand %vm3629, %vm3630
        %v3632 = vsel %vm3631, %v3628, 0
        %v3634 = vshrl.u32 %v3632, 16
        %v3636 = vshll.u32 %v3632, 16
        %v3638 = vrot.slane %v3636, 1
        %v3639 = vor.u32 %v3634, %v3638
        %3640 = vrot.lane.b32.xlu0 %v3639, 96
        %v3641 = vpop.permute.xlu0 %3640
        %v3643 = vrot.slane %v3632, 1
        %3644 = vrot.lane.b32.xlu0 %v3643, 64
        %v3645 = vpop.permute.xlu0 %3644
        %vm3646 = vcmask 785408
        %v3648 = vsel %vm3646, %v3632, %v3641
        %vm3650 = vcmask 523264
        %v3652 = vsel %vm3650, %v3641, %v3645
        %v3654 = vld [vmem:[#allocation20] sm:$0xf]
        %v3655 = vld [vmem:[#allocation20 + $0x4] sm:$0xf]
        %v3656 = vld [vmem:[#allocation20 + $0x8] sm:$0xf]
        %v3657 = vld [vmem:[#allocation20 + $0xc] sm:$0xf]
        %v3658 = vld [vmem:[#allocation20 + $0x10] sm:$0xf]
        %v3659 = vld [vmem:[#allocation20 + $0x14] sm:$0xf]
        %v3660 = vld [vmem:[#allocation20 + $0x18] sm:$0xf]
        %v3661 = vld [vmem:[#allocation20 + $0x1c] sm:$0xf]
        %v3662 = vld [vmem:[#allocation20 + $0x20] sm:$0xf]
        %v3663 = vld [vmem:[#allocation20 + $0x24] sm:$0xf]
        %v3664 = vld [vmem:[#allocation20 + $0x28] sm:$0xf]
        %v3665 = vld [vmem:[#allocation20 + $0x2c] sm:$0xf]
        %v3666 = vld [vmem:[#allocation20 + $0x30] sm:$0xf]
        %v3667 = vld [vmem:[#allocation20 + $0x34] sm:$0xf]
        %v3668 = vld [vmem:[#allocation20 + $0x38] sm:$0xf]
        %v3669 = vld [vmem:[#allocation20 + $0x3c] sm:$0xf]
        %v3670 = vld [vmem:[#allocation20 + $0x40] sm:$0xf]
        %v3671 = vld [vmem:[#allocation20 + $0x44] sm:$0xf]
        %v3672 = vld [vmem:[#allocation20 + $0x48] sm:$0xf]
        %v3673 = vld [vmem:[#allocation20 + $0x4c] sm:$0xf]
        %v3674 = vld [vmem:[#allocation20 + $0x50] sm:$0xf]
        %v3675 = vld [vmem:[#allocation20 + $0x54] sm:$0xf]
        %v3676 = vld [vmem:[#allocation20 + $0x58] sm:$0xf]
        %v3677 = vld [vmem:[#allocation20 + $0x5c] sm:$0xf]
        %v3678 = vld [vmem:[#allocation20 + $0x60] sm:$0xf]
        %v3679 = vld [vmem:[#allocation20 + $0x64] sm:$0xf]
        %v3680 = vld [vmem:[#allocation20 + $0x68] sm:$0xf]
        %v3681 = vld [vmem:[#allocation20 + $0x6c] sm:$0xf]
        %v3682 = vld [vmem:[#allocation20 + $0x70] sm:$0xf]
        %v3683 = vld [vmem:[#allocation20 + $0x74] sm:$0xf]
        %v3684 = vld [vmem:[#allocation20 + $0x78] sm:$0xf]
        %v3685 = vld [vmem:[#allocation20 + $0x7c] sm:$0xf]
        %v3686 = vld [vmem:[#allocation20 + $0x80] sm:$0xf]
        %v3687 = vld [vmem:[#allocation20 + $0x84] sm:$0xf]
        %v3688 = vld [vmem:[#allocation20 + $0x88] sm:$0xf]
        %v3689 = vld [vmem:[#allocation20 + $0x8c] sm:$0xf]
        %v3690 = vld [vmem:[#allocation22] sm:$0x1]
        %v3692 = vperm.slane %v3690, 0
        %v3730 = vunpack.c.l.b16 %v3654
        %v3731 = vunpack.c.l.b16 %v3655
        %v3732 = vunpack.c.l.b16 %v3656
        %v3733 = vunpack.c.l.b16 %v3657
        %v3734 = vunpack.c.l.b16 %v3658
        %v3735 = vunpack.c.l.b16 %v3659
        %v3736 = vunpack.c.l.b16 %v3660
        %v3737 = vunpack.c.l.b16 %v3661
        %v3738 = vunpack.c.l.b16 %v3662
        %v3739 = vunpack.c.l.b16 %v3663
        %v3740 = vunpack.c.l.b16 %v3664
        %v3741 = vunpack.c.l.b16 %v3665
        %v3742 = vunpack.c.l.b16 %v3666
        %v3743 = vunpack.c.l.b16 %v3667
        %v3744 = vunpack.c.l.b16 %v3668
        %v3745 = vunpack.c.l.b16 %v3669
        %v3746 = vunpack.c.l.b16 %v3670
        %v3747 = vunpack.c.l.b16 %v3671
        %v3748 = vunpack.c.l.b16 %v3672
        %v3749 = vunpack.c.l.b16 %v3673
        %v3750 = vunpack.c.l.b16 %v3674
        %v3751 = vunpack.c.l.b16 %v3675
        %v3752 = vunpack.c.l.b16 %v3676
        %v3753 = vunpack.c.l.b16 %v3677
        %v3754 = vunpack.c.l.b16 %v3678
        %v3755 = vunpack.c.l.b16 %v3679
        %v3756 = vunpack.c.l.b16 %v3680
        %v3757 = vunpack.c.l.b16 %v3681
        %v3758 = vunpack.c.l.b16 %v3682
        %v3759 = vunpack.c.l.b16 %v3683
        %v3760 = vunpack.c.l.b16 %v3684
        %v3761 = vunpack.c.l.b16 %v3685
        %v3762 = vunpack.c.l.b16 %v3686
        %v3763 = vunpack.c.l.b16 %v3687
        %v3764 = vunpack.c.l.b16 %v3688
        %v3765 = vunpack.c.l.b16 %v3689
        %v3766 = vpack.c.b16 %v3731, %v3730
        %v3767 = vpack.c.b16 %v3733, %v3732
        %v3768 = vpack.c.b16 %v3735, %v3734
        %v3769 = vpack.c.b16 %v3737, %v3736
        %v3770 = vpack.c.b16 %v3739, %v3738
        %v3771 = vpack.c.b16 %v3741, %v3740
        %v3772 = vpack.c.b16 %v3743, %v3742
        %v3773 = vpack.c.b16 %v3745, %v3744
        %v3774 = vpack.c.b16 %v3747, %v3746
        %v3775 = vpack.c.b16 %v3749, %v3748
        %v3776 = vpack.c.b16 %v3751, %v3750
        %v3777 = vpack.c.b16 %v3753, %v3752
        %v3778 = vpack.c.b16 %v3755, %v3754
        %v3779 = vpack.c.b16 %v3757, %v3756
        %v3780 = vpack.c.b16 %v3759, %v3758
        %v3781 = vpack.c.b16 %v3761, %v3760
        %v3782 = vpack.c.b16 %v3763, %v3762
        %v3783 = vpack.c.b16 %v3765, %v3764
        %v3802 = vsel %vm2618, %v3645, 0
        %3804 = vmatpush.bf16.msra.mxu0 %v3773
        %3805 = vmatpush.bf16.msra.mxu0 %v3772
        %3806 = vmatpush.bf16.msra.mxu0 %v3771
        %3807 = vmatpush.bf16.msra.mxu0 %v3770
        %3808 = vmatpush.bf16.msra.mxu0 %v3769
        %3809 = vmatpush.bf16.msra.mxu0 %v3768
        %3810 = vmatpush.bf16.msra.mxu0 %v3767
        %3811 = vmatpush.bf16.msra.mxu0 %v3766
        %3812 = vmatmul.bf16.gmra.mxu0 %v3648
        %v3813 = vpop.f32.mrf.mxu0
        %v3814 = vadd.f32 %v3692, %v3813
        %v3815 = vpop.f32.mrf.mxu0
        %3816 = vdwg.mxu0
        %3817 = vmatpush.bf16.msra.mxu0 %v3781
        %3818 = vmatpush.bf16.msra.mxu0 %v3780
        %3819 = vmatpush.bf16.msra.mxu0 %v3779
        %3820 = vmatpush.bf16.msra.mxu0 %v3778
        %3821 = vmatpush.bf16.msra.mxu0 %v3777
        %3822 = vmatpush.bf16.msra.mxu0 %v3776
        %3823 = vmatpush.bf16.msra.mxu0 %v3775
        %3824 = vmatpush.bf16.msra.mxu0 %v3774
        %3825 = vmatmul.bf16.gmra.mxu0 %v3652
        %v3826 = vpop.f32.mrf.mxu0
        %v3827 = vadd.f32 %v3814, %v3826
        %v3828 = vpop.f32.mrf.mxu0
        %3829 = vdwg.mxu0
        %3830 = vmatpush.bf16.msra.mxu0 0
        %3831 = vmatpush.bf16.msra.mxu0 0
        %3832 = vmatpush.bf16.msra.mxu0 0
        %3833 = vmatpush.bf16.msra.mxu0 0
        %3834 = vmatpush.bf16.msra.mxu0 0
        %3835 = vmatpush.bf16.msra.mxu0 0
        %3836 = vmatpush.bf16.msra.mxu0 %v3783
        %3837 = vmatpush.bf16.msra.mxu0 %v3782
        %3838 = vmatmul.bf16.gmra.mxu0 %v3802
        %v3839 = vpop.f32.mrf.mxu0
        %v3840 = vadd.f32 %v3827, %v3839
        %v3841 = vpop.f32.mrf.mxu0
        %3842 = vdwg.mxu0
        %v3844 = vshll.u32 %v3397, 16
        %v3846 = vrot.slane %v3844, 1
        %v3848 = vrot.slane %v3397, 1
        %v3849 = vrot.slane %v3844, 2
        %v3851 = vsel %vm2646, %v3394, %v3846
        %v3854 = vsel %vm2567, %v3851, %v3848
        %v3856 = vsel %vm3455, %v3854, %v3849
        %v3857 = vld [vmem:[#allocation23] sm:$0xf]
        %v3858 = vld [vmem:[#allocation23 + $0x4] sm:$0xf]
        %v3859 = vld [vmem:[#allocation23 + $0x8] sm:$0xf]
        %v3860 = vld [vmem:[#allocation23 + $0xc] sm:$0xf]
        %v3861 = vld [vmem:[#allocation23 + $0x10] sm:$0xf]
        %v3862 = vld [vmem:[#allocation23 + $0x14] sm:$0xf]
        %v3863 = vld [vmem:[#allocation23 + $0x18] sm:$0xf]
        %v3864 = vld [vmem:[#allocation23 + $0x1c] sm:$0xf]
        %v3865 = vld [vmem:[#allocation25] sm:$0x1]
        %v3867 = vperm.slane %v3865, 0
        %v3877 = vunpack.c.l.b16 %v3857
        %v3878 = vunpack.c.l.b16 %v3858
        %v3879 = vunpack.c.l.b16 %v3859
        %v3880 = vunpack.c.l.b16 %v3860
        %v3881 = vunpack.c.l.b16 %v3861
        %v3882 = vunpack.c.l.b16 %v3862
        %v3883 = vunpack.c.l.b16 %v3863
        %v3884 = vunpack.c.l.b16 %v3864
        %v3885 = vpack.c.b16 %v3878, %v3877
        %v3886 = vpack.c.b16 %v3880, %v3879
        %v3887 = vpack.c.b16 %v3882, %v3881
        %v3888 = vpack.c.b16 %v3884, %v3883
        %v3894 = vsel %vm3650, %v3856, 0
        %3896 = vmatpush.bf16.msra.mxu0 0
        %3897 = vmatpush.bf16.msra.mxu0 0
        %3898 = vmatpush.bf16.msra.mxu0 0
        %3899 = vmatpush.bf16.msra.mxu0 0
        %3900 = vmatpush.bf16.msra.mxu0 %v3888
        %3901 = vmatpush.bf16.msra.mxu0 %v3887
        %3902 = vmatpush.bf16.msra.mxu0 %v3886
        %3903 = vmatpush.bf16.msra.mxu0 %v3885
        %3904 = vmatmul.bf16.gmra.mxu0 %v3894
        %v3905 = vpop.f32.mrf.mxu0
        %v3906 = vadd.f32 %v3867, %v3905
        %v3907 = vpop.f32.mrf.mxu0
        %3908 = vdwg.mxu0
        %v3909 = vadd.f32 %v3840, %v3906
        %v3910 = vmax.f32 %v3909, 0.0
        %v3911 = vpack.c.bf16 %v3910, %v3910
        %v3913 = vunpack.c.l.b16 %v3911
        %v3914 = vpack.c.b16 %v3913, %v3913
        %3915 = vrot.lane.b32.xlu0 %v3914, 16
        %v3916 = vpop.permute.xlu0 %3915
        %v3918 = vsel %vm2614, 0, %v3916
        %v3919 = vsel %vm2665, %v3918, 0
        %v3920 = vshrl.u32 %v3919, 16
        %v3922 = vrot.slane %v3920, 7
        %v3923 = vshll.u32 %v3919, 16
        %v3925 = vor.u32 %v3922, %v3923
        %v3927 = vsel %vm2646, 0, %v3925
        %v3928 = vsel %vm3631, %v3927, 0
        %v3930 = vshrl.u32 %v3928, 16
        %v3932 = vshll.u32 %v3928, 16
        %v3934 = vrot.slane %v3932, 1
        %v3935 = vor.u32 %v3930, %v3934
        %3936 = vrot.lane.b32.xlu0 %v3935, 96
        %v3937 = vpop.permute.xlu0 %3936
        %v3939 = vrot.slane %v3928, 1
        %3940 = vrot.lane.b32.xlu0 %v3939, 64
        %v3941 = vpop.permute.xlu0 %3940
        %v3943 = vsel %vm3646, %v3928, %v3937
        %v3946 = vsel %vm3650, %v3937, %v3941
        %v3948 = vld [vmem:[#allocation26] sm:$0xf]
        %v3949 = vld [vmem:[#allocation26 + $0x4] sm:$0xf]
        %v3950 = vld [vmem:[#allocation26 + $0x8] sm:$0xf]
        %v3951 = vld [vmem:[#allocation26 + $0xc] sm:$0xf]
        %v3952 = vld [vmem:[#allocation26 + $0x10] sm:$0xf]
        %v3953 = vld [vmem:[#allocation26 + $0x14] sm:$0xf]
        %v3954 = vld [vmem:[#allocation26 + $0x18] sm:$0xf]
        %v3955 = vld [vmem:[#allocation26 + $0x1c] sm:$0xf]
        %v3956 = vld [vmem:[#allocation26 + $0x20] sm:$0xf]
        %v3957 = vld [vmem:[#allocation26 + $0x24] sm:$0xf]
        %v3958 = vld [vmem:[#allocation26 + $0x28] sm:$0xf]
        %v3959 = vld [vmem:[#allocation26 + $0x2c] sm:$0xf]
        %v3960 = vld [vmem:[#allocation26 + $0x30] sm:$0xf]
        %v3961 = vld [vmem:[#allocation26 + $0x34] sm:$0xf]
        %v3962 = vld [vmem:[#allocation26 + $0x38] sm:$0xf]
        %v3963 = vld [vmem:[#allocation26 + $0x3c] sm:$0xf]
        %v3964 = vld [vmem:[#allocation26 + $0x40] sm:$0xf]
        %v3965 = vld [vmem:[#allocation26 + $0x44] sm:$0xf]
        %v3966 = vld [vmem:[#allocation26 + $0x48] sm:$0xf]
        %v3967 = vld [vmem:[#allocation26 + $0x4c] sm:$0xf]
        %v3968 = vld [vmem:[#allocation26 + $0x50] sm:$0xf]
        %v3969 = vld [vmem:[#allocation26 + $0x54] sm:$0xf]
        %v3970 = vld [vmem:[#allocation26 + $0x58] sm:$0xf]
        %v3971 = vld [vmem:[#allocation26 + $0x5c] sm:$0xf]
        %v3972 = vld [vmem:[#allocation26 + $0x60] sm:$0xf]
        %v3973 = vld [vmem:[#allocation26 + $0x64] sm:$0xf]
        %v3974 = vld [vmem:[#allocation26 + $0x68] sm:$0xf]
        %v3975 = vld [vmem:[#allocation26 + $0x6c] sm:$0xf]
        %v3976 = vld [vmem:[#allocation26 + $0x70] sm:$0xf]
        %v3977 = vld [vmem:[#allocation26 + $0x74] sm:$0xf]
        %v3978 = vld [vmem:[#allocation26 + $0x78] sm:$0xf]
        %v3979 = vld [vmem:[#allocation26 + $0x7c] sm:$0xf]
        %v3980 = vld [vmem:[#allocation26 + $0x80] sm:$0xf]
        %v3981 = vld [vmem:[#allocation26 + $0x84] sm:$0xf]
        %v3982 = vld [vmem:[#allocation26 + $0x88] sm:$0xf]
        %v3983 = vld [vmem:[#allocation26 + $0x8c] sm:$0xf]
        %v3984 = vld [vmem:[#allocation28] sm:$0x1]
        %v3986 = vperm.slane %v3984, 0
        %v4024 = vunpack.c.l.b16 %v3948
        %v4025 = vunpack.c.l.b16 %v3949
        %v4026 = vunpack.c.l.b16 %v3950
        %v4027 = vunpack.c.l.b16 %v3951
        %v4028 = vunpack.c.l.b16 %v3952
        %v4029 = vunpack.c.l.b16 %v3953
        %v4030 = vunpack.c.l.b16 %v3954
        %v4031 = vunpack.c.l.b16 %v3955
        %v4032 = vunpack.c.l.b16 %v3956
        %v4033 = vunpack.c.l.b16 %v3957
        %v4034 = vunpack.c.l.b16 %v3958
        %v4035 = vunpack.c.l.b16 %v3959
        %v4036 = vunpack.c.l.b16 %v3960
        %v4037 = vunpack.c.l.b16 %v3961
        %v4038 = vunpack.c.l.b16 %v3962
        %v4039 = vunpack.c.l.b16 %v3963
        %v4040 = vunpack.c.l.b16 %v3964
        %v4041 = vunpack.c.l.b16 %v3965
        %v4042 = vunpack.c.l.b16 %v3966
        %v4043 = vunpack.c.l.b16 %v3967
        %v4044 = vunpack.c.l.b16 %v3968
        %v4045 = vunpack.c.l.b16 %v3969
        %v4046 = vunpack.c.l.b16 %v3970
        %v4047 = vunpack.c.l.b16 %v3971
        %v4048 = vunpack.c.l.b16 %v3972
        %v4049 = vunpack.c.l.b16 %v3973
        %v4050 = vunpack.c.l.b16 %v3974
        %v4051 = vunpack.c.l.b16 %v3975
        %v4052 = vunpack.c.l.b16 %v3976
        %v4053 = vunpack.c.l.b16 %v3977
        %v4054 = vunpack.c.l.b16 %v3978
        %v4055 = vunpack.c.l.b16 %v3979
        %v4056 = vunpack.c.l.b16 %v3980
        %v4057 = vunpack.c.l.b16 %v3981
        %v4058 = vunpack.c.l.b16 %v3982
        %v4059 = vunpack.c.l.b16 %v3983
        %v4060 = vpack.c.b16 %v4025, %v4024
        %v4061 = vpack.c.b16 %v4027, %v4026
        %v4062 = vpack.c.b16 %v4029, %v4028
        %v4063 = vpack.c.b16 %v4031, %v4030
        %v4064 = vpack.c.b16 %v4033, %v4032
        %v4065 = vpack.c.b16 %v4035, %v4034
        %v4066 = vpack.c.b16 %v4037, %v4036
        %v4067 = vpack.c.b16 %v4039, %v4038
        %v4068 = vpack.c.b16 %v4041, %v4040
        %v4069 = vpack.c.b16 %v4043, %v4042
        %v4070 = vpack.c.b16 %v4045, %v4044
        %v4071 = vpack.c.b16 %v4047, %v4046
        %v4072 = vpack.c.b16 %v4049, %v4048
        %v4073 = vpack.c.b16 %v4051, %v4050
        %v4074 = vpack.c.b16 %v4053, %v4052
        %v4075 = vpack.c.b16 %v4055, %v4054
        %v4076 = vpack.c.b16 %v4057, %v4056
        %v4077 = vpack.c.b16 %v4059, %v4058
        %v4096 = vsel %vm2618, %v3941, 0
        %4098 = vmatpush.bf16.msra.mxu0 %v4067
        %4099 = vmatpush.bf16.msra.mxu0 %v4066
        %4100 = vmatpush.bf16.msra.mxu0 %v4065
        %4101 = vmatpush.bf16.msra.mxu0 %v4064
        %4102 = vmatpush.bf16.msra.mxu0 %v4063
        %4103 = vmatpush.bf16.msra.mxu0 %v4062
        %4104 = vmatpush.bf16.msra.mxu0 %v4061
        %4105 = vmatpush.bf16.msra.mxu0 %v4060
        %4106 = vmatmul.bf16.gmra.mxu0 %v3943
        %v4107 = vpop.f32.mrf.mxu0
        %v4108 = vadd.f32 %v3986, %v4107
        %v4109 = vpop.f32.mrf.mxu0
        %4110 = vdwg.mxu0
        %4111 = vmatpush.bf16.msra.mxu0 %v4075
        %4112 = vmatpush.bf16.msra.mxu0 %v4074
        %4113 = vmatpush.bf16.msra.mxu0 %v4073
        %4114 = vmatpush.bf16.msra.mxu0 %v4072
        %4115 = vmatpush.bf16.msra.mxu0 %v4071
        %4116 = vmatpush.bf16.msra.mxu0 %v4070
        %4117 = vmatpush.bf16.msra.mxu0 %v4069
        %4118 = vmatpush.bf16.msra.mxu0 %v4068
        %4119 = vmatmul.bf16.gmra.mxu0 %v3946
        %v4120 = vpop.f32.mrf.mxu0
        %v4121 = vadd.f32 %v4108, %v4120
        %v4122 = vpop.f32.mrf.mxu0
        %4123 = vdwg.mxu0
        %4124 = vmatpush.bf16.msra.mxu0 0
        %4125 = vmatpush.bf16.msra.mxu0 0
        %4126 = vmatpush.bf16.msra.mxu0 0
        %4127 = vmatpush.bf16.msra.mxu0 0
        %4128 = vmatpush.bf16.msra.mxu0 0
        %4129 = vmatpush.bf16.msra.mxu0 0
        %4130 = vmatpush.bf16.msra.mxu0 %v4077
        %4131 = vmatpush.bf16.msra.mxu0 %v4076
        %4132 = vmatmul.bf16.gmra.mxu0 %v4096
        %v4133 = vpop.f32.mrf.mxu0
        %v4134 = vadd.f32 %v4121, %v4133
        %v4135 = vpop.f32.mrf.mxu0
        %4136 = vdwg.mxu0
        %v4137 = vmax.f32 %v4134, 0.0
        %v4138 = vpack.c.bf16 %v4137, %v4137
        %v4140 = vunpack.c.l.b16 %v4138
        %v4141 = vpack.c.b16 %v4140, %v4140
        %4142 = vrot.lane.b32.xlu0 %v4141, 16
        %v4143 = vpop.permute.xlu0 %4142
        %v4145 = vsel %vm2614, 0, %v4143
        %v4146 = vsel %vm2665, %v4145, 0
        %v4147 = vshrl.u32 %v4146, 16
        %v4149 = vrot.slane %v4147, 7
        %v4150 = vshll.u32 %v4146, 16
        %v4152 = vor.u32 %v4149, %v4150
        %v4154 = vsel %vm2646, 0, %v4152
        %v4155 = vsel %vm3631, %v4154, 0
        %v4157 = vshrl.u32 %v4155, 16
        %v4159 = vshll.u32 %v4155, 16
        %v4161 = vrot.slane %v4159, 1
        %v4162 = vor.u32 %v4157, %v4161
        %4163 = vrot.lane.b32.xlu0 %v4162, 96
        %v4164 = vpop.permute.xlu0 %4163
        %v4166 = vrot.slane %v4155, 1
        %4167 = vrot.lane.b32.xlu0 %v4166, 64
        %v4168 = vpop.permute.xlu0 %4167
        %v4170 = vsel %vm3646, %v4155, %v4164
        %v4173 = vsel %vm3650, %v4164, %v4168
        %v4175 = vld [vmem:[#allocation29] sm:$0xf]
        %v4176 = vld [vmem:[#allocation29 + $0x4] sm:$0xf]
        %v4177 = vld [vmem:[#allocation29 + $0x8] sm:$0xf]
        %v4178 = vld [vmem:[#allocation29 + $0xc] sm:$0xf]
        %v4179 = vld [vmem:[#allocation29 + $0x10] sm:$0xf]
        %v4180 = vld [vmem:[#allocation29 + $0x14] sm:$0xf]
        %v4181 = vld [vmem:[#allocation29 + $0x18] sm:$0xf]
        %v4182 = vld [vmem:[#allocation29 + $0x1c] sm:$0xf]
        %v4183 = vld [vmem:[#allocation29 + $0x20] sm:$0xf]
        %v4184 = vld [vmem:[#allocation29 + $0x24] sm:$0xf]
        %v4185 = vld [vmem:[#allocation29 + $0x28] sm:$0xf]
        %v4186 = vld [vmem:[#allocation29 + $0x2c] sm:$0xf]
        %v4187 = vld [vmem:[#allocation29 + $0x30] sm:$0xf]
        %v4188 = vld [vmem:[#allocation29 + $0x34] sm:$0xf]
        %v4189 = vld [vmem:[#allocation29 + $0x38] sm:$0xf]
        %v4190 = vld [vmem:[#allocation29 + $0x3c] sm:$0xf]
        %v4191 = vld [vmem:[#allocation29 + $0x40] sm:$0xf]
        %v4192 = vld [vmem:[#allocation29 + $0x44] sm:$0xf]
        %v4193 = vld [vmem:[#allocation29 + $0x48] sm:$0xf]
        %v4194 = vld [vmem:[#allocation29 + $0x4c] sm:$0xf]
        %v4195 = vld [vmem:[#allocation29 + $0x50] sm:$0xf]
        %v4196 = vld [vmem:[#allocation29 + $0x54] sm:$0xf]
        %v4197 = vld [vmem:[#allocation29 + $0x58] sm:$0xf]
        %v4198 = vld [vmem:[#allocation29 + $0x5c] sm:$0xf]
        %v4199 = vld [vmem:[#allocation29 + $0x60] sm:$0xf]
        %v4200 = vld [vmem:[#allocation29 + $0x64] sm:$0xf]
        %v4201 = vld [vmem:[#allocation29 + $0x68] sm:$0xf]
        %v4202 = vld [vmem:[#allocation29 + $0x6c] sm:$0xf]
        %v4203 = vld [vmem:[#allocation29 + $0x70] sm:$0xf]
        %v4204 = vld [vmem:[#allocation29 + $0x74] sm:$0xf]
        %v4205 = vld [vmem:[#allocation29 + $0x78] sm:$0xf]
        %v4206 = vld [vmem:[#allocation29 + $0x7c] sm:$0xf]
        %v4207 = vld [vmem:[#allocation29 + $0x80] sm:$0xf]
        %v4208 = vld [vmem:[#allocation29 + $0x84] sm:$0xf]
        %v4209 = vld [vmem:[#allocation29 + $0x88] sm:$0xf]
        %v4210 = vld [vmem:[#allocation29 + $0x8c] sm:$0xf]
        %v4211 = vld [vmem:[#allocation31] sm:$0x1]
        %v4213 = vperm.slane %v4211, 0
        %v4251 = vunpack.c.l.b16 %v4175
        %v4252 = vunpack.c.l.b16 %v4176
        %v4253 = vunpack.c.l.b16 %v4177
        %v4254 = vunpack.c.l.b16 %v4178
        %v4255 = vunpack.c.l.b16 %v4179
        %v4256 = vunpack.c.l.b16 %v4180
        %v4257 = vunpack.c.l.b16 %v4181
        %v4258 = vunpack.c.l.b16 %v4182
        %v4259 = vunpack.c.l.b16 %v4183
        %v4260 = vunpack.c.l.b16 %v4184
        %v4261 = vunpack.c.l.b16 %v4185
        %v4262 = vunpack.c.l.b16 %v4186
        %v4263 = vunpack.c.l.b16 %v4187
        %v4264 = vunpack.c.l.b16 %v4188
        %v4265 = vunpack.c.l.b16 %v4189
        %v4266 = vunpack.c.l.b16 %v4190
        %v4267 = vunpack.c.l.b16 %v4191
        %v4268 = vunpack.c.l.b16 %v4192
        %v4269 = vunpack.c.l.b16 %v4193
        %v4270 = vunpack.c.l.b16 %v4194
        %v4271 = vunpack.c.l.b16 %v4195
        %v4272 = vunpack.c.l.b16 %v4196
        %v4273 = vunpack.c.l.b16 %v4197
        %v4274 = vunpack.c.l.b16 %v4198
        %v4275 = vunpack.c.l.b16 %v4199
        %v4276 = vunpack.c.l.b16 %v4200
        %v4277 = vunpack.c.l.b16 %v4201
        %v4278 = vunpack.c.l.b16 %v4202
        %v4279 = vunpack.c.l.b16 %v4203
        %v4280 = vunpack.c.l.b16 %v4204
        %v4281 = vunpack.c.l.b16 %v4205
        %v4282 = vunpack.c.l.b16 %v4206
        %v4283 = vunpack.c.l.b16 %v4207
        %v4284 = vunpack.c.l.b16 %v4208
        %v4285 = vunpack.c.l.b16 %v4209
        %v4286 = vunpack.c.l.b16 %v4210
        %v4287 = vpack.c.b16 %v4252, %v4251
        %v4288 = vpack.c.b16 %v4254, %v4253
        %v4289 = vpack.c.b16 %v4256, %v4255
        %v4290 = vpack.c.b16 %v4258, %v4257
        %v4291 = vpack.c.b16 %v4260, %v4259
        %v4292 = vpack.c.b16 %v4262, %v4261
        %v4293 = vpack.c.b16 %v4264, %v4263
        %v4294 = vpack.c.b16 %v4266, %v4265
        %v4295 = vpack.c.b16 %v4268, %v4267
        %v4296 = vpack.c.b16 %v4270, %v4269
        %v4297 = vpack.c.b16 %v4272, %v4271
        %v4298 = vpack.c.b16 %v4274, %v4273
        %v4299 = vpack.c.b16 %v4276, %v4275
        %v4300 = vpack.c.b16 %v4278, %v4277
        %v4301 = vpack.c.b16 %v4280, %v4279
        %v4302 = vpack.c.b16 %v4282, %v4281
        %v4303 = vpack.c.b16 %v4284, %v4283
        %v4304 = vpack.c.b16 %v4286, %v4285
        %v4323 = vsel %vm2618, %v4168, 0
        %4325 = vmatpush.bf16.msra.mxu0 %v4294
        %4326 = vmatpush.bf16.msra.mxu0 %v4293
        %4327 = vmatpush.bf16.msra.mxu0 %v4292
        %4328 = vmatpush.bf16.msra.mxu0 %v4291
        %4329 = vmatpush.bf16.msra.mxu0 %v4290
        %4330 = vmatpush.bf16.msra.mxu0 %v4289
        %4331 = vmatpush.bf16.msra.mxu0 %v4288
        %4332 = vmatpush.bf16.msra.mxu0 %v4287
        %4333 = vmatmul.bf16.gmra.mxu0 %v4170
        %v4334 = vpop.f32.mrf.mxu0
        %v4335 = vadd.f32 %v4213, %v4334
        %v4336 = vpop.f32.mrf.mxu0
        %4337 = vdwg.mxu0
        %4338 = vmatpush.bf16.msra.mxu0 %v4302
        %4339 = vmatpush.bf16.msra.mxu0 %v4301
        %4340 = vmatpush.bf16.msra.mxu0 %v4300
        %4341 = vmatpush.bf16.msra.mxu0 %v4299
        %4342 = vmatpush.bf16.msra.mxu0 %v4298
        %4343 = vmatpush.bf16.msra.mxu0 %v4297
        %4344 = vmatpush.bf16.msra.mxu0 %v4296
        %4345 = vmatpush.bf16.msra.mxu0 %v4295
        %4346 = vmatmul.bf16.gmra.mxu0 %v4173
        %v4347 = vpop.f32.mrf.mxu0
        %v4348 = vadd.f32 %v4335, %v4347
        %v4349 = vpop.f32.mrf.mxu0
        %4350 = vdwg.mxu0
        %4351 = vmatpush.bf16.msra.mxu0 0
        %4352 = vmatpush.bf16.msra.mxu0 0
        %4353 = vmatpush.bf16.msra.mxu0 0
        %4354 = vmatpush.bf16.msra.mxu0 0
        %4355 = vmatpush.bf16.msra.mxu0 0
        %4356 = vmatpush.bf16.msra.mxu0 0
        %4357 = vmatpush.bf16.msra.mxu0 %v4304
        %4358 = vmatpush.bf16.msra.mxu0 %v4303
        %4359 = vmatmul.bf16.gmra.mxu0 %v4323
        %v4360 = vpop.f32.mrf.mxu0
        %v4361 = vadd.f32 %v4348, %v4360
        %v4362 = vpop.f32.mrf.mxu0
        %4363 = vdwg.mxu0
        %v4364 = vadd.f32 %v4361, %v3910
        %v4365 = vmax.f32 %v4364, 0.0
        %v4366 = vpack.c.bf16 %v4365, %v4365
        %v4368 = vunpack.c.l.b16 %v4366
        %v4369 = vpack.c.b16 %v4368, %v4368
        %4370 = vrot.lane.b32.xlu0 %v4369, 16
        %v4371 = vpop.permute.xlu0 %4370
        %v4373 = vsel %vm2614, 0, %v4371
        %v4374 = vsel %vm2665, %v4373, 0
        %v4375 = vshrl.u32 %v4374, 16
        %v4377 = vrot.slane %v4375, 7
        %v4378 = vshll.u32 %v4374, 16
        %v4380 = vor.u32 %v4377, %v4378
        %v4382 = vsel %vm2646, 0, %v4380
        %v4383 = vsel %vm3631, %v4382, 0
        %v4385 = vshrl.u32 %v4383, 16
        %4387 = vrot.lane.b32.xlu0 %v4385, 96
        %v4388 = vpop.permute.xlu0 %4387
        %v4390 = vrot.slane %v4383, 1
        %4391 = vrot.lane.b32.xlu0 %v4390, 64
        %v4392 = vpop.permute.xlu0 %4391
        %v4395 = vsel %vm3646, %v4383, %v4388
        %v4398 = vsel %vm3650, %v4388, %v4392
        %v4400 = vshll.u32 %v4395, 16
        %v4402 = vrot.slane %v4400, 1
        %v4403 = vshll.u32 %v4398, 16
        %v4405 = vrot.slane %v4403, 1
        %v4406 = vshll.u32 %v4392, 16
        %v4408 = vrot.slane %v4406, 1
        %v4412 = vsel %vm2646, %v4395, %v4402
        %v4413 = vsel %vm2646, %v4398, %v4405
        %v4414 = vsel %vm2646, %v4392, %v4408
        %v4415 = vld [vmem:[#allocation32] sm:$0xf]
        %v4416 = vld [vmem:[#allocation32 + $0x4] sm:$0xf]
        %v4417 = vld [vmem:[#allocation32 + $0x8] sm:$0xf]
        %v4418 = vld [vmem:[#allocation32 + $0xc] sm:$0xf]
        %v4419 = vld [vmem:[#allocation32 + $0x10] sm:$0xf]
        %v4420 = vld [vmem:[#allocation32 + $0x14] sm:$0xf]
        %v4421 = vld [vmem:[#allocation32 + $0x18] sm:$0xf]
        %v4422 = vld [vmem:[#allocation32 + $0x1c] sm:$0xf]
        %v4423 = vld [vmem:[#allocation32 + $0x20] sm:$0xf]
        %v4424 = vld [vmem:[#allocation32 + $0x24] sm:$0xf]
        %v4425 = vld [vmem:[#allocation32 + $0x28] sm:$0xf]
        %v4426 = vld [vmem:[#allocation32 + $0x2c] sm:$0xf]
        %v4427 = vld [vmem:[#allocation32 + $0x30] sm:$0xf]
        %v4428 = vld [vmem:[#allocation32 + $0x34] sm:$0xf]
        %v4429 = vld [vmem:[#allocation32 + $0x38] sm:$0xf]
        %v4430 = vld [vmem:[#allocation32 + $0x3c] sm:$0xf]
        %v4431 = vld [vmem:[#allocation32 + $0x40] sm:$0xf]
        %v4432 = vld [vmem:[#allocation32 + $0x44] sm:$0xf]
        %v4433 = vld [vmem:[#allocation32 + $0x48] sm:$0xf]
        %v4434 = vld [vmem:[#allocation32 + $0x4c] sm:$0xf]
        %v4435 = vld [vmem:[#allocation32 + $0x50] sm:$0xf]
        %v4436 = vld [vmem:[#allocation32 + $0x54] sm:$0xf]
        %v4437 = vld [vmem:[#allocation32 + $0x58] sm:$0xf]
        %v4438 = vld [vmem:[#allocation32 + $0x5c] sm:$0xf]
        %v4439 = vld [vmem:[#allocation32 + $0x60] sm:$0xf]
        %v4440 = vld [vmem:[#allocation32 + $0x64] sm:$0xf]
        %v4441 = vld [vmem:[#allocation32 + $0x68] sm:$0xf]
        %v4442 = vld [vmem:[#allocation32 + $0x6c] sm:$0xf]
        %v4443 = vld [vmem:[#allocation32 + $0x70] sm:$0xf]
        %v4444 = vld [vmem:[#allocation32 + $0x74] sm:$0xf]
        %v4445 = vld [vmem:[#allocation32 + $0x78] sm:$0xf]
        %v4446 = vld [vmem:[#allocation32 + $0x7c] sm:$0xf]
        %v4447 = vld [vmem:[#allocation32 + $0x80] sm:$0xf]
        %v4448 = vld [vmem:[#allocation32 + $0x84] sm:$0xf]
        %v4449 = vld [vmem:[#allocation32 + $0x88] sm:$0xf]
        %v4450 = vld [vmem:[#allocation32 + $0x8c] sm:$0xf]
        %v4451 = vld [vmem:[#allocation34] sm:$0x1]
        %v4453 = vperm.slane %v4451, 0
        %v4491 = vunpack.c.l.b16 %v4415
        %v4492 = vunpack.c.l.b16 %v4416
        %v4493 = vunpack.c.l.b16 %v4417
        %v4494 = vunpack.c.l.b16 %v4418
        %v4495 = vunpack.c.l.b16 %v4419
        %v4496 = vunpack.c.l.b16 %v4420
        %v4497 = vunpack.c.l.b16 %v4421
        %v4498 = vunpack.c.l.b16 %v4422
        %v4499 = vunpack.c.l.b16 %v4423
        %v4500 = vunpack.c.l.b16 %v4424
        %v4501 = vunpack.c.l.b16 %v4425
        %v4502 = vunpack.c.l.b16 %v4426
        %v4503 = vunpack.c.l.b16 %v4427
        %v4504 = vunpack.c.l.b16 %v4428
        %v4505 = vunpack.c.l.b16 %v4429
        %v4506 = vunpack.c.l.b16 %v4430
        %v4507 = vunpack.c.l.b16 %v4431
        %v4508 = vunpack.c.l.b16 %v4432
        %v4509 = vunpack.c.l.b16 %v4433
        %v4510 = vunpack.c.l.b16 %v4434
        %v4511 = vunpack.c.l.b16 %v4435
        %v4512 = vunpack.c.l.b16 %v4436
        %v4513 = vunpack.c.l.b16 %v4437
        %v4514 = vunpack.c.l.b16 %v4438
        %v4515 = vunpack.c.l.b16 %v4439
        %v4516 = vunpack.c.l.b16 %v4440
        %v4517 = vunpack.c.l.b16 %v4441
        %v4518 = vunpack.c.l.b16 %v4442
        %v4519 = vunpack.c.l.b16 %v4443
        %v4520 = vunpack.c.l.b16 %v4444
        %v4521 = vunpack.c.l.b16 %v4445
        %v4522 = vunpack.c.l.b16 %v4446
        %v4523 = vunpack.c.l.b16 %v4447
        %v4524 = vunpack.c.l.b16 %v4448
        %v4525 = vunpack.c.l.b16 %v4449
        %v4526 = vunpack.c.l.b16 %v4450
        %v4527 = vpack.c.b16 %v4492, %v4491
        %v4528 = vpack.c.b16 %v4494, %v4493
        %v4529 = vpack.c.b16 %v4496, %v4495
        %v4530 = vpack.c.b16 %v4498, %v4497
        %v4531 = vpack.c.b16 %v4500, %v4499
        %v4532 = vpack.c.b16 %v4502, %v4501
        %v4533 = vpack.c.b16 %v4504, %v4503
        %v4534 = vpack.c.b16 %v4506, %v4505
        %v4535 = vpack.c.b16 %v4508, %v4507
        %v4536 = vpack.c.b16 %v4510, %v4509
        %v4537 = vpack.c.b16 %v4512, %v4511
        %v4538 = vpack.c.b16 %v4514, %v4513
        %v4539 = vpack.c.b16 %v4516, %v4515
        %v4540 = vpack.c.b16 %v4518, %v4517
        %v4541 = vpack.c.b16 %v4520, %v4519
        %v4542 = vpack.c.b16 %v4522, %v4521
        %v4543 = vpack.c.b16 %v4524, %v4523
        %v4544 = vpack.c.b16 %v4526, %v4525
        %v4564 = vsel %vm2618, %v4414, 0
        %4566 = vmatpush.bf16.msra.mxu0 %v4534
        %4567 = vmatpush.bf16.msra.mxu0 %v4533
        %4568 = vmatpush.bf16.msra.mxu0 %v4532
        %4569 = vmatpush.bf16.msra.mxu0 %v4531
        %4570 = vmatpush.bf16.msra.mxu0 %v4530
        %4571 = vmatpush.bf16.msra.mxu0 %v4529
        %4572 = vmatpush.bf16.msra.mxu0 %v4528
        %4573 = vmatpush.bf16.msra.mxu0 %v4527
        %4574 = vmatmul.bf16.gmra.mxu0 %v4412
        %v4575 = vpop.f32.mrf.mxu0
        %v4576 = vadd.f32 %v4453, %v4575
        %v4577 = vpop.f32.mrf.mxu0
        %4578 = vdwg.mxu0
        %4579 = vmatpush.bf16.msra.mxu0 %v4542
        %4580 = vmatpush.bf16.msra.mxu0 %v4541
        %4581 = vmatpush.bf16.msra.mxu0 %v4540
        %4582 = vmatpush.bf16.msra.mxu0 %v4539
        %4583 = vmatpush.bf16.msra.mxu0 %v4538
        %4584 = vmatpush.bf16.msra.mxu0 %v4537
        %4585 = vmatpush.bf16.msra.mxu0 %v4536
        %4586 = vmatpush.bf16.msra.mxu0 %v4535
        %4587 = vmatmul.bf16.gmra.mxu0 %v4413
        %v4588 = vpop.f32.mrf.mxu0
        %v4589 = vadd.f32 %v4576, %v4588
        %v4590 = vpop.f32.mrf.mxu0
        %4591 = vdwg.mxu0
        %4592 = vmatpush.bf16.msra.mxu0 0
        %4593 = vmatpush.bf16.msra.mxu0 0
        %4594 = vmatpush.bf16.msra.mxu0 0
        %4595 = vmatpush.bf16.msra.mxu0 0
        %4596 = vmatpush.bf16.msra.mxu0 0
        %4597 = vmatpush.bf16.msra.mxu0 0
        %4598 = vmatpush.bf16.msra.mxu0 %v4544
        %4599 = vmatpush.bf16.msra.mxu0 %v4543
        %4600 = vmatmul.bf16.gmra.mxu0 %v4564
        %v4601 = vpop.f32.mrf.mxu0
        %v4602 = vadd.f32 %v4589, %v4601
        %v4603 = vpop.f32.mrf.mxu0
        %4604 = vdwg.mxu0
        %v4605 = vmax.f32 %v4602, 0.0
        %v4606 = vpack.c.bf16 %v4605, %v4605
        %v4608 = vunpack.c.l.b16 %v4606
        %v4609 = vpack.c.b16 %v4608, %v4608
        %4610 = vrot.lane.b32.xlu0 %v4609, 32
        %v4611 = vpop.permute.xlu0 %4610
        %v4613 = vsel %vm2618, 0, %v4611
        %v4614 = vsel %vm3646, %v4613, 0
        %v4615 = vshrl.u32 %v4614, 16
        %v4617 = vrot.slane %v4615, 7
        %v4618 = vshll.u32 %v4614, 16
        %v4620 = vor.u32 %v4617, %v4618
        %v4622 = vsel %vm2646, 0, %v4620
        %v4623 = vsel %vm3455, %v4622, 0
        %v4625 = vshrl.u32 %v4623, 16
        %v4627 = vshll.u32 %v4623, 16
        %v4629 = vrot.slane %v4627, 1
        %v4630 = vor.u32 %v4625, %v4629
        %v4633 = vrot.slane %v4623, 1
        %v4635 = vld [vmem:[#allocation35] sm:$0xf]
        %v4636 = vld [vmem:[#allocation35 + $0x4] sm:$0xf]
        %v4637 = vld [vmem:[#allocation35 + $0x8] sm:$0xf]
        %v4638 = vld [vmem:[#allocation35 + $0xc] sm:$0xf]
        %v4639 = vld [vmem:[#allocation35 + $0x10] sm:$0xf]
        %v4640 = vld [vmem:[#allocation35 + $0x14] sm:$0xf]
        %v4641 = vld [vmem:[#allocation35 + $0x18] sm:$0xf]
        %v4642 = vld [vmem:[#allocation35 + $0x1c] sm:$0xf]
        %v4643 = vld [vmem:[#allocation35 + $0x20] sm:$0xf]
        %v4644 = vld [vmem:[#allocation35 + $0x24] sm:$0xf]
        %v4645 = vld [vmem:[#allocation35 + $0x28] sm:$0xf]
        %v4646 = vld [vmem:[#allocation35 + $0x2c] sm:$0xf]
        %v4647 = vld [vmem:[#allocation35 + $0x30] sm:$0xf]
        %v4648 = vld [vmem:[#allocation35 + $0x34] sm:$0xf]
        %v4649 = vld [vmem:[#allocation35 + $0x38] sm:$0xf]
        %v4650 = vld [vmem:[#allocation35 + $0x3c] sm:$0xf]
        %v4651 = vld [vmem:[#allocation35 + $0x40] sm:$0xf]
        %v4652 = vld [vmem:[#allocation35 + $0x44] sm:$0xf]
        %v4653 = vld [vmem:[#allocation35 + $0x48] sm:$0xf]
        %v4654 = vld [vmem:[#allocation35 + $0x4c] sm:$0xf]
        %v4655 = vld [vmem:[#allocation35 + $0x50] sm:$0xf]
        %v4656 = vld [vmem:[#allocation35 + $0x54] sm:$0xf]
        %v4657 = vld [vmem:[#allocation35 + $0x58] sm:$0xf]
        %v4658 = vld [vmem:[#allocation35 + $0x5c] sm:$0xf]
        %v4659 = vld [vmem:[#allocation35 + $0x60] sm:$0xf]
        %v4660 = vld [vmem:[#allocation35 + $0x64] sm:$0xf]
        %v4661 = vld [vmem:[#allocation35 + $0x68] sm:$0xf]
        %v4662 = vld [vmem:[#allocation35 + $0x6c] sm:$0xf]
        %v4663 = vld [vmem:[#allocation35 + $0x70] sm:$0xf]
        %v4664 = vld [vmem:[#allocation35 + $0x74] sm:$0xf]
        %v4665 = vld [vmem:[#allocation35 + $0x78] sm:$0xf]
        %v4666 = vld [vmem:[#allocation35 + $0x7c] sm:$0xf]
        %v4667 = vld [vmem:[#allocation35 + $0x80] sm:$0xf]
        %v4668 = vld [vmem:[#allocation35 + $0x84] sm:$0xf]
        %v4669 = vld [vmem:[#allocation35 + $0x88] sm:$0xf]
        %v4670 = vld [vmem:[#allocation35 + $0x8c] sm:$0xf]
        %v4671 = vld [vmem:[#allocation35 + $0x90] sm:$0xf]
        %v4672 = vld [vmem:[#allocation35 + $0x94] sm:$0xf]
        %v4673 = vld [vmem:[#allocation35 + $0x98] sm:$0xf]
        %v4674 = vld [vmem:[#allocation35 + $0x9c] sm:$0xf]
        %v4675 = vld [vmem:[#allocation35 + $0xa0] sm:$0xf]
        %v4676 = vld [vmem:[#allocation35 + $0xa4] sm:$0xf]
        %v4677 = vld [vmem:[#allocation35 + $0xa8] sm:$0xf]
        %v4678 = vld [vmem:[#allocation35 + $0xac] sm:$0xf]
        %v4679 = vld [vmem:[#allocation35 + $0xb0] sm:$0xf]
        %v4680 = vld [vmem:[#allocation35 + $0xb4] sm:$0xf]
        %v4681 = vld [vmem:[#allocation35 + $0xb8] sm:$0xf]
        %v4682 = vld [vmem:[#allocation35 + $0xbc] sm:$0xf]
        %v4683 = vld [vmem:[#allocation37] sm:$0x1]
        %v4685 = vperm.slane %v4683, 0
        %v4735 = vunpack.c.l.b16 %v4635
        %v4736 = vunpack.c.l.b16 %v4636
        %v4737 = vunpack.c.l.b16 %v4637
        %v4738 = vunpack.c.l.b16 %v4638
        %v4739 = vunpack.c.l.b16 %v4639
        %v4740 = vunpack.c.l.b16 %v4640
        %v4741 = vunpack.c.l.b16 %v4641
        %v4742 = vunpack.c.l.b16 %v4642
        %v4743 = vunpack.c.l.b16 %v4643
        %v4744 = vunpack.c.l.b16 %v4644
        %v4745 = vunpack.c.l.b16 %v4645
        %v4746 = vunpack.c.l.b16 %v4646
        %v4747 = vunpack.c.l.b16 %v4647
        %v4748 = vunpack.c.l.b16 %v4648
        %v4749 = vunpack.c.l.b16 %v4649
        %v4750 = vunpack.c.l.b16 %v4650
        %v4751 = vunpack.c.l.b16 %v4651
        %v4752 = vunpack.c.l.b16 %v4652
        %v4753 = vunpack.c.l.b16 %v4653
        %v4754 = vunpack.c.l.b16 %v4654
        %v4755 = vunpack.c.l.b16 %v4655
        %v4756 = vunpack.c.l.b16 %v4656
        %v4757 = vunpack.c.l.b16 %v4657
        %v4758 = vunpack.c.l.b16 %v4658
        %v4759 = vunpack.c.l.b16 %v4659
        %v4760 = vunpack.c.l.b16 %v4660
        %v4761 = vunpack.c.l.b16 %v4661
        %v4762 = vunpack.c.l.b16 %v4662
        %v4763 = vunpack.c.l.b16 %v4663
        %v4764 = vunpack.c.l.b16 %v4664
        %v4765 = vunpack.c.l.b16 %v4665
        %v4766 = vunpack.c.l.b16 %v4666
        %v4767 = vunpack.c.l.b16 %v4667
        %v4768 = vunpack.c.l.b16 %v4668
        %v4769 = vunpack.c.l.b16 %v4669
        %v4770 = vunpack.c.l.b16 %v4670
        %v4771 = vunpack.c.l.b16 %v4671
        %v4772 = vunpack.c.l.b16 %v4672
        %v4773 = vunpack.c.l.b16 %v4673
        %v4774 = vunpack.c.l.b16 %v4674
        %v4775 = vunpack.c.l.b16 %v4675
        %v4776 = vunpack.c.l.b16 %v4676
        %v4777 = vunpack.c.l.b16 %v4677
        %v4778 = vunpack.c.l.b16 %v4678
        %v4779 = vunpack.c.l.b16 %v4679
        %v4780 = vunpack.c.l.b16 %v4680
        %v4781 = vunpack.c.l.b16 %v4681
        %v4782 = vunpack.c.l.b16 %v4682
        %v4783 = vpack.c.b16 %v4736, %v4735
        %v4784 = vpack.c.b16 %v4738, %v4737
        %v4785 = vpack.c.b16 %v4740, %v4739
        %v4786 = vpack.c.b16 %v4742, %v4741
        %v4787 = vpack.c.b16 %v4744, %v4743
        %v4788 = vpack.c.b16 %v4746, %v4745
        %v4789 = vpack.c.b16 %v4748, %v4747
        %v4790 = vpack.c.b16 %v4750, %v4749
        %v4791 = vpack.c.b16 %v4752, %v4751
        %v4792 = vpack.c.b16 %v4754, %v4753
        %v4793 = vpack.c.b16 %v4756, %v4755
        %v4794 = vpack.c.b16 %v4758, %v4757
        %v4795 = vpack.c.b16 %v4760, %v4759
        %v4796 = vpack.c.b16 %v4762, %v4761
        %v4797 = vpack.c.b16 %v4764, %v4763
        %v4798 = vpack.c.b16 %v4766, %v4765
        %v4799 = vpack.c.b16 %v4768, %v4767
        %v4800 = vpack.c.b16 %v4770, %v4769
        %v4801 = vpack.c.b16 %v4772, %v4771
        %v4802 = vpack.c.b16 %v4774, %v4773
        %v4803 = vpack.c.b16 %v4776, %v4775
        %v4804 = vpack.c.b16 %v4778, %v4777
        %v4805 = vpack.c.b16 %v4780, %v4779
        %v4806 = vpack.c.b16 %v4782, %v4781
        %4831 = vmatpush.bf16.msra.mxu0 %v4790
        %4832 = vmatpush.bf16.msra.mxu0 %v4789
        %4833 = vmatpush.bf16.msra.mxu0 %v4788
        %4834 = vmatpush.bf16.msra.mxu0 %v4787
        %4835 = vmatpush.bf16.msra.mxu0 %v4786
        %4836 = vmatpush.bf16.msra.mxu0 %v4785
        %4837 = vmatpush.bf16.msra.mxu0 %v4784
        %4838 = vmatpush.bf16.msra.mxu0 %v4783
        %4839 = vmatmul.bf16.gmra.mxu0 %v4623
        %v4840 = vpop.f32.mrf.mxu0
        %v4841 = vadd.f32 %v4685, %v4840
        %v4842 = vpop.f32.mrf.mxu0
        %4843 = vdwg.mxu0
        %4844 = vmatpush.bf16.msra.mxu0 %v4798
        %4845 = vmatpush.bf16.msra.mxu0 %v4797
        %4846 = vmatpush.bf16.msra.mxu0 %v4796
        %4847 = vmatpush.bf16.msra.mxu0 %v4795
        %4848 = vmatpush.bf16.msra.mxu0 %v4794
        %4849 = vmatpush.bf16.msra.mxu0 %v4793
        %4850 = vmatpush.bf16.msra.mxu0 %v4792
        %4851 = vmatpush.bf16.msra.mxu0 %v4791
        %4852 = vmatmul.bf16.gmra.mxu0 %v4630
        %v4853 = vpop.f32.mrf.mxu0
        %v4854 = vadd.f32 %v4841, %v4853
        %v4855 = vpop.f32.mrf.mxu0
        %4856 = vdwg.mxu0
        %4857 = vmatpush.bf16.msra.mxu0 %v4806
        %4858 = vmatpush.bf16.msra.mxu0 %v4805
        %4859 = vmatpush.bf16.msra.mxu0 %v4804
        %4860 = vmatpush.bf16.msra.mxu0 %v4803
        %4861 = vmatpush.bf16.msra.mxu0 %v4802
        %4862 = vmatpush.bf16.msra.mxu0 %v4801
        %4863 = vmatpush.bf16.msra.mxu0 %v4800
        %4864 = vmatpush.bf16.msra.mxu0 %v4799
        %4865 = vmatmul.bf16.gmra.mxu0 %v4633
        %v4866 = vpop.f32.mrf.mxu0
        %v4867 = vadd.f32 %v4854, %v4866
        %v4868 = vpop.f32.mrf.mxu0
        %4869 = vdwg.mxu0
        %v4871 = vshll.u32 %v4369, 16
        %v4873 = vrot.slane %v4871, 1
        %v4875 = vsel %vm2646, %v4366, %v4873
        %v4876 = vld [vmem:[#allocation38] sm:$0xf]
        %v4877 = vld [vmem:[#allocation38 + $0x4] sm:$0xf]
        %v4878 = vld [vmem:[#allocation38 + $0x8] sm:$0xf]
        %v4879 = vld [vmem:[#allocation38 + $0xc] sm:$0xf]
        %v4880 = vld [vmem:[#allocation38 + $0x10] sm:$0xf]
        %v4881 = vld [vmem:[#allocation38 + $0x14] sm:$0xf]
        %v4882 = vld [vmem:[#allocation38 + $0x18] sm:$0xf]
        %v4883 = vld [vmem:[#allocation38 + $0x1c] sm:$0xf]
        %v4884 = vld [vmem:[#allocation40] sm:$0x1]
        %v4886 = vperm.slane %v4884, 0
        %v4896 = vunpack.c.l.b16 %v4876
        %v4897 = vunpack.c.l.b16 %v4877
        %v4898 = vunpack.c.l.b16 %v4878
        %v4899 = vunpack.c.l.b16 %v4879
        %v4900 = vunpack.c.l.b16 %v4880
        %v4901 = vunpack.c.l.b16 %v4881
        %v4902 = vunpack.c.l.b16 %v4882
        %v4903 = vunpack.c.l.b16 %v4883
        %v4904 = vpack.c.b16 %v4897, %v4896
        %v4905 = vpack.c.b16 %v4899, %v4898
        %v4906 = vpack.c.b16 %v4901, %v4900
        %v4907 = vpack.c.b16 %v4903, %v4902
        %v4913 = vsel %vm3650, %v4875, 0
        %4915 = vmatpush.bf16.msra.mxu0 0
        %4916 = vmatpush.bf16.msra.mxu0 0
        %4917 = vmatpush.bf16.msra.mxu0 0
        %4918 = vmatpush.bf16.msra.mxu0 0
        %4919 = vmatpush.bf16.msra.mxu0 %v4907
        %4920 = vmatpush.bf16.msra.mxu0 %v4906
        %4921 = vmatpush.bf16.msra.mxu0 %v4905
        %4922 = vmatpush.bf16.msra.mxu0 %v4904
        %4923 = vmatmul.bf16.gmra.mxu0 %v4913
        %v4924 = vpop.f32.mrf.mxu0
        %v4925 = vadd.f32 %v4886, %v4924
        %v4926 = vpop.f32.mrf.mxu0
        %4927 = vdwg.mxu0
        %v4928 = vadd.f32 %v4867, %v4925
        %v4929 = vmax.f32 %v4928, 0.0
        %v4930 = vpack.c.bf16 %v4929, %v4929
        %v4932 = vunpack.c.l.b16 %v4930
        %v4933 = vpack.c.b16 %v4932, %v4932
        %4934 = vrot.lane.b32.xlu0 %v4933, 32
        %v4935 = vpop.permute.xlu0 %4934
        %v4937 = vsel %vm2618, 0, %v4935
        %v4938 = vsel %vm3646, %v4937, 0
        %v4939 = vshrl.u32 %v4938, 16
        %v4941 = vrot.slane %v4939, 7
        %v4942 = vshll.u32 %v4938, 16
        %v4944 = vor.u32 %v4941, %v4942
        %v4946 = vsel %vm2646, 0, %v4944
        %v4947 = vsel %vm3455, %v4946, 0
        %v4949 = vshrl.u32 %v4947, 16
        %v4951 = vshll.u32 %v4947, 16
        %v4953 = vrot.slane %v4951, 1
        %v4954 = vor.u32 %v4949, %v4953
        %v4957 = vrot.slane %v4947, 1
        %v4959 = vld [vmem:[#allocation41] sm:$0xf]
        %v4960 = vld [vmem:[#allocation41 + $0x4] sm:$0xf]
        %v4961 = vld [vmem:[#allocation41 + $0x8] sm:$0xf]
        %v4962 = vld [vmem:[#allocation41 + $0xc] sm:$0xf]
        %v4963 = vld [vmem:[#allocation41 + $0x10] sm:$0xf]
        %v4964 = vld [vmem:[#allocation41 + $0x14] sm:$0xf]
        %v4965 = vld [vmem:[#allocation41 + $0x18] sm:$0xf]
        %v4966 = vld [vmem:[#allocation41 + $0x1c] sm:$0xf]
        %v4967 = vld [vmem:[#allocation41 + $0x20] sm:$0xf]
        %v4968 = vld [vmem:[#allocation41 + $0x24] sm:$0xf]
        %v4969 = vld [vmem:[#allocation41 + $0x28] sm:$0xf]
        %v4970 = vld [vmem:[#allocation41 + $0x2c] sm:$0xf]
        %v4971 = vld [vmem:[#allocation41 + $0x30] sm:$0xf]
        %v4972 = vld [vmem:[#allocation41 + $0x34] sm:$0xf]
        %v4973 = vld [vmem:[#allocation41 + $0x38] sm:$0xf]
        %v4974 = vld [vmem:[#allocation41 + $0x3c] sm:$0xf]
        %v4975 = vld [vmem:[#allocation41 + $0x40] sm:$0xf]
        %v4976 = vld [vmem:[#allocation41 + $0x44] sm:$0xf]
        %v4977 = vld [vmem:[#allocation41 + $0x48] sm:$0xf]
        %v4978 = vld [vmem:[#allocation41 + $0x4c] sm:$0xf]
        %v4979 = vld [vmem:[#allocation41 + $0x50] sm:$0xf]
        %v4980 = vld [vmem:[#allocation41 + $0x54] sm:$0xf]
        %v4981 = vld [vmem:[#allocation41 + $0x58] sm:$0xf]
        %v4982 = vld [vmem:[#allocation41 + $0x5c] sm:$0xf]
        %v4983 = vld [vmem:[#allocation41 + $0x60] sm:$0xf]
        %v4984 = vld [vmem:[#allocation41 + $0x64] sm:$0xf]
        %v4985 = vld [vmem:[#allocation41 + $0x68] sm:$0xf]
        %v4986 = vld [vmem:[#allocation41 + $0x6c] sm:$0xf]
        %v4987 = vld [vmem:[#allocation41 + $0x70] sm:$0xf]
        %v4988 = vld [vmem:[#allocation41 + $0x74] sm:$0xf]
        %v4989 = vld [vmem:[#allocation41 + $0x78] sm:$0xf]
        %v4990 = vld [vmem:[#allocation41 + $0x7c] sm:$0xf]
        %v4991 = vld [vmem:[#allocation41 + $0x80] sm:$0xf]
        %v4992 = vld [vmem:[#allocation41 + $0x84] sm:$0xf]
        %v4993 = vld [vmem:[#allocation41 + $0x88] sm:$0xf]
        %v4994 = vld [vmem:[#allocation41 + $0x8c] sm:$0xf]
        %v4995 = vld [vmem:[#allocation41 + $0x90] sm:$0xf]
        %v4996 = vld [vmem:[#allocation41 + $0x94] sm:$0xf]
        %v4997 = vld [vmem:[#allocation41 + $0x98] sm:$0xf]
        %v4998 = vld [vmem:[#allocation41 + $0x9c] sm:$0xf]
        %v4999 = vld [vmem:[#allocation41 + $0xa0] sm:$0xf]
        %v5000 = vld [vmem:[#allocation41 + $0xa4] sm:$0xf]
        %v5001 = vld [vmem:[#allocation41 + $0xa8] sm:$0xf]
        %v5002 = vld [vmem:[#allocation41 + $0xac] sm:$0xf]
        %v5003 = vld [vmem:[#allocation41 + $0xb0] sm:$0xf]
        %v5004 = vld [vmem:[#allocation41 + $0xb4] sm:$0xf]
        %v5005 = vld [vmem:[#allocation41 + $0xb8] sm:$0xf]
        %v5006 = vld [vmem:[#allocation41 + $0xbc] sm:$0xf]
        %v5007 = vld [vmem:[#allocation43] sm:$0x1]
        %v5009 = vperm.slane %v5007, 0
        %v5059 = vunpack.c.l.b16 %v4959
        %v5060 = vunpack.c.l.b16 %v4960
        %v5061 = vunpack.c.l.b16 %v4961
        %v5062 = vunpack.c.l.b16 %v4962
        %v5063 = vunpack.c.l.b16 %v4963
        %v5064 = vunpack.c.l.b16 %v4964
        %v5065 = vunpack.c.l.b16 %v4965
        %v5066 = vunpack.c.l.b16 %v4966
        %v5067 = vunpack.c.l.b16 %v4967
        %v5068 = vunpack.c.l.b16 %v4968
        %v5069 = vunpack.c.l.b16 %v4969
        %v5070 = vunpack.c.l.b16 %v4970
        %v5071 = vunpack.c.l.b16 %v4971
        %v5072 = vunpack.c.l.b16 %v4972
        %v5073 = vunpack.c.l.b16 %v4973
        %v5074 = vunpack.c.l.b16 %v4974
        %v5075 = vunpack.c.l.b16 %v4975
        %v5076 = vunpack.c.l.b16 %v4976
        %v5077 = vunpack.c.l.b16 %v4977
        %v5078 = vunpack.c.l.b16 %v4978
        %v5079 = vunpack.c.l.b16 %v4979
        %v5080 = vunpack.c.l.b16 %v4980
        %v5081 = vunpack.c.l.b16 %v4981
        %v5082 = vunpack.c.l.b16 %v4982
        %v5083 = vunpack.c.l.b16 %v4983
        %v5084 = vunpack.c.l.b16 %v4984
        %v5085 = vunpack.c.l.b16 %v4985
        %v5086 = vunpack.c.l.b16 %v4986
        %v5087 = vunpack.c.l.b16 %v4987
        %v5088 = vunpack.c.l.b16 %v4988
        %v5089 = vunpack.c.l.b16 %v4989
        %v5090 = vunpack.c.l.b16 %v4990
        %v5091 = vunpack.c.l.b16 %v4991
        %v5092 = vunpack.c.l.b16 %v4992
        %v5093 = vunpack.c.l.b16 %v4993
        %v5094 = vunpack.c.l.b16 %v4994
        %v5095 = vunpack.c.l.b16 %v4995
        %v5096 = vunpack.c.l.b16 %v4996
        %v5097 = vunpack.c.l.b16 %v4997
        %v5098 = vunpack.c.l.b16 %v4998
        %v5099 = vunpack.c.l.b16 %v4999
        %v5100 = vunpack.c.l.b16 %v5000
        %v5101 = vunpack.c.l.b16 %v5001
        %v5102 = vunpack.c.l.b16 %v5002
        %v5103 = vunpack.c.l.b16 %v5003
        %v5104 = vunpack.c.l.b16 %v5004
        %v5105 = vunpack.c.l.b16 %v5005
        %v5106 = vunpack.c.l.b16 %v5006
        %v5107 = vpack.c.b16 %v5060, %v5059
        %v5108 = vpack.c.b16 %v5062, %v5061
        %v5109 = vpack.c.b16 %v5064, %v5063
        %v5110 = vpack.c.b16 %v5066, %v5065
        %v5111 = vpack.c.b16 %v5068, %v5067
        %v5112 = vpack.c.b16 %v5070, %v5069
        %v5113 = vpack.c.b16 %v5072, %v5071
        %v5114 = vpack.c.b16 %v5074, %v5073
        %v5115 = vpack.c.b16 %v5076, %v5075
        %v5116 = vpack.c.b16 %v5078, %v5077
        %v5117 = vpack.c.b16 %v5080, %v5079
        %v5118 = vpack.c.b16 %v5082, %v5081
        %v5119 = vpack.c.b16 %v5084, %v5083
        %v5120 = vpack.c.b16 %v5086, %v5085
        %v5121 = vpack.c.b16 %v5088, %v5087
        %v5122 = vpack.c.b16 %v5090, %v5089
        %v5123 = vpack.c.b16 %v5092, %v5091
        %v5124 = vpack.c.b16 %v5094, %v5093
        %v5125 = vpack.c.b16 %v5096, %v5095
        %v5126 = vpack.c.b16 %v5098, %v5097
        %v5127 = vpack.c.b16 %v5100, %v5099
        %v5128 = vpack.c.b16 %v5102, %v5101
        %v5129 = vpack.c.b16 %v5104, %v5103
        %v5130 = vpack.c.b16 %v5106, %v5105
        %5155 = vmatpush.bf16.msra.mxu0 %v5114
        %5156 = vmatpush.bf16.msra.mxu0 %v5113
        %5157 = vmatpush.bf16.msra.mxu0 %v5112
        %5158 = vmatpush.bf16.msra.mxu0 %v5111
        %5159 = vmatpush.bf16.msra.mxu0 %v5110
        %5160 = vmatpush.bf16.msra.mxu0 %v5109
        %5161 = vmatpush.bf16.msra.mxu0 %v5108
        %5162 = vmatpush.bf16.msra.mxu0 %v5107
        %5163 = vmatmul.bf16.gmra.mxu0 %v4947
        %v5164 = vpop.f32.mrf.mxu0
        %v5165 = vadd.f32 %v5009, %v5164
        %v5166 = vpop.f32.mrf.mxu0
        %5167 = vdwg.mxu0
        %5168 = vmatpush.bf16.msra.mxu0 %v5122
        %5169 = vmatpush.bf16.msra.mxu0 %v5121
        %5170 = vmatpush.bf16.msra.mxu0 %v5120
        %5171 = vmatpush.bf16.msra.mxu0 %v5119
        %5172 = vmatpush.bf16.msra.mxu0 %v5118
        %5173 = vmatpush.bf16.msra.mxu0 %v5117
        %5174 = vmatpush.bf16.msra.mxu0 %v5116
        %5175 = vmatpush.bf16.msra.mxu0 %v5115
        %5176 = vmatmul.bf16.gmra.mxu0 %v4954
        %v5177 = vpop.f32.mrf.mxu0
        %v5178 = vadd.f32 %v5165, %v5177
        %v5179 = vpop.f32.mrf.mxu0
        %5180 = vdwg.mxu0
        %5181 = vmatpush.bf16.msra.mxu0 %v5130
        %5182 = vmatpush.bf16.msra.mxu0 %v5129
        %5183 = vmatpush.bf16.msra.mxu0 %v5128
        %5184 = vmatpush.bf16.msra.mxu0 %v5127
        %5185 = vmatpush.bf16.msra.mxu0 %v5126
        %5186 = vmatpush.bf16.msra.mxu0 %v5125
        %5187 = vmatpush.bf16.msra.mxu0 %v5124
        %5188 = vmatpush.bf16.msra.mxu0 %v5123
        %5189 = vmatmul.bf16.gmra.mxu0 %v4957
        %v5190 = vpop.f32.mrf.mxu0
        %v5191 = vadd.f32 %v5178, %v5190
        %v5192 = vpop.f32.mrf.mxu0
        %5193 = vdwg.mxu0
        %v5194 = vmax.f32 %v5191, 0.0
        %v5195 = vpack.c.bf16 %v5194, %v5194
        %v5197 = vunpack.c.l.b16 %v5195
        %v5198 = vpack.c.b16 %v5197, %v5197
        %5199 = vrot.lane.b32.xlu0 %v5198, 32
        %v5200 = vpop.permute.xlu0 %5199
        %v5202 = vsel %vm2618, 0, %v5200
        %v5203 = vsel %vm3646, %v5202, 0
        %v5204 = vshrl.u32 %v5203, 16
        %v5206 = vrot.slane %v5204, 7
        %v5207 = vshll.u32 %v5203, 16
        %v5209 = vor.u32 %v5206, %v5207
        %v5211 = vsel %vm2646, 0, %v5209
        %v5212 = vsel %vm3455, %v5211, 0
        %v5214 = vshrl.u32 %v5212, 16
        %v5216 = vshll.u32 %v5212, 16
        %v5218 = vrot.slane %v5216, 1
        %v5219 = vor.u32 %v5214, %v5218
        %v5222 = vrot.slane %v5212, 1
        %v5224 = vld [vmem:[#allocation44] sm:$0xf]
        %v5225 = vld [vmem:[#allocation44 + $0x4] sm:$0xf]
        %v5226 = vld [vmem:[#allocation44 + $0x8] sm:$0xf]
        %v5227 = vld [vmem:[#allocation44 + $0xc] sm:$0xf]
        %v5228 = vld [vmem:[#allocation44 + $0x10] sm:$0xf]
        %v5229 = vld [vmem:[#allocation44 + $0x14] sm:$0xf]
        %v5230 = vld [vmem:[#allocation44 + $0x18] sm:$0xf]
        %v5231 = vld [vmem:[#allocation44 + $0x1c] sm:$0xf]
        %v5232 = vld [vmem:[#allocation44 + $0x20] sm:$0xf]
        %v5233 = vld [vmem:[#allocation44 + $0x24] sm:$0xf]
        %v5234 = vld [vmem:[#allocation44 + $0x28] sm:$0xf]
        %v5235 = vld [vmem:[#allocation44 + $0x2c] sm:$0xf]
        %v5236 = vld [vmem:[#allocation44 + $0x30] sm:$0xf]
        %v5237 = vld [vmem:[#allocation44 + $0x34] sm:$0xf]
        %v5238 = vld [vmem:[#allocation44 + $0x38] sm:$0xf]
        %v5239 = vld [vmem:[#allocation44 + $0x3c] sm:$0xf]
        %v5240 = vld [vmem:[#allocation44 + $0x40] sm:$0xf]
        %v5241 = vld [vmem:[#allocation44 + $0x44] sm:$0xf]
        %v5242 = vld [vmem:[#allocation44 + $0x48] sm:$0xf]
        %v5243 = vld [vmem:[#allocation44 + $0x4c] sm:$0xf]
        %v5244 = vld [vmem:[#allocation44 + $0x50] sm:$0xf]
        %v5245 = vld [vmem:[#allocation44 + $0x54] sm:$0xf]
        %v5246 = vld [vmem:[#allocation44 + $0x58] sm:$0xf]
        %v5247 = vld [vmem:[#allocation44 + $0x5c] sm:$0xf]
        %v5248 = vld [vmem:[#allocation44 + $0x60] sm:$0xf]
        %v5249 = vld [vmem:[#allocation44 + $0x64] sm:$0xf]
        %v5250 = vld [vmem:[#allocation44 + $0x68] sm:$0xf]
        %v5251 = vld [vmem:[#allocation44 + $0x6c] sm:$0xf]
        %v5252 = vld [vmem:[#allocation44 + $0x70] sm:$0xf]
        %v5253 = vld [vmem:[#allocation44 + $0x74] sm:$0xf]
        %v5254 = vld [vmem:[#allocation44 + $0x78] sm:$0xf]
        %v5255 = vld [vmem:[#allocation44 + $0x7c] sm:$0xf]
        %v5256 = vld [vmem:[#allocation44 + $0x80] sm:$0xf]
        %v5257 = vld [vmem:[#allocation44 + $0x84] sm:$0xf]
        %v5258 = vld [vmem:[#allocation44 + $0x88] sm:$0xf]
        %v5259 = vld [vmem:[#allocation44 + $0x8c] sm:$0xf]
        %v5260 = vld [vmem:[#allocation44 + $0x90] sm:$0xf]
        %v5261 = vld [vmem:[#allocation44 + $0x94] sm:$0xf]
        %v5262 = vld [vmem:[#allocation44 + $0x98] sm:$0xf]
        %v5263 = vld [vmem:[#allocation44 + $0x9c] sm:$0xf]
        %v5264 = vld [vmem:[#allocation44 + $0xa0] sm:$0xf]
        %v5265 = vld [vmem:[#allocation44 + $0xa4] sm:$0xf]
        %v5266 = vld [vmem:[#allocation44 + $0xa8] sm:$0xf]
        %v5267 = vld [vmem:[#allocation44 + $0xac] sm:$0xf]
        %v5268 = vld [vmem:[#allocation44 + $0xb0] sm:$0xf]
        %v5269 = vld [vmem:[#allocation44 + $0xb4] sm:$0xf]
        %v5270 = vld [vmem:[#allocation44 + $0xb8] sm:$0xf]
        %v5271 = vld [vmem:[#allocation44 + $0xbc] sm:$0xf]
        %v5272 = vld [vmem:[#allocation46] sm:$0x1]
        %v5274 = vperm.slane %v5272, 0
        %v5324 = vunpack.c.l.b16 %v5224
        %v5325 = vunpack.c.l.b16 %v5225
        %v5326 = vunpack.c.l.b16 %v5226
        %v5327 = vunpack.c.l.b16 %v5227
        %v5328 = vunpack.c.l.b16 %v5228
        %v5329 = vunpack.c.l.b16 %v5229
        %v5330 = vunpack.c.l.b16 %v5230
        %v5331 = vunpack.c.l.b16 %v5231
        %v5332 = vunpack.c.l.b16 %v5232
        %v5333 = vunpack.c.l.b16 %v5233
        %v5334 = vunpack.c.l.b16 %v5234
        %v5335 = vunpack.c.l.b16 %v5235
        %v5336 = vunpack.c.l.b16 %v5236
        %v5337 = vunpack.c.l.b16 %v5237
        %v5338 = vunpack.c.l.b16 %v5238
        %v5339 = vunpack.c.l.b16 %v5239
        %v5340 = vunpack.c.l.b16 %v5240
        %v5341 = vunpack.c.l.b16 %v5241
        %v5342 = vunpack.c.l.b16 %v5242
        %v5343 = vunpack.c.l.b16 %v5243
        %v5344 = vunpack.c.l.b16 %v5244
        %v5345 = vunpack.c.l.b16 %v5245
        %v5346 = vunpack.c.l.b16 %v5246
        %v5347 = vunpack.c.l.b16 %v5247
        %v5348 = vunpack.c.l.b16 %v5248
        %v5349 = vunpack.c.l.b16 %v5249
        %v5350 = vunpack.c.l.b16 %v5250
        %v5351 = vunpack.c.l.b16 %v5251
        %v5352 = vunpack.c.l.b16 %v5252
        %v5353 = vunpack.c.l.b16 %v5253
        %v5354 = vunpack.c.l.b16 %v5254
        %v5355 = vunpack.c.l.b16 %v5255
        %v5356 = vunpack.c.l.b16 %v5256
        %v5357 = vunpack.c.l.b16 %v5257
        %v5358 = vunpack.c.l.b16 %v5258
        %v5359 = vunpack.c.l.b16 %v5259
        %v5360 = vunpack.c.l.b16 %v5260
        %v5361 = vunpack.c.l.b16 %v5261
        %v5362 = vunpack.c.l.b16 %v5262
        %v5363 = vunpack.c.l.b16 %v5263
        %v5364 = vunpack.c.l.b16 %v5264
        %v5365 = vunpack.c.l.b16 %v5265
        %v5366 = vunpack.c.l.b16 %v5266
        %v5367 = vunpack.c.l.b16 %v5267
        %v5368 = vunpack.c.l.b16 %v5268
        %v5369 = vunpack.c.l.b16 %v5269
        %v5370 = vunpack.c.l.b16 %v5270
        %v5371 = vunpack.c.l.b16 %v5271
        %v5372 = vpack.c.b16 %v5325, %v5324
        %v5373 = vpack.c.b16 %v5327, %v5326
        %v5374 = vpack.c.b16 %v5329, %v5328
        %v5375 = vpack.c.b16 %v5331, %v5330
        %v5376 = vpack.c.b16 %v5333, %v5332
        %v5377 = vpack.c.b16 %v5335, %v5334
        %v5378 = vpack.c.b16 %v5337, %v5336
        %v5379 = vpack.c.b16 %v5339, %v5338
        %v5380 = vpack.c.b16 %v5341, %v5340
        %v5381 = vpack.c.b16 %v5343, %v5342
        %v5382 = vpack.c.b16 %v5345, %v5344
        %v5383 = vpack.c.b16 %v5347, %v5346
        %v5384 = vpack.c.b16 %v5349, %v5348
        %v5385 = vpack.c.b16 %v5351, %v5350
        %v5386 = vpack.c.b16 %v5353, %v5352
        %v5387 = vpack.c.b16 %v5355, %v5354
        %v5388 = vpack.c.b16 %v5357, %v5356
        %v5389 = vpack.c.b16 %v5359, %v5358
        %v5390 = vpack.c.b16 %v5361, %v5360
        %v5391 = vpack.c.b16 %v5363, %v5362
        %v5392 = vpack.c.b16 %v5365, %v5364
        %v5393 = vpack.c.b16 %v5367, %v5366
        %v5394 = vpack.c.b16 %v5369, %v5368
        %v5395 = vpack.c.b16 %v5371, %v5370
        %5420 = vmatpush.bf16.msra.mxu0 %v5379
        %5421 = vmatpush.bf16.msra.mxu0 %v5378
        %5422 = vmatpush.bf16.msra.mxu0 %v5377
        %5423 = vmatpush.bf16.msra.mxu0 %v5376
        %5424 = vmatpush.bf16.msra.mxu0 %v5375
        %5425 = vmatpush.bf16.msra.mxu0 %v5374
        %5426 = vmatpush.bf16.msra.mxu0 %v5373
        %5427 = vmatpush.bf16.msra.mxu0 %v5372
        %5428 = vmatmul.bf16.gmra.mxu0 %v5212
        %v5429 = vpop.f32.mrf.mxu0
        %v5430 = vadd.f32 %v5274, %v5429
        %v5431 = vpop.f32.mrf.mxu0
        %5432 = vdwg.mxu0
        %5433 = vmatpush.bf16.msra.mxu0 %v5387
        %5434 = vmatpush.bf16.msra.mxu0 %v5386
        %5435 = vmatpush.bf16.msra.mxu0 %v5385
        %5436 = vmatpush.bf16.msra.mxu0 %v5384
        %5437 = vmatpush.bf16.msra.mxu0 %v5383
        %5438 = vmatpush.bf16.msra.mxu0 %v5382
        %5439 = vmatpush.bf16.msra.mxu0 %v5381
        %5440 = vmatpush.bf16.msra.mxu0 %v5380
        %5441 = vmatmul.bf16.gmra.mxu0 %v5219
        %v5442 = vpop.f32.mrf.mxu0
        %v5443 = vadd.f32 %v5430, %v5442
        %v5444 = vpop.f32.mrf.mxu0
        %5445 = vdwg.mxu0
        %5446 = vmatpush.bf16.msra.mxu0 %v5395
        %5447 = vmatpush.bf16.msra.mxu0 %v5394
        %5448 = vmatpush.bf16.msra.mxu0 %v5393
        %5449 = vmatpush.bf16.msra.mxu0 %v5392
        %5450 = vmatpush.bf16.msra.mxu0 %v5391
        %5451 = vmatpush.bf16.msra.mxu0 %v5390
        %5452 = vmatpush.bf16.msra.mxu0 %v5389
        %5453 = vmatpush.bf16.msra.mxu0 %v5388
        %5454 = vmatmul.bf16.gmra.mxu0 %v5222
        %v5455 = vpop.f32.mrf.mxu0
        %v5456 = vadd.f32 %v5443, %v5455
        %v5457 = vpop.f32.mrf.mxu0
        %5458 = vdwg.mxu0
        %v5459 = vadd.f32 %v5456, %v4929
        %v5460 = vmax.f32 %v5459, 0.0
        %v5461 = vpack.c.bf16 %v5460, %v5460
        %v5463 = vunpack.c.l.b16 %v5461
        %v5464 = vpack.c.b16 %v5463, %v5463
        %5465 = vrot.lane.b32.xlu0 %v5464, 32
        %v5466 = vpop.permute.xlu0 %5465
        %v5468 = vsel %vm2618, 0, %v5466
        %v5469 = vsel %vm3646, %v5468, 0
        %v5470 = vshrl.u32 %v5469, 16
        %v5472 = vrot.slane %v5470, 7
        %v5473 = vshll.u32 %v5469, 16
        %v5475 = vor.u32 %v5472, %v5473
        %v5477 = vsel %vm2646, 0, %v5475
        %v5478 = vsel %vm3455, %v5477, 0
        %v5480 = vshrl.u32 %v5478, 16
        %v5484 = vrot.slane %v5478, 1
        %v5486 = vld [vmem:[#allocation47] sm:$0xf]
        %v5487 = vld [vmem:[#allocation47 + $0x4] sm:$0xf]
        %v5488 = vld [vmem:[#allocation47 + $0x8] sm:$0xf]
        %v5489 = vld [vmem:[#allocation47 + $0xc] sm:$0xf]
        %v5490 = vld [vmem:[#allocation47 + $0x10] sm:$0xf]
        %v5491 = vld [vmem:[#allocation47 + $0x14] sm:$0xf]
        %v5492 = vld [vmem:[#allocation47 + $0x18] sm:$0xf]
        %v5493 = vld [vmem:[#allocation47 + $0x1c] sm:$0xf]
        %v5494 = vld [vmem:[#allocation47 + $0x20] sm:$0xf]
        %v5495 = vld [vmem:[#allocation47 + $0x24] sm:$0xf]
        %v5496 = vld [vmem:[#allocation47 + $0x28] sm:$0xf]
        %v5497 = vld [vmem:[#allocation47 + $0x2c] sm:$0xf]
        %v5498 = vld [vmem:[#allocation47 + $0x30] sm:$0xf]
        %v5499 = vld [vmem:[#allocation47 + $0x34] sm:$0xf]
        %v5500 = vld [vmem:[#allocation47 + $0x38] sm:$0xf]
        %v5501 = vld [vmem:[#allocation47 + $0x3c] sm:$0xf]
        %v5502 = vld [vmem:[#allocation47 + $0x40] sm:$0xf]
        %v5503 = vld [vmem:[#allocation47 + $0x44] sm:$0xf]
        %v5504 = vld [vmem:[#allocation47 + $0x48] sm:$0xf]
        %v5505 = vld [vmem:[#allocation47 + $0x4c] sm:$0xf]
        %v5506 = vld [vmem:[#allocation47 + $0x50] sm:$0xf]
        %v5507 = vld [vmem:[#allocation47 + $0x54] sm:$0xf]
        %v5508 = vld [vmem:[#allocation47 + $0x58] sm:$0xf]
        %v5509 = vld [vmem:[#allocation47 + $0x5c] sm:$0xf]
        %v5510 = vld [vmem:[#allocation47 + $0x60] sm:$0xf]
        %v5511 = vld [vmem:[#allocation47 + $0x64] sm:$0xf]
        %v5512 = vld [vmem:[#allocation47 + $0x68] sm:$0xf]
        %v5513 = vld [vmem:[#allocation47 + $0x6c] sm:$0xf]
        %v5514 = vld [vmem:[#allocation47 + $0x70] sm:$0xf]
        %v5515 = vld [vmem:[#allocation47 + $0x74] sm:$0xf]
        %v5516 = vld [vmem:[#allocation47 + $0x78] sm:$0xf]
        %v5517 = vld [vmem:[#allocation47 + $0x7c] sm:$0xf]
        %v5518 = vld [vmem:[#allocation47 + $0x80] sm:$0xf]
        %v5519 = vld [vmem:[#allocation47 + $0x84] sm:$0xf]
        %v5520 = vld [vmem:[#allocation47 + $0x88] sm:$0xf]
        %v5521 = vld [vmem:[#allocation47 + $0x8c] sm:$0xf]
        %v5522 = vld [vmem:[#allocation47 + $0x90] sm:$0xf]
        %v5523 = vld [vmem:[#allocation47 + $0x94] sm:$0xf]
        %v5524 = vld [vmem:[#allocation47 + $0x98] sm:$0xf]
        %v5525 = vld [vmem:[#allocation47 + $0x9c] sm:$0xf]
        %v5526 = vld [vmem:[#allocation47 + $0xa0] sm:$0xf]
        %v5527 = vld [vmem:[#allocation47 + $0xa4] sm:$0xf]
        %v5528 = vld [vmem:[#allocation47 + $0xa8] sm:$0xf]
        %v5529 = vld [vmem:[#allocation47 + $0xac] sm:$0xf]
        %v5530 = vld [vmem:[#allocation47 + $0xb0] sm:$0xf]
        %v5531 = vld [vmem:[#allocation47 + $0xb4] sm:$0xf]
        %v5532 = vld [vmem:[#allocation47 + $0xb8] sm:$0xf]
        %v5533 = vld [vmem:[#allocation47 + $0xbc] sm:$0xf]
        %v5534 = vld [vmem:[#allocation49] sm:$0x1]
        %v5583 = vunpack.c.l.b16 %v5486
        %v5584 = vunpack.c.l.b16 %v5487
        %v5585 = vunpack.c.l.b16 %v5488
        %v5586 = vunpack.c.l.b16 %v5489
        %v5587 = vunpack.c.l.b16 %v5490
        %v5588 = vunpack.c.l.b16 %v5491
        %v5589 = vunpack.c.l.b16 %v5492
        %v5590 = vunpack.c.l.b16 %v5493
        %v5591 = vunpack.c.l.b16 %v5494
        %v5592 = vunpack.c.l.b16 %v5495
        %v5593 = vunpack.c.l.b16 %v5496
        %v5594 = vunpack.c.l.b16 %v5497
        %v5595 = vunpack.c.l.b16 %v5498
        %v5596 = vunpack.c.l.b16 %v5499
        %v5597 = vunpack.c.l.b16 %v5500
        %v5598 = vunpack.c.l.b16 %v5501
        %v5599 = vunpack.c.l.b16 %v5502
        %v5600 = vunpack.c.l.b16 %v5503
        %v5601 = vunpack.c.l.b16 %v5504
        %v5602 = vunpack.c.l.b16 %v5505
        %v5603 = vunpack.c.l.b16 %v5506
        %v5604 = vunpack.c.l.b16 %v5507
        %v5605 = vunpack.c.l.b16 %v5508
        %v5606 = vunpack.c.l.b16 %v5509
        %v5607 = vunpack.c.l.b16 %v5510
        %v5608 = vunpack.c.l.b16 %v5511
        %v5609 = vunpack.c.l.b16 %v5512
        %v5610 = vunpack.c.l.b16 %v5513
        %v5611 = vunpack.c.l.b16 %v5514
        %v5612 = vunpack.c.l.b16 %v5515
        %v5613 = vunpack.c.l.b16 %v5516
        %v5614 = vunpack.c.l.b16 %v5517
        %v5615 = vunpack.c.l.b16 %v5518
        %v5616 = vunpack.c.l.b16 %v5519
        %v5617 = vunpack.c.l.b16 %v5520
        %v5618 = vunpack.c.l.b16 %v5521
        %v5619 = vunpack.c.l.b16 %v5522
        %v5620 = vunpack.c.l.b16 %v5523
        %v5621 = vunpack.c.l.b16 %v5524
        %v5622 = vunpack.c.l.b16 %v5525
        %v5623 = vunpack.c.l.b16 %v5526
        %v5624 = vunpack.c.l.b16 %v5527
        %v5625 = vunpack.c.l.b16 %v5528
        %v5626 = vunpack.c.l.b16 %v5529
        %v5627 = vunpack.c.l.b16 %v5530
        %v5628 = vunpack.c.l.b16 %v5531
        %v5629 = vunpack.c.l.b16 %v5532
        %v5630 = vunpack.c.l.b16 %v5533
        %v5631 = vpack.c.b16 %v5584, %v5583
        %v5632 = vpack.c.b16 %v5586, %v5585
        %v5633 = vpack.c.b16 %v5588, %v5587
        %v5634 = vpack.c.b16 %v5590, %v5589
        %v5635 = vpack.c.b16 %v5592, %v5591
        %v5636 = vpack.c.b16 %v5594, %v5593
        %v5637 = vpack.c.b16 %v5596, %v5595
        %v5638 = vpack.c.b16 %v5598, %v5597
        %v5639 = vpack.c.b16 %v5600, %v5599
        %v5640 = vpack.c.b16 %v5602, %v5601
        %v5641 = vpack.c.b16 %v5604, %v5603
        %v5642 = vpack.c.b16 %v5606, %v5605
        %v5643 = vpack.c.b16 %v5608, %v5607
        %v5644 = vpack.c.b16 %v5610, %v5609
        %v5645 = vpack.c.b16 %v5612, %v5611
        %v5646 = vpack.c.b16 %v5614, %v5613
        %v5647 = vpack.c.b16 %v5616, %v5615
        %v5648 = vpack.c.b16 %v5618, %v5617
        %v5649 = vpack.c.b16 %v5620, %v5619
        %v5650 = vpack.c.b16 %v5622, %v5621
        %v5651 = vpack.c.b16 %v5624, %v5623
        %v5652 = vpack.c.b16 %v5626, %v5625
        %v5653 = vpack.c.b16 %v5628, %v5627
        %v5654 = vpack.c.b16 %v5630, %v5629
        %5679 = vmatpush.bf16.msra.mxu0 %v5638
        %5680 = vmatpush.bf16.msra.mxu0 %v5637
        %5681 = vmatpush.bf16.msra.mxu0 %v5636
        %5682 = vmatpush.bf16.msra.mxu0 %v5635
        %5683 = vmatpush.bf16.msra.mxu0 %v5634
        %5684 = vmatpush.bf16.msra.mxu0 %v5633
        %5685 = vmatpush.bf16.msra.mxu0 %v5632
        %5686 = vmatpush.bf16.msra.mxu0 %v5631
        %5687 = vmatmul.bf16.gmra.mxu0 %v5478
        %v5688 = vpop.f32.mrf.mxu0
        %v5689 = vadd.f32 %v5534, %v5688
        %v5690 = vpop.f32.mrf.mxu0
        %5691 = vdwg.mxu0
        %5692 = vmatpush.bf16.msra.mxu0 %v5646
        %5693 = vmatpush.bf16.msra.mxu0 %v5645
        %5694 = vmatpush.bf16.msra.mxu0 %v5644
        %5695 = vmatpush.bf16.msra.mxu0 %v5643
        %5696 = vmatpush.bf16.msra.mxu0 %v5642
        %5697 = vmatpush.bf16.msra.mxu0 %v5641
        %5698 = vmatpush.bf16.msra.mxu0 %v5640
        %5699 = vmatpush.bf16.msra.mxu0 %v5639
        %5700 = vmatmul.bf16.gmra.mxu0 %v5480
        %v5701 = vpop.f32.mrf.mxu0
        %v5702 = vadd.f32 %v5689, %v5701
        %v5703 = vpop.f32.mrf.mxu0
        %5704 = vdwg.mxu0
        %5705 = vmatpush.bf16.msra.mxu0 %v5654
        %5706 = vmatpush.bf16.msra.mxu0 %v5653
        %5707 = vmatpush.bf16.msra.mxu0 %v5652
        %5708 = vmatpush.bf16.msra.mxu0 %v5651
        %5709 = vmatpush.bf16.msra.mxu0 %v5650
        %5710 = vmatpush.bf16.msra.mxu0 %v5649
        %5711 = vmatpush.bf16.msra.mxu0 %v5648
        %5712 = vmatpush.bf16.msra.mxu0 %v5647
        %5713 = vmatmul.bf16.gmra.mxu0 %v5484
        %v5714 = vpop.f32.mrf.mxu0
        %v5715 = vadd.f32 %v5702, %v5714
        %v5716 = vpop.f32.mrf.mxu0
        %5717 = vdwg.mxu0
        %v5718 = vmax.f32 %v5715, 0.0
        %v5719 = vpack.c.bf16 %v5718, %v5718
        %v5721 = vunpack.c.l.b16 %v5719
        %v5722 = vpack.c.b16 %v5721, %v5721
        %5723 = vrot.lane.b32.xlu0 %v5722, 64
        %v5724 = vpop.permute.xlu0 %5723
        %v5726 = vsel %vm3650, 0, %v5724
        %v5727 = vshll.u32 %v5726, 16
        %v5729 = vshll.u32 0, 16
        %v5733 = vsel %vm2646, 0, %v5727
        %v5734 = vsel %vm2646, 0, %v5729
        %v5736 = vsel %vm2567, %v5733, 0
        %v5739 = vsel %vm2567, %v5734, 0
        %v5740 = vshrl.u32 %v5736, 16
        %v5742 = vshrl.u32 %v5739, 16
        %5744 = vrot.lane.b32.xlu0 %v5740, 64
        %v5745 = vpop.permute.xlu0 %5744
        %5746 = vrot.lane.b32.xlu0 %v5742, 64
        %v5747 = vpop.permute.xlu0 %5746
        %vm5748 = vcmask 523264
        %v5749 = vsel %vm5748, %v5745, %v5747
        %v5753 = vrot.slane %v5736, 1
        %v5754 = vrot.slane %v5739, 1
        %v5757 = vsel %vm3650, %v5739, %v5745
        %v5759 = vld [vmem:[#allocation50] sm:$0xf]
        %v5760 = vld [vmem:[#allocation50 + $0x4] sm:$0xf]
        %v5761 = vld [vmem:[#allocation50 + $0x8] sm:$0xf]
        %v5762 = vld [vmem:[#allocation50 + $0xc] sm:$0xf]
        %v5763 = vld [vmem:[#allocation50 + $0x10] sm:$0xf]
        %v5764 = vld [vmem:[#allocation50 + $0x14] sm:$0xf]
        %v5765 = vld [vmem:[#allocation50 + $0x18] sm:$0xf]
        %v5766 = vld [vmem:[#allocation50 + $0x1c] sm:$0xf]
        %v5767 = vld [vmem:[#allocation50 + $0x20] sm:$0xf]
        %v5768 = vld [vmem:[#allocation50 + $0x24] sm:$0xf]
        %v5769 = vld [vmem:[#allocation50 + $0x28] sm:$0xf]
        %v5770 = vld [vmem:[#allocation50 + $0x2c] sm:$0xf]
        %v5771 = vld [vmem:[#allocation50 + $0x30] sm:$0xf]
        %v5772 = vld [vmem:[#allocation50 + $0x34] sm:$0xf]
        %v5773 = vld [vmem:[#allocation50 + $0x38] sm:$0xf]
        %v5774 = vld [vmem:[#allocation50 + $0x3c] sm:$0xf]
        %v5775 = vld [vmem:[#allocation50 + $0x40] sm:$0xf]
        %v5776 = vld [vmem:[#allocation50 + $0x44] sm:$0xf]
        %v5777 = vld [vmem:[#allocation50 + $0x48] sm:$0xf]
        %v5778 = vld [vmem:[#allocation50 + $0x4c] sm:$0xf]
        %v5779 = vld [vmem:[#allocation50 + $0x50] sm:$0xf]
        %v5780 = vld [vmem:[#allocation50 + $0x54] sm:$0xf]
        %v5781 = vld [vmem:[#allocation50 + $0x58] sm:$0xf]
        %v5782 = vld [vmem:[#allocation50 + $0x5c] sm:$0xf]
        %v5783 = vld [vmem:[#allocation50 + $0x60] sm:$0xf]
        %v5784 = vld [vmem:[#allocation50 + $0x64] sm:$0xf]
        %v5785 = vld [vmem:[#allocation50 + $0x68] sm:$0xf]
        %v5786 = vld [vmem:[#allocation50 + $0x6c] sm:$0xf]
        %v5787 = vld [vmem:[#allocation50 + $0x70] sm:$0xf]
        %v5788 = vld [vmem:[#allocation50 + $0x74] sm:$0xf]
        %v5789 = vld [vmem:[#allocation50 + $0x78] sm:$0xf]
        %v5790 = vld [vmem:[#allocation50 + $0x7c] sm:$0xf]
        %v5791 = vld [vmem:[#allocation50 + $0x80] sm:$0xf]
        %v5792 = vld [vmem:[#allocation50 + $0x84] sm:$0xf]
        %v5793 = vld [vmem:[#allocation50 + $0x88] sm:$0xf]
        %v5794 = vld [vmem:[#allocation50 + $0x8c] sm:$0xf]
        %v5795 = vld [vmem:[#allocation50 + $0x90] sm:$0xf]
        %v5796 = vld [vmem:[#allocation50 + $0x94] sm:$0xf]
        %v5797 = vld [vmem:[#allocation50 + $0x98] sm:$0xf]
        %v5798 = vld [vmem:[#allocation50 + $0x9c] sm:$0xf]
        %v5799 = vld [vmem:[#allocation50 + $0xa0] sm:$0xf]
        %v5800 = vld [vmem:[#allocation50 + $0xa4] sm:$0xf]
        %v5801 = vld [vmem:[#allocation50 + $0xa8] sm:$0xf]
        %v5802 = vld [vmem:[#allocation50 + $0xac] sm:$0xf]
        %v5803 = vld [vmem:[#allocation50 + $0xb0] sm:$0xf]
        %v5804 = vld [vmem:[#allocation50 + $0xb4] sm:$0xf]
        %v5805 = vld [vmem:[#allocation50 + $0xb8] sm:$0xf]
        %v5806 = vld [vmem:[#allocation50 + $0xbc] sm:$0xf]
        %v5807 = vld [vmem:[#allocation50 + $0xc0] sm:$0xf]
        %v5808 = vld [vmem:[#allocation50 + $0xc4] sm:$0xf]
        %v5809 = vld [vmem:[#allocation50 + $0xc8] sm:$0xf]
        %v5810 = vld [vmem:[#allocation50 + $0xcc] sm:$0xf]
        %v5811 = vld [vmem:[#allocation50 + $0xd0] sm:$0xf]
        %v5812 = vld [vmem:[#allocation50 + $0xd4] sm:$0xf]
        %v5813 = vld [vmem:[#allocation50 + $0xd8] sm:$0xf]
        %v5814 = vld [vmem:[#allocation50 + $0xdc] sm:$0xf]
        %v5815 = vld [vmem:[#allocation50 + $0xe0] sm:$0xf]
        %v5816 = vld [vmem:[#allocation50 + $0xe4] sm:$0xf]
        %v5817 = vld [vmem:[#allocation50 + $0xe8] sm:$0xf]
        %v5818 = vld [vmem:[#allocation50 + $0xec] sm:$0xf]
        %v5819 = vld [vmem:[#allocation50 + $0xf0] sm:$0xf]
        %v5820 = vld [vmem:[#allocation50 + $0xf4] sm:$0xf]
        %v5821 = vld [vmem:[#allocation50 + $0xf8] sm:$0xf]
        %v5822 = vld [vmem:[#allocation50 + $0xfc] sm:$0xf]
        %v5823 = vld [vmem:[#allocation50 + $0x100] sm:$0xf]
        %v5824 = vld [vmem:[#allocation50 + $0x104] sm:$0xf]
        %v5825 = vld [vmem:[#allocation50 + $0x108] sm:$0xf]
        %v5826 = vld [vmem:[#allocation50 + $0x10c] sm:$0xf]
        %v5827 = vld [vmem:[#allocation50 + $0x110] sm:$0xf]
        %v5828 = vld [vmem:[#allocation50 + $0x114] sm:$0xf]
        %v5829 = vld [vmem:[#allocation50 + $0x118] sm:$0xf]
        %v5830 = vld [vmem:[#allocation50 + $0x11c] sm:$0xf]
        %v5831 = vld [vmem:[#allocation52] sm:$0x1]
        %v5904 = vunpack.c.l.b16 %v5759
        %v5905 = vunpack.c.l.b16 %v5760
        %v5906 = vunpack.c.l.b16 %v5761
        %v5907 = vunpack.c.l.b16 %v5762
        %v5908 = vunpack.c.l.b16 %v5763
        %v5909 = vunpack.c.l.b16 %v5764
        %v5910 = vunpack.c.l.b16 %v5765
        %v5911 = vunpack.c.l.b16 %v5766
        %v5912 = vunpack.c.l.b16 %v5767
        %v5913 = vunpack.c.l.b16 %v5768
        %v5914 = vunpack.c.l.b16 %v5769
        %v5915 = vunpack.c.l.b16 %v5770
        %v5916 = vunpack.c.l.b16 %v5771
        %v5917 = vunpack.c.l.b16 %v5772
        %v5918 = vunpack.c.l.b16 %v5773
        %v5919 = vunpack.c.l.b16 %v5774
        %v5920 = vunpack.c.l.b16 %v5775
        %v5921 = vunpack.c.l.b16 %v5776
        %v5922 = vunpack.c.l.b16 %v5777
        %v5923 = vunpack.c.l.b16 %v5778
        %v5924 = vunpack.c.l.b16 %v5779
        %v5925 = vunpack.c.l.b16 %v5780
        %v5926 = vunpack.c.l.b16 %v5781
        %v5927 = vunpack.c.l.b16 %v5782
        %v5928 = vunpack.c.l.b16 %v5783
        %v5929 = vunpack.c.l.b16 %v5784
        %v5930 = vunpack.c.l.b16 %v5785
        %v5931 = vunpack.c.l.b16 %v5786
        %v5932 = vunpack.c.l.b16 %v5787
        %v5933 = vunpack.c.l.b16 %v5788
        %v5934 = vunpack.c.l.b16 %v5789
        %v5935 = vunpack.c.l.b16 %v5790
        %v5936 = vunpack.c.l.b16 %v5791
        %v5937 = vunpack.c.l.b16 %v5792
        %v5938 = vunpack.c.l.b16 %v5793
        %v5939 = vunpack.c.l.b16 %v5794
        %v5940 = vunpack.c.l.b16 %v5795
        %v5941 = vunpack.c.l.b16 %v5796
        %v5942 = vunpack.c.l.b16 %v5797
        %v5943 = vunpack.c.l.b16 %v5798
        %v5944 = vunpack.c.l.b16 %v5799
        %v5945 = vunpack.c.l.b16 %v5800
        %v5946 = vunpack.c.l.b16 %v5801
        %v5947 = vunpack.c.l.b16 %v5802
        %v5948 = vunpack.c.l.b16 %v5803
        %v5949 = vunpack.c.l.b16 %v5804
        %v5950 = vunpack.c.l.b16 %v5805
        %v5951 = vunpack.c.l.b16 %v5806
        %v5952 = vunpack.c.l.b16 %v5807
        %v5953 = vunpack.c.l.b16 %v5808
        %v5954 = vunpack.c.l.b16 %v5809
        %v5955 = vunpack.c.l.b16 %v5810
        %v5956 = vunpack.c.l.b16 %v5811
        %v5957 = vunpack.c.l.b16 %v5812
        %v5958 = vunpack.c.l.b16 %v5813
        %v5959 = vunpack.c.l.b16 %v5814
        %v5960 = vunpack.c.l.b16 %v5815
        %v5961 = vunpack.c.l.b16 %v5816
        %v5962 = vunpack.c.l.b16 %v5817
        %v5963 = vunpack.c.l.b16 %v5818
        %v5964 = vunpack.c.l.b16 %v5819
        %v5965 = vunpack.c.l.b16 %v5820
        %v5966 = vunpack.c.l.b16 %v5821
        %v5967 = vunpack.c.l.b16 %v5822
        %v5968 = vunpack.c.l.b16 %v5823
        %v5969 = vunpack.c.l.b16 %v5824
        %v5970 = vunpack.c.l.b16 %v5825
        %v5971 = vunpack.c.l.b16 %v5826
        %v5972 = vunpack.c.l.b16 %v5827
        %v5973 = vunpack.c.l.b16 %v5828
        %v5974 = vunpack.c.l.b16 %v5829
        %v5975 = vunpack.c.l.b16 %v5830
        %v5976 = vpack.c.b16 %v5905, %v5904
        %v5977 = vpack.c.b16 %v5907, %v5906
        %v5978 = vpack.c.b16 %v5909, %v5908
        %v5979 = vpack.c.b16 %v5911, %v5910
        %v5980 = vpack.c.b16 %v5913, %v5912
        %v5981 = vpack.c.b16 %v5915, %v5914
        %v5982 = vpack.c.b16 %v5917, %v5916
        %v5983 = vpack.c.b16 %v5919, %v5918
        %v5984 = vpack.c.b16 %v5921, %v5920
        %v5985 = vpack.c.b16 %v5923, %v5922
        %v5986 = vpack.c.b16 %v5925, %v5924
        %v5987 = vpack.c.b16 %v5927, %v5926
        %v5988 = vpack.c.b16 %v5929, %v5928
        %v5989 = vpack.c.b16 %v5931, %v5930
        %v5990 = vpack.c.b16 %v5933, %v5932
        %v5991 = vpack.c.b16 %v5935, %v5934
        %v5992 = vpack.c.b16 %v5937, %v5936
        %v5993 = vpack.c.b16 %v5939, %v5938
        %v5994 = vpack.c.b16 %v5941, %v5940
        %v5995 = vpack.c.b16 %v5943, %v5942
        %v5996 = vpack.c.b16 %v5945, %v5944
        %v5997 = vpack.c.b16 %v5947, %v5946
        %v5998 = vpack.c.b16 %v5949, %v5948
        %v5999 = vpack.c.b16 %v5951, %v5950
        %v6000 = vpack.c.b16 %v5953, %v5952
        %v6001 = vpack.c.b16 %v5955, %v5954
        %v6002 = vpack.c.b16 %v5957, %v5956
        %v6003 = vpack.c.b16 %v5959, %v5958
        %v6004 = vpack.c.b16 %v5961, %v5960
        %v6005 = vpack.c.b16 %v5963, %v5962
        %v6006 = vpack.c.b16 %v5965, %v5964
        %v6007 = vpack.c.b16 %v5967, %v5966
        %v6008 = vpack.c.b16 %v5969, %v5968
        %v6009 = vpack.c.b16 %v5971, %v5970
        %v6010 = vpack.c.b16 %v5973, %v5972
        %v6011 = vpack.c.b16 %v5975, %v5974
        %v6049 = vsel %vm3650, %v5754, 0
        %6051 = vmatpush.bf16.msra.mxu0 %v5983
        %6052 = vmatpush.bf16.msra.mxu0 %v5982
        %6053 = vmatpush.bf16.msra.mxu0 %v5981
        %6054 = vmatpush.bf16.msra.mxu0 %v5980
        %6055 = vmatpush.bf16.msra.mxu0 %v5979
        %6056 = vmatpush.bf16.msra.mxu0 %v5978
        %6057 = vmatpush.bf16.msra.mxu0 %v5977
        %6058 = vmatpush.bf16.msra.mxu0 %v5976
        %6059 = vmatmul.bf16.gmra.mxu0 %v5736
        %v6060 = vpop.f32.mrf.mxu0
        %v6061 = vadd.f32 %v5831, %v6060
        %v6062 = vpop.f32.mrf.mxu0
        %6063 = vdwg.mxu0
        %6064 = vmatpush.bf16.msra.mxu0 %v5991
        %6065 = vmatpush.bf16.msra.mxu0 %v5990
        %6066 = vmatpush.bf16.msra.mxu0 %v5989
        %6067 = vmatpush.bf16.msra.mxu0 %v5988
        %6068 = vmatpush.bf16.msra.mxu0 %v5987
        %6069 = vmatpush.bf16.msra.mxu0 %v5986
        %6070 = vmatpush.bf16.msra.mxu0 %v5985
        %6071 = vmatpush.bf16.msra.mxu0 %v5984
        %6072 = vmatmul.bf16.gmra.mxu0 %v5757
        %v6073 = vpop.f32.mrf.mxu0
        %v6074 = vadd.f32 %v6061, %v6073
        %v6075 = vpop.f32.mrf.mxu0
        %6076 = vdwg.mxu0
        %6077 = vmatpush.bf16.msra.mxu0 %v5999
        %6078 = vmatpush.bf16.msra.mxu0 %v5998
        %6079 = vmatpush.bf16.msra.mxu0 %v5997
        %6080 = vmatpush.bf16.msra.mxu0 %v5996
        %6081 = vmatpush.bf16.msra.mxu0 %v5995
        %6082 = vmatpush.bf16.msra.mxu0 %v5994
        %6083 = vmatpush.bf16.msra.mxu0 %v5993
        %6084 = vmatpush.bf16.msra.mxu0 %v5992
        %6085 = vmatmul.bf16.gmra.mxu0 %v5749
        %v6086 = vpop.f32.mrf.mxu0
        %v6087 = vadd.f32 %v6074, %v6086
        %v6088 = vpop.f32.mrf.mxu0
        %6089 = vdwg.mxu0
        %6090 = vmatpush.bf16.msra.mxu0 %v6007
        %6091 = vmatpush.bf16.msra.mxu0 %v6006
        %6092 = vmatpush.bf16.msra.mxu0 %v6005
        %6093 = vmatpush.bf16.msra.mxu0 %v6004
        %6094 = vmatpush.bf16.msra.mxu0 %v6003
        %6095 = vmatpush.bf16.msra.mxu0 %v6002
        %6096 = vmatpush.bf16.msra.mxu0 %v6001
        %6097 = vmatpush.bf16.msra.mxu0 %v6000
        %6098 = vmatmul.bf16.gmra.mxu0 %v5753
        %v6099 = vpop.f32.mrf.mxu0
        %v6100 = vadd.f32 %v6087, %v6099
        %v6101 = vpop.f32.mrf.mxu0
        %6102 = vdwg.mxu0
        %6103 = vmatpush.bf16.msra.mxu0 0
        %6104 = vmatpush.bf16.msra.mxu0 0
        %6105 = vmatpush.bf16.msra.mxu0 0
        %6106 = vmatpush.bf16.msra.mxu0 0
        %6107 = vmatpush.bf16.msra.mxu0 %v6011
        %6108 = vmatpush.bf16.msra.mxu0 %v6010
        %6109 = vmatpush.bf16.msra.mxu0 %v6009
        %6110 = vmatpush.bf16.msra.mxu0 %v6008
        %6111 = vmatmul.bf16.gmra.mxu0 %v6049
        %v6112 = vpop.f32.mrf.mxu0
        %v6113 = vadd.f32 %v6100, %v6112
        %v6114 = vpop.f32.mrf.mxu0
        %6115 = vdwg.mxu0
        %v6116 = vld [vmem:[#allocation53] sm:$0xf]
        %v6117 = vld [vmem:[#allocation53 + $0x4] sm:$0xf]
        %v6118 = vld [vmem:[#allocation53 + $0x8] sm:$0xf]
        %v6119 = vld [vmem:[#allocation53 + $0xc] sm:$0xf]
        %v6120 = vld [vmem:[#allocation53 + $0x10] sm:$0xf]
        %v6121 = vld [vmem:[#allocation53 + $0x14] sm:$0xf]
        %v6122 = vld [vmem:[#allocation53 + $0x18] sm:$0xf]
        %v6123 = vld [vmem:[#allocation53 + $0x1c] sm:$0xf]
        %v6124 = vld [vmem:[#allocation55] sm:$0x1]
        %v6133 = vunpack.c.l.b16 %v6116
        %v6134 = vunpack.c.l.b16 %v6117
        %v6135 = vunpack.c.l.b16 %v6118
        %v6136 = vunpack.c.l.b16 %v6119
        %v6137 = vunpack.c.l.b16 %v6120
        %v6138 = vunpack.c.l.b16 %v6121
        %v6139 = vunpack.c.l.b16 %v6122
        %v6140 = vunpack.c.l.b16 %v6123
        %v6141 = vpack.c.b16 %v6134, %v6133
        %v6142 = vpack.c.b16 %v6136, %v6135
        %v6143 = vpack.c.b16 %v6138, %v6137
        %v6144 = vpack.c.b16 %v6140, %v6139
        %v6150 = vsel %vm3650, %v5461, 0
        %6152 = vmatpush.bf16.msra.mxu0 0
        %6153 = vmatpush.bf16.msra.mxu0 0
        %6154 = vmatpush.bf16.msra.mxu0 0
        %6155 = vmatpush.bf16.msra.mxu0 0
        %6156 = vmatpush.bf16.msra.mxu0 %v6144
        %6157 = vmatpush.bf16.msra.mxu0 %v6143
        %6158 = vmatpush.bf16.msra.mxu0 %v6142
        %6159 = vmatpush.bf16.msra.mxu0 %v6141
        %6160 = vmatmul.bf16.gmra.mxu0 %v6150
        %v6161 = vpop.f32.mrf.mxu0
        %v6162 = vadd.f32 %v6124, %v6161
        %v6163 = vpop.f32.mrf.mxu0
        %6164 = vdwg.mxu0
        %v6165 = vadd.f32 %v6113, %v6162
        %v6166 = vmax.f32 %v6165, 0.0
        %v6167 = vpack.c.bf16 %v6166, %v6166
        %v6169 = vunpack.c.l.b16 %v6167
        %v6170 = vpack.c.b16 %v6169, %v6169
        %6171 = vrot.lane.b32.xlu0 %v6170, 64
        %v6172 = vpop.permute.xlu0 %6171
        %v6174 = vsel %vm3650, 0, %v6172
        %v6175 = vshll.u32 %v6174, 16
        %v6178 = vsel %vm2646, 0, %v6175
        %v6180 = vsel %vm2567, %v6178, 0
        %v6182 = vshrl.u32 %v6180, 16
        %6184 = vrot.lane.b32.xlu0 %v6182, 64
        %v6185 = vpop.permute.xlu0 %6184
        %v6186 = vsel %vm5748, %v6185, %v5747
        %v6189 = vrot.slane %v6180, 1
        %v6192 = vsel %vm3650, %v5739, %v6185
        %v6194 = vld [vmem:[%s77] sm:$0xf]
        %v6195 = vld [vmem:[%s77 + $0x4] sm:$0xf]
        %v6196 = vld [vmem:[%s77 + $0x8] sm:$0xf]
        %v6197 = vld [vmem:[%s77 + $0xc] sm:$0xf]
        %v6198 = vld [vmem:[%s77 + $0x10] sm:$0xf]
        %v6199 = vld [vmem:[%s77 + $0x14] sm:$0xf]
        %v6200 = vld [vmem:[%s77 + $0x18] sm:$0xf]
        %v6201 = vld [vmem:[%s77 + $0x1c] sm:$0xf]
        %v6202 = vld [vmem:[%s77 + $0x20] sm:$0xf]
        %v6203 = vld [vmem:[%s77 + $0x24] sm:$0xf]
        %v6204 = vld [vmem:[%s77 + $0x28] sm:$0xf]
        %v6205 = vld [vmem:[%s77 + $0x2c] sm:$0xf]
        %v6206 = vld [vmem:[%s77 + $0x30] sm:$0xf]
        %v6207 = vld [vmem:[%s77 + $0x34] sm:$0xf]
        %v6208 = vld [vmem:[%s77 + $0x38] sm:$0xf]
        %v6209 = vld [vmem:[%s77 + $0x3c] sm:$0xf]
        %v6210 = vld [vmem:[%s77 + $0x40] sm:$0xf]
        %v6211 = vld [vmem:[%s77 + $0x44] sm:$0xf]
        %v6212 = vld [vmem:[%s77 + $0x48] sm:$0xf]
        %v6213 = vld [vmem:[%s77 + $0x4c] sm:$0xf]
        %v6214 = vld [vmem:[%s77 + $0x50] sm:$0xf]
        %v6215 = vld [vmem:[%s77 + $0x54] sm:$0xf]
        %v6216 = vld [vmem:[%s77 + $0x58] sm:$0xf]
        %v6217 = vld [vmem:[%s77 + $0x5c] sm:$0xf]
        %v6218 = vld [vmem:[%s77 + $0x60] sm:$0xf]
        %v6219 = vld [vmem:[%s77 + $0x64] sm:$0xf]
        %v6220 = vld [vmem:[%s77 + $0x68] sm:$0xf]
        %v6221 = vld [vmem:[%s77 + $0x6c] sm:$0xf]
        %v6222 = vld [vmem:[%s77 + $0x70] sm:$0xf]
        %v6223 = vld [vmem:[%s77 + $0x74] sm:$0xf]
        %v6224 = vld [vmem:[%s77 + $0x78] sm:$0xf]
        %v6225 = vld [vmem:[%s77 + $0x7c] sm:$0xf]
        %v6226 = vld [vmem:[%s77 + $0x80] sm:$0xf]
        %v6227 = vld [vmem:[%s77 + $0x84] sm:$0xf]
        %v6228 = vld [vmem:[%s77 + $0x88] sm:$0xf]
        %v6229 = vld [vmem:[%s77 + $0x8c] sm:$0xf]
        %v6230 = vld [vmem:[%s77 + $0x90] sm:$0xf]
        %v6231 = vld [vmem:[%s77 + $0x94] sm:$0xf]
        %v6232 = vld [vmem:[%s77 + $0x98] sm:$0xf]
        %v6233 = vld [vmem:[%s77 + $0x9c] sm:$0xf]
        %v6234 = vld [vmem:[%s77 + $0xa0] sm:$0xf]
        %v6235 = vld [vmem:[%s77 + $0xa4] sm:$0xf]
        %v6236 = vld [vmem:[%s77 + $0xa8] sm:$0xf]
        %v6237 = vld [vmem:[%s77 + $0xac] sm:$0xf]
        %v6238 = vld [vmem:[%s77 + $0xb0] sm:$0xf]
        %v6239 = vld [vmem:[%s77 + $0xb4] sm:$0xf]
        %v6240 = vld [vmem:[%s77 + $0xb8] sm:$0xf]
        %v6241 = vld [vmem:[%s77 + $0xbc] sm:$0xf]
        %v6242 = vld [vmem:[%s77 + $0xc0] sm:$0xf]
        %v6243 = vld [vmem:[%s77 + $0xc4] sm:$0xf]
        %v6244 = vld [vmem:[%s77 + $0xc8] sm:$0xf]
        %v6245 = vld [vmem:[%s77 + $0xcc] sm:$0xf]
        %v6246 = vld [vmem:[%s77 + $0xd0] sm:$0xf]
        %v6247 = vld [vmem:[%s77 + $0xd4] sm:$0xf]
        %v6248 = vld [vmem:[%s77 + $0xd8] sm:$0xf]
        %v6249 = vld [vmem:[%s77 + $0xdc] sm:$0xf]
        %v6250 = vld [vmem:[%s77 + $0xe0] sm:$0xf]
        %v6251 = vld [vmem:[%s77 + $0xe4] sm:$0xf]
        %v6252 = vld [vmem:[%s77 + $0xe8] sm:$0xf]
        %v6253 = vld [vmem:[%s77 + $0xec] sm:$0xf]
        %v6254 = vld [vmem:[%s77 + $0xf0] sm:$0xf]
        %v6255 = vld [vmem:[%s77 + $0xf4] sm:$0xf]
        %v6256 = vld [vmem:[%s77 + $0xf8] sm:$0xf]
        %v6257 = vld [vmem:[%s77 + $0xfc] sm:$0xf]
        %v6258 = vld [vmem:[%s77 + $0x100] sm:$0xf]
        %v6259 = vld [vmem:[%s77 + $0x104] sm:$0xf]
        %v6260 = vld [vmem:[%s77 + $0x108] sm:$0xf]
        %v6261 = vld [vmem:[%s77 + $0x10c] sm:$0xf]
        %v6262 = vld [vmem:[%s77 + $0x110] sm:$0xf]
        %v6263 = vld [vmem:[%s77 + $0x114] sm:$0xf]
        %v6264 = vld [vmem:[%s77 + $0x118] sm:$0xf]
        %v6265 = vld [vmem:[%s77 + $0x11c] sm:$0xf]
        %v6266 = vld [vmem:[#allocation56] sm:$0x1]
        %v6339 = vunpack.c.l.b16 %v6194
        %v6340 = vunpack.c.l.b16 %v6195
        %v6341 = vunpack.c.l.b16 %v6196
        %v6342 = vunpack.c.l.b16 %v6197
        %v6343 = vunpack.c.l.b16 %v6198
        %v6344 = vunpack.c.l.b16 %v6199
        %v6345 = vunpack.c.l.b16 %v6200
        %v6346 = vunpack.c.l.b16 %v6201
        %v6347 = vunpack.c.l.b16 %v6202
        %v6348 = vunpack.c.l.b16 %v6203
        %v6349 = vunpack.c.l.b16 %v6204
        %v6350 = vunpack.c.l.b16 %v6205
        %v6351 = vunpack.c.l.b16 %v6206
        %v6352 = vunpack.c.l.b16 %v6207
        %v6353 = vunpack.c.l.b16 %v6208
        %v6354 = vunpack.c.l.b16 %v6209
        %v6355 = vunpack.c.l.b16 %v6210
        %v6356 = vunpack.c.l.b16 %v6211
        %v6357 = vunpack.c.l.b16 %v6212
        %v6358 = vunpack.c.l.b16 %v6213
        %v6359 = vunpack.c.l.b16 %v6214
        %v6360 = vunpack.c.l.b16 %v6215
        %v6361 = vunpack.c.l.b16 %v6216
        %v6362 = vunpack.c.l.b16 %v6217
        %v6363 = vunpack.c.l.b16 %v6218
        %v6364 = vunpack.c.l.b16 %v6219
        %v6365 = vunpack.c.l.b16 %v6220
        %v6366 = vunpack.c.l.b16 %v6221
        %v6367 = vunpack.c.l.b16 %v6222
        %v6368 = vunpack.c.l.b16 %v6223
        %v6369 = vunpack.c.l.b16 %v6224
        %v6370 = vunpack.c.l.b16 %v6225
        %v6371 = vunpack.c.l.b16 %v6226
        %v6372 = vunpack.c.l.b16 %v6227
        %v6373 = vunpack.c.l.b16 %v6228
        %v6374 = vunpack.c.l.b16 %v6229
        %v6375 = vunpack.c.l.b16 %v6230
        %v6376 = vunpack.c.l.b16 %v6231
        %v6377 = vunpack.c.l.b16 %v6232
        %v6378 = vunpack.c.l.b16 %v6233
        %v6379 = vunpack.c.l.b16 %v6234
        %v6380 = vunpack.c.l.b16 %v6235
        %v6381 = vunpack.c.l.b16 %v6236
        %v6382 = vunpack.c.l.b16 %v6237
        %v6383 = vunpack.c.l.b16 %v6238
        %v6384 = vunpack.c.l.b16 %v6239
        %v6385 = vunpack.c.l.b16 %v6240
        %v6386 = vunpack.c.l.b16 %v6241
        %v6387 = vunpack.c.l.b16 %v6242
        %v6388 = vunpack.c.l.b16 %v6243
        %v6389 = vunpack.c.l.b16 %v6244
        %v6390 = vunpack.c.l.b16 %v6245
        %v6391 = vunpack.c.l.b16 %v6246
        %v6392 = vunpack.c.l.b16 %v6247
        %v6393 = vunpack.c.l.b16 %v6248
        %v6394 = vunpack.c.l.b16 %v6249
        %v6395 = vunpack.c.l.b16 %v6250
        %v6396 = vunpack.c.l.b16 %v6251
        %v6397 = vunpack.c.l.b16 %v6252
        %v6398 = vunpack.c.l.b16 %v6253
        %v6399 = vunpack.c.l.b16 %v6254
        %v6400 = vunpack.c.l.b16 %v6255
        %v6401 = vunpack.c.l.b16 %v6256
        %v6402 = vunpack.c.l.b16 %v6257
        %v6403 = vunpack.c.l.b16 %v6258
        %v6404 = vunpack.c.l.b16 %v6259
        %v6405 = vunpack.c.l.b16 %v6260
        %v6406 = vunpack.c.l.b16 %v6261
        %v6407 = vunpack.c.l.b16 %v6262
        %v6408 = vunpack.c.l.b16 %v6263
        %v6409 = vunpack.c.l.b16 %v6264
        %v6410 = vunpack.c.l.b16 %v6265
        %v6411 = vpack.c.b16 %v6340, %v6339
        %v6412 = vpack.c.b16 %v6342, %v6341
        %v6413 = vpack.c.b16 %v6344, %v6343
        %v6414 = vpack.c.b16 %v6346, %v6345
        %v6415 = vpack.c.b16 %v6348, %v6347
        %v6416 = vpack.c.b16 %v6350, %v6349
        %v6417 = vpack.c.b16 %v6352, %v6351
        %v6418 = vpack.c.b16 %v6354, %v6353
        %v6419 = vpack.c.b16 %v6356, %v6355
        %v6420 = vpack.c.b16 %v6358, %v6357
        %v6421 = vpack.c.b16 %v6360, %v6359
        %v6422 = vpack.c.b16 %v6362, %v6361
        %v6423 = vpack.c.b16 %v6364, %v6363
        %v6424 = vpack.c.b16 %v6366, %v6365
        %v6425 = vpack.c.b16 %v6368, %v6367
        %v6426 = vpack.c.b16 %v6370, %v6369
        %v6427 = vpack.c.b16 %v6372, %v6371
        %v6428 = vpack.c.b16 %v6374, %v6373
        %v6429 = vpack.c.b16 %v6376, %v6375
        %v6430 = vpack.c.b16 %v6378, %v6377
        %v6431 = vpack.c.b16 %v6380, %v6379
        %v6432 = vpack.c.b16 %v6382, %v6381
        %v6433 = vpack.c.b16 %v6384, %v6383
        %v6434 = vpack.c.b16 %v6386, %v6385
        %v6435 = vpack.c.b16 %v6388, %v6387
        %v6436 = vpack.c.b16 %v6390, %v6389
        %v6437 = vpack.c.b16 %v6392, %v6391
        %v6438 = vpack.c.b16 %v6394, %v6393
        %v6439 = vpack.c.b16 %v6396, %v6395
        %v6440 = vpack.c.b16 %v6398, %v6397
        %v6441 = vpack.c.b16 %v6400, %v6399
        %v6442 = vpack.c.b16 %v6402, %v6401
        %v6443 = vpack.c.b16 %v6404, %v6403
        %v6444 = vpack.c.b16 %v6406, %v6405
        %v6445 = vpack.c.b16 %v6408, %v6407
        %v6446 = vpack.c.b16 %v6410, %v6409
        %6483 = vmatpush.bf16.msra.mxu0 %v6418
        %6484 = vmatpush.bf16.msra.mxu0 %v6417
        %6485 = vmatpush.bf16.msra.mxu0 %v6416
        %6486 = vmatpush.bf16.msra.mxu0 %v6415
        %6487 = vmatpush.bf16.msra.mxu0 %v6414
        %6488 = vmatpush.bf16.msra.mxu0 %v6413
        %6489 = vmatpush.bf16.msra.mxu0 %v6412
        %6490 = vmatpush.bf16.msra.mxu0 %v6411
        %6491 = vmatmul.bf16.gmra.mxu0 %v6180
        %v6492 = vpop.f32.mrf.mxu0
        %v6493 = vadd.f32 %v6266, %v6492
        %v6494 = vpop.f32.mrf.mxu0
        %6495 = vdwg.mxu0
        %6496 = vmatpush.bf16.msra.mxu0 %v6426
        %6497 = vmatpush.bf16.msra.mxu0 %v6425
        %6498 = vmatpush.bf16.msra.mxu0 %v6424
        %6499 = vmatpush.bf16.msra.mxu0 %v6423
        %6500 = vmatpush.bf16.msra.mxu0 %v6422
        %6501 = vmatpush.bf16.msra.mxu0 %v6421
        %6502 = vmatpush.bf16.msra.mxu0 %v6420
        %6503 = vmatpush.bf16.msra.mxu0 %v6419
        %6504 = vmatmul.bf16.gmra.mxu0 %v6192
        %v6505 = vpop.f32.mrf.mxu0
        %v6506 = vadd.f32 %v6493, %v6505
        %v6507 = vpop.f32.mrf.mxu0
        %6508 = vdwg.mxu0
        %6509 = vmatpush.bf16.msra.mxu0 %v6434
        %6510 = vmatpush.bf16.msra.mxu0 %v6433
        %6511 = vmatpush.bf16.msra.mxu0 %v6432
        %6512 = vmatpush.bf16.msra.mxu0 %v6431
        %6513 = vmatpush.bf16.msra.mxu0 %v6430
        %6514 = vmatpush.bf16.msra.mxu0 %v6429
        %6515 = vmatpush.bf16.msra.mxu0 %v6428
        %6516 = vmatpush.bf16.msra.mxu0 %v6427
        %6517 = vmatmul.bf16.gmra.mxu0 %v6186
        %v6518 = vpop.f32.mrf.mxu0
        %v6519 = vadd.f32 %v6506, %v6518
        %v6520 = vpop.f32.mrf.mxu0
        %6521 = vdwg.mxu0
        %6522 = vmatpush.bf16.msra.mxu0 %v6442
        %6523 = vmatpush.bf16.msra.mxu0 %v6441
        %6524 = vmatpush.bf16.msra.mxu0 %v6440
        %6525 = vmatpush.bf16.msra.mxu0 %v6439
        %6526 = vmatpush.bf16.msra.mxu0 %v6438
        %6527 = vmatpush.bf16.msra.mxu0 %v6437
        %6528 = vmatpush.bf16.msra.mxu0 %v6436
        %6529 = vmatpush.bf16.msra.mxu0 %v6435
        %6530 = vmatmul.bf16.gmra.mxu0 %v6189
        %v6531 = vpop.f32.mrf.mxu0
        %v6532 = vadd.f32 %v6519, %v6531
        %v6533 = vpop.f32.mrf.mxu0
        %6534 = vdwg.mxu0
        %6535 = vmatpush.bf16.msra.mxu0 0
        %6536 = vmatpush.bf16.msra.mxu0 0
        %6537 = vmatpush.bf16.msra.mxu0 0
        %6538 = vmatpush.bf16.msra.mxu0 0
        %6539 = vmatpush.bf16.msra.mxu0 %v6446
        %6540 = vmatpush.bf16.msra.mxu0 %v6445
        %6541 = vmatpush.bf16.msra.mxu0 %v6444
        %6542 = vmatpush.bf16.msra.mxu0 %v6443
        %6543 = vmatmul.bf16.gmra.mxu0 %v6049
        %v6544 = vpop.f32.mrf.mxu0
        %v6545 = vadd.f32 %v6532, %v6544
        %v6546 = vpop.f32.mrf.mxu0
        %6547 = vdwg.mxu0
        %v6548 = vmax.f32 %v6545, 0.0
        %v6549 = vpack.c.bf16 %v6548, %v6548
        %v6551 = vunpack.c.l.b16 %v6549
        %v6552 = vpack.c.b16 %v6551, %v6551
        %6553 = vrot.lane.b32.xlu0 %v6552, 64
        %v6554 = vpop.permute.xlu0 %6553
        %v6556 = vsel %vm3650, 0, %v6554
        %v6557 = vshll.u32 %v6556, 16
        %v6560 = vsel %vm2646, 0, %v6557
        %v6562 = vsel %vm2567, %v6560, 0
        %v6564 = vshrl.u32 %v6562, 16
        %6566 = vrot.lane.b32.xlu0 %v6564, 64
        %v6567 = vpop.permute.xlu0 %6566
        %v6568 = vsel %vm5748, %v6567, %v5747
        %v6571 = vrot.slane %v6562, 1
        %v6574 = vsel %vm3650, %v5739, %v6567
        %v6576 = vld [vmem:[%s81] sm:$0xf]
        %v6577 = vld [vmem:[%s81 + $0x4] sm:$0xf]
        %v6578 = vld [vmem:[%s81 + $0x8] sm:$0xf]
        %v6579 = vld [vmem:[%s81 + $0xc] sm:$0xf]
        %v6580 = vld [vmem:[%s81 + $0x10] sm:$0xf]
        %v6581 = vld [vmem:[%s81 + $0x14] sm:$0xf]
        %v6582 = vld [vmem:[%s81 + $0x18] sm:$0xf]
        %v6583 = vld [vmem:[%s81 + $0x1c] sm:$0xf]
        %v6584 = vld [vmem:[%s81 + $0x20] sm:$0xf]
        %v6585 = vld [vmem:[%s81 + $0x24] sm:$0xf]
        %v6586 = vld [vmem:[%s81 + $0x28] sm:$0xf]
        %v6587 = vld [vmem:[%s81 + $0x2c] sm:$0xf]
        %v6588 = vld [vmem:[%s81 + $0x30] sm:$0xf]
        %v6589 = vld [vmem:[%s81 + $0x34] sm:$0xf]
        %v6590 = vld [vmem:[%s81 + $0x38] sm:$0xf]
        %v6591 = vld [vmem:[%s81 + $0x3c] sm:$0xf]
        %v6592 = vld [vmem:[%s81 + $0x40] sm:$0xf]
        %v6593 = vld [vmem:[%s81 + $0x44] sm:$0xf]
        %v6594 = vld [vmem:[%s81 + $0x48] sm:$0xf]
        %v6595 = vld [vmem:[%s81 + $0x4c] sm:$0xf]
        %v6596 = vld [vmem:[%s81 + $0x50] sm:$0xf]
        %v6597 = vld [vmem:[%s81 + $0x54] sm:$0xf]
        %v6598 = vld [vmem:[%s81 + $0x58] sm:$0xf]
        %v6599 = vld [vmem:[%s81 + $0x5c] sm:$0xf]
        %v6600 = vld [vmem:[%s81 + $0x60] sm:$0xf]
        %v6601 = vld [vmem:[%s81 + $0x64] sm:$0xf]
        %v6602 = vld [vmem:[%s81 + $0x68] sm:$0xf]
        %v6603 = vld [vmem:[%s81 + $0x6c] sm:$0xf]
        %v6604 = vld [vmem:[%s81 + $0x70] sm:$0xf]
        %v6605 = vld [vmem:[%s81 + $0x74] sm:$0xf]
        %v6606 = vld [vmem:[%s81 + $0x78] sm:$0xf]
        %v6607 = vld [vmem:[%s81 + $0x7c] sm:$0xf]
        %v6608 = vld [vmem:[%s81 + $0x80] sm:$0xf]
        %v6609 = vld [vmem:[%s81 + $0x84] sm:$0xf]
        %v6610 = vld [vmem:[%s81 + $0x88] sm:$0xf]
        %v6611 = vld [vmem:[%s81 + $0x8c] sm:$0xf]
        %v6612 = vld [vmem:[%s81 + $0x90] sm:$0xf]
        %v6613 = vld [vmem:[%s81 + $0x94] sm:$0xf]
        %v6614 = vld [vmem:[%s81 + $0x98] sm:$0xf]
        %v6615 = vld [vmem:[%s81 + $0x9c] sm:$0xf]
        %v6616 = vld [vmem:[%s81 + $0xa0] sm:$0xf]
        %v6617 = vld [vmem:[%s81 + $0xa4] sm:$0xf]
        %v6618 = vld [vmem:[%s81 + $0xa8] sm:$0xf]
        %v6619 = vld [vmem:[%s81 + $0xac] sm:$0xf]
        %v6620 = vld [vmem:[%s81 + $0xb0] sm:$0xf]
        %v6621 = vld [vmem:[%s81 + $0xb4] sm:$0xf]
        %v6622 = vld [vmem:[%s81 + $0xb8] sm:$0xf]
        %v6623 = vld [vmem:[%s81 + $0xbc] sm:$0xf]
        %v6624 = vld [vmem:[%s81 + $0xc0] sm:$0xf]
        %v6625 = vld [vmem:[%s81 + $0xc4] sm:$0xf]
        %v6626 = vld [vmem:[%s81 + $0xc8] sm:$0xf]
        %v6627 = vld [vmem:[%s81 + $0xcc] sm:$0xf]
        %v6628 = vld [vmem:[%s81 + $0xd0] sm:$0xf]
        %v6629 = vld [vmem:[%s81 + $0xd4] sm:$0xf]
        %v6630 = vld [vmem:[%s81 + $0xd8] sm:$0xf]
        %v6631 = vld [vmem:[%s81 + $0xdc] sm:$0xf]
        %v6632 = vld [vmem:[%s81 + $0xe0] sm:$0xf]
        %v6633 = vld [vmem:[%s81 + $0xe4] sm:$0xf]
        %v6634 = vld [vmem:[%s81 + $0xe8] sm:$0xf]
        %v6635 = vld [vmem:[%s81 + $0xec] sm:$0xf]
        %v6636 = vld [vmem:[%s81 + $0xf0] sm:$0xf]
        %v6637 = vld [vmem:[%s81 + $0xf4] sm:$0xf]
        %v6638 = vld [vmem:[%s81 + $0xf8] sm:$0xf]
        %v6639 = vld [vmem:[%s81 + $0xfc] sm:$0xf]
        %v6640 = vld [vmem:[%s81 + $0x100] sm:$0xf]
        %v6641 = vld [vmem:[%s81 + $0x104] sm:$0xf]
        %v6642 = vld [vmem:[%s81 + $0x108] sm:$0xf]
        %v6643 = vld [vmem:[%s81 + $0x10c] sm:$0xf]
        %v6644 = vld [vmem:[%s81 + $0x110] sm:$0xf]
        %v6645 = vld [vmem:[%s81 + $0x114] sm:$0xf]
        %v6646 = vld [vmem:[%s81 + $0x118] sm:$0xf]
        %v6647 = vld [vmem:[%s81 + $0x11c] sm:$0xf]
        %v6648 = vld [vmem:[#allocation58] sm:$0x1]
        %v6721 = vunpack.c.l.b16 %v6576
        %v6722 = vunpack.c.l.b16 %v6577
        %v6723 = vunpack.c.l.b16 %v6578
        %v6724 = vunpack.c.l.b16 %v6579
        %v6725 = vunpack.c.l.b16 %v6580
        %v6726 = vunpack.c.l.b16 %v6581
        %v6727 = vunpack.c.l.b16 %v6582
        %v6728 = vunpack.c.l.b16 %v6583
        %v6729 = vunpack.c.l.b16 %v6584
        %v6730 = vunpack.c.l.b16 %v6585
        %v6731 = vunpack.c.l.b16 %v6586
        %v6732 = vunpack.c.l.b16 %v6587
        %v6733 = vunpack.c.l.b16 %v6588
        %v6734 = vunpack.c.l.b16 %v6589
        %v6735 = vunpack.c.l.b16 %v6590
        %v6736 = vunpack.c.l.b16 %v6591
        %v6737 = vunpack.c.l.b16 %v6592
        %v6738 = vunpack.c.l.b16 %v6593
        %v6739 = vunpack.c.l.b16 %v6594
        %v6740 = vunpack.c.l.b16 %v6595
        %v6741 = vunpack.c.l.b16 %v6596
        %v6742 = vunpack.c.l.b16 %v6597
        %v6743 = vunpack.c.l.b16 %v6598
        %v6744 = vunpack.c.l.b16 %v6599
        %v6745 = vunpack.c.l.b16 %v6600
        %v6746 = vunpack.c.l.b16 %v6601
        %v6747 = vunpack.c.l.b16 %v6602
        %v6748 = vunpack.c.l.b16 %v6603
        %v6749 = vunpack.c.l.b16 %v6604
        %v6750 = vunpack.c.l.b16 %v6605
        %v6751 = vunpack.c.l.b16 %v6606
        %v6752 = vunpack.c.l.b16 %v6607
        %v6753 = vunpack.c.l.b16 %v6608
        %v6754 = vunpack.c.l.b16 %v6609
        %v6755 = vunpack.c.l.b16 %v6610
        %v6756 = vunpack.c.l.b16 %v6611
        %v6757 = vunpack.c.l.b16 %v6612
        %v6758 = vunpack.c.l.b16 %v6613
        %v6759 = vunpack.c.l.b16 %v6614
        %v6760 = vunpack.c.l.b16 %v6615
        %v6761 = vunpack.c.l.b16 %v6616
        %v6762 = vunpack.c.l.b16 %v6617
        %v6763 = vunpack.c.l.b16 %v6618
        %v6764 = vunpack.c.l.b16 %v6619
        %v6765 = vunpack.c.l.b16 %v6620
        %v6766 = vunpack.c.l.b16 %v6621
        %v6767 = vunpack.c.l.b16 %v6622
        %v6768 = vunpack.c.l.b16 %v6623
        %v6769 = vunpack.c.l.b16 %v6624
        %v6770 = vunpack.c.l.b16 %v6625
        %v6771 = vunpack.c.l.b16 %v6626
        %v6772 = vunpack.c.l.b16 %v6627
        %v6773 = vunpack.c.l.b16 %v6628
        %v6774 = vunpack.c.l.b16 %v6629
        %v6775 = vunpack.c.l.b16 %v6630
        %v6776 = vunpack.c.l.b16 %v6631
        %v6777 = vunpack.c.l.b16 %v6632
        %v6778 = vunpack.c.l.b16 %v6633
        %v6779 = vunpack.c.l.b16 %v6634
        %v6780 = vunpack.c.l.b16 %v6635
        %v6781 = vunpack.c.l.b16 %v6636
        %v6782 = vunpack.c.l.b16 %v6637
        %v6783 = vunpack.c.l.b16 %v6638
        %v6784 = vunpack.c.l.b16 %v6639
        %v6785 = vunpack.c.l.b16 %v6640
        %v6786 = vunpack.c.l.b16 %v6641
        %v6787 = vunpack.c.l.b16 %v6642
        %v6788 = vunpack.c.l.b16 %v6643
        %v6789 = vunpack.c.l.b16 %v6644
        %v6790 = vunpack.c.l.b16 %v6645
        %v6791 = vunpack.c.l.b16 %v6646
        %v6792 = vunpack.c.l.b16 %v6647
        %v6793 = vpack.c.b16 %v6722, %v6721
        %v6794 = vpack.c.b16 %v6724, %v6723
        %v6795 = vpack.c.b16 %v6726, %v6725
        %v6796 = vpack.c.b16 %v6728, %v6727
        %v6797 = vpack.c.b16 %v6730, %v6729
        %v6798 = vpack.c.b16 %v6732, %v6731
        %v6799 = vpack.c.b16 %v6734, %v6733
        %v6800 = vpack.c.b16 %v6736, %v6735
        %v6801 = vpack.c.b16 %v6738, %v6737
        %v6802 = vpack.c.b16 %v6740, %v6739
        %v6803 = vpack.c.b16 %v6742, %v6741
        %v6804 = vpack.c.b16 %v6744, %v6743
        %v6805 = vpack.c.b16 %v6746, %v6745
        %v6806 = vpack.c.b16 %v6748, %v6747
        %v6807 = vpack.c.b16 %v6750, %v6749
        %v6808 = vpack.c.b16 %v6752, %v6751
        %v6809 = vpack.c.b16 %v6754, %v6753
        %v6810 = vpack.c.b16 %v6756, %v6755
        %v6811 = vpack.c.b16 %v6758, %v6757
        %v6812 = vpack.c.b16 %v6760, %v6759
        %v6813 = vpack.c.b16 %v6762, %v6761
        %v6814 = vpack.c.b16 %v6764, %v6763
        %v6815 = vpack.c.b16 %v6766, %v6765
        %v6816 = vpack.c.b16 %v6768, %v6767
        %v6817 = vpack.c.b16 %v6770, %v6769
        %v6818 = vpack.c.b16 %v6772, %v6771
        %v6819 = vpack.c.b16 %v6774, %v6773
        %v6820 = vpack.c.b16 %v6776, %v6775
        %v6821 = vpack.c.b16 %v6778, %v6777
        %v6822 = vpack.c.b16 %v6780, %v6779
        %v6823 = vpack.c.b16 %v6782, %v6781
        %v6824 = vpack.c.b16 %v6784, %v6783
        %v6825 = vpack.c.b16 %v6786, %v6785
        %v6826 = vpack.c.b16 %v6788, %v6787
        %v6827 = vpack.c.b16 %v6790, %v6789
        %v6828 = vpack.c.b16 %v6792, %v6791
        %6865 = vmatpush.bf16.msra.mxu0 %v6800
        %6866 = vmatpush.bf16.msra.mxu0 %v6799
        %6867 = vmatpush.bf16.msra.mxu0 %v6798
        %6868 = vmatpush.bf16.msra.mxu0 %v6797
        %6869 = vmatpush.bf16.msra.mxu0 %v6796
        %6870 = vmatpush.bf16.msra.mxu0 %v6795
        %6871 = vmatpush.bf16.msra.mxu0 %v6794
        %6872 = vmatpush.bf16.msra.mxu0 %v6793
        %6873 = vmatmul.bf16.gmra.mxu0 %v6562
        %v6874 = vpop.f32.mrf.mxu0
        %v6875 = vadd.f32 %v6648, %v6874
        %v6876 = vpop.f32.mrf.mxu0
        %6877 = vdwg.mxu0
        %6878 = vmatpush.bf16.msra.mxu0 %v6808
        %6879 = vmatpush.bf16.msra.mxu0 %v6807
        %6880 = vmatpush.bf16.msra.mxu0 %v6806
        %6881 = vmatpush.bf16.msra.mxu0 %v6805
        %6882 = vmatpush.bf16.msra.mxu0 %v6804
        %6883 = vmatpush.bf16.msra.mxu0 %v6803
        %6884 = vmatpush.bf16.msra.mxu0 %v6802
        %6885 = vmatpush.bf16.msra.mxu0 %v6801
        %6886 = vmatmul.bf16.gmra.mxu0 %v6574
        %v6887 = vpop.f32.mrf.mxu0
        %v6888 = vadd.f32 %v6875, %v6887
        %v6889 = vpop.f32.mrf.mxu0
        %6890 = vdwg.mxu0
        %6891 = vmatpush.bf16.msra.mxu0 %v6816
        %6892 = vmatpush.bf16.msra.mxu0 %v6815
        %6893 = vmatpush.bf16.msra.mxu0 %v6814
        %6894 = vmatpush.bf16.msra.mxu0 %v6813
        %6895 = vmatpush.bf16.msra.mxu0 %v6812
        %6896 = vmatpush.bf16.msra.mxu0 %v6811
        %6897 = vmatpush.bf16.msra.mxu0 %v6810
        %6898 = vmatpush.bf16.msra.mxu0 %v6809
        %6899 = vmatmul.bf16.gmra.mxu0 %v6568
        %v6900 = vpop.f32.mrf.mxu0
        %v6901 = vadd.f32 %v6888, %v6900
        %v6902 = vpop.f32.mrf.mxu0
        %6903 = vdwg.mxu0
        %6904 = vmatpush.bf16.msra.mxu0 %v6824
        %6905 = vmatpush.bf16.msra.mxu0 %v6823
        %6906 = vmatpush.bf16.msra.mxu0 %v6822
        %6907 = vmatpush.bf16.msra.mxu0 %v6821
        %6908 = vmatpush.bf16.msra.mxu0 %v6820
        %6909 = vmatpush.bf16.msra.mxu0 %v6819
        %6910 = vmatpush.bf16.msra.mxu0 %v6818
        %6911 = vmatpush.bf16.msra.mxu0 %v6817
        %6912 = vmatmul.bf16.gmra.mxu0 %v6571
        %v6913 = vpop.f32.mrf.mxu0
        %v6914 = vadd.f32 %v6901, %v6913
        %v6915 = vpop.f32.mrf.mxu0
        %6916 = vdwg.mxu0
        %6917 = vmatpush.bf16.msra.mxu0 0
        %6918 = vmatpush.bf16.msra.mxu0 0
        %6919 = vmatpush.bf16.msra.mxu0 0
        %6920 = vmatpush.bf16.msra.mxu0 0
        %6921 = vmatpush.bf16.msra.mxu0 %v6828
        %6922 = vmatpush.bf16.msra.mxu0 %v6827
        %6923 = vmatpush.bf16.msra.mxu0 %v6826
        %6924 = vmatpush.bf16.msra.mxu0 %v6825
        %6925 = vmatmul.bf16.gmra.mxu0 %v6049
        %v6926 = vpop.f32.mrf.mxu0
        %v6927 = vadd.f32 %v6914, %v6926
        %v6928 = vpop.f32.mrf.mxu0
        %6929 = vdwg.mxu0
        %v6930 = vadd.f32 %v6927, %v6166
        %v6931 = vmax.f32 %v6930, 0.0
        %v6932 = vpack.c.bf16 %v6931, %v6931
        %v6933 = vld [vmem:[%s85] sm:$0xf]
        %v6934 = vld [vmem:[%s85 + $0x4] sm:$0xf]
        %v6935 = vld [vmem:[%s85 + $0x8] sm:$0xf]
        %v6936 = vld [vmem:[%s85 + $0xc] sm:$0xf]
        %v6937 = vld [vmem:[%s85 + $0x10] sm:$0xf]
        %v6938 = vld [vmem:[%s85 + $0x14] sm:$0xf]
        %v6939 = vld [vmem:[%s85 + $0x18] sm:$0xf]
        %v6940 = vld [vmem:[%s85 + $0x1c] sm:$0xf]
        %v6941 = vld [vmem:[%s87] sm:$0x1]
        %v6950 = vunpack.c.l.b16 %v6933
        %v6951 = vunpack.c.l.b16 %v6934
        %v6952 = vunpack.c.l.b16 %v6935
        %v6953 = vunpack.c.l.b16 %v6936
        %v6954 = vunpack.c.l.b16 %v6937
        %v6955 = vunpack.c.l.b16 %v6938
        %v6956 = vunpack.c.l.b16 %v6939
        %v6957 = vunpack.c.l.b16 %v6940
        %v6958 = vpack.c.b16 %v6951, %v6950
        %v6959 = vpack.c.b16 %v6953, %v6952
        %v6960 = vpack.c.b16 %v6955, %v6954
        %v6961 = vpack.c.b16 %v6957, %v6956
        %v6967 = vsel %vm3650, %v6932, 0
        %6969 = vmatpush.bf16.msra.mxu0 0
        %6970 = vmatpush.bf16.msra.mxu0 0
        %6971 = vmatpush.bf16.msra.mxu0 0
        %6972 = vmatpush.bf16.msra.mxu0 0
        %6973 = vmatpush.bf16.msra.mxu0 %v6961
        %6974 = vmatpush.bf16.msra.mxu0 %v6960
        %6975 = vmatpush.bf16.msra.mxu0 %v6959
        %6976 = vmatpush.bf16.msra.mxu0 %v6958
        %6977 = vmatmul.bf16.gmra.mxu0 %v6967
        %v6978 = vpop.f32.mrf.mxu0
        %v6979 = vadd.f32 %v6941, %v6978
        %v6980 = vpop.f32.mrf.mxu0
        %6981 = vdwg.mxu0
        %vm6982 = vcmask 32768
        %6983 = vst.msk [vmem:[%s1900] sm:$0x1] %vm6982, %v6979
        %s6984 = sand.u32 %s1064, 1
        %s6985 = scalar_lea.sflag [#allocation4], %s6984
        %s6986 = sand.u32 %s1064, 1
        %s6987 = scalar_lea.vmem [#allocation59], %s6986
        // Predicated region
        $region345: #{_lambda_.1} parent=195 // pred_check
          %p6988 = pneg %p1074
        $region346: #{_lambda_.1} parent=195 // pred_check_branch
          %6990 = sbr.rel (%p6988) target = $region348
        $region347: #{_lambda_.1} parent=195 // pred_region
          %6992 = vsyncadd %s6985, 0
          %s6993 = scalar_lea.hbm %s89, %s122
          %s6995 = sshll.u32 %s6987, 4
          %s6996 = int_to_ptr.vmem [resolvable:$true] %s6995
          %s6997 = sshll.u32 %s6993, 4
          %s6998 = int_to_ptr.hbm [resolvable:$true] %s6997
          %7000 = dma.vmem_to_hbm [thread:$0]  %s6996, 16, %s6998, %s6985
        $region348: #{_lambda_.1} parent=195 // pred_fallthru
          _
      $region196: #{_lambda_.1} parent=5 // pred_fallthru
        _
      %p7001 = scmp.le.s32.totalorder 2, %s117
      // Predicated region
      $region349: #{_lambda_.1} parent=5 // pred_check
        %p7002 = pneg %p7001
      $region350: #{_lambda_.1} parent=5 // pred_check_branch
        %7004 = sbr.rel (%p7002) target = $region352
      $region351: #{_lambda_.1} parent=5 // pred_region
        %s7005 = ssub.s32 %s117, 2
        // Predicated region
        $region353: #{_lambda_.1} parent=351 // pred_check
          %p7006 = pneg %p1080
        $region354: #{_lambda_.1} parent=351 // pred_check_branch
          %7008 = sbr.rel (%p7006) target = $region356
        $region355: #{_lambda_.1} parent=351 // pred_region
          %s7009 = sand.u32 %s1065, 1
          %s7010 = scalar_lea.sflag [#allocation4], %s7009
          %s7011 = sand.u32 %s1065, 1
          %s7012 = scalar_lea.vmem [#allocation59], %s7011
          %7014 = dma.done %s7010, 16
        $region356: #{_lambda_.1} parent=351 // pred_fallthru
          _
      $region352: #{_lambda_.1} parent=5 // pred_fallthru
        _
    $region6: #{_lambda_.1} parent=1 // loop_footer
      %s121 = sadd.s32 1, %s117
    $region7: #{_lambda_.1} parent=1 // loop_footer_branch
      %116 = sbr.rel target = $region3
    $region8: #{_lambda_.1} parent=1 // loop_exit
      _
    %7015 = vsyncpa [#allocation3], 1
    %s7016 = scalar_lea.sflag [#allocation3], 1
    %7017 = vsyncpa %s7016, 1
    %7018 = vsyncpa [#allocation6], 1
    %7019 = vsyncpa [#allocation9], 1
    %7020 = vsyncpa [#allocation12], 1
    %7021 = vsyncpa [#allocation15], 1
    %7022 = vsyncpa [#allocation18], 1
    %7023 = vsyncpa [#allocation21], 1
    %7024 = vsyncpa [#allocation24], 1
    %7025 = vsyncpa [#allocation27], 1
    %7026 = vsyncpa [#allocation30], 1
    %7027 = vsyncpa [#allocation33], 1
    %7028 = vsyncpa [#allocation36], 1
    %7029 = vsyncpa [#allocation39], 1
    %7030 = vsyncpa [#allocation42], 1
    %7031 = vsyncpa [#allocation45], 1
    %7032 = vsyncpa [#allocation48], 1
    %7033 = vsyncpa [#allocation51], 1
    %7034 = vsyncpa [#allocation54], 1
    %7035 = vsyncpa [#allocation57], 1
    %7036 = vsyncpa [#allocation4], 1
    %s7037 = scalar_lea.sflag [#allocation4], 1
    %7038 = vsyncpa %s7037, 1

</llo_original>
